<compile_context>
chip_gen: v7x
topology: tpu7x:2x2x1
jax: 0.10.0
libtpu: 0.0.40
codegen_flags: <defaults>
</compile_context>

<pallas_src>
import numpy as np
import jax
import jax.numpy as jnp
from jax import lax
from jax.experimental import pallas as pl
from jax.experimental.pallas import tpu as pltpu

# ---------------- small config consistent with the module ----------------
B = 2             # batch
L = 8             # sequence length (both p and h)
VOCAB = 50        # args.word_vocab_size
VOCAB_PAD = 64    # vocab padded to a sublane-tile multiple for the one-hot matmul
D_MODEL = 32      # args.word_dim == d_model == args.hidden_size
N_HEAD = 4
D_K = 8
D_V = 8
D_INNER = 64      # d_inner_hid
N_LAYERS = 2
CLASS_SIZE = 3    # args.class_size
PAD = 0           # Constants.PAD

TWO_B = 2 * B                 # p and h batched together through the shared encoder
ROWS = TWO_B * L              # 32 token rows
HDK = N_HEAD * D_K            # 32
HDV = N_HEAD * D_V            # 32
HB = N_HEAD * TWO_B           # heads folded into the batch dim (16)
OUT_ROWS, OUT_LANES = 8, 128  # lane-dense padded output slab


# ============================ fused Pallas kernel ============================

def _layer_norm(z, gamma, beta, eps=1e-6):
    mu = jnp.mean(z, axis=-1, keepdims=True)
    var = jnp.mean((z - mu) ** 2, axis=-1, keepdims=True)
    return (z - mu) * lax.rsqrt(var + eps) * gamma + beta


def _siamese_kernel(p_ids_ref, h_ids_ref, emb_ref, pos_ref,
                    wqkv_ref, wo3_ref, bo_ref, ln1_ref,
                    w1_ref, b1_ref, w2_ref, b2_ref, ln2_ref,
                    fc1w_ref, fc1b_ref, fc2w_ref, fc2b_ref,
                    o_ref):
    """Whole Siamese forward: embeddings + 2 encoder layers + pooling + pred head."""
    ids = jnp.concatenate([p_ids_ref[...], h_ids_ref[...]], axis=0)      # (TWO_B, L) i32

    # ---- fused embedding gather (one-hot matmul on MXU) + positional add ----
    iota = lax.broadcasted_iota(jnp.int32, (TWO_B, L, VOCAB_PAD), 2)
    onehot = (ids[:, :, None] == iota).astype(jnp.float32).reshape(ROWS, VOCAB_PAD)
    x = jnp.dot(onehot, emb_ref[...], preferred_element_type=jnp.float32)  # (ROWS, D)
    x = x + jnp.tile(pos_ref[...], (TWO_B, 1))                             # pos 0..L-1

    # ---- PAD-key attention mask, built in-kernel and hoisted out of the layer loop ----
    neg = jnp.where(ids == PAD, 1e9, 0.0).astype(jnp.float32)              # (TWO_B, L)
    neg_h = jnp.tile(neg, (N_HEAD, 1))[:, None, :]                          # (HB, 1, L)

    for li in range(N_LAYERS):                          # static unroll (2 layers)
        # ---- multi-head self-attention: fused QKV, heads folded into the batch dim ----
        qkv = jnp.dot(x, wqkv_ref[li], preferred_element_type=jnp.float32)  # (ROWS, 3*HDK)
        q = jnp.stack([qkv[:, h * D_K:(h + 1) * D_K]
                       for h in range(N_HEAD)], axis=0).reshape(HB, L, D_K)
        k = jnp.stack([qkv[:, HDK + h * D_K: HDK + (h + 1) * D_K]
                       for h in range(N_HEAD)], axis=0).reshape(HB, L, D_K)
        v = jnp.stack([qkv[:, 2 * HDK + h * D_V: 2 * HDK + (h + 1) * D_V]
                       for h in range(N_HEAD)], axis=0).reshape(HB, L, D_V)

        # 1/sqrt(d_k) is pre-folded into the Q columns of wqkv at init time.
        s = jnp.einsum('bqd,bkd->bqk', q, k,
                       preferred_element_type=jnp.float32)                   # (HB, L, L)
        s = s - neg_h                                    # mask PAD keys
        s = s - jnp.max(s, axis=-1, keepdims=True)       # stable softmax
        p = jnp.exp(s)
        p = p * pl.reciprocal(jnp.sum(p, axis=-1, keepdims=True), approx=True)
        a = jnp.einsum('bqk,bkd->bqd', p, v,
                       preferred_element_type=jnp.float32)                   # (HB, L, D_V)

        # output projection folded per head (no cross-lane concat), then head-sum
        o4 = jnp.einsum('hrd,hdm->hrm', a.reshape(N_HEAD, ROWS, D_V), wo3_ref[li],
                        preferred_element_type=jnp.float32)                  # (H, ROWS, D)
        o = jnp.sum(o4, axis=0) + bo_ref[li]                                 # (ROWS, D)
        ln1 = ln1_ref[li]
        x = _layer_norm(o + x, ln1[0:1, :], ln1[1:2, :])

        # ---- position-wise feed-forward ----
        hdd = jnp.maximum(
            jnp.dot(x, w1_ref[li], preferred_element_type=jnp.float32) + b1_ref[li], 0.0)
        o2 = jnp.dot(hdd, w2_ref[li], preferred_element_type=jnp.float32) + b2_ref[li]
        ln2 = ln2_ref[li]
        x = _layer_norm(o2 + x, ln2[0:1, :], ln2[1:2, :])

    # ---- prediction head: mean-pool over seq, concat(p,h), fc1+tanh, fc2 ----
    means = jnp.mean(x.reshape(TWO_B, L, D_MODEL), axis=1)                   # (TWO_B, D)
    p_mean, h_mean = means[:B], means[B:]
    fc1w = fc1w_ref[...]
    # concat([p_mean, h_mean], -1) @ W1 == p_mean @ W1[:D] + h_mean @ W1[D:]
    y = jnp.tanh(jnp.dot(p_mean, fc1w[:D_MODEL], preferred_element_type=jnp.float32)
                 + jnp.dot(h_mean, fc1w[D_MODEL:], preferred_element_type=jnp.float32)
                 + fc1b_ref[...])
    logits = jnp.dot(y, fc2w_ref[...], preferred_element_type=jnp.float32) + fc2b_ref[...]

    # lane-dense padded writeback: full unmasked zero store + tiny (B, CLASS) store
    o_ref[...] = jnp.zeros((OUT_ROWS, OUT_LANES), jnp.float32)
    o_ref[0:B, 0:CLASS_SIZE] = logits


def _full_spec(shape):
    return pl.BlockSpec(shape, lambda i, _n=len(shape): (0,) * _n)


def siamese_pallas(params, p_ids, h_ids):
    padded = pl.pallas_call(
        _siamese_kernel,
        out_shape=jax.ShapeDtypeStruct((OUT_ROWS, OUT_LANES), jnp.float32),
        grid=(1,),
        in_specs=[
            _full_spec((B, L)),                                # p_ids (int32)
            _full_spec((B, L)),                                # h_ids (int32)
            _full_spec((VOCAB_PAD, D_MODEL)),                  # padded word embedding
            _full_spec((L, D_MODEL)),                          # sinusoid PE rows 0..L-1
            _full_spec((N_LAYERS, D_MODEL, 3 * HDK)),          # fused QKV (Q pre-scaled)
            _full_spec((N_LAYERS, N_HEAD, D_V, D_MODEL)),      # per-head output proj
            _full_spec((N_LAYERS, 1, D_MODEL)),                # bo
            _full_spec((N_LAYERS, 2, D_MODEL)),                # ln1 [gamma; beta]
            _full_spec((N_LAYERS, D_MODEL, D_INNER)),          # w1
            _full_spec((N_LAYERS, 1, D_INNER)),                # b1
            _full_spec((N_LAYERS, D_INNER, D_MODEL)),          # w2
            _full_spec((N_LAYERS, 1, D_MODEL)),                # b2
            _full_spec((N_LAYERS, 2, D_MODEL)),                # ln2
            _full_spec((2 * D_MODEL, D_MODEL)),                # pred_fc1 W
            _full_spec((1, D_MODEL)),                          # pred_fc1 b
            _full_spec((D_MODEL, CLASS_SIZE)),                 # pred_fc2 W
            _full_spec((1, CLASS_SIZE)),                       # pred_fc2 b
        ],
        out_specs=_full_spec((OUT_ROWS, OUT_LANES)),
        compiler_params=pltpu.CompilerParams(dimension_semantics=("arbitrary",)),
    )(p_ids, h_ids, params["emb_pad"], params["pos_l"],
      params["wqkv"], params["wo3"], params["bo"], params["ln1"],
      params["w1"], params["b1"], params["w2"], params["b2"], params["ln2"],
      params["fc1_w"], params["fc1_b"], params["fc2_w"], params["fc2_b"])
    return padded[:B, :CLASS_SIZE].reshape(B, 1, CLASS_SIZE)


# ============================ model glue (plain JAX) ============================

def position_encoding_init(n_position, d_pos_vec):
    """Sinusoid table, identical to the torch helper (row 0 is zeros)."""
    pe = np.array(
        [[pos / np.power(10000, 2 * (j // 2) / d_pos_vec) for j in range(d_pos_vec)]
         if pos != 0 else np.zeros(d_pos_vec) for pos in range(n_position)])
    pe[1:, 0::2] = np.sin(pe[1:, 0::2])
    pe[1:, 1::2] = np.cos(pe[1:, 1::2])
    return jnp.asarray(pe, dtype=jnp.float32)


def init_params(key):
    keys = jax.random.split(key, 4 + N_LAYERS)
    emb = jax.random.normal(keys[0], (VOCAB, D_MODEL), jnp.float32) * 0.1
    emb_pad = jnp.zeros((VOCAB_PAD, D_MODEL), jnp.float32).at[:VOCAB].set(emb)
    params = {
        "emb_pad": emb_pad,
        "pos_l": position_encoding_init(100, D_MODEL)[:L],     # rows 0..L-1, as in torch
        # prediction head: uniform(-0.005, 0.005) like reset_parameters, bias = 0
        "fc1_w": jax.random.uniform(keys[1], (2 * D_MODEL, D_MODEL),
                                    minval=-0.005, maxval=0.005),
        "fc1_b": jnp.zeros((1, D_MODEL), jnp.float32),
        "fc2_w": jax.random.uniform(keys[2], (D_MODEL, CLASS_SIZE),
                                    minval=-0.005, maxval=0.005),
        "fc2_b": jnp.zeros((1, CLASS_SIZE), jnp.float32),
    }
    wqkv, wo3, bo, ln1, w1, b1, w2, b2, ln2 = ([] for _ in range(9))
    inv_sqrt_dk = 1.0 / float(np.sqrt(D_K))
    for li in range(N_LAYERS):
        k = jax.random.split(keys[4 + li], 6)
        # 1/sqrt(d_k) attention scale folded into the Q projection (static transform)
        wq = (jax.random.normal(k[0], (D_MODEL, HDK)) / np.sqrt(D_MODEL)) * inv_sqrt_dk
        wk = jax.random.normal(k[1], (D_MODEL, HDK)) / np.sqrt(D_MODEL)
        wv = jax.random.normal(k[2], (D_MODEL, HDV)) / np.sqrt(D_MODEL)
        wqkv.append(jnp.concatenate([wq, wk, wv], axis=-1))           # fused QKV weight
        wo = jax.random.normal(k[3], (HDV, D_MODEL)) / np.sqrt(HDV)
        wo3.append(wo.reshape(N_HEAD, D_V, D_MODEL))                  # per-head out proj
        bo.append(jnp.zeros((1, D_MODEL), jnp.float32))
        ln1.append(jnp.stack([jnp.ones(D_MODEL), jnp.zeros(D_MODEL)]))  # [gamma; beta]
        w1.append(jax.random.normal(k[4], (D_MODEL, D_INNER)) / np.sqrt(D_MODEL))
        b1.append(jnp.zeros((1, D_INNER), jnp.float32))
        w2.append(jax.random.normal(k[5], (D_INNER, D_MODEL)) / np.sqrt(D_INNER))
        b2.append(jnp.zeros((1, D_MODEL), jnp.float32))
        ln2.append(jnp.stack([jnp.ones(D_MODEL), jnp.zeros(D_MODEL)]))
    params.update(
        wqkv=jnp.stack(wqkv), wo3=jnp.stack(wo3), bo=jnp.stack(bo), ln1=jnp.stack(ln1),
        w1=jnp.stack(w1), b1=jnp.stack(b1), w2=jnp.stack(w2), b2=jnp.stack(b2),
        ln2=jnp.stack(ln2))
    return params


def siamese_forward(params, p_ids, h_ids):
    """p_ids, h_ids: (B, L) int32 token ids. Returns (B, 1, CLASS_SIZE)."""
    # Embedding gather, positional add, mask, both encoders (weight-shared, batched
    # together) and the prediction head all run inside the single Pallas kernel.
    return siamese_pallas(params, p_ids, h_ids)          # dropout = identity (eval)


# ================================ main ================================

if __name__ == "__main__":
    key = jax.random.PRNGKey(0)
    k_param, k_p, k_h = jax.random.split(key, 3)
    params = init_params(k_param)

    p_ids = jax.random.randint(k_p, (B, L), 1, VOCAB, dtype=jnp.int32)
    h_ids = jax.random.randint(k_h, (B, L), 1, VOCAB, dtype=jnp.int32)
    # trailing PAD tokens to exercise the attention padding mask
    p_ids = p_ids.at[:, -1].set(PAD)
    h_ids = h_ids.at[:, -2:].set(PAD)

    out = jax.jit(siamese_forward)(params, p_ids, h_ids)
    out = jax.block_until_ready(out)

    assert out.shape == (B, 1, CLASS_SIZE), out.shape
    assert out.dtype == jnp.float32
    assert bool(jnp.all(jnp.isfinite(out)))
    print("KERNEL_OK")
</pallas_src>

<mosaic_0001>
module attributes {stable_mosaic.version = 11 : i64} {
  func.func @_siamese_kernel(%arg0: i32, %arg1: memref<2x8xi32, #tpu.memory_space<vmem>>, %arg2: memref<2x8xi32, #tpu.memory_space<vmem>>, %arg3: memref<64x32xf32, #tpu.memory_space<vmem>>, %arg4: memref<8x32xf32, #tpu.memory_space<vmem>>, %arg5: memref<2x32x96xf32, #tpu.memory_space<vmem>>, %arg6: memref<2x4x8x32xf32, #tpu.memory_space<vmem>>, %arg7: memref<2x1x32xf32, #tpu.memory_space<vmem>>, %arg8: memref<2x2x32xf32, #tpu.memory_space<vmem>>, %arg9: memref<2x32x64xf32, #tpu.memory_space<vmem>>, %arg10: memref<2x1x64xf32, #tpu.memory_space<vmem>>, %arg11: memref<2x64x32xf32, #tpu.memory_space<vmem>>, %arg12: memref<2x1x32xf32, #tpu.memory_space<vmem>>, %arg13: memref<2x2x32xf32, #tpu.memory_space<vmem>>, %arg14: memref<64x32xf32, #tpu.memory_space<vmem>>, %arg15: memref<1x32xf32, #tpu.memory_space<vmem>>, %arg16: memref<32x3xf32, #tpu.memory_space<vmem>>, %arg17: memref<1x3xf32, #tpu.memory_space<vmem>>, %arg18: memref<8x128xf32, #tpu.memory_space<vmem>>) attributes {dimension_semantics = [#tpu.dimension_semantics<arbitrary>], iteration_bounds = array<i64: 1>, scalar_prefetch = 0 : i64, scratch_operands = 0 : i64, tpu.core_type = #tpu.core_type<tc>, window_params = [{pipeline_mode = #tpu.pipeline_mode<synchronous>, transform_indices = @transform_0, window_bounds = array<i64: 2, 8>}, {pipeline_mode = #tpu.pipeline_mode<synchronous>, transform_indices = @transform_1, window_bounds = array<i64: 2, 8>}, {pipeline_mode = #tpu.pipeline_mode<synchronous>, transform_indices = @transform_2, window_bounds = array<i64: 64, 32>}, {pipeline_mode = #tpu.pipeline_mode<synchronous>, transform_indices = @transform_3, window_bounds = array<i64: 8, 32>}, {pipeline_mode = #tpu.pipeline_mode<synchronous>, transform_indices = @transform_4, window_bounds = array<i64: 2, 32, 96>}, {pipeline_mode = #tpu.pipeline_mode<synchronous>, transform_indices = @transform_5, window_bounds = array<i64: 2, 4, 8, 32>}, {pipeline_mode = #tpu.pipeline_mode<synchronous>, transform_indices = @transform_6, window_bounds = array<i64: 2, 1, 32>}, {pipeline_mode = #tpu.pipeline_mode<synchronous>, transform_indices = @transform_7, window_bounds = array<i64: 2, 2, 32>}, {pipeline_mode = #tpu.pipeline_mode<synchronous>, transform_indices = @transform_8, window_bounds = array<i64: 2, 32, 64>}, {pipeline_mode = #tpu.pipeline_mode<synchronous>, transform_indices = @transform_9, window_bounds = array<i64: 2, 1, 64>}, {pipeline_mode = #tpu.pipeline_mode<synchronous>, transform_indices = @transform_10, window_bounds = array<i64: 2, 64, 32>}, {pipeline_mode = #tpu.pipeline_mode<synchronous>, transform_indices = @transform_11, window_bounds = array<i64: 2, 1, 32>}, {pipeline_mode = #tpu.pipeline_mode<synchronous>, transform_indices = @transform_12, window_bounds = array<i64: 2, 2, 32>}, {pipeline_mode = #tpu.pipeline_mode<synchronous>, transform_indices = @transform_13, window_bounds = array<i64: 64, 32>}, {pipeline_mode = #tpu.pipeline_mode<synchronous>, transform_indices = @transform_14, window_bounds = array<i64: 1, 32>}, {pipeline_mode = #tpu.pipeline_mode<synchronous>, transform_indices = @transform_15, window_bounds = array<i64: 32, 3>}, {pipeline_mode = #tpu.pipeline_mode<synchronous>, transform_indices = @transform_16, window_bounds = array<i64: 1, 3>}, {pipeline_mode = #tpu.pipeline_mode<synchronous>, transform_indices = @transform_17, window_bounds = array<i64: 8, 128>}]} {
    %c0 = arith.constant 0 : index
    %c0_0 = arith.constant 0 : index
    %0 = vector.load %arg1[%c0, %c0_0] : memref<2x8xi32, #tpu.memory_space<vmem>>, vector<2x8xi32>
    %c0_1 = arith.constant 0 : index
    %c0_2 = arith.constant 0 : index
    %1 = vector.load %arg2[%c0_1, %c0_2] : memref<2x8xi32, #tpu.memory_space<vmem>>, vector<2x8xi32>
    %2 = tpu.concatenate %0, %1 in 0 : vector<2x8xi32>, vector<2x8xi32> -> vector<4x8xi32>
    %3 = tpu.iota {dimensions = array<i32: 2>} : vector<4x8x64xi32>
    %4 = vector.shape_cast %2 : vector<4x8xi32> to vector<4x8x1xi32>
    %5 = vector.broadcast %4 : vector<4x8x1xi32> to vector<4x8x64xi32>
    %6 = arith.cmpi eq, %5, %3 : vector<4x8x64xi32>
    %7 = arith.extui %6 : vector<4x8x64xi1> to vector<4x8x64xi32>
    %8 = arith.sitofp %7 : vector<4x8x64xi32> to vector<4x8x64xf32>
    %9 = vector.shape_cast %8 : vector<4x8x64xf32> to vector<32x64xf32>
    %c0_3 = arith.constant 0 : index
    %c0_4 = arith.constant 0 : index
    %10 = vector.load %arg3[%c0_3, %c0_4] : memref<64x32xf32, #tpu.memory_space<vmem>>, vector<64x32xf32>
    %cst = arith.constant dense<0.000000e+00> : vector<32x32xf32>
    %11 = tpu.matmul %9, %10, %cst {dimension_numbers = #tpu.dot_dimension_numbers<[1], [0], [0], [1], [0, 0, 1, 1], [], []>} : vector<32x64xf32>, vector<64x32xf32>, vector<32x32xf32> -> vector<32x32xf32>
    %c0_5 = arith.constant 0 : index
    %c0_6 = arith.constant 0 : index
    %12 = vector.load %arg4[%c0_5, %c0_6] : memref<8x32xf32, #tpu.memory_space<vmem>>, vector<8x32xf32>
    %13 = tpu.concatenate %12, %12, %12, %12 in 0 : vector<8x32xf32>, vector<8x32xf32>, vector<8x32xf32>, vector<8x32xf32> -> vector<32x32xf32>
    %14 = arith.addf %11, %13 : vector<32x32xf32>
    %c0_i32 = arith.constant 0 : i32
    %15 = vector.broadcast %c0_i32 : i32 to vector<4x8xi32>
    %16 = arith.cmpi eq, %2, %15 : vector<4x8xi32>
    %cst_7 = arith.constant 1.000000e+09 : f32
    %cst_8 = arith.constant 0.000000e+00 : f32
    %17 = vector.broadcast %cst_7 : f32 to vector<4x8xf32>
    %18 = vector.broadcast %cst_8 : f32 to vector<4x8xf32>
    %19 = arith.select %16, %17, %18 : vector<4x8xi1>, vector<4x8xf32>
    %20 = tpu.concatenate %19, %19, %19, %19 in 0 : vector<4x8xf32>, vector<4x8xf32>, vector<4x8xf32>, vector<4x8xf32> -> vector<16x8xf32>
    %21 = vector.shape_cast %20 : vector<16x8xf32> to vector<16x1x8xf32>
    %c0_9 = arith.constant 0 : index
    %c0_10 = arith.constant 0 : index
    %c0_11 = arith.constant 0 : index
    %22 = vector.load %arg5[%c0_9, %c0_10, %c0_11] : memref<2x32x96xf32, #tpu.memory_space<vmem>>, vector<1x32x96xf32>
    %23 = vector.shape_cast %22 : vector<1x32x96xf32> to vector<32x96xf32>
    %cst_12 = arith.constant dense<0.000000e+00> : vector<32x96xf32>
    %24 = tpu.matmul %14, %23, %cst_12 {dimension_numbers = #tpu.dot_dimension_numbers<[1], [0], [0], [1], [0, 0, 1, 1], [], []>} : vector<32x32xf32>, vector<32x96xf32>, vector<32x96xf32> -> vector<32x96xf32>
    %25 = vector.extract_strided_slice %24 {offsets = [0, 0], sizes = [32, 8], strides = [1, 1]} : vector<32x96xf32> to vector<32x8xf32>
    %26 = vector.extract_strided_slice %24 {offsets = [0, 8], sizes = [32, 8], strides = [1, 1]} : vector<32x96xf32> to vector<32x8xf32>
    %27 = vector.extract_strided_slice %24 {offsets = [0, 16], sizes = [32, 8], strides = [1, 1]} : vector<32x96xf32> to vector<32x8xf32>
    %28 = vector.extract_strided_slice %24 {offsets = [0, 24], sizes = [32, 8], strides = [1, 1]} : vector<32x96xf32> to vector<32x8xf32>
    %29 = vector.shape_cast %25 : vector<32x8xf32> to vector<1x32x8xf32>
    %30 = vector.shape_cast %26 : vector<32x8xf32> to vector<1x32x8xf32>
    %31 = vector.shape_cast %27 : vector<32x8xf32> to vector<1x32x8xf32>
    %32 = vector.shape_cast %28 : vector<32x8xf32> to vector<1x32x8xf32>
    %33 = tpu.concatenate %29, %30, %31, %32 in 0 : vector<1x32x8xf32>, vector<1x32x8xf32>, vector<1x32x8xf32>, vector<1x32x8xf32> -> vector<4x32x8xf32>
    %34 = vector.shape_cast %33 : vector<4x32x8xf32> to vector<16x8x8xf32>
    %35 = vector.extract_strided_slice %24 {offsets = [0, 32], sizes = [32, 8], strides = [1, 1]} : vector<32x96xf32> to vector<32x8xf32>
    %36 = vector.extract_strided_slice %24 {offsets = [0, 40], sizes = [32, 8], strides = [1, 1]} : vector<32x96xf32> to vector<32x8xf32>
    %37 = vector.extract_strided_slice %24 {offsets = [0, 48], sizes = [32, 8], strides = [1, 1]} : vector<32x96xf32> to vector<32x8xf32>
    %38 = vector.extract_strided_slice %24 {offsets = [0, 56], sizes = [32, 8], strides = [1, 1]} : vector<32x96xf32> to vector<32x8xf32>
    %39 = vector.shape_cast %35 : vector<32x8xf32> to vector<1x32x8xf32>
    %40 = vector.shape_cast %36 : vector<32x8xf32> to vector<1x32x8xf32>
    %41 = vector.shape_cast %37 : vector<32x8xf32> to vector<1x32x8xf32>
    %42 = vector.shape_cast %38 : vector<32x8xf32> to vector<1x32x8xf32>
    %43 = tpu.concatenate %39, %40, %41, %42 in 0 : vector<1x32x8xf32>, vector<1x32x8xf32>, vector<1x32x8xf32>, vector<1x32x8xf32> -> vector<4x32x8xf32>
    %44 = vector.shape_cast %43 : vector<4x32x8xf32> to vector<16x8x8xf32>
    %45 = vector.extract_strided_slice %24 {offsets = [0, 64], sizes = [32, 8], strides = [1, 1]} : vector<32x96xf32> to vector<32x8xf32>
    %46 = vector.extract_strided_slice %24 {offsets = [0, 72], sizes = [32, 8], strides = [1, 1]} : vector<32x96xf32> to vector<32x8xf32>
    %47 = vector.extract_strided_slice %24 {offsets = [0, 80], sizes = [32, 8], strides = [1, 1]} : vector<32x96xf32> to vector<32x8xf32>
    %48 = vector.extract_strided_slice %24 {offsets = [0, 88], sizes = [32, 8], strides = [1, 1]} : vector<32x96xf32> to vector<32x8xf32>
    %49 = vector.shape_cast %45 : vector<32x8xf32> to vector<1x32x8xf32>
    %50 = vector.shape_cast %46 : vector<32x8xf32> to vector<1x32x8xf32>
    %51 = vector.shape_cast %47 : vector<32x8xf32> to vector<1x32x8xf32>
    %52 = vector.shape_cast %48 : vector<32x8xf32> to vector<1x32x8xf32>
    %53 = tpu.concatenate %49, %50, %51, %52 in 0 : vector<1x32x8xf32>, vector<1x32x8xf32>, vector<1x32x8xf32>, vector<1x32x8xf32> -> vector<4x32x8xf32>
    %54 = vector.shape_cast %53 : vector<4x32x8xf32> to vector<16x8x8xf32>
    "tpu.trace_start"() <{level = 10 : i32, message = "bqd,bkd->bqk"}> : () -> ()
    %cst_13 = arith.constant dense<0.000000e+00> : vector<16x8x8xf32>
    %55 = tpu.matmul %34, %44, %cst_13 {dimension_numbers = #tpu.dot_dimension_numbers<[2], [2], [1], [1], [0, 0, 0, 1, 1, 1], [0], [0]>} : vector<16x8x8xf32>, vector<16x8x8xf32>, vector<16x8x8xf32> -> vector<16x8x8xf32>
    "tpu.trace_stop"() : () -> ()
    %56 = vector.broadcast %21 : vector<16x1x8xf32> to vector<16x8x8xf32>
    %57 = arith.subf %55, %56 : vector<16x8x8xf32>
    %cst_14 = arith.constant dense<0xFF800000> : vector<16x8xf32>
    %58 = vector.multi_reduction <maximumf>, %57, %cst_14 [2] : vector<16x8x8xf32> to vector<16x8xf32>
    %59 = vector.shape_cast %58 : vector<16x8xf32> to vector<16x8x1xf32>
    %60 = vector.broadcast %59 : vector<16x8x1xf32> to vector<16x8x8xf32>
    %61 = arith.subf %57, %60 : vector<16x8x8xf32>
    %62 = math.exp %61 : vector<16x8x8xf32>
    %cst_15 = arith.constant dense<0.000000e+00> : vector<16x8xf32>
    %63 = vector.multi_reduction <add>, %62, %cst_15 [2] : vector<16x8x8xf32> to vector<16x8xf32>
    %64 = vector.shape_cast %63 : vector<16x8xf32> to vector<16x8x1xf32>
    %65 = tpu.reciprocal %64 {approx = true} : vector<16x8x1xf32> -> vector<16x8x1xf32>
    %66 = vector.broadcast %65 : vector<16x8x1xf32> to vector<16x8x8xf32>
    %67 = arith.mulf %62, %66 : vector<16x8x8xf32>
    "tpu.trace_start"() <{level = 10 : i32, message = "bqk,bkd->bqd"}> : () -> ()
    %cst_16 = arith.constant dense<0.000000e+00> : vector<16x8x8xf32>
    %68 = tpu.matmul %67, %54, %cst_16 {dimension_numbers = #tpu.dot_dimension_numbers<[2], [1], [1], [2], [0, 0, 0, 1, 1, 2], [0], [0]>} : vector<16x8x8xf32>, vector<16x8x8xf32>, vector<16x8x8xf32> -> vector<16x8x8xf32>
    "tpu.trace_stop"() : () -> ()
    %69 = vector.shape_cast %68 : vector<16x8x8xf32> to vector<4x32x8xf32>
    %c0_17 = arith.constant 0 : index
    %c0_18 = arith.constant 0 : index
    %c0_19 = arith.constant 0 : index
    %c0_20 = arith.constant 0 : index
    %70 = vector.load %arg6[%c0_17, %c0_18, %c0_19, %c0_20] : memref<2x4x8x32xf32, #tpu.memory_space<vmem>>, vector<1x4x8x32xf32>
    %71 = vector.shape_cast %70 : vector<1x4x8x32xf32> to vector<4x8x32xf32>
    "tpu.trace_start"() <{level = 10 : i32, message = "hrd,hdm->hrm"}> : () -> ()
    %cst_21 = arith.constant dense<0.000000e+00> : vector<4x32x32xf32>
    %72 = tpu.matmul %69, %71, %cst_21 {dimension_numbers = #tpu.dot_dimension_numbers<[2], [1], [1], [2], [0, 0, 0, 1, 1, 2], [0], [0]>} : vector<4x32x8xf32>, vector<4x8x32xf32>, vector<4x32x32xf32> -> vector<4x32x32xf32>
    "tpu.trace_stop"() : () -> ()
    %cst_22 = arith.constant dense<0.000000e+00> : vector<32x32xf32>
    %73 = vector.multi_reduction <add>, %72, %cst_22 [0] : vector<4x32x32xf32> to vector<32x32xf32>
    %c0_23 = arith.constant 0 : index
    %c0_24 = arith.constant 0 : index
    %c0_25 = arith.constant 0 : index
    %74 = vector.load %arg7[%c0_23, %c0_24, %c0_25] : memref<2x1x32xf32, #tpu.memory_space<vmem>>, vector<1x1x32xf32>
    %75 = vector.shape_cast %74 : vector<1x1x32xf32> to vector<1x32xf32>
    %76 = vector.broadcast %75 : vector<1x32xf32> to vector<32x32xf32>
    %77 = arith.addf %73, %76 : vector<32x32xf32>
    %c0_26 = arith.constant 0 : index
    %c0_27 = arith.constant 0 : index
    %c0_28 = arith.constant 0 : index
    %78 = vector.load %arg8[%c0_26, %c0_27, %c0_28] : memref<2x2x32xf32, #tpu.memory_space<vmem>>, vector<1x2x32xf32>
    %79 = vector.shape_cast %78 : vector<1x2x32xf32> to vector<2x32xf32>
    %80 = arith.addf %77, %14 : vector<32x32xf32>
    %81 = vector.extract_strided_slice %79 {offsets = [0, 0], sizes = [1, 32], strides = [1, 1]} : vector<2x32xf32> to vector<1x32xf32>
    %82 = vector.extract_strided_slice %79 {offsets = [1, 0], sizes = [1, 32], strides = [1, 1]} : vector<2x32xf32> to vector<1x32xf32>
    %cst_29 = arith.constant dense<0.000000e+00> : vector<32xf32>
    %83 = vector.multi_reduction <add>, %80, %cst_29 [1] : vector<32x32xf32> to vector<32xf32>
    %84 = vector.shape_cast %83 : vector<32xf32> to vector<32x1xf32>
    %cst_30 = arith.constant 3.200000e+01 : f32
    %85 = vector.broadcast %cst_30 : f32 to vector<32x1xf32>
    %86 = arith.divf %84, %85 : vector<32x1xf32>
    %87 = vector.broadcast %86 : vector<32x1xf32> to vector<32x32xf32>
    %88 = arith.subf %80, %87 : vector<32x32xf32>
    %89 = arith.mulf %88, %88 : vector<32x32xf32>
    %cst_31 = arith.constant dense<0.000000e+00> : vector<32xf32>
    %90 = vector.multi_reduction <add>, %89, %cst_31 [1] : vector<32x32xf32> to vector<32xf32>
    %91 = vector.shape_cast %90 : vector<32xf32> to vector<32x1xf32>
    %cst_32 = arith.constant 3.200000e+01 : f32
    %92 = vector.broadcast %cst_32 : f32 to vector<32x1xf32>
    %93 = arith.divf %91, %92 : vector<32x1xf32>
    %94 = vector.broadcast %86 : vector<32x1xf32> to vector<32x32xf32>
    %95 = arith.subf %80, %94 : vector<32x32xf32>
    %cst_33 = arith.constant 9.99999997E-7 : f32
    %96 = vector.broadcast %cst_33 : f32 to vector<32x1xf32>
    %97 = arith.addf %93, %96 : vector<32x1xf32>
    %98 = math.rsqrt %97 : vector<32x1xf32>
    %99 = vector.broadcast %98 : vector<32x1xf32> to vector<32x32xf32>
    %100 = arith.mulf %95, %99 : vector<32x32xf32>
    %101 = vector.broadcast %81 : vector<1x32xf32> to vector<32x32xf32>
    %102 = arith.mulf %100, %101 : vector<32x32xf32>
    %103 = vector.broadcast %82 : vector<1x32xf32> to vector<32x32xf32>
    %104 = arith.addf %102, %103 : vector<32x32xf32>
    %c0_34 = arith.constant 0 : index
    %c0_35 = arith.constant 0 : index
    %c0_36 = arith.constant 0 : index
    %105 = vector.load %arg9[%c0_34, %c0_35, %c0_36] : memref<2x32x64xf32, #tpu.memory_space<vmem>>, vector<1x32x64xf32>
    %106 = vector.shape_cast %105 : vector<1x32x64xf32> to vector<32x64xf32>
    %cst_37 = arith.constant dense<0.000000e+00> : vector<32x64xf32>
    %107 = tpu.matmul %104, %106, %cst_37 {dimension_numbers = #tpu.dot_dimension_numbers<[1], [0], [0], [1], [0, 0, 1, 1], [], []>} : vector<32x32xf32>, vector<32x64xf32>, vector<32x64xf32> -> vector<32x64xf32>
    %c0_38 = arith.constant 0 : index
    %c0_39 = arith.constant 0 : index
    %c0_40 = arith.constant 0 : index
    %108 = vector.load %arg10[%c0_38, %c0_39, %c0_40] : memref<2x1x64xf32, #tpu.memory_space<vmem>>, vector<1x1x64xf32>
    %109 = vector.shape_cast %108 : vector<1x1x64xf32> to vector<1x64xf32>
    %110 = vector.broadcast %109 : vector<1x64xf32> to vector<32x64xf32>
    %111 = arith.addf %107, %110 : vector<32x64xf32>
    %cst_41 = arith.constant 0.000000e+00 : f32
    %112 = vector.broadcast %cst_41 : f32 to vector<32x64xf32>
    %113 = arith.maximumf %111, %112 : vector<32x64xf32>
    %c0_42 = arith.constant 0 : index
    %c0_43 = arith.constant 0 : index
    %c0_44 = arith.constant 0 : index
    %114 = vector.load %arg11[%c0_42, %c0_43, %c0_44] : memref<2x64x32xf32, #tpu.memory_space<vmem>>, vector<1x64x32xf32>
    %115 = vector.shape_cast %114 : vector<1x64x32xf32> to vector<64x32xf32>
    %cst_45 = arith.constant dense<0.000000e+00> : vector<32x32xf32>
    %116 = tpu.matmul %113, %115, %cst_45 {dimension_numbers = #tpu.dot_dimension_numbers<[1], [0], [0], [1], [0, 0, 1, 1], [], []>} : vector<32x64xf32>, vector<64x32xf32>, vector<32x32xf32> -> vector<32x32xf32>
    %c0_46 = arith.constant 0 : index
    %c0_47 = arith.constant 0 : index
    %c0_48 = arith.constant 0 : index
    %117 = vector.load %arg12[%c0_46, %c0_47, %c0_48] : memref<2x1x32xf32, #tpu.memory_space<vmem>>, vector<1x1x32xf32>
    %118 = vector.shape_cast %117 : vector<1x1x32xf32> to vector<1x32xf32>
    %119 = vector.broadcast %118 : vector<1x32xf32> to vector<32x32xf32>
    %120 = arith.addf %116, %119 : vector<32x32xf32>
    %c0_49 = arith.constant 0 : index
    %c0_50 = arith.constant 0 : index
    %c0_51 = arith.constant 0 : index
    %121 = vector.load %arg13[%c0_49, %c0_50, %c0_51] : memref<2x2x32xf32, #tpu.memory_space<vmem>>, vector<1x2x32xf32>
    %122 = vector.shape_cast %121 : vector<1x2x32xf32> to vector<2x32xf32>
    %123 = arith.addf %120, %104 : vector<32x32xf32>
    %124 = vector.extract_strided_slice %122 {offsets = [0, 0], sizes = [1, 32], strides = [1, 1]} : vector<2x32xf32> to vector<1x32xf32>
    %125 = vector.extract_strided_slice %122 {offsets = [1, 0], sizes = [1, 32], strides = [1, 1]} : vector<2x32xf32> to vector<1x32xf32>
    %cst_52 = arith.constant dense<0.000000e+00> : vector<32xf32>
    %126 = vector.multi_reduction <add>, %123, %cst_52 [1] : vector<32x32xf32> to vector<32xf32>
    %127 = vector.shape_cast %126 : vector<32xf32> to vector<32x1xf32>
    %cst_53 = arith.constant 3.200000e+01 : f32
    %128 = vector.broadcast %cst_53 : f32 to vector<32x1xf32>
    %129 = arith.divf %127, %128 : vector<32x1xf32>
    %130 = vector.broadcast %129 : vector<32x1xf32> to vector<32x32xf32>
    %131 = arith.subf %123, %130 : vector<32x32xf32>
    %132 = arith.mulf %131, %131 : vector<32x32xf32>
    %cst_54 = arith.constant dense<0.000000e+00> : vector<32xf32>
    %133 = vector.multi_reduction <add>, %132, %cst_54 [1] : vector<32x32xf32> to vector<32xf32>
    %134 = vector.shape_cast %133 : vector<32xf32> to vector<32x1xf32>
    %cst_55 = arith.constant 3.200000e+01 : f32
    %135 = vector.broadcast %cst_55 : f32 to vector<32x1xf32>
    %136 = arith.divf %134, %135 : vector<32x1xf32>
    %137 = vector.broadcast %129 : vector<32x1xf32> to vector<32x32xf32>
    %138 = arith.subf %123, %137 : vector<32x32xf32>
    %cst_56 = arith.constant 9.99999997E-7 : f32
    %139 = vector.broadcast %cst_56 : f32 to vector<32x1xf32>
    %140 = arith.addf %136, %139 : vector<32x1xf32>
    %141 = math.rsqrt %140 : vector<32x1xf32>
    %142 = vector.broadcast %141 : vector<32x1xf32> to vector<32x32xf32>
    %143 = arith.mulf %138, %142 : vector<32x32xf32>
    %144 = vector.broadcast %124 : vector<1x32xf32> to vector<32x32xf32>
    %145 = arith.mulf %143, %144 : vector<32x32xf32>
    %146 = vector.broadcast %125 : vector<1x32xf32> to vector<32x32xf32>
    %147 = arith.addf %145, %146 : vector<32x32xf32>
    %c1 = arith.constant 1 : index
    %c0_57 = arith.constant 0 : index
    %c0_58 = arith.constant 0 : index
    %148 = vector.load %arg5[%c1, %c0_57, %c0_58] : memref<2x32x96xf32, #tpu.memory_space<vmem>>, vector<1x32x96xf32>
    %149 = vector.shape_cast %148 : vector<1x32x96xf32> to vector<32x96xf32>
    %cst_59 = arith.constant dense<0.000000e+00> : vector<32x96xf32>
    %150 = tpu.matmul %147, %149, %cst_59 {dimension_numbers = #tpu.dot_dimension_numbers<[1], [0], [0], [1], [0, 0, 1, 1], [], []>} : vector<32x32xf32>, vector<32x96xf32>, vector<32x96xf32> -> vector<32x96xf32>
    %151 = vector.extract_strided_slice %150 {offsets = [0, 0], sizes = [32, 8], strides = [1, 1]} : vector<32x96xf32> to vector<32x8xf32>
    %152 = vector.extract_strided_slice %150 {offsets = [0, 8], sizes = [32, 8], strides = [1, 1]} : vector<32x96xf32> to vector<32x8xf32>
    %153 = vector.extract_strided_slice %150 {offsets = [0, 16], sizes = [32, 8], strides = [1, 1]} : vector<32x96xf32> to vector<32x8xf32>
    %154 = vector.extract_strided_slice %150 {offsets = [0, 24], sizes = [32, 8], strides = [1, 1]} : vector<32x96xf32> to vector<32x8xf32>
    %155 = vector.shape_cast %151 : vector<32x8xf32> to vector<1x32x8xf32>
    %156 = vector.shape_cast %152 : vector<32x8xf32> to vector<1x32x8xf32>
    %157 = vector.shape_cast %153 : vector<32x8xf32> to vector<1x32x8xf32>
    %158 = vector.shape_cast %154 : vector<32x8xf32> to vector<1x32x8xf32>
    %159 = tpu.concatenate %155, %156, %157, %158 in 0 : vector<1x32x8xf32>, vector<1x32x8xf32>, vector<1x32x8xf32>, vector<1x32x8xf32> -> vector<4x32x8xf32>
    %160 = vector.shape_cast %159 : vector<4x32x8xf32> to vector<16x8x8xf32>
    %161 = vector.extract_strided_slice %150 {offsets = [0, 32], sizes = [32, 8], strides = [1, 1]} : vector<32x96xf32> to vector<32x8xf32>
    %162 = vector.extract_strided_slice %150 {offsets = [0, 40], sizes = [32, 8], strides = [1, 1]} : vector<32x96xf32> to vector<32x8xf32>
    %163 = vector.extract_strided_slice %150 {offsets = [0, 48], sizes = [32, 8], strides = [1, 1]} : vector<32x96xf32> to vector<32x8xf32>
    %164 = vector.extract_strided_slice %150 {offsets = [0, 56], sizes = [32, 8], strides = [1, 1]} : vector<32x96xf32> to vector<32x8xf32>
    %165 = vector.shape_cast %161 : vector<32x8xf32> to vector<1x32x8xf32>
    %166 = vector.shape_cast %162 : vector<32x8xf32> to vector<1x32x8xf32>
    %167 = vector.shape_cast %163 : vector<32x8xf32> to vector<1x32x8xf32>
    %168 = vector.shape_cast %164 : vector<32x8xf32> to vector<1x32x8xf32>
    %169 = tpu.concatenate %165, %166, %167, %168 in 0 : vector<1x32x8xf32>, vector<1x32x8xf32>, vector<1x32x8xf32>, vector<1x32x8xf32> -> vector<4x32x8xf32>
    %170 = vector.shape_cast %169 : vector<4x32x8xf32> to vector<16x8x8xf32>
    %171 = vector.extract_strided_slice %150 {offsets = [0, 64], sizes = [32, 8], strides = [1, 1]} : vector<32x96xf32> to vector<32x8xf32>
    %172 = vector.extract_strided_slice %150 {offsets = [0, 72], sizes = [32, 8], strides = [1, 1]} : vector<32x96xf32> to vector<32x8xf32>
    %173 = vector.extract_strided_slice %150 {offsets = [0, 80], sizes = [32, 8], strides = [1, 1]} : vector<32x96xf32> to vector<32x8xf32>
    %174 = vector.extract_strided_slice %150 {offsets = [0, 88], sizes = [32, 8], strides = [1, 1]} : vector<32x96xf32> to vector<32x8xf32>
    %175 = vector.shape_cast %171 : vector<32x8xf32> to vector<1x32x8xf32>
    %176 = vector.shape_cast %172 : vector<32x8xf32> to vector<1x32x8xf32>
    %177 = vector.shape_cast %173 : vector<32x8xf32> to vector<1x32x8xf32>
    %178 = vector.shape_cast %174 : vector<32x8xf32> to vector<1x32x8xf32>
    %179 = tpu.concatenate %175, %176, %177, %178 in 0 : vector<1x32x8xf32>, vector<1x32x8xf32>, vector<1x32x8xf32>, vector<1x32x8xf32> -> vector<4x32x8xf32>
    %180 = vector.shape_cast %179 : vector<4x32x8xf32> to vector<16x8x8xf32>
    "tpu.trace_start"() <{level = 10 : i32, message = "bqd,bkd->bqk"}> : () -> ()
    %cst_60 = arith.constant dense<0.000000e+00> : vector<16x8x8xf32>
    %181 = tpu.matmul %160, %170, %cst_60 {dimension_numbers = #tpu.dot_dimension_numbers<[2], [2], [1], [1], [0, 0, 0, 1, 1, 1], [0], [0]>} : vector<16x8x8xf32>, vector<16x8x8xf32>, vector<16x8x8xf32> -> vector<16x8x8xf32>
    "tpu.trace_stop"() : () -> ()
    %182 = vector.broadcast %21 : vector<16x1x8xf32> to vector<16x8x8xf32>
    %183 = arith.subf %181, %182 : vector<16x8x8xf32>
    %cst_61 = arith.constant dense<0xFF800000> : vector<16x8xf32>
    %184 = vector.multi_reduction <maximumf>, %183, %cst_61 [2] : vector<16x8x8xf32> to vector<16x8xf32>
    %185 = vector.shape_cast %184 : vector<16x8xf32> to vector<16x8x1xf32>
    %186 = vector.broadcast %185 : vector<16x8x1xf32> to vector<16x8x8xf32>
    %187 = arith.subf %183, %186 : vector<16x8x8xf32>
    %188 = math.exp %187 : vector<16x8x8xf32>
    %cst_62 = arith.constant dense<0.000000e+00> : vector<16x8xf32>
    %189 = vector.multi_reduction <add>, %188, %cst_62 [2] : vector<16x8x8xf32> to vector<16x8xf32>
    %190 = vector.shape_cast %189 : vector<16x8xf32> to vector<16x8x1xf32>
    %191 = tpu.reciprocal %190 {approx = true} : vector<16x8x1xf32> -> vector<16x8x1xf32>
    %192 = vector.broadcast %191 : vector<16x8x1xf32> to vector<16x8x8xf32>
    %193 = arith.mulf %188, %192 : vector<16x8x8xf32>
    "tpu.trace_start"() <{level = 10 : i32, message = "bqk,bkd->bqd"}> : () -> ()
    %cst_63 = arith.constant dense<0.000000e+00> : vector<16x8x8xf32>
    %194 = tpu.matmul %193, %180, %cst_63 {dimension_numbers = #tpu.dot_dimension_numbers<[2], [1], [1], [2], [0, 0, 0, 1, 1, 2], [0], [0]>} : vector<16x8x8xf32>, vector<16x8x8xf32>, vector<16x8x8xf32> -> vector<16x8x8xf32>
    "tpu.trace_stop"() : () -> ()
    %195 = vector.shape_cast %194 : vector<16x8x8xf32> to vector<4x32x8xf32>
    %c1_64 = arith.constant 1 : index
    %c0_65 = arith.constant 0 : index
    %c0_66 = arith.constant 0 : index
    %c0_67 = arith.constant 0 : index
    %196 = vector.load %arg6[%c1_64, %c0_65, %c0_66, %c0_67] : memref<2x4x8x32xf32, #tpu.memory_space<vmem>>, vector<1x4x8x32xf32>
    %197 = vector.shape_cast %196 : vector<1x4x8x32xf32> to vector<4x8x32xf32>
    "tpu.trace_start"() <{level = 10 : i32, message = "hrd,hdm->hrm"}> : () -> ()
    %cst_68 = arith.constant dense<0.000000e+00> : vector<4x32x32xf32>
    %198 = tpu.matmul %195, %197, %cst_68 {dimension_numbers = #tpu.dot_dimension_numbers<[2], [1], [1], [2], [0, 0, 0, 1, 1, 2], [0], [0]>} : vector<4x32x8xf32>, vector<4x8x32xf32>, vector<4x32x32xf32> -> vector<4x32x32xf32>
    "tpu.trace_stop"() : () -> ()
    %cst_69 = arith.constant dense<0.000000e+00> : vector<32x32xf32>
    %199 = vector.multi_reduction <add>, %198, %cst_69 [0] : vector<4x32x32xf32> to vector<32x32xf32>
    %c1_70 = arith.constant 1 : index
    %c0_71 = arith.constant 0 : index
    %c0_72 = arith.constant 0 : index
    %200 = vector.load %arg7[%c1_70, %c0_71, %c0_72] : memref<2x1x32xf32, #tpu.memory_space<vmem>>, vector<1x1x32xf32>
    %201 = vector.shape_cast %200 : vector<1x1x32xf32> to vector<1x32xf32>
    %202 = vector.broadcast %201 : vector<1x32xf32> to vector<32x32xf32>
    %203 = arith.addf %199, %202 : vector<32x32xf32>
    %c1_73 = arith.constant 1 : index
    %c0_74 = arith.constant 0 : index
    %c0_75 = arith.constant 0 : index
    %204 = vector.load %arg8[%c1_73, %c0_74, %c0_75] : memref<2x2x32xf32, #tpu.memory_space<vmem>>, vector<1x2x32xf32>
    %205 = vector.shape_cast %204 : vector<1x2x32xf32> to vector<2x32xf32>
    %206 = arith.addf %203, %147 : vector<32x32xf32>
    %207 = vector.extract_strided_slice %205 {offsets = [0, 0], sizes = [1, 32], strides = [1, 1]} : vector<2x32xf32> to vector<1x32xf32>
    %208 = vector.extract_strided_slice %205 {offsets = [1, 0], sizes = [1, 32], strides = [1, 1]} : vector<2x32xf32> to vector<1x32xf32>
    %cst_76 = arith.constant dense<0.000000e+00> : vector<32xf32>
    %209 = vector.multi_reduction <add>, %206, %cst_76 [1] : vector<32x32xf32> to vector<32xf32>
    %210 = vector.shape_cast %209 : vector<32xf32> to vector<32x1xf32>
    %cst_77 = arith.constant 3.200000e+01 : f32
    %211 = vector.broadcast %cst_77 : f32 to vector<32x1xf32>
    %212 = arith.divf %210, %211 : vector<32x1xf32>
    %213 = vector.broadcast %212 : vector<32x1xf32> to vector<32x32xf32>
    %214 = arith.subf %206, %213 : vector<32x32xf32>
    %215 = arith.mulf %214, %214 : vector<32x32xf32>
    %cst_78 = arith.constant dense<0.000000e+00> : vector<32xf32>
    %216 = vector.multi_reduction <add>, %215, %cst_78 [1] : vector<32x32xf32> to vector<32xf32>
    %217 = vector.shape_cast %216 : vector<32xf32> to vector<32x1xf32>
    %cst_79 = arith.constant 3.200000e+01 : f32
    %218 = vector.broadcast %cst_79 : f32 to vector<32x1xf32>
    %219 = arith.divf %217, %218 : vector<32x1xf32>
    %220 = vector.broadcast %212 : vector<32x1xf32> to vector<32x32xf32>
    %221 = arith.subf %206, %220 : vector<32x32xf32>
    %cst_80 = arith.constant 9.99999997E-7 : f32
    %222 = vector.broadcast %cst_80 : f32 to vector<32x1xf32>
    %223 = arith.addf %219, %222 : vector<32x1xf32>
    %224 = math.rsqrt %223 : vector<32x1xf32>
    %225 = vector.broadcast %224 : vector<32x1xf32> to vector<32x32xf32>
    %226 = arith.mulf %221, %225 : vector<32x32xf32>
    %227 = vector.broadcast %207 : vector<1x32xf32> to vector<32x32xf32>
    %228 = arith.mulf %226, %227 : vector<32x32xf32>
    %229 = vector.broadcast %208 : vector<1x32xf32> to vector<32x32xf32>
    %230 = arith.addf %228, %229 : vector<32x32xf32>
    %c1_81 = arith.constant 1 : index
    %c0_82 = arith.constant 0 : index
    %c0_83 = arith.constant 0 : index
    %231 = vector.load %arg9[%c1_81, %c0_82, %c0_83] : memref<2x32x64xf32, #tpu.memory_space<vmem>>, vector<1x32x64xf32>
    %232 = vector.shape_cast %231 : vector<1x32x64xf32> to vector<32x64xf32>
    %cst_84 = arith.constant dense<0.000000e+00> : vector<32x64xf32>
    %233 = tpu.matmul %230, %232, %cst_84 {dimension_numbers = #tpu.dot_dimension_numbers<[1], [0], [0], [1], [0, 0, 1, 1], [], []>} : vector<32x32xf32>, vector<32x64xf32>, vector<32x64xf32> -> vector<32x64xf32>
    %c1_85 = arith.constant 1 : index
    %c0_86 = arith.constant 0 : index
    %c0_87 = arith.constant 0 : index
    %234 = vector.load %arg10[%c1_85, %c0_86, %c0_87] : memref<2x1x64xf32, #tpu.memory_space<vmem>>, vector<1x1x64xf32>
    %235 = vector.shape_cast %234 : vector<1x1x64xf32> to vector<1x64xf32>
    %236 = vector.broadcast %235 : vector<1x64xf32> to vector<32x64xf32>
    %237 = arith.addf %233, %236 : vector<32x64xf32>
    %cst_88 = arith.constant 0.000000e+00 : f32
    %238 = vector.broadcast %cst_88 : f32 to vector<32x64xf32>
    %239 = arith.maximumf %237, %238 : vector<32x64xf32>
    %c1_89 = arith.constant 1 : index
    %c0_90 = arith.constant 0 : index
    %c0_91 = arith.constant 0 : index
    %240 = vector.load %arg11[%c1_89, %c0_90, %c0_91] : memref<2x64x32xf32, #tpu.memory_space<vmem>>, vector<1x64x32xf32>
    %241 = vector.shape_cast %240 : vector<1x64x32xf32> to vector<64x32xf32>
    %cst_92 = arith.constant dense<0.000000e+00> : vector<32x32xf32>
    %242 = tpu.matmul %239, %241, %cst_92 {dimension_numbers = #tpu.dot_dimension_numbers<[1], [0], [0], [1], [0, 0, 1, 1], [], []>} : vector<32x64xf32>, vector<64x32xf32>, vector<32x32xf32> -> vector<32x32xf32>
    %c1_93 = arith.constant 1 : index
    %c0_94 = arith.constant 0 : index
    %c0_95 = arith.constant 0 : index
    %243 = vector.load %arg12[%c1_93, %c0_94, %c0_95] : memref<2x1x32xf32, #tpu.memory_space<vmem>>, vector<1x1x32xf32>
    %244 = vector.shape_cast %243 : vector<1x1x32xf32> to vector<1x32xf32>
    %245 = vector.broadcast %244 : vector<1x32xf32> to vector<32x32xf32>
    %246 = arith.addf %242, %245 : vector<32x32xf32>
    %c1_96 = arith.constant 1 : index
    %c0_97 = arith.constant 0 : index
    %c0_98 = arith.constant 0 : index
    %247 = vector.load %arg13[%c1_96, %c0_97, %c0_98] : memref<2x2x32xf32, #tpu.memory_space<vmem>>, vector<1x2x32xf32>
    %248 = vector.shape_cast %247 : vector<1x2x32xf32> to vector<2x32xf32>
    %249 = arith.addf %246, %230 : vector<32x32xf32>
    %250 = vector.extract_strided_slice %248 {offsets = [0, 0], sizes = [1, 32], strides = [1, 1]} : vector<2x32xf32> to vector<1x32xf32>
    %251 = vector.extract_strided_slice %248 {offsets = [1, 0], sizes = [1, 32], strides = [1, 1]} : vector<2x32xf32> to vector<1x32xf32>
    %cst_99 = arith.constant dense<0.000000e+00> : vector<32xf32>
    %252 = vector.multi_reduction <add>, %249, %cst_99 [1] : vector<32x32xf32> to vector<32xf32>
    %253 = vector.shape_cast %252 : vector<32xf32> to vector<32x1xf32>
    %cst_100 = arith.constant 3.200000e+01 : f32
    %254 = vector.broadcast %cst_100 : f32 to vector<32x1xf32>
    %255 = arith.divf %253, %254 : vector<32x1xf32>
    %256 = vector.broadcast %255 : vector<32x1xf32> to vector<32x32xf32>
    %257 = arith.subf %249, %256 : vector<32x32xf32>
    %258 = arith.mulf %257, %257 : vector<32x32xf32>
    %cst_101 = arith.constant dense<0.000000e+00> : vector<32xf32>
    %259 = vector.multi_reduction <add>, %258, %cst_101 [1] : vector<32x32xf32> to vector<32xf32>
    %260 = vector.shape_cast %259 : vector<32xf32> to vector<32x1xf32>
    %cst_102 = arith.constant 3.200000e+01 : f32
    %261 = vector.broadcast %cst_102 : f32 to vector<32x1xf32>
    %262 = arith.divf %260, %261 : vector<32x1xf32>
    %263 = vector.broadcast %255 : vector<32x1xf32> to vector<32x32xf32>
    %264 = arith.subf %249, %263 : vector<32x32xf32>
    %cst_103 = arith.constant 9.99999997E-7 : f32
    %265 = vector.broadcast %cst_103 : f32 to vector<32x1xf32>
    %266 = arith.addf %262, %265 : vector<32x1xf32>
    %267 = math.rsqrt %266 : vector<32x1xf32>
    %268 = vector.broadcast %267 : vector<32x1xf32> to vector<32x32xf32>
    %269 = arith.mulf %264, %268 : vector<32x32xf32>
    %270 = vector.broadcast %250 : vector<1x32xf32> to vector<32x32xf32>
    %271 = arith.mulf %269, %270 : vector<32x32xf32>
    %272 = vector.broadcast %251 : vector<1x32xf32> to vector<32x32xf32>
    %273 = arith.addf %271, %272 : vector<32x32xf32>
    %274 = vector.shape_cast %273 : vector<32x32xf32> to vector<4x8x32xf32>
    %cst_104 = arith.constant dense<0.000000e+00> : vector<4x32xf32>
    %275 = vector.multi_reduction <add>, %274, %cst_104 [1] : vector<4x8x32xf32> to vector<4x32xf32>
    %cst_105 = arith.constant 8.000000e+00 : f32
    %276 = vector.broadcast %cst_105 : f32 to vector<4x32xf32>
    %277 = arith.divf %275, %276 : vector<4x32xf32>
    %278 = vector.extract_strided_slice %277 {offsets = [0, 0], sizes = [2, 32], strides = [1, 1]} : vector<4x32xf32> to vector<2x32xf32>
    %279 = vector.extract_strided_slice %277 {offsets = [2, 0], sizes = [2, 32], strides = [1, 1]} : vector<4x32xf32> to vector<2x32xf32>
    %c0_106 = arith.constant 0 : index
    %c0_107 = arith.constant 0 : index
    %280 = vector.load %arg14[%c0_106, %c0_107] : memref<64x32xf32, #tpu.memory_space<vmem>>, vector<64x32xf32>
    %281 = vector.extract_strided_slice %280 {offsets = [0, 0], sizes = [32, 32], strides = [1, 1]} : vector<64x32xf32> to vector<32x32xf32>
    %cst_108 = arith.constant dense<0.000000e+00> : vector<2x32xf32>
    %282 = tpu.matmul %278, %281, %cst_108 {dimension_numbers = #tpu.dot_dimension_numbers<[1], [0], [0], [1], [0, 0, 1, 1], [], []>} : vector<2x32xf32>, vector<32x32xf32>, vector<2x32xf32> -> vector<2x32xf32>
    %283 = vector.extract_strided_slice %280 {offsets = [32, 0], sizes = [32, 32], strides = [1, 1]} : vector<64x32xf32> to vector<32x32xf32>
    %cst_109 = arith.constant dense<0.000000e+00> : vector<2x32xf32>
    %284 = tpu.matmul %279, %283, %cst_109 {dimension_numbers = #tpu.dot_dimension_numbers<[1], [0], [0], [1], [0, 0, 1, 1], [], []>} : vector<2x32xf32>, vector<32x32xf32>, vector<2x32xf32> -> vector<2x32xf32>
    %285 = arith.addf %282, %284 : vector<2x32xf32>
    %c0_110 = arith.constant 0 : index
    %c0_111 = arith.constant 0 : index
    %286 = vector.load %arg15[%c0_110, %c0_111] : memref<1x32xf32, #tpu.memory_space<vmem>>, vector<1x32xf32>
    %287 = vector.broadcast %286 : vector<1x32xf32> to vector<2x32xf32>
    %288 = arith.addf %285, %287 : vector<2x32xf32>
    %289 = math.tanh %288 : vector<2x32xf32>
    %c0_112 = arith.constant 0 : index
    %c0_113 = arith.constant 0 : index
    %290 = vector.load %arg16[%c0_112, %c0_113] : memref<32x3xf32, #tpu.memory_space<vmem>>, vector<32x3xf32>
    %cst_114 = arith.constant dense<0.000000e+00> : vector<2x3xf32>
    %291 = tpu.matmul %289, %290, %cst_114 {dimension_numbers = #tpu.dot_dimension_numbers<[1], [0], [0], [1], [0, 0, 1, 1], [], []>} : vector<2x32xf32>, vector<32x3xf32>, vector<2x3xf32> -> vector<2x3xf32>
    %c0_115 = arith.constant 0 : index
    %c0_116 = arith.constant 0 : index
    %292 = vector.load %arg17[%c0_115, %c0_116] : memref<1x3xf32, #tpu.memory_space<vmem>>, vector<1x3xf32>
    %293 = vector.broadcast %292 : vector<1x3xf32> to vector<2x3xf32>
    %294 = arith.addf %291, %293 : vector<2x3xf32>
    %cst_117 = arith.constant 0.000000e+00 : f32
    %295 = vector.broadcast %cst_117 : f32 to vector<8x128xf32>
    %c0_118 = arith.constant 0 : index
    %c0_119 = arith.constant 0 : index
    %296 = vector.load %arg18[%c0_118, %c0_119] : memref<8x128xf32, #tpu.memory_space<vmem>>, vector<8x128xf32>
    tpu.vector_store %arg18[%c0_118, %c0_119], %295 {strides = array<i32>} : memref<8x128xf32, #tpu.memory_space<vmem>>, vector<8x128xf32>,
    %c0_120 = arith.constant 0 : index
    %c0_121 = arith.constant 0 : index
    %297 = vector.load %arg18[%c0_120, %c0_121] : memref<8x128xf32, #tpu.memory_space<vmem>>, vector<2x3xf32>
    tpu.vector_store %arg18[%c0_120, %c0_121], %294 {strides = array<i32>} : memref<8x128xf32, #tpu.memory_space<vmem>>, vector<2x3xf32>,
    return
  }
  func.func @transform_0(%arg0: i32) -> (i32, i32) {
    %c0_i32 = arith.constant 0 : i32
    %c0_i32_0 = arith.constant 0 : i32
    %c0_i32_1 = arith.constant 0 : i32
    return %c0_i32, %c0_i32_0 : i32, i32
  }
  func.func @transform_1(%arg0: i32) -> (i32, i32) {
    %c0_i32 = arith.constant 0 : i32
    %c0_i32_0 = arith.constant 0 : i32
    %c0_i32_1 = arith.constant 0 : i32
    return %c0_i32, %c0_i32_0 : i32, i32
  }
  func.func @transform_2(%arg0: i32) -> (i32, i32) {
    %c0_i32 = arith.constant 0 : i32
    %c0_i32_0 = arith.constant 0 : i32
    %c0_i32_1 = arith.constant 0 : i32
    return %c0_i32, %c0_i32_0 : i32, i32
  }
  func.func @transform_3(%arg0: i32) -> (i32, i32) {
    %c0_i32 = arith.constant 0 : i32
    %c0_i32_0 = arith.constant 0 : i32
    %c0_i32_1 = arith.constant 0 : i32
    return %c0_i32, %c0_i32_0 : i32, i32
  }
  func.func @transform_4(%arg0: i32) -> (i32, i32, i32) {
    %c0_i32 = arith.constant 0 : i32
    %c0_i32_0 = arith.constant 0 : i32
    %c0_i32_1 = arith.constant 0 : i32
    %c0_i32_2 = arith.constant 0 : i32
    return %c0_i32, %c0_i32_0, %c0_i32_1 : i32, i32, i32
  }
  func.func @transform_5(%arg0: i32) -> (i32, i32, i32, i32) {
    %c0_i32 = arith.constant 0 : i32
    %c0_i32_0 = arith.constant 0 : i32
    %c0_i32_1 = arith.constant 0 : i32
    %c0_i32_2 = arith.constant 0 : i32
    %c0_i32_3 = arith.constant 0 : i32
    return %c0_i32, %c0_i32_0, %c0_i32_1, %c0_i32_2 : i32, i32, i32, i32
  }
  func.func @transform_6(%arg0: i32) -> (i32, i32, i32) {
    %c0_i32 = arith.constant 0 : i32
    %c0_i32_0 = arith.constant 0 : i32
    %c0_i32_1 = arith.constant 0 : i32
    %c0_i32_2 = arith.constant 0 : i32
    return %c0_i32, %c0_i32_0, %c0_i32_1 : i32, i32, i32
  }
  func.func @transform_7(%arg0: i32) -> (i32, i32, i32) {
    %c0_i32 = arith.constant 0 : i32
    %c0_i32_0 = arith.constant 0 : i32
    %c0_i32_1 = arith.constant 0 : i32
    %c0_i32_2 = arith.constant 0 : i32
    return %c0_i32, %c0_i32_0, %c0_i32_1 : i32, i32, i32
  }
  func.func @transform_8(%arg0: i32) -> (i32, i32, i32) {
    %c0_i32 = arith.constant 0 : i32
    %c0_i32_0 = arith.constant 0 : i32
    %c0_i32_1 = arith.constant 0 : i32
    %c0_i32_2 = arith.constant 0 : i32
    return %c0_i32, %c0_i32_0, %c0_i32_1 : i32, i32, i32
  }
  func.func @transform_9(%arg0: i32) -> (i32, i32, i32) {
    %c0_i32 = arith.constant 0 : i32
    %c0_i32_0 = arith.constant 0 : i32
    %c0_i32_1 = arith.constant 0 : i32
    %c0_i32_2 = arith.constant 0 : i32
    return %c0_i32, %c0_i32_0, %c0_i32_1 : i32, i32, i32
  }
  func.func @transform_10(%arg0: i32) -> (i32, i32, i32) {
    %c0_i32 = arith.constant 0 : i32
    %c0_i32_0 = arith.constant 0 : i32
    %c0_i32_1 = arith.constant 0 : i32
    %c0_i32_2 = arith.constant 0 : i32
    return %c0_i32, %c0_i32_0, %c0_i32_1 : i32, i32, i32
  }
  func.func @transform_11(%arg0: i32) -> (i32, i32, i32) {
    %c0_i32 = arith.constant 0 : i32
    %c0_i32_0 = arith.constant 0 : i32
    %c0_i32_1 = arith.constant 0 : i32
    %c0_i32_2 = arith.constant 0 : i32
    return %c0_i32, %c0_i32_0, %c0_i32_1 : i32, i32, i32
  }
  func.func @transform_12(%arg0: i32) -> (i32, i32, i32) {
    %c0_i32 = arith.constant 0 : i32
    %c0_i32_0 = arith.constant 0 : i32
    %c0_i32_1 = arith.constant 0 : i32
    %c0_i32_2 = arith.constant 0 : i32
    return %c0_i32, %c0_i32_0, %c0_i32_1 : i32, i32, i32
  }
  func.func @transform_13(%arg0: i32) -> (i32, i32) {
    %c0_i32 = arith.constant 0 : i32
    %c0_i32_0 = arith.constant 0 : i32
    %c0_i32_1 = arith.constant 0 : i32
    return %c0_i32, %c0_i32_0 : i32, i32
  }
  func.func @transform_14(%arg0: i32) -> (i32, i32) {
    %c0_i32 = arith.constant 0 : i32
    %c0_i32_0 = arith.constant 0 : i32
    %c0_i32_1 = arith.constant 0 : i32
    return %c0_i32, %c0_i32_0 : i32, i32
  }
  func.func @transform_15(%arg0: i32) -> (i32, i32) {
    %c0_i32 = arith.constant 0 : i32
    %c0_i32_0 = arith.constant 0 : i32
    %c0_i32_1 = arith.constant 0 : i32
    return %c0_i32, %c0_i32_0 : i32, i32
  }
  func.func @transform_16(%arg0: i32) -> (i32, i32) {
    %c0_i32 = arith.constant 0 : i32
    %c0_i32_0 = arith.constant 0 : i32
    %c0_i32_1 = arith.constant 0 : i32
    return %c0_i32, %c0_i32_0 : i32, i32
  }
  func.func @transform_17(%arg0: i32) -> (i32, i32) {
    %c0_i32 = arith.constant 0 : i32
    %c0_i32_0 = arith.constant 0 : i32
    %c0_i32_1 = arith.constant 0 : i32
    return %c0_i32, %c0_i32_0 : i32, i32
  }
}

</mosaic_0001>

<llo_original>
// kernel: siamese_forward.1
$region0: #{siamese_forward.1}
  #allocation0 [shape = 'u32[]', space=smem, size = 0x4, offset = 0x4, fixed_abs, tag = 'smem constant byte address 0x4 - core index']
  #allocation1 [shape = 'u32[144,128]{1,0:T(1,128)}', space=vmem, size = 0x12000, scoped, tag = 'internal scratch']
  %s0 = inlined_call_operand.vmem [shape: s32[2,8], index: 0, kind: input, shape index: {}]
  %s1 = inlined_call_operand.vmem [shape: s32[2,8], index: 1, kind: input, shape index: {}]
  %s2 = inlined_call_operand.vmem [shape: f32[64,32], index: 2, kind: input, shape index: {}]
  %s3 = inlined_call_operand.vmem [shape: f32[8,32], index: 3, kind: input, shape index: {}]
  %s4 = inlined_call_operand.vmem [shape: f32[2,32,96], index: 4, kind: input, shape index: {}]
  %s5 = inlined_call_operand.vmem [shape: f32[2,4,8,32], index: 5, kind: input, shape index: {}]
  %s6 = inlined_call_operand.vmem [shape: f32[2,1,32], index: 6, kind: input, shape index: {}]
  %s7 = inlined_call_operand.vmem [shape: f32[2,2,32], index: 7, kind: input, shape index: {}]
  %s8 = inlined_call_operand.vmem [shape: f32[2,32,64], index: 8, kind: input, shape index: {}]
  %s9 = inlined_call_operand.vmem [shape: f32[2,1,64], index: 9, kind: input, shape index: {}]
  %s10 = inlined_call_operand.vmem [shape: f32[2,64,32], index: 10, kind: input, shape index: {}]
  %s11 = inlined_call_operand.vmem [shape: f32[2,1,32], index: 11, kind: input, shape index: {}]
  %s12 = inlined_call_operand.vmem [shape: f32[2,2,32], index: 12, kind: input, shape index: {}]
  %s13 = inlined_call_operand.vmem [shape: f32[64,32], index: 13, kind: input, shape index: {}]
  %s14 = inlined_call_operand.vmem [shape: f32[1,32], index: 14, kind: input, shape index: {}]
  %s15 = inlined_call_operand.vmem [shape: f32[32,3], index: 15, kind: input, shape index: {}]
  %s16 = inlined_call_operand.vmem [shape: f32[1,3], index: 16, kind: input, shape index: {}]
  %s17 = inlined_call_operand.vmem [shape: f32[8,128], index: 17, kind: output, shape index: {}]
  %s18 = sld [smem:[#allocation0]]
  $region78: #{siamese_forward.1} parent=0
    _
  %s20 = ssub.s32 1, %s18
  %s21 = scalar_select 0, %s20, %s18
  // Predicated region
  $region2: #{siamese_forward.1} parent=0 // pred_check
    _
  $region3: #{siamese_forward.1} parent=0 // pred_check_branch
    %23 = sbr.rel (0) target = $region5
  $region4: #{siamese_forward.1} parent=0 // pred_region
    _
  $region5: #{siamese_forward.1} parent=0 // pred_fallthru
    _
  // Predicated region
  $region6: #{siamese_forward.1} parent=0 // pred_check
    _
  $region7: #{siamese_forward.1} parent=0 // pred_check_branch
    %25 = sbr.rel (0) target = $region9
  $region8: #{siamese_forward.1} parent=0 // pred_region
    _
  $region9: #{siamese_forward.1} parent=0 // pred_fallthru
    _
  // Predicated region
  $region10: #{siamese_forward.1} parent=0 // pred_check
    _
  $region11: #{siamese_forward.1} parent=0 // pred_check_branch
    %27 = sbr.rel (0) target = $region13
  $region12: #{siamese_forward.1} parent=0 // pred_region
    _
  $region13: #{siamese_forward.1} parent=0 // pred_fallthru
    _
  // Predicated region
  $region14: #{siamese_forward.1} parent=0 // pred_check
    _
  $region15: #{siamese_forward.1} parent=0 // pred_check_branch
    %29 = sbr.rel (0) target = $region17
  $region16: #{siamese_forward.1} parent=0 // pred_region
    _
  $region17: #{siamese_forward.1} parent=0 // pred_fallthru
    _
  // Predicated region
  $region18: #{siamese_forward.1} parent=0 // pred_check
    _
  $region19: #{siamese_forward.1} parent=0 // pred_check_branch
    %31 = sbr.rel (0) target = $region21
  $region20: #{siamese_forward.1} parent=0 // pred_region
    _
  $region21: #{siamese_forward.1} parent=0 // pred_fallthru
    _
  // Predicated region
  $region22: #{siamese_forward.1} parent=0 // pred_check
    _
  $region23: #{siamese_forward.1} parent=0 // pred_check_branch
    %33 = sbr.rel (0) target = $region25
  $region24: #{siamese_forward.1} parent=0 // pred_region
    _
  $region25: #{siamese_forward.1} parent=0 // pred_fallthru
    _
  // Predicated region
  $region26: #{siamese_forward.1} parent=0 // pred_check
    _
  $region27: #{siamese_forward.1} parent=0 // pred_check_branch
    %35 = sbr.rel (0) target = $region29
  $region28: #{siamese_forward.1} parent=0 // pred_region
    _
  $region29: #{siamese_forward.1} parent=0 // pred_fallthru
    _
  // Predicated region
  $region30: #{siamese_forward.1} parent=0 // pred_check
    _
  $region31: #{siamese_forward.1} parent=0 // pred_check_branch
    %37 = sbr.rel (0) target = $region33
  $region32: #{siamese_forward.1} parent=0 // pred_region
    _
  $region33: #{siamese_forward.1} parent=0 // pred_fallthru
    _
  // Predicated region
  $region34: #{siamese_forward.1} parent=0 // pred_check
    _
  $region35: #{siamese_forward.1} parent=0 // pred_check_branch
    %39 = sbr.rel (0) target = $region37
  $region36: #{siamese_forward.1} parent=0 // pred_region
    _
  $region37: #{siamese_forward.1} parent=0 // pred_fallthru
    _
  // Predicated region
  $region38: #{siamese_forward.1} parent=0 // pred_check
    _
  $region39: #{siamese_forward.1} parent=0 // pred_check_branch
    %41 = sbr.rel (0) target = $region41
  $region40: #{siamese_forward.1} parent=0 // pred_region
    _
  $region41: #{siamese_forward.1} parent=0 // pred_fallthru
    _
  // Predicated region
  $region42: #{siamese_forward.1} parent=0 // pred_check
    _
  $region43: #{siamese_forward.1} parent=0 // pred_check_branch
    %43 = sbr.rel (0) target = $region45
  $region44: #{siamese_forward.1} parent=0 // pred_region
    _
  $region45: #{siamese_forward.1} parent=0 // pred_fallthru
    _
  // Predicated region
  $region46: #{siamese_forward.1} parent=0 // pred_check
    _
  $region47: #{siamese_forward.1} parent=0 // pred_check_branch
    %45 = sbr.rel (0) target = $region49
  $region48: #{siamese_forward.1} parent=0 // pred_region
    _
  $region49: #{siamese_forward.1} parent=0 // pred_fallthru
    _
  // Predicated region
  $region50: #{siamese_forward.1} parent=0 // pred_check
    _
  $region51: #{siamese_forward.1} parent=0 // pred_check_branch
    %47 = sbr.rel (0) target = $region53
  $region52: #{siamese_forward.1} parent=0 // pred_region
    _
  $region53: #{siamese_forward.1} parent=0 // pred_fallthru
    _
  // Predicated region
  $region54: #{siamese_forward.1} parent=0 // pred_check
    _
  $region55: #{siamese_forward.1} parent=0 // pred_check_branch
    %49 = sbr.rel (0) target = $region57
  $region56: #{siamese_forward.1} parent=0 // pred_region
    _
  $region57: #{siamese_forward.1} parent=0 // pred_fallthru
    _
  // Predicated region
  $region58: #{siamese_forward.1} parent=0 // pred_check
    _
  $region59: #{siamese_forward.1} parent=0 // pred_check_branch
    %51 = sbr.rel (0) target = $region61
  $region60: #{siamese_forward.1} parent=0 // pred_region
    _
  $region61: #{siamese_forward.1} parent=0 // pred_fallthru
    _
  // Predicated region
  $region62: #{siamese_forward.1} parent=0 // pred_check
    _
  $region63: #{siamese_forward.1} parent=0 // pred_check_branch
    %53 = sbr.rel (0) target = $region65
  $region64: #{siamese_forward.1} parent=0 // pred_region
    _
  $region65: #{siamese_forward.1} parent=0 // pred_fallthru
    _
  // Predicated region
  $region66: #{siamese_forward.1} parent=0 // pred_check
    _
  $region67: #{siamese_forward.1} parent=0 // pred_check_branch
    %55 = sbr.rel (0) target = $region69
  $region68: #{siamese_forward.1} parent=0 // pred_region
    _
  $region69: #{siamese_forward.1} parent=0 // pred_fallthru
    _
  %v56 = vld [vmem:[%s0] sm:$0x3]
  %v57 = vld [vmem:[%s1] sm:$0x3]
  %v58 = vrot.slane %v57, 6
  %vm59 = vcmask 1041408
  %v60 = vsel %vm59, %v56, %v58
  %v61 = vlaneseq
  %v62 = vand.u32 %v61, 127
  %v63 = vlaneseq
  %v64 = vshrl.u32 %v63, 7
  %v65 = vsub.s32 0, %v64
  %v66 = vrot.slane %v60, %v65
  %68 = vbcast.lane.b32.xlu0 %v66, 256
  %v69 = vpop.permute.xlu0 %68
  %v70 = vlaneseq
  %v71 = vshrl.u32 %v70, 7
  %v72 = vsub.s32 1, %v71
  %v73 = vrot.slane %v60, %v72
  %75 = vbcast.lane.b32.xlu0 %v73, 256
  %v76 = vpop.permute.xlu0 %75
  %v77 = vlaneseq
  %v78 = vshrl.u32 %v77, 7
  %v79 = vsub.s32 2, %v78
  %v80 = vrot.slane %v60, %v79
  %82 = vbcast.lane.b32.xlu0 %v80, 256
  %v83 = vpop.permute.xlu0 %82
  %v84 = vlaneseq
  %v85 = vshrl.u32 %v84, 7
  %v86 = vsub.s32 3, %v85
  %v87 = vrot.slane %v60, %v86
  %89 = vbcast.lane.b32.xlu0 %v87, 256
  %v90 = vpop.permute.xlu0 %89
  %vm91 = vcmp.eq.s32.totalorder %v69, %v62
  %vm92 = vcmp.eq.s32.totalorder %v76, %v62
  %vm93 = vcmp.eq.s32.totalorder %v83, %v62
  %vm94 = vcmp.eq.s32.totalorder %v90, %v62
  %v95 = vsel %vm91, 1, 0
  %v96 = vsel %vm92, 1, 0
  %v97 = vsel %vm93, 1, 0
  %v98 = vsel %vm94, 1, 0
  %v99 = vcvt.s32.f32 %v95
  %v100 = vcvt.s32.f32 %v96
  %v101 = vcvt.s32.f32 %v97
  %v102 = vcvt.s32.f32 %v98
  %v103 = vld [vmem:[%s2] sm:$0xff]
  %v104 = vld [vmem:[%s2 + $0x8] sm:$0xff]
  %v105 = vld [vmem:[%s2 + $0x10] sm:$0xff]
  %v106 = vld [vmem:[%s2 + $0x18] sm:$0xff]
  %v107 = vld [vmem:[%s2 + $0x20] sm:$0xff]
  %v108 = vld [vmem:[%s2 + $0x28] sm:$0xff]
  %v109 = vld [vmem:[%s2 + $0x30] sm:$0xff]
  %v110 = vld [vmem:[%s2 + $0x38] sm:$0xff]
  %v111 = vld [vmem:[%s3] sm:$0xff]
  %vm112 = vcmask 523264
  %v114 = vsel %vm112, %v99, 0
  %v117 = vsel %vm112, %v100, 0
  %v120 = vsel %vm112, %v101, 0
  %v123 = vsel %vm112, %v102, 0
  %125 = vmatprep.subr.mxu0 0.0
  %126 = vmatpush1.msra.mxu0 %v103
  %127 = vmatprep.subr.mxu0 0.0
  %128 = vmatpush1.msra.mxu0 %v104
  %129 = vmatprep.subr.mxu0 0.0
  %130 = vmatpush1.msra.mxu0 %v105
  %131 = vmatprep.subr.mxu0 0.0
  %132 = vmatpush1.msra.mxu0 %v106
  %133 = vmatprep.subr.mxu0 0.0
  %134 = vmatpush1.msra.mxu0 %v107
  %135 = vmatprep.subr.mxu0 0.0
  %136 = vmatpush1.msra.mxu0 %v108
  %137 = vmatprep.subr.mxu0 0.0
  %138 = vmatpush1.msra.mxu0 %v109
  %139 = vmatprep.subr.mxu0 0.0
  %140 = vmatpush1.msra.mxu0 %v110
  %141 = vmatprep.subr.mxu0 0.0
  %142 = vmatpush1.msra.mxu0 0.0
  %143 = vmatprep.subr.mxu0 0.0
  %144 = vmatpush1.msra.mxu0 0.0
  %145 = vmatprep.subr.mxu0 0.0
  %146 = vmatpush1.msra.mxu0 0.0
  %147 = vmatprep.subr.mxu0 0.0
  %148 = vmatpush1.msra.mxu0 0.0
  %149 = vmatprep.subr.mxu0 0.0
  %150 = vmatpush1.msra.mxu0 0.0
  %151 = vmatprep.subr.mxu0 0.0
  %152 = vmatpush1.msra.mxu0 0.0
  %153 = vmatprep.subr.mxu0 0.0
  %154 = vmatpush1.msra.mxu0 0.0
  %155 = vmatprep.subr.mxu0 0.0
  %156 = vmatpush1.msra.mxu0 0.0
  %157 = vmatprep.subr.mxu0 0.0
  %158 = vmatpush1.msra.mxu0 0.0
  %159 = vmatprep.subr.mxu0 0.0
  %160 = vmatpush1.msra.mxu0 0.0
  %161 = vmatprep.subr.mxu0 0.0
  %162 = vmatpush1.msra.mxu0 0.0
  %163 = vmatprep.subr.mxu0 0.0
  %164 = vmatpush1.msra.mxu0 0.0
  %165 = vmatprep.subr.mxu0 0.0
  %166 = vmatpush1.msra.mxu0 0.0
  %167 = vmatprep.subr.mxu0 0.0
  %168 = vmatpush1.msra.mxu0 0.0
  %169 = vmatprep.subr.mxu0 0.0
  %170 = vmatpush1.msra.mxu0 0.0
  %171 = vmatprep.subr.mxu0 0.0
  %172 = vmatpush1.msra.mxu0 0.0
  %173 = vmatprep.subr.mxu0 0.0
  %174 = vmatpush1.msra.mxu0 0.0
  %175 = vmatprep.subr.mxu0 0.0
  %176 = vmatpush1.msra.mxu0 0.0
  %177 = vmatprep.subr.mxu0 0.0
  %178 = vmatpush1.msra.mxu0 0.0
  %179 = vmatprep.subr.mxu0 0.0
  %180 = vmatpush1.msra.mxu0 0.0
  %181 = vmatprep.subr.mxu0 0.0
  %182 = vmatpush1.msra.mxu0 0.0
  %183 = vmatprep.subr.mxu0 0.0
  %184 = vmatpush1.msra.mxu0 0.0
  %185 = vmatprep.subr.mxu0 0.0
  %186 = vmatpush1.msra.mxu0 0.0
  %187 = vmatprep.subr.mxu0 0.0
  %188 = vmatpush1.msra.mxu0 0.0
  %189 = vmatprep.mubr.f32.mxu0 0.0
  %190 = vmatmul.mubr.f32.gmra.mrb[0].mxu0 %v114
  %v191 = vpop.f32.mrb[0].mxu0
  %v192 = vadd.f32 %v111, %v191
  %v193 = vpop.f32.mrb[0].mxu0
  %194 = vmatprep.mubr.f32.mxu0 0.0
  %195 = vmatmul.mubr.f32.gmra.mrb[0].mxu0 %v117
  %v196 = vpop.f32.mrb[0].mxu0
  %v197 = vadd.f32 %v111, %v196
  %v198 = vpop.f32.mrb[0].mxu0
  %199 = vmatprep.mubr.f32.mxu0 0.0
  %200 = vmatmul.mubr.f32.gmra.mrb[0].mxu0 %v120
  %v201 = vpop.f32.mrb[0].mxu0
  %v202 = vadd.f32 %v111, %v201
  %v203 = vpop.f32.mrb[0].mxu0
  %204 = vmatprep.mubr.f32.mxu0 0.0
  %205 = vmatmul.mubr.f32.gmra.mrb[0].mxu0 %v123
  %v206 = vpop.f32.mrb[0].mxu0
  %v207 = vadd.f32 %v111, %v206
  %v208 = vpop.f32.mrb[0].mxu0
  %209 = vdwg.mxu0
  %vm210 = vcmp.eq.s32.totalorder %v60, 0
  %v211 = vsel %vm210, 1e+09, 0.0
  %v213 = vrot.slane %v211, 4
  %vm215 = vcmask 1043456
  %v216 = vsel %vm215, %v211, %v213
  %v218 = vcombine.high %v216, %v216
  %v220 = vunpack.c.l.s4 1966171168
  %v221 = vunpack.c.0.s8 %v220
  %v222 = vlaneseq
  %v223 = vshrl.u32 %v222, 7
  %v224 = vsub.s32 %v221, %v223
  %v225 = vrot.slane %v216, %v224
  %v227 = vunpack.c.l.s4 1966171168
  %v228 = vunpack.c.0.s8 %v227
  %v229 = vlaneseq
  %v230 = vshrl.u32 %v229, 7
  %v231 = vsub.s32 %v228, %v230
  %v232 = vrot.slane %v218, %v231
  %v233 = vcombine.high %v225, %v225
  %v234 = vcombine.high %v232, %v232
  %v236 = vunpack.c.l.s4 1966171168
  %v237 = vunpack.c.0.s8 %v236
  %v238 = vlaneseq
  %v239 = vshrl.u32 %v238, 7
  %v240 = vsub.s32 %v237, %v239
  %v241 = vrot.slane %v225, %v240
  %v243 = vunpack.c.l.s4 1966171168
  %v244 = vunpack.c.0.s8 %v243
  %v245 = vlaneseq
  %v246 = vshrl.u32 %v245, 7
  %v247 = vsub.s32 %v244, %v246
  %v248 = vrot.slane %v232, %v247
  %v250 = vunpack.c.l.s4 1966171168
  %v251 = vunpack.c.0.s8 %v250
  %v252 = vlaneseq
  %v253 = vshrl.u32 %v252, 7
  %v254 = vsub.s32 %v251, %v253
  %v255 = vrot.slane %v233, %v254
  %v257 = vunpack.c.l.s4 1966171168
  %v258 = vunpack.c.0.s8 %v257
  %v259 = vlaneseq
  %v260 = vshrl.u32 %v259, 7
  %v261 = vsub.s32 %v258, %v260
  %v262 = vrot.slane %v234, %v261
  %v263 = vcombine.high %v241, %v241
  %v264 = vcombine.high %v248, %v248
  %v265 = vcombine.high %v255, %v255
  %v266 = vcombine.high %v262, %v262
  %v267 = vld [vmem:[%s4] sm:$0xff]
  %v268 = vld [vmem:[%s4 + $0x8] sm:$0xff]
  %v269 = vld [vmem:[%s4 + $0x10] sm:$0xff]
  %v270 = vld [vmem:[%s4 + $0x18] sm:$0xff]
  %vm271 = vcmask 261120
  %v273 = vsel %vm271, %v192, 0
  %v276 = vsel %vm271, %v197, 0
  %v279 = vsel %vm271, %v202, 0
  %v282 = vsel %vm271, %v207, 0
  %284 = vmatprep.subr.mxu0 0.0
  %285 = vmatpush1.msra.mxu0 %v267
  %286 = vmatprep.subr.mxu0 0.0
  %287 = vmatpush1.msra.mxu0 %v268
  %288 = vmatprep.subr.mxu0 0.0
  %289 = vmatpush1.msra.mxu0 %v269
  %290 = vmatprep.subr.mxu0 0.0
  %291 = vmatpush1.msra.mxu0 %v270
  %292 = vmatprep.subr.mxu0 0.0
  %293 = vmatpush1.msra.mxu0 0.0
  %294 = vmatprep.subr.mxu0 0.0
  %295 = vmatpush1.msra.mxu0 0.0
  %296 = vmatprep.subr.mxu0 0.0
  %297 = vmatpush1.msra.mxu0 0.0
  %298 = vmatprep.subr.mxu0 0.0
  %299 = vmatpush1.msra.mxu0 0.0
  %300 = vmatprep.subr.mxu0 0.0
  %301 = vmatpush1.msra.mxu0 0.0
  %302 = vmatprep.subr.mxu0 0.0
  %303 = vmatpush1.msra.mxu0 0.0
  %304 = vmatprep.subr.mxu0 0.0
  %305 = vmatpush1.msra.mxu0 0.0
  %306 = vmatprep.subr.mxu0 0.0
  %307 = vmatpush1.msra.mxu0 0.0
  %308 = vmatprep.subr.mxu0 0.0
  %309 = vmatpush1.msra.mxu0 0.0
  %310 = vmatprep.subr.mxu0 0.0
  %311 = vmatpush1.msra.mxu0 0.0
  %312 = vmatprep.subr.mxu0 0.0
  %313 = vmatpush1.msra.mxu0 0.0
  %314 = vmatprep.subr.mxu0 0.0
  %315 = vmatpush1.msra.mxu0 0.0
  %316 = vmatprep.subr.mxu0 0.0
  %317 = vmatpush1.msra.mxu0 0.0
  %318 = vmatprep.subr.mxu0 0.0
  %319 = vmatpush1.msra.mxu0 0.0
  %320 = vmatprep.subr.mxu0 0.0
  %321 = vmatpush1.msra.mxu0 0.0
  %322 = vmatprep.subr.mxu0 0.0
  %323 = vmatpush1.msra.mxu0 0.0
  %324 = vmatprep.subr.mxu0 0.0
  %325 = vmatpush1.msra.mxu0 0.0
  %326 = vmatprep.subr.mxu0 0.0
  %327 = vmatpush1.msra.mxu0 0.0
  %328 = vmatprep.subr.mxu0 0.0
  %329 = vmatpush1.msra.mxu0 0.0
  %330 = vmatprep.subr.mxu0 0.0
  %331 = vmatpush1.msra.mxu0 0.0
  %332 = vmatprep.subr.mxu0 0.0
  %333 = vmatpush1.msra.mxu0 0.0
  %334 = vmatprep.subr.mxu0 0.0
  %335 = vmatpush1.msra.mxu0 0.0
  %336 = vmatprep.subr.mxu0 0.0
  %337 = vmatpush1.msra.mxu0 0.0
  %338 = vmatprep.subr.mxu0 0.0
  %339 = vmatpush1.msra.mxu0 0.0
  %340 = vmatprep.subr.mxu0 0.0
  %341 = vmatpush1.msra.mxu0 0.0
  %342 = vmatprep.subr.mxu0 0.0
  %343 = vmatpush1.msra.mxu0 0.0
  %344 = vmatprep.subr.mxu0 0.0
  %345 = vmatpush1.msra.mxu0 0.0
  %346 = vmatprep.subr.mxu0 0.0
  %347 = vmatpush1.msra.mxu0 0.0
  %348 = vmatprep.mubr.f32.mxu0 0.0
  %349 = vmatmul.mubr.f32.gmra.mrb[0].mxu0 %v273
  %v350 = vpop.f32.mrb[0].mxu0
  %v351 = vadd.f32 0.0, %v350
  %v352 = vpop.f32.mrb[0].mxu0
  %353 = vmatprep.mubr.f32.mxu0 0.0
  %354 = vmatmul.mubr.f32.gmra.mrb[0].mxu0 %v276
  %v355 = vpop.f32.mrb[0].mxu0
  %v356 = vadd.f32 0.0, %v355
  %v357 = vpop.f32.mrb[0].mxu0
  %358 = vmatprep.mubr.f32.mxu0 0.0
  %359 = vmatmul.mubr.f32.gmra.mrb[0].mxu0 %v279
  %v360 = vpop.f32.mrb[0].mxu0
  %v361 = vadd.f32 0.0, %v360
  %v362 = vpop.f32.mrb[0].mxu0
  %363 = vmatprep.mubr.f32.mxu0 0.0
  %364 = vmatmul.mubr.f32.gmra.mrb[0].mxu0 %v282
  %v365 = vpop.f32.mrb[0].mxu0
  %v366 = vadd.f32 0.0, %v365
  %v367 = vpop.f32.mrb[0].mxu0
  %368 = vdwg.mxu0
  %373 = vrot.lane.b32.xlu0 %v351, 120
  %v374 = vpop.permute.xlu0 %373
  %375 = vrot.lane.b32.xlu0 %v356, 120
  %v376 = vpop.permute.xlu0 %375
  %377 = vrot.lane.b32.xlu0 %v361, 120
  %v378 = vpop.permute.xlu0 %377
  %379 = vrot.lane.b32.xlu0 %v366, 120
  %v380 = vpop.permute.xlu0 %379
  %381 = vrot.lane.b32.xlu0 %v351, 112
  %v382 = vpop.permute.xlu0 %381
  %383 = vrot.lane.b32.xlu0 %v356, 112
  %v384 = vpop.permute.xlu0 %383
  %385 = vrot.lane.b32.xlu0 %v361, 112
  %v386 = vpop.permute.xlu0 %385
  %387 = vrot.lane.b32.xlu0 %v366, 112
  %v388 = vpop.permute.xlu0 %387
  %389 = vrot.lane.b32.xlu0 %v351, 104
  %v390 = vpop.permute.xlu0 %389
  %391 = vrot.lane.b32.xlu0 %v356, 104
  %v392 = vpop.permute.xlu0 %391
  %393 = vrot.lane.b32.xlu0 %v361, 104
  %v394 = vpop.permute.xlu0 %393
  %395 = vrot.lane.b32.xlu0 %v366, 104
  %v396 = vpop.permute.xlu0 %395
  %397 = vrot.lane.b32.xlu0 %v351, 96
  %v398 = vpop.permute.xlu0 %397
  %vm399 = vcmask 64512
  %v400 = vsel %vm399, %v351, 0
  %v402 = vsel %vm399, %v398, 0
  %404 = vmatprep.subr.mxu0 0.0
  %405 = vmatpush1.xpose.msra.mxu0 %v402
  %406 = vmatprep.subr.mxu0 0.0
  %407 = vmatpush1.xpose.msra.mxu0 0.0
  %408 = vmatprep.subr.mxu0 0.0
  %409 = vmatpush1.xpose.msra.mxu0 0.0
  %410 = vmatprep.subr.mxu0 0.0
  %411 = vmatpush1.xpose.msra.mxu0 0.0
  %412 = vmatprep.subr.mxu0 0.0
  %413 = vmatpush1.xpose.msra.mxu0 0.0
  %414 = vmatprep.subr.mxu0 0.0
  %415 = vmatpush1.xpose.msra.mxu0 0.0
  %416 = vmatprep.subr.mxu0 0.0
  %417 = vmatpush1.xpose.msra.mxu0 0.0
  %418 = vmatprep.subr.mxu0 0.0
  %419 = vmatpush1.xpose.msra.mxu0 0.0
  %420 = vmatprep.subr.mxu0 0.0
  %421 = vmatpush1.xpose.msra.mxu0 0.0
  %422 = vmatprep.subr.mxu0 0.0
  %423 = vmatpush1.xpose.msra.mxu0 0.0
  %424 = vmatprep.subr.mxu0 0.0
  %425 = vmatpush1.xpose.msra.mxu0 0.0
  %426 = vmatprep.subr.mxu0 0.0
  %427 = vmatpush1.xpose.msra.mxu0 0.0
  %428 = vmatprep.subr.mxu0 0.0
  %429 = vmatpush1.xpose.msra.mxu0 0.0
  %430 = vmatprep.subr.mxu0 0.0
  %431 = vmatpush1.xpose.msra.mxu0 0.0
  %432 = vmatprep.subr.mxu0 0.0
  %433 = vmatpush1.xpose.msra.mxu0 0.0
  %434 = vmatprep.subr.mxu0 0.0
  %435 = vmatpush1.xpose.msra.mxu0 0.0
  %436 = vmatprep.subr.mxu0 0.0
  %437 = vmatpush1.xpose.msra.mxu0 0.0
  %438 = vmatprep.subr.mxu0 0.0
  %439 = vmatpush1.xpose.msra.mxu0 0.0
  %440 = vmatprep.subr.mxu0 0.0
  %441 = vmatpush1.xpose.msra.mxu0 0.0
  %442 = vmatprep.subr.mxu0 0.0
  %443 = vmatpush1.xpose.msra.mxu0 0.0
  %444 = vmatprep.subr.mxu0 0.0
  %445 = vmatpush1.xpose.msra.mxu0 0.0
  %446 = vmatprep.subr.mxu0 0.0
  %447 = vmatpush1.xpose.msra.mxu0 0.0
  %448 = vmatprep.subr.mxu0 0.0
  %449 = vmatpush1.xpose.msra.mxu0 0.0
  %450 = vmatprep.subr.mxu0 0.0
  %451 = vmatpush1.xpose.msra.mxu0 0.0
  %452 = vmatprep.subr.mxu0 0.0
  %453 = vmatpush1.xpose.msra.mxu0 0.0
  %454 = vmatprep.subr.mxu0 0.0
  %455 = vmatpush1.xpose.msra.mxu0 0.0
  %456 = vmatprep.subr.mxu0 0.0
  %457 = vmatpush1.xpose.msra.mxu0 0.0
  %458 = vmatprep.subr.mxu0 0.0
  %459 = vmatpush1.xpose.msra.mxu0 0.0
  %460 = vmatprep.subr.mxu0 0.0
  %461 = vmatpush1.xpose.msra.mxu0 0.0
  %462 = vmatprep.subr.mxu0 0.0
  %463 = vmatpush1.xpose.msra.mxu0 0.0
  %464 = vmatprep.subr.mxu0 0.0
  %465 = vmatpush1.xpose.msra.mxu0 0.0
  %466 = vmatprep.subr.mxu0 0.0
  %467 = vmatpush1.xpose.msra.mxu0 0.0
  %468 = vmatprep.mubr.f32.mxu0 0.0
  %469 = vmatmul.mubr.f32.gmra.mrb[0].mxu0 %v400
  %v470 = vpop.f32.mrb[0].mxu0
  %v471 = vadd.f32 0.0, %v470
  %v472 = vpop.f32.mrb[0].mxu0
  %473 = vdwg.mxu0
  %474 = vrot.lane.b32.xlu0 %v356, 96
  %v475 = vpop.permute.xlu0 %474
  %v476 = vsel %vm399, %v356, 0
  %v478 = vsel %vm399, %v475, 0
  %480 = vmatprep.subr.mxu0 0.0
  %481 = vmatpush1.xpose.msra.mxu0 %v478
  %482 = vmatprep.subr.mxu0 0.0
  %483 = vmatpush1.xpose.msra.mxu0 0.0
  %484 = vmatprep.subr.mxu0 0.0
  %485 = vmatpush1.xpose.msra.mxu0 0.0
  %486 = vmatprep.subr.mxu0 0.0
  %487 = vmatpush1.xpose.msra.mxu0 0.0
  %488 = vmatprep.subr.mxu0 0.0
  %489 = vmatpush1.xpose.msra.mxu0 0.0
  %490 = vmatprep.subr.mxu0 0.0
  %491 = vmatpush1.xpose.msra.mxu0 0.0
  %492 = vmatprep.subr.mxu0 0.0
  %493 = vmatpush1.xpose.msra.mxu0 0.0
  %494 = vmatprep.subr.mxu0 0.0
  %495 = vmatpush1.xpose.msra.mxu0 0.0
  %496 = vmatprep.subr.mxu0 0.0
  %497 = vmatpush1.xpose.msra.mxu0 0.0
  %498 = vmatprep.subr.mxu0 0.0
  %499 = vmatpush1.xpose.msra.mxu0 0.0
  %500 = vmatprep.subr.mxu0 0.0
  %501 = vmatpush1.xpose.msra.mxu0 0.0
  %502 = vmatprep.subr.mxu0 0.0
  %503 = vmatpush1.xpose.msra.mxu0 0.0
  %504 = vmatprep.subr.mxu0 0.0
  %505 = vmatpush1.xpose.msra.mxu0 0.0
  %506 = vmatprep.subr.mxu0 0.0
  %507 = vmatpush1.xpose.msra.mxu0 0.0
  %508 = vmatprep.subr.mxu0 0.0
  %509 = vmatpush1.xpose.msra.mxu0 0.0
  %510 = vmatprep.subr.mxu0 0.0
  %511 = vmatpush1.xpose.msra.mxu0 0.0
  %512 = vmatprep.subr.mxu0 0.0
  %513 = vmatpush1.xpose.msra.mxu0 0.0
  %514 = vmatprep.subr.mxu0 0.0
  %515 = vmatpush1.xpose.msra.mxu0 0.0
  %516 = vmatprep.subr.mxu0 0.0
  %517 = vmatpush1.xpose.msra.mxu0 0.0
  %518 = vmatprep.subr.mxu0 0.0
  %519 = vmatpush1.xpose.msra.mxu0 0.0
  %520 = vmatprep.subr.mxu0 0.0
  %521 = vmatpush1.xpose.msra.mxu0 0.0
  %522 = vmatprep.subr.mxu0 0.0
  %523 = vmatpush1.xpose.msra.mxu0 0.0
  %524 = vmatprep.subr.mxu0 0.0
  %525 = vmatpush1.xpose.msra.mxu0 0.0
  %526 = vmatprep.subr.mxu0 0.0
  %527 = vmatpush1.xpose.msra.mxu0 0.0
  %528 = vmatprep.subr.mxu0 0.0
  %529 = vmatpush1.xpose.msra.mxu0 0.0
  %530 = vmatprep.subr.mxu0 0.0
  %531 = vmatpush1.xpose.msra.mxu0 0.0
  %532 = vmatprep.subr.mxu0 0.0
  %533 = vmatpush1.xpose.msra.mxu0 0.0
  %534 = vmatprep.subr.mxu0 0.0
  %535 = vmatpush1.xpose.msra.mxu0 0.0
  %536 = vmatprep.subr.mxu0 0.0
  %537 = vmatpush1.xpose.msra.mxu0 0.0
  %538 = vmatprep.subr.mxu0 0.0
  %539 = vmatpush1.xpose.msra.mxu0 0.0
  %540 = vmatprep.subr.mxu0 0.0
  %541 = vmatpush1.xpose.msra.mxu0 0.0
  %542 = vmatprep.subr.mxu0 0.0
  %543 = vmatpush1.xpose.msra.mxu0 0.0
  %544 = vmatprep.mubr.f32.mxu0 0.0
  %545 = vmatmul.mubr.f32.gmra.mrb[0].mxu0 %v476
  %v546 = vpop.f32.mrb[0].mxu0
  %v547 = vadd.f32 0.0, %v546
  %v548 = vpop.f32.mrb[0].mxu0
  %549 = vdwg.mxu0
  %550 = vrot.lane.b32.xlu0 %v361, 96
  %v551 = vpop.permute.xlu0 %550
  %v552 = vsel %vm399, %v361, 0
  %v554 = vsel %vm399, %v551, 0
  %556 = vmatprep.subr.mxu0 0.0
  %557 = vmatpush1.xpose.msra.mxu0 %v554
  %558 = vmatprep.subr.mxu0 0.0
  %559 = vmatpush1.xpose.msra.mxu0 0.0
  %560 = vmatprep.subr.mxu0 0.0
  %561 = vmatpush1.xpose.msra.mxu0 0.0
  %562 = vmatprep.subr.mxu0 0.0
  %563 = vmatpush1.xpose.msra.mxu0 0.0
  %564 = vmatprep.subr.mxu0 0.0
  %565 = vmatpush1.xpose.msra.mxu0 0.0
  %566 = vmatprep.subr.mxu0 0.0
  %567 = vmatpush1.xpose.msra.mxu0 0.0
  %568 = vmatprep.subr.mxu0 0.0
  %569 = vmatpush1.xpose.msra.mxu0 0.0
  %570 = vmatprep.subr.mxu0 0.0
  %571 = vmatpush1.xpose.msra.mxu0 0.0
  %572 = vmatprep.subr.mxu0 0.0
  %573 = vmatpush1.xpose.msra.mxu0 0.0
  %574 = vmatprep.subr.mxu0 0.0
  %575 = vmatpush1.xpose.msra.mxu0 0.0
  %576 = vmatprep.subr.mxu0 0.0
  %577 = vmatpush1.xpose.msra.mxu0 0.0
  %578 = vmatprep.subr.mxu0 0.0
  %579 = vmatpush1.xpose.msra.mxu0 0.0
  %580 = vmatprep.subr.mxu0 0.0
  %581 = vmatpush1.xpose.msra.mxu0 0.0
  %582 = vmatprep.subr.mxu0 0.0
  %583 = vmatpush1.xpose.msra.mxu0 0.0
  %584 = vmatprep.subr.mxu0 0.0
  %585 = vmatpush1.xpose.msra.mxu0 0.0
  %586 = vmatprep.subr.mxu0 0.0
  %587 = vmatpush1.xpose.msra.mxu0 0.0
  %588 = vmatprep.subr.mxu0 0.0
  %589 = vmatpush1.xpose.msra.mxu0 0.0
  %590 = vmatprep.subr.mxu0 0.0
  %591 = vmatpush1.xpose.msra.mxu0 0.0
  %592 = vmatprep.subr.mxu0 0.0
  %593 = vmatpush1.xpose.msra.mxu0 0.0
  %594 = vmatprep.subr.mxu0 0.0
  %595 = vmatpush1.xpose.msra.mxu0 0.0
  %596 = vmatprep.subr.mxu0 0.0
  %597 = vmatpush1.xpose.msra.mxu0 0.0
  %598 = vmatprep.subr.mxu0 0.0
  %599 = vmatpush1.xpose.msra.mxu0 0.0
  %600 = vmatprep.subr.mxu0 0.0
  %601 = vmatpush1.xpose.msra.mxu0 0.0
  %602 = vmatprep.subr.mxu0 0.0
  %603 = vmatpush1.xpose.msra.mxu0 0.0
  %604 = vmatprep.subr.mxu0 0.0
  %605 = vmatpush1.xpose.msra.mxu0 0.0
  %606 = vmatprep.subr.mxu0 0.0
  %607 = vmatpush1.xpose.msra.mxu0 0.0
  %608 = vmatprep.subr.mxu0 0.0
  %609 = vmatpush1.xpose.msra.mxu0 0.0
  %610 = vmatprep.subr.mxu0 0.0
  %611 = vmatpush1.xpose.msra.mxu0 0.0
  %612 = vmatprep.subr.mxu0 0.0
  %613 = vmatpush1.xpose.msra.mxu0 0.0
  %614 = vmatprep.subr.mxu0 0.0
  %615 = vmatpush1.xpose.msra.mxu0 0.0
  %616 = vmatprep.subr.mxu0 0.0
  %617 = vmatpush1.xpose.msra.mxu0 0.0
  %618 = vmatprep.subr.mxu0 0.0
  %619 = vmatpush1.xpose.msra.mxu0 0.0
  %620 = vmatprep.mubr.f32.mxu0 0.0
  %621 = vmatmul.mubr.f32.gmra.mrb[0].mxu0 %v552
  %v622 = vpop.f32.mrb[0].mxu0
  %v623 = vadd.f32 0.0, %v622
  %v624 = vpop.f32.mrb[0].mxu0
  %625 = vdwg.mxu0
  %626 = vrot.lane.b32.xlu0 %v366, 96
  %v627 = vpop.permute.xlu0 %626
  %v628 = vsel %vm399, %v366, 0
  %v630 = vsel %vm399, %v627, 0
  %632 = vmatprep.subr.mxu0 0.0
  %633 = vmatpush1.xpose.msra.mxu0 %v630
  %634 = vmatprep.subr.mxu0 0.0
  %635 = vmatpush1.xpose.msra.mxu0 0.0
  %636 = vmatprep.subr.mxu0 0.0
  %637 = vmatpush1.xpose.msra.mxu0 0.0
  %638 = vmatprep.subr.mxu0 0.0
  %639 = vmatpush1.xpose.msra.mxu0 0.0
  %640 = vmatprep.subr.mxu0 0.0
  %641 = vmatpush1.xpose.msra.mxu0 0.0
  %642 = vmatprep.subr.mxu0 0.0
  %643 = vmatpush1.xpose.msra.mxu0 0.0
  %644 = vmatprep.subr.mxu0 0.0
  %645 = vmatpush1.xpose.msra.mxu0 0.0
  %646 = vmatprep.subr.mxu0 0.0
  %647 = vmatpush1.xpose.msra.mxu0 0.0
  %648 = vmatprep.subr.mxu0 0.0
  %649 = vmatpush1.xpose.msra.mxu0 0.0
  %650 = vmatprep.subr.mxu0 0.0
  %651 = vmatpush1.xpose.msra.mxu0 0.0
  %652 = vmatprep.subr.mxu0 0.0
  %653 = vmatpush1.xpose.msra.mxu0 0.0
  %654 = vmatprep.subr.mxu0 0.0
  %655 = vmatpush1.xpose.msra.mxu0 0.0
  %656 = vmatprep.subr.mxu0 0.0
  %657 = vmatpush1.xpose.msra.mxu0 0.0
  %658 = vmatprep.subr.mxu0 0.0
  %659 = vmatpush1.xpose.msra.mxu0 0.0
  %660 = vmatprep.subr.mxu0 0.0
  %661 = vmatpush1.xpose.msra.mxu0 0.0
  %662 = vmatprep.subr.mxu0 0.0
  %663 = vmatpush1.xpose.msra.mxu0 0.0
  %664 = vmatprep.subr.mxu0 0.0
  %665 = vmatpush1.xpose.msra.mxu0 0.0
  %666 = vmatprep.subr.mxu0 0.0
  %667 = vmatpush1.xpose.msra.mxu0 0.0
  %668 = vmatprep.subr.mxu0 0.0
  %669 = vmatpush1.xpose.msra.mxu0 0.0
  %670 = vmatprep.subr.mxu0 0.0
  %671 = vmatpush1.xpose.msra.mxu0 0.0
  %672 = vmatprep.subr.mxu0 0.0
  %673 = vmatpush1.xpose.msra.mxu0 0.0
  %674 = vmatprep.subr.mxu0 0.0
  %675 = vmatpush1.xpose.msra.mxu0 0.0
  %676 = vmatprep.subr.mxu0 0.0
  %677 = vmatpush1.xpose.msra.mxu0 0.0
  %678 = vmatprep.subr.mxu0 0.0
  %679 = vmatpush1.xpose.msra.mxu0 0.0
  %680 = vmatprep.subr.mxu0 0.0
  %681 = vmatpush1.xpose.msra.mxu0 0.0
  %682 = vmatprep.subr.mxu0 0.0
  %683 = vmatpush1.xpose.msra.mxu0 0.0
  %684 = vmatprep.subr.mxu0 0.0
  %685 = vmatpush1.xpose.msra.mxu0 0.0
  %686 = vmatprep.subr.mxu0 0.0
  %687 = vmatpush1.xpose.msra.mxu0 0.0
  %688 = vmatprep.subr.mxu0 0.0
  %689 = vmatpush1.xpose.msra.mxu0 0.0
  %690 = vmatprep.subr.mxu0 0.0
  %691 = vmatpush1.xpose.msra.mxu0 0.0
  %692 = vmatprep.subr.mxu0 0.0
  %693 = vmatpush1.xpose.msra.mxu0 0.0
  %694 = vmatprep.subr.mxu0 0.0
  %695 = vmatpush1.xpose.msra.mxu0 0.0
  %696 = vmatprep.mubr.f32.mxu0 0.0
  %697 = vmatmul.mubr.f32.gmra.mrb[0].mxu0 %v628
  %v698 = vpop.f32.mrb[0].mxu0
  %v699 = vadd.f32 0.0, %v698
  %v700 = vpop.f32.mrb[0].mxu0
  %701 = vdwg.mxu0
  %702 = vrot.lane.b32.xlu0 %v374, 96
  %v703 = vpop.permute.xlu0 %702
  %v704 = vsel %vm399, %v374, 0
  %v706 = vsel %vm399, %v703, 0
  %708 = vmatprep.subr.mxu0 0.0
  %709 = vmatpush1.xpose.msra.mxu0 %v706
  %710 = vmatprep.subr.mxu0 0.0
  %711 = vmatpush1.xpose.msra.mxu0 0.0
  %712 = vmatprep.subr.mxu0 0.0
  %713 = vmatpush1.xpose.msra.mxu0 0.0
  %714 = vmatprep.subr.mxu0 0.0
  %715 = vmatpush1.xpose.msra.mxu0 0.0
  %716 = vmatprep.subr.mxu0 0.0
  %717 = vmatpush1.xpose.msra.mxu0 0.0
  %718 = vmatprep.subr.mxu0 0.0
  %719 = vmatpush1.xpose.msra.mxu0 0.0
  %720 = vmatprep.subr.mxu0 0.0
  %721 = vmatpush1.xpose.msra.mxu0 0.0
  %722 = vmatprep.subr.mxu0 0.0
  %723 = vmatpush1.xpose.msra.mxu0 0.0
  %724 = vmatprep.subr.mxu0 0.0
  %725 = vmatpush1.xpose.msra.mxu0 0.0
  %726 = vmatprep.subr.mxu0 0.0
  %727 = vmatpush1.xpose.msra.mxu0 0.0
  %728 = vmatprep.subr.mxu0 0.0
  %729 = vmatpush1.xpose.msra.mxu0 0.0
  %730 = vmatprep.subr.mxu0 0.0
  %731 = vmatpush1.xpose.msra.mxu0 0.0
  %732 = vmatprep.subr.mxu0 0.0
  %733 = vmatpush1.xpose.msra.mxu0 0.0
  %734 = vmatprep.subr.mxu0 0.0
  %735 = vmatpush1.xpose.msra.mxu0 0.0
  %736 = vmatprep.subr.mxu0 0.0
  %737 = vmatpush1.xpose.msra.mxu0 0.0
  %738 = vmatprep.subr.mxu0 0.0
  %739 = vmatpush1.xpose.msra.mxu0 0.0
  %740 = vmatprep.subr.mxu0 0.0
  %741 = vmatpush1.xpose.msra.mxu0 0.0
  %742 = vmatprep.subr.mxu0 0.0
  %743 = vmatpush1.xpose.msra.mxu0 0.0
  %744 = vmatprep.subr.mxu0 0.0
  %745 = vmatpush1.xpose.msra.mxu0 0.0
  %746 = vmatprep.subr.mxu0 0.0
  %747 = vmatpush1.xpose.msra.mxu0 0.0
  %748 = vmatprep.subr.mxu0 0.0
  %749 = vmatpush1.xpose.msra.mxu0 0.0
  %750 = vmatprep.subr.mxu0 0.0
  %751 = vmatpush1.xpose.msra.mxu0 0.0
  %752 = vmatprep.subr.mxu0 0.0
  %753 = vmatpush1.xpose.msra.mxu0 0.0
  %754 = vmatprep.subr.mxu0 0.0
  %755 = vmatpush1.xpose.msra.mxu0 0.0
  %756 = vmatprep.subr.mxu0 0.0
  %757 = vmatpush1.xpose.msra.mxu0 0.0
  %758 = vmatprep.subr.mxu0 0.0
  %759 = vmatpush1.xpose.msra.mxu0 0.0
  %760 = vmatprep.subr.mxu0 0.0
  %761 = vmatpush1.xpose.msra.mxu0 0.0
  %762 = vmatprep.subr.mxu0 0.0
  %763 = vmatpush1.xpose.msra.mxu0 0.0
  %764 = vmatprep.subr.mxu0 0.0
  %765 = vmatpush1.xpose.msra.mxu0 0.0
  %766 = vmatprep.subr.mxu0 0.0
  %767 = vmatpush1.xpose.msra.mxu0 0.0
  %768 = vmatprep.subr.mxu0 0.0
  %769 = vmatpush1.xpose.msra.mxu0 0.0
  %770 = vmatprep.subr.mxu0 0.0
  %771 = vmatpush1.xpose.msra.mxu0 0.0
  %772 = vmatprep.mubr.f32.mxu0 0.0
  %773 = vmatmul.mubr.f32.gmra.mrb[0].mxu0 %v704
  %v774 = vpop.f32.mrb[0].mxu0
  %v775 = vadd.f32 0.0, %v774
  %v776 = vpop.f32.mrb[0].mxu0
  %777 = vdwg.mxu0
  %778 = vrot.lane.b32.xlu0 %v376, 96
  %v779 = vpop.permute.xlu0 %778
  %v780 = vsel %vm399, %v376, 0
  %v782 = vsel %vm399, %v779, 0
  %784 = vmatprep.subr.mxu0 0.0
  %785 = vmatpush1.xpose.msra.mxu0 %v782
  %786 = vmatprep.subr.mxu0 0.0
  %787 = vmatpush1.xpose.msra.mxu0 0.0
  %788 = vmatprep.subr.mxu0 0.0
  %789 = vmatpush1.xpose.msra.mxu0 0.0
  %790 = vmatprep.subr.mxu0 0.0
  %791 = vmatpush1.xpose.msra.mxu0 0.0
  %792 = vmatprep.subr.mxu0 0.0
  %793 = vmatpush1.xpose.msra.mxu0 0.0
  %794 = vmatprep.subr.mxu0 0.0
  %795 = vmatpush1.xpose.msra.mxu0 0.0
  %796 = vmatprep.subr.mxu0 0.0
  %797 = vmatpush1.xpose.msra.mxu0 0.0
  %798 = vmatprep.subr.mxu0 0.0
  %799 = vmatpush1.xpose.msra.mxu0 0.0
  %800 = vmatprep.subr.mxu0 0.0
  %801 = vmatpush1.xpose.msra.mxu0 0.0
  %802 = vmatprep.subr.mxu0 0.0
  %803 = vmatpush1.xpose.msra.mxu0 0.0
  %804 = vmatprep.subr.mxu0 0.0
  %805 = vmatpush1.xpose.msra.mxu0 0.0
  %806 = vmatprep.subr.mxu0 0.0
  %807 = vmatpush1.xpose.msra.mxu0 0.0
  %808 = vmatprep.subr.mxu0 0.0
  %809 = vmatpush1.xpose.msra.mxu0 0.0
  %810 = vmatprep.subr.mxu0 0.0
  %811 = vmatpush1.xpose.msra.mxu0 0.0
  %812 = vmatprep.subr.mxu0 0.0
  %813 = vmatpush1.xpose.msra.mxu0 0.0
  %814 = vmatprep.subr.mxu0 0.0
  %815 = vmatpush1.xpose.msra.mxu0 0.0
  %816 = vmatprep.subr.mxu0 0.0
  %817 = vmatpush1.xpose.msra.mxu0 0.0
  %818 = vmatprep.subr.mxu0 0.0
  %819 = vmatpush1.xpose.msra.mxu0 0.0
  %820 = vmatprep.subr.mxu0 0.0
  %821 = vmatpush1.xpose.msra.mxu0 0.0
  %822 = vmatprep.subr.mxu0 0.0
  %823 = vmatpush1.xpose.msra.mxu0 0.0
  %824 = vmatprep.subr.mxu0 0.0
  %825 = vmatpush1.xpose.msra.mxu0 0.0
  %826 = vmatprep.subr.mxu0 0.0
  %827 = vmatpush1.xpose.msra.mxu0 0.0
  %828 = vmatprep.subr.mxu0 0.0
  %829 = vmatpush1.xpose.msra.mxu0 0.0
  %830 = vmatprep.subr.mxu0 0.0
  %831 = vmatpush1.xpose.msra.mxu0 0.0
  %832 = vmatprep.subr.mxu0 0.0
  %833 = vmatpush1.xpose.msra.mxu0 0.0
  %834 = vmatprep.subr.mxu0 0.0
  %835 = vmatpush1.xpose.msra.mxu0 0.0
  %836 = vmatprep.subr.mxu0 0.0
  %837 = vmatpush1.xpose.msra.mxu0 0.0
  %838 = vmatprep.subr.mxu0 0.0
  %839 = vmatpush1.xpose.msra.mxu0 0.0
  %840 = vmatprep.subr.mxu0 0.0
  %841 = vmatpush1.xpose.msra.mxu0 0.0
  %842 = vmatprep.subr.mxu0 0.0
  %843 = vmatpush1.xpose.msra.mxu0 0.0
  %844 = vmatprep.subr.mxu0 0.0
  %845 = vmatpush1.xpose.msra.mxu0 0.0
  %846 = vmatprep.subr.mxu0 0.0
  %847 = vmatpush1.xpose.msra.mxu0 0.0
  %848 = vmatprep.mubr.f32.mxu0 0.0
  %849 = vmatmul.mubr.f32.gmra.mrb[0].mxu0 %v780
  %v850 = vpop.f32.mrb[0].mxu0
  %v851 = vadd.f32 0.0, %v850
  %v852 = vpop.f32.mrb[0].mxu0
  %853 = vdwg.mxu0
  %854 = vrot.lane.b32.xlu0 %v378, 96
  %v855 = vpop.permute.xlu0 %854
  %v856 = vsel %vm399, %v378, 0
  %v858 = vsel %vm399, %v855, 0
  %860 = vmatprep.subr.mxu0 0.0
  %861 = vmatpush1.xpose.msra.mxu0 %v858
  %862 = vmatprep.subr.mxu0 0.0
  %863 = vmatpush1.xpose.msra.mxu0 0.0
  %864 = vmatprep.subr.mxu0 0.0
  %865 = vmatpush1.xpose.msra.mxu0 0.0
  %866 = vmatprep.subr.mxu0 0.0
  %867 = vmatpush1.xpose.msra.mxu0 0.0
  %868 = vmatprep.subr.mxu0 0.0
  %869 = vmatpush1.xpose.msra.mxu0 0.0
  %870 = vmatprep.subr.mxu0 0.0
  %871 = vmatpush1.xpose.msra.mxu0 0.0
  %872 = vmatprep.subr.mxu0 0.0
  %873 = vmatpush1.xpose.msra.mxu0 0.0
  %874 = vmatprep.subr.mxu0 0.0
  %875 = vmatpush1.xpose.msra.mxu0 0.0
  %876 = vmatprep.subr.mxu0 0.0
  %877 = vmatpush1.xpose.msra.mxu0 0.0
  %878 = vmatprep.subr.mxu0 0.0
  %879 = vmatpush1.xpose.msra.mxu0 0.0
  %880 = vmatprep.subr.mxu0 0.0
  %881 = vmatpush1.xpose.msra.mxu0 0.0
  %882 = vmatprep.subr.mxu0 0.0
  %883 = vmatpush1.xpose.msra.mxu0 0.0
  %884 = vmatprep.subr.mxu0 0.0
  %885 = vmatpush1.xpose.msra.mxu0 0.0
  %886 = vmatprep.subr.mxu0 0.0
  %887 = vmatpush1.xpose.msra.mxu0 0.0
  %888 = vmatprep.subr.mxu0 0.0
  %889 = vmatpush1.xpose.msra.mxu0 0.0
  %890 = vmatprep.subr.mxu0 0.0
  %891 = vmatpush1.xpose.msra.mxu0 0.0
  %892 = vmatprep.subr.mxu0 0.0
  %893 = vmatpush1.xpose.msra.mxu0 0.0
  %894 = vmatprep.subr.mxu0 0.0
  %895 = vmatpush1.xpose.msra.mxu0 0.0
  %896 = vmatprep.subr.mxu0 0.0
  %897 = vmatpush1.xpose.msra.mxu0 0.0
  %898 = vmatprep.subr.mxu0 0.0
  %899 = vmatpush1.xpose.msra.mxu0 0.0
  %900 = vmatprep.subr.mxu0 0.0
  %901 = vmatpush1.xpose.msra.mxu0 0.0
  %902 = vmatprep.subr.mxu0 0.0
  %903 = vmatpush1.xpose.msra.mxu0 0.0
  %904 = vmatprep.subr.mxu0 0.0
  %905 = vmatpush1.xpose.msra.mxu0 0.0
  %906 = vmatprep.subr.mxu0 0.0
  %907 = vmatpush1.xpose.msra.mxu0 0.0
  %908 = vmatprep.subr.mxu0 0.0
  %909 = vmatpush1.xpose.msra.mxu0 0.0
  %910 = vmatprep.subr.mxu0 0.0
  %911 = vmatpush1.xpose.msra.mxu0 0.0
  %912 = vmatprep.subr.mxu0 0.0
  %913 = vmatpush1.xpose.msra.mxu0 0.0
  %914 = vmatprep.subr.mxu0 0.0
  %915 = vmatpush1.xpose.msra.mxu0 0.0
  %916 = vmatprep.subr.mxu0 0.0
  %917 = vmatpush1.xpose.msra.mxu0 0.0
  %918 = vmatprep.subr.mxu0 0.0
  %919 = vmatpush1.xpose.msra.mxu0 0.0
  %920 = vmatprep.subr.mxu0 0.0
  %921 = vmatpush1.xpose.msra.mxu0 0.0
  %922 = vmatprep.subr.mxu0 0.0
  %923 = vmatpush1.xpose.msra.mxu0 0.0
  %924 = vmatprep.mubr.f32.mxu0 0.0
  %925 = vmatmul.mubr.f32.gmra.mrb[0].mxu0 %v856
  %v926 = vpop.f32.mrb[0].mxu0
  %v927 = vadd.f32 0.0, %v926
  %v928 = vpop.f32.mrb[0].mxu0
  %929 = vdwg.mxu0
  %930 = vrot.lane.b32.xlu0 %v380, 96
  %v931 = vpop.permute.xlu0 %930
  %v932 = vsel %vm399, %v380, 0
  %v934 = vsel %vm399, %v931, 0
  %936 = vmatprep.subr.mxu0 0.0
  %937 = vmatpush1.xpose.msra.mxu0 %v934
  %938 = vmatprep.subr.mxu0 0.0
  %939 = vmatpush1.xpose.msra.mxu0 0.0
  %940 = vmatprep.subr.mxu0 0.0
  %941 = vmatpush1.xpose.msra.mxu0 0.0
  %942 = vmatprep.subr.mxu0 0.0
  %943 = vmatpush1.xpose.msra.mxu0 0.0
  %944 = vmatprep.subr.mxu0 0.0
  %945 = vmatpush1.xpose.msra.mxu0 0.0
  %946 = vmatprep.subr.mxu0 0.0
  %947 = vmatpush1.xpose.msra.mxu0 0.0
  %948 = vmatprep.subr.mxu0 0.0
  %949 = vmatpush1.xpose.msra.mxu0 0.0
  %950 = vmatprep.subr.mxu0 0.0
  %951 = vmatpush1.xpose.msra.mxu0 0.0
  %952 = vmatprep.subr.mxu0 0.0
  %953 = vmatpush1.xpose.msra.mxu0 0.0
  %954 = vmatprep.subr.mxu0 0.0
  %955 = vmatpush1.xpose.msra.mxu0 0.0
  %956 = vmatprep.subr.mxu0 0.0
  %957 = vmatpush1.xpose.msra.mxu0 0.0
  %958 = vmatprep.subr.mxu0 0.0
  %959 = vmatpush1.xpose.msra.mxu0 0.0
  %960 = vmatprep.subr.mxu0 0.0
  %961 = vmatpush1.xpose.msra.mxu0 0.0
  %962 = vmatprep.subr.mxu0 0.0
  %963 = vmatpush1.xpose.msra.mxu0 0.0
  %964 = vmatprep.subr.mxu0 0.0
  %965 = vmatpush1.xpose.msra.mxu0 0.0
  %966 = vmatprep.subr.mxu0 0.0
  %967 = vmatpush1.xpose.msra.mxu0 0.0
  %968 = vmatprep.subr.mxu0 0.0
  %969 = vmatpush1.xpose.msra.mxu0 0.0
  %970 = vmatprep.subr.mxu0 0.0
  %971 = vmatpush1.xpose.msra.mxu0 0.0
  %972 = vmatprep.subr.mxu0 0.0
  %973 = vmatpush1.xpose.msra.mxu0 0.0
  %974 = vmatprep.subr.mxu0 0.0
  %975 = vmatpush1.xpose.msra.mxu0 0.0
  %976 = vmatprep.subr.mxu0 0.0
  %977 = vmatpush1.xpose.msra.mxu0 0.0
  %978 = vmatprep.subr.mxu0 0.0
  %979 = vmatpush1.xpose.msra.mxu0 0.0
  %980 = vmatprep.subr.mxu0 0.0
  %981 = vmatpush1.xpose.msra.mxu0 0.0
  %982 = vmatprep.subr.mxu0 0.0
  %983 = vmatpush1.xpose.msra.mxu0 0.0
  %984 = vmatprep.subr.mxu0 0.0
  %985 = vmatpush1.xpose.msra.mxu0 0.0
  %986 = vmatprep.subr.mxu0 0.0
  %987 = vmatpush1.xpose.msra.mxu0 0.0
  %988 = vmatprep.subr.mxu0 0.0
  %989 = vmatpush1.xpose.msra.mxu0 0.0
  %990 = vmatprep.subr.mxu0 0.0
  %991 = vmatpush1.xpose.msra.mxu0 0.0
  %992 = vmatprep.subr.mxu0 0.0
  %993 = vmatpush1.xpose.msra.mxu0 0.0
  %994 = vmatprep.subr.mxu0 0.0
  %995 = vmatpush1.xpose.msra.mxu0 0.0
  %996 = vmatprep.subr.mxu0 0.0
  %997 = vmatpush1.xpose.msra.mxu0 0.0
  %998 = vmatprep.subr.mxu0 0.0
  %999 = vmatpush1.xpose.msra.mxu0 0.0
  %1000 = vmatprep.mubr.f32.mxu0 0.0
  %1001 = vmatmul.mubr.f32.gmra.mrb[0].mxu0 %v932
  %v1002 = vpop.f32.mrb[0].mxu0
  %v1003 = vadd.f32 0.0, %v1002
  %v1004 = vpop.f32.mrb[0].mxu0
  %1005 = vdwg.mxu0
  %1006 = vrot.lane.b32.xlu0 %v382, 96
  %v1007 = vpop.permute.xlu0 %1006
  %v1008 = vsel %vm399, %v382, 0
  %v1010 = vsel %vm399, %v1007, 0
  %1012 = vmatprep.subr.mxu0 0.0
  %1013 = vmatpush1.xpose.msra.mxu0 %v1010
  %1014 = vmatprep.subr.mxu0 0.0
  %1015 = vmatpush1.xpose.msra.mxu0 0.0
  %1016 = vmatprep.subr.mxu0 0.0
  %1017 = vmatpush1.xpose.msra.mxu0 0.0
  %1018 = vmatprep.subr.mxu0 0.0
  %1019 = vmatpush1.xpose.msra.mxu0 0.0
  %1020 = vmatprep.subr.mxu0 0.0
  %1021 = vmatpush1.xpose.msra.mxu0 0.0
  %1022 = vmatprep.subr.mxu0 0.0
  %1023 = vmatpush1.xpose.msra.mxu0 0.0
  %1024 = vmatprep.subr.mxu0 0.0
  %1025 = vmatpush1.xpose.msra.mxu0 0.0
  %1026 = vmatprep.subr.mxu0 0.0
  %1027 = vmatpush1.xpose.msra.mxu0 0.0
  %1028 = vmatprep.subr.mxu0 0.0
  %1029 = vmatpush1.xpose.msra.mxu0 0.0
  %1030 = vmatprep.subr.mxu0 0.0
  %1031 = vmatpush1.xpose.msra.mxu0 0.0
  %1032 = vmatprep.subr.mxu0 0.0
  %1033 = vmatpush1.xpose.msra.mxu0 0.0
  %1034 = vmatprep.subr.mxu0 0.0
  %1035 = vmatpush1.xpose.msra.mxu0 0.0
  %1036 = vmatprep.subr.mxu0 0.0
  %1037 = vmatpush1.xpose.msra.mxu0 0.0
  %1038 = vmatprep.subr.mxu0 0.0
  %1039 = vmatpush1.xpose.msra.mxu0 0.0
  %1040 = vmatprep.subr.mxu0 0.0
  %1041 = vmatpush1.xpose.msra.mxu0 0.0
  %1042 = vmatprep.subr.mxu0 0.0
  %1043 = vmatpush1.xpose.msra.mxu0 0.0
  %1044 = vmatprep.subr.mxu0 0.0
  %1045 = vmatpush1.xpose.msra.mxu0 0.0
  %1046 = vmatprep.subr.mxu0 0.0
  %1047 = vmatpush1.xpose.msra.mxu0 0.0
  %1048 = vmatprep.subr.mxu0 0.0
  %1049 = vmatpush1.xpose.msra.mxu0 0.0
  %1050 = vmatprep.subr.mxu0 0.0
  %1051 = vmatpush1.xpose.msra.mxu0 0.0
  %1052 = vmatprep.subr.mxu0 0.0
  %1053 = vmatpush1.xpose.msra.mxu0 0.0
  %1054 = vmatprep.subr.mxu0 0.0
  %1055 = vmatpush1.xpose.msra.mxu0 0.0
  %1056 = vmatprep.subr.mxu0 0.0
  %1057 = vmatpush1.xpose.msra.mxu0 0.0
  %1058 = vmatprep.subr.mxu0 0.0
  %1059 = vmatpush1.xpose.msra.mxu0 0.0
  %1060 = vmatprep.subr.mxu0 0.0
  %1061 = vmatpush1.xpose.msra.mxu0 0.0
  %1062 = vmatprep.subr.mxu0 0.0
  %1063 = vmatpush1.xpose.msra.mxu0 0.0
  %1064 = vmatprep.subr.mxu0 0.0
  %1065 = vmatpush1.xpose.msra.mxu0 0.0
  %1066 = vmatprep.subr.mxu0 0.0
  %1067 = vmatpush1.xpose.msra.mxu0 0.0
  %1068 = vmatprep.subr.mxu0 0.0
  %1069 = vmatpush1.xpose.msra.mxu0 0.0
  %1070 = vmatprep.subr.mxu0 0.0
  %1071 = vmatpush1.xpose.msra.mxu0 0.0
  %1072 = vmatprep.subr.mxu0 0.0
  %1073 = vmatpush1.xpose.msra.mxu0 0.0
  %1074 = vmatprep.subr.mxu0 0.0
  %1075 = vmatpush1.xpose.msra.mxu0 0.0
  %1076 = vmatprep.mubr.f32.mxu0 0.0
  %1077 = vmatmul.mubr.f32.gmra.mrb[0].mxu0 %v1008
  %v1078 = vpop.f32.mrb[0].mxu0
  %v1079 = vadd.f32 0.0, %v1078
  %v1080 = vpop.f32.mrb[0].mxu0
  %1081 = vdwg.mxu0
  %1082 = vrot.lane.b32.xlu0 %v384, 96
  %v1083 = vpop.permute.xlu0 %1082
  %v1084 = vsel %vm399, %v384, 0
  %v1086 = vsel %vm399, %v1083, 0
  %1088 = vmatprep.subr.mxu0 0.0
  %1089 = vmatpush1.xpose.msra.mxu0 %v1086
  %1090 = vmatprep.subr.mxu0 0.0
  %1091 = vmatpush1.xpose.msra.mxu0 0.0
  %1092 = vmatprep.subr.mxu0 0.0
  %1093 = vmatpush1.xpose.msra.mxu0 0.0
  %1094 = vmatprep.subr.mxu0 0.0
  %1095 = vmatpush1.xpose.msra.mxu0 0.0
  %1096 = vmatprep.subr.mxu0 0.0
  %1097 = vmatpush1.xpose.msra.mxu0 0.0
  %1098 = vmatprep.subr.mxu0 0.0
  %1099 = vmatpush1.xpose.msra.mxu0 0.0
  %1100 = vmatprep.subr.mxu0 0.0
  %1101 = vmatpush1.xpose.msra.mxu0 0.0
  %1102 = vmatprep.subr.mxu0 0.0
  %1103 = vmatpush1.xpose.msra.mxu0 0.0
  %1104 = vmatprep.subr.mxu0 0.0
  %1105 = vmatpush1.xpose.msra.mxu0 0.0
  %1106 = vmatprep.subr.mxu0 0.0
  %1107 = vmatpush1.xpose.msra.mxu0 0.0
  %1108 = vmatprep.subr.mxu0 0.0
  %1109 = vmatpush1.xpose.msra.mxu0 0.0
  %1110 = vmatprep.subr.mxu0 0.0
  %1111 = vmatpush1.xpose.msra.mxu0 0.0
  %1112 = vmatprep.subr.mxu0 0.0
  %1113 = vmatpush1.xpose.msra.mxu0 0.0
  %1114 = vmatprep.subr.mxu0 0.0
  %1115 = vmatpush1.xpose.msra.mxu0 0.0
  %1116 = vmatprep.subr.mxu0 0.0
  %1117 = vmatpush1.xpose.msra.mxu0 0.0
  %1118 = vmatprep.subr.mxu0 0.0
  %1119 = vmatpush1.xpose.msra.mxu0 0.0
  %1120 = vmatprep.subr.mxu0 0.0
  %1121 = vmatpush1.xpose.msra.mxu0 0.0
  %1122 = vmatprep.subr.mxu0 0.0
  %1123 = vmatpush1.xpose.msra.mxu0 0.0
  %1124 = vmatprep.subr.mxu0 0.0
  %1125 = vmatpush1.xpose.msra.mxu0 0.0
  %1126 = vmatprep.subr.mxu0 0.0
  %1127 = vmatpush1.xpose.msra.mxu0 0.0
  %1128 = vmatprep.subr.mxu0 0.0
  %1129 = vmatpush1.xpose.msra.mxu0 0.0
  %1130 = vmatprep.subr.mxu0 0.0
  %1131 = vmatpush1.xpose.msra.mxu0 0.0
  %1132 = vmatprep.subr.mxu0 0.0
  %1133 = vmatpush1.xpose.msra.mxu0 0.0
  %1134 = vmatprep.subr.mxu0 0.0
  %1135 = vmatpush1.xpose.msra.mxu0 0.0
  %1136 = vmatprep.subr.mxu0 0.0
  %1137 = vmatpush1.xpose.msra.mxu0 0.0
  %1138 = vmatprep.subr.mxu0 0.0
  %1139 = vmatpush1.xpose.msra.mxu0 0.0
  %1140 = vmatprep.subr.mxu0 0.0
  %1141 = vmatpush1.xpose.msra.mxu0 0.0
  %1142 = vmatprep.subr.mxu0 0.0
  %1143 = vmatpush1.xpose.msra.mxu0 0.0
  %1144 = vmatprep.subr.mxu0 0.0
  %1145 = vmatpush1.xpose.msra.mxu0 0.0
  %1146 = vmatprep.subr.mxu0 0.0
  %1147 = vmatpush1.xpose.msra.mxu0 0.0
  %1148 = vmatprep.subr.mxu0 0.0
  %1149 = vmatpush1.xpose.msra.mxu0 0.0
  %1150 = vmatprep.subr.mxu0 0.0
  %1151 = vmatpush1.xpose.msra.mxu0 0.0
  %1152 = vmatprep.mubr.f32.mxu0 0.0
  %1153 = vmatmul.mubr.f32.gmra.mrb[0].mxu0 %v1084
  %v1154 = vpop.f32.mrb[0].mxu0
  %v1155 = vadd.f32 0.0, %v1154
  %v1156 = vpop.f32.mrb[0].mxu0
  %1157 = vdwg.mxu0
  %1158 = vrot.lane.b32.xlu0 %v386, 96
  %v1159 = vpop.permute.xlu0 %1158
  %v1160 = vsel %vm399, %v386, 0
  %v1162 = vsel %vm399, %v1159, 0
  %1164 = vmatprep.subr.mxu0 0.0
  %1165 = vmatpush1.xpose.msra.mxu0 %v1162
  %1166 = vmatprep.subr.mxu0 0.0
  %1167 = vmatpush1.xpose.msra.mxu0 0.0
  %1168 = vmatprep.subr.mxu0 0.0
  %1169 = vmatpush1.xpose.msra.mxu0 0.0
  %1170 = vmatprep.subr.mxu0 0.0
  %1171 = vmatpush1.xpose.msra.mxu0 0.0
  %1172 = vmatprep.subr.mxu0 0.0
  %1173 = vmatpush1.xpose.msra.mxu0 0.0
  %1174 = vmatprep.subr.mxu0 0.0
  %1175 = vmatpush1.xpose.msra.mxu0 0.0
  %1176 = vmatprep.subr.mxu0 0.0
  %1177 = vmatpush1.xpose.msra.mxu0 0.0
  %1178 = vmatprep.subr.mxu0 0.0
  %1179 = vmatpush1.xpose.msra.mxu0 0.0
  %1180 = vmatprep.subr.mxu0 0.0
  %1181 = vmatpush1.xpose.msra.mxu0 0.0
  %1182 = vmatprep.subr.mxu0 0.0
  %1183 = vmatpush1.xpose.msra.mxu0 0.0
  %1184 = vmatprep.subr.mxu0 0.0
  %1185 = vmatpush1.xpose.msra.mxu0 0.0
  %1186 = vmatprep.subr.mxu0 0.0
  %1187 = vmatpush1.xpose.msra.mxu0 0.0
  %1188 = vmatprep.subr.mxu0 0.0
  %1189 = vmatpush1.xpose.msra.mxu0 0.0
  %1190 = vmatprep.subr.mxu0 0.0
  %1191 = vmatpush1.xpose.msra.mxu0 0.0
  %1192 = vmatprep.subr.mxu0 0.0
  %1193 = vmatpush1.xpose.msra.mxu0 0.0
  %1194 = vmatprep.subr.mxu0 0.0
  %1195 = vmatpush1.xpose.msra.mxu0 0.0
  %1196 = vmatprep.subr.mxu0 0.0
  %1197 = vmatpush1.xpose.msra.mxu0 0.0
  %1198 = vmatprep.subr.mxu0 0.0
  %1199 = vmatpush1.xpose.msra.mxu0 0.0
  %1200 = vmatprep.subr.mxu0 0.0
  %1201 = vmatpush1.xpose.msra.mxu0 0.0
  %1202 = vmatprep.subr.mxu0 0.0
  %1203 = vmatpush1.xpose.msra.mxu0 0.0
  %1204 = vmatprep.subr.mxu0 0.0
  %1205 = vmatpush1.xpose.msra.mxu0 0.0
  %1206 = vmatprep.subr.mxu0 0.0
  %1207 = vmatpush1.xpose.msra.mxu0 0.0
  %1208 = vmatprep.subr.mxu0 0.0
  %1209 = vmatpush1.xpose.msra.mxu0 0.0
  %1210 = vmatprep.subr.mxu0 0.0
  %1211 = vmatpush1.xpose.msra.mxu0 0.0
  %1212 = vmatprep.subr.mxu0 0.0
  %1213 = vmatpush1.xpose.msra.mxu0 0.0
  %1214 = vmatprep.subr.mxu0 0.0
  %1215 = vmatpush1.xpose.msra.mxu0 0.0
  %1216 = vmatprep.subr.mxu0 0.0
  %1217 = vmatpush1.xpose.msra.mxu0 0.0
  %1218 = vmatprep.subr.mxu0 0.0
  %1219 = vmatpush1.xpose.msra.mxu0 0.0
  %1220 = vmatprep.subr.mxu0 0.0
  %1221 = vmatpush1.xpose.msra.mxu0 0.0
  %1222 = vmatprep.subr.mxu0 0.0
  %1223 = vmatpush1.xpose.msra.mxu0 0.0
  %1224 = vmatprep.subr.mxu0 0.0
  %1225 = vmatpush1.xpose.msra.mxu0 0.0
  %1226 = vmatprep.subr.mxu0 0.0
  %1227 = vmatpush1.xpose.msra.mxu0 0.0
  %1228 = vmatprep.mubr.f32.mxu0 0.0
  %1229 = vmatmul.mubr.f32.gmra.mrb[0].mxu0 %v1160
  %v1230 = vpop.f32.mrb[0].mxu0
  %v1231 = vadd.f32 0.0, %v1230
  %v1232 = vpop.f32.mrb[0].mxu0
  %1233 = vdwg.mxu0
  %1234 = vrot.lane.b32.xlu0 %v388, 96
  %v1235 = vpop.permute.xlu0 %1234
  %v1236 = vsel %vm399, %v388, 0
  %v1238 = vsel %vm399, %v1235, 0
  %1240 = vmatprep.subr.mxu0 0.0
  %1241 = vmatpush1.xpose.msra.mxu0 %v1238
  %1242 = vmatprep.subr.mxu0 0.0
  %1243 = vmatpush1.xpose.msra.mxu0 0.0
  %1244 = vmatprep.subr.mxu0 0.0
  %1245 = vmatpush1.xpose.msra.mxu0 0.0
  %1246 = vmatprep.subr.mxu0 0.0
  %1247 = vmatpush1.xpose.msra.mxu0 0.0
  %1248 = vmatprep.subr.mxu0 0.0
  %1249 = vmatpush1.xpose.msra.mxu0 0.0
  %1250 = vmatprep.subr.mxu0 0.0
  %1251 = vmatpush1.xpose.msra.mxu0 0.0
  %1252 = vmatprep.subr.mxu0 0.0
  %1253 = vmatpush1.xpose.msra.mxu0 0.0
  %1254 = vmatprep.subr.mxu0 0.0
  %1255 = vmatpush1.xpose.msra.mxu0 0.0
  %1256 = vmatprep.subr.mxu0 0.0
  %1257 = vmatpush1.xpose.msra.mxu0 0.0
  %1258 = vmatprep.subr.mxu0 0.0
  %1259 = vmatpush1.xpose.msra.mxu0 0.0
  %1260 = vmatprep.subr.mxu0 0.0
  %1261 = vmatpush1.xpose.msra.mxu0 0.0
  %1262 = vmatprep.subr.mxu0 0.0
  %1263 = vmatpush1.xpose.msra.mxu0 0.0
  %1264 = vmatprep.subr.mxu0 0.0
  %1265 = vmatpush1.xpose.msra.mxu0 0.0
  %1266 = vmatprep.subr.mxu0 0.0
  %1267 = vmatpush1.xpose.msra.mxu0 0.0
  %1268 = vmatprep.subr.mxu0 0.0
  %1269 = vmatpush1.xpose.msra.mxu0 0.0
  %1270 = vmatprep.subr.mxu0 0.0
  %1271 = vmatpush1.xpose.msra.mxu0 0.0
  %1272 = vmatprep.subr.mxu0 0.0
  %1273 = vmatpush1.xpose.msra.mxu0 0.0
  %1274 = vmatprep.subr.mxu0 0.0
  %1275 = vmatpush1.xpose.msra.mxu0 0.0
  %1276 = vmatprep.subr.mxu0 0.0
  %1277 = vmatpush1.xpose.msra.mxu0 0.0
  %1278 = vmatprep.subr.mxu0 0.0
  %1279 = vmatpush1.xpose.msra.mxu0 0.0
  %1280 = vmatprep.subr.mxu0 0.0
  %1281 = vmatpush1.xpose.msra.mxu0 0.0
  %1282 = vmatprep.subr.mxu0 0.0
  %1283 = vmatpush1.xpose.msra.mxu0 0.0
  %1284 = vmatprep.subr.mxu0 0.0
  %1285 = vmatpush1.xpose.msra.mxu0 0.0
  %1286 = vmatprep.subr.mxu0 0.0
  %1287 = vmatpush1.xpose.msra.mxu0 0.0
  %1288 = vmatprep.subr.mxu0 0.0
  %1289 = vmatpush1.xpose.msra.mxu0 0.0
  %1290 = vmatprep.subr.mxu0 0.0
  %1291 = vmatpush1.xpose.msra.mxu0 0.0
  %1292 = vmatprep.subr.mxu0 0.0
  %1293 = vmatpush1.xpose.msra.mxu0 0.0
  %1294 = vmatprep.subr.mxu0 0.0
  %1295 = vmatpush1.xpose.msra.mxu0 0.0
  %1296 = vmatprep.subr.mxu0 0.0
  %1297 = vmatpush1.xpose.msra.mxu0 0.0
  %1298 = vmatprep.subr.mxu0 0.0
  %1299 = vmatpush1.xpose.msra.mxu0 0.0
  %1300 = vmatprep.subr.mxu0 0.0
  %1301 = vmatpush1.xpose.msra.mxu0 0.0
  %1302 = vmatprep.subr.mxu0 0.0
  %1303 = vmatpush1.xpose.msra.mxu0 0.0
  %1304 = vmatprep.mubr.f32.mxu0 0.0
  %1305 = vmatmul.mubr.f32.gmra.mrb[0].mxu0 %v1236
  %v1306 = vpop.f32.mrb[0].mxu0
  %v1307 = vadd.f32 0.0, %v1306
  %v1308 = vpop.f32.mrb[0].mxu0
  %1309 = vdwg.mxu0
  %1310 = vrot.lane.b32.xlu0 %v390, 96
  %v1311 = vpop.permute.xlu0 %1310
  %v1312 = vsel %vm399, %v390, 0
  %v1314 = vsel %vm399, %v1311, 0
  %1316 = vmatprep.subr.mxu0 0.0
  %1317 = vmatpush1.xpose.msra.mxu0 %v1314
  %1318 = vmatprep.subr.mxu0 0.0
  %1319 = vmatpush1.xpose.msra.mxu0 0.0
  %1320 = vmatprep.subr.mxu0 0.0
  %1321 = vmatpush1.xpose.msra.mxu0 0.0
  %1322 = vmatprep.subr.mxu0 0.0
  %1323 = vmatpush1.xpose.msra.mxu0 0.0
  %1324 = vmatprep.subr.mxu0 0.0
  %1325 = vmatpush1.xpose.msra.mxu0 0.0
  %1326 = vmatprep.subr.mxu0 0.0
  %1327 = vmatpush1.xpose.msra.mxu0 0.0
  %1328 = vmatprep.subr.mxu0 0.0
  %1329 = vmatpush1.xpose.msra.mxu0 0.0
  %1330 = vmatprep.subr.mxu0 0.0
  %1331 = vmatpush1.xpose.msra.mxu0 0.0
  %1332 = vmatprep.subr.mxu0 0.0
  %1333 = vmatpush1.xpose.msra.mxu0 0.0
  %1334 = vmatprep.subr.mxu0 0.0
  %1335 = vmatpush1.xpose.msra.mxu0 0.0
  %1336 = vmatprep.subr.mxu0 0.0
  %1337 = vmatpush1.xpose.msra.mxu0 0.0
  %1338 = vmatprep.subr.mxu0 0.0
  %1339 = vmatpush1.xpose.msra.mxu0 0.0
  %1340 = vmatprep.subr.mxu0 0.0
  %1341 = vmatpush1.xpose.msra.mxu0 0.0
  %1342 = vmatprep.subr.mxu0 0.0
  %1343 = vmatpush1.xpose.msra.mxu0 0.0
  %1344 = vmatprep.subr.mxu0 0.0
  %1345 = vmatpush1.xpose.msra.mxu0 0.0
  %1346 = vmatprep.subr.mxu0 0.0
  %1347 = vmatpush1.xpose.msra.mxu0 0.0
  %1348 = vmatprep.subr.mxu0 0.0
  %1349 = vmatpush1.xpose.msra.mxu0 0.0
  %1350 = vmatprep.subr.mxu0 0.0
  %1351 = vmatpush1.xpose.msra.mxu0 0.0
  %1352 = vmatprep.subr.mxu0 0.0
  %1353 = vmatpush1.xpose.msra.mxu0 0.0
  %1354 = vmatprep.subr.mxu0 0.0
  %1355 = vmatpush1.xpose.msra.mxu0 0.0
  %1356 = vmatprep.subr.mxu0 0.0
  %1357 = vmatpush1.xpose.msra.mxu0 0.0
  %1358 = vmatprep.subr.mxu0 0.0
  %1359 = vmatpush1.xpose.msra.mxu0 0.0
  %1360 = vmatprep.subr.mxu0 0.0
  %1361 = vmatpush1.xpose.msra.mxu0 0.0
  %1362 = vmatprep.subr.mxu0 0.0
  %1363 = vmatpush1.xpose.msra.mxu0 0.0
  %1364 = vmatprep.subr.mxu0 0.0
  %1365 = vmatpush1.xpose.msra.mxu0 0.0
  %1366 = vmatprep.subr.mxu0 0.0
  %1367 = vmatpush1.xpose.msra.mxu0 0.0
  %1368 = vmatprep.subr.mxu0 0.0
  %1369 = vmatpush1.xpose.msra.mxu0 0.0
  %1370 = vmatprep.subr.mxu0 0.0
  %1371 = vmatpush1.xpose.msra.mxu0 0.0
  %1372 = vmatprep.subr.mxu0 0.0
  %1373 = vmatpush1.xpose.msra.mxu0 0.0
  %1374 = vmatprep.subr.mxu0 0.0
  %1375 = vmatpush1.xpose.msra.mxu0 0.0
  %1376 = vmatprep.subr.mxu0 0.0
  %1377 = vmatpush1.xpose.msra.mxu0 0.0
  %1378 = vmatprep.subr.mxu0 0.0
  %1379 = vmatpush1.xpose.msra.mxu0 0.0
  %1380 = vmatprep.mubr.f32.mxu0 0.0
  %1381 = vmatmul.mubr.f32.gmra.mrb[0].mxu0 %v1312
  %v1382 = vpop.f32.mrb[0].mxu0
  %v1383 = vadd.f32 0.0, %v1382
  %v1384 = vpop.f32.mrb[0].mxu0
  %1385 = vdwg.mxu0
  %1386 = vrot.lane.b32.xlu0 %v392, 96
  %v1387 = vpop.permute.xlu0 %1386
  %v1388 = vsel %vm399, %v392, 0
  %v1390 = vsel %vm399, %v1387, 0
  %1392 = vmatprep.subr.mxu0 0.0
  %1393 = vmatpush1.xpose.msra.mxu0 %v1390
  %1394 = vmatprep.subr.mxu0 0.0
  %1395 = vmatpush1.xpose.msra.mxu0 0.0
  %1396 = vmatprep.subr.mxu0 0.0
  %1397 = vmatpush1.xpose.msra.mxu0 0.0
  %1398 = vmatprep.subr.mxu0 0.0
  %1399 = vmatpush1.xpose.msra.mxu0 0.0
  %1400 = vmatprep.subr.mxu0 0.0
  %1401 = vmatpush1.xpose.msra.mxu0 0.0
  %1402 = vmatprep.subr.mxu0 0.0
  %1403 = vmatpush1.xpose.msra.mxu0 0.0
  %1404 = vmatprep.subr.mxu0 0.0
  %1405 = vmatpush1.xpose.msra.mxu0 0.0
  %1406 = vmatprep.subr.mxu0 0.0
  %1407 = vmatpush1.xpose.msra.mxu0 0.0
  %1408 = vmatprep.subr.mxu0 0.0
  %1409 = vmatpush1.xpose.msra.mxu0 0.0
  %1410 = vmatprep.subr.mxu0 0.0
  %1411 = vmatpush1.xpose.msra.mxu0 0.0
  %1412 = vmatprep.subr.mxu0 0.0
  %1413 = vmatpush1.xpose.msra.mxu0 0.0
  %1414 = vmatprep.subr.mxu0 0.0
  %1415 = vmatpush1.xpose.msra.mxu0 0.0
  %1416 = vmatprep.subr.mxu0 0.0
  %1417 = vmatpush1.xpose.msra.mxu0 0.0
  %1418 = vmatprep.subr.mxu0 0.0
  %1419 = vmatpush1.xpose.msra.mxu0 0.0
  %1420 = vmatprep.subr.mxu0 0.0
  %1421 = vmatpush1.xpose.msra.mxu0 0.0
  %1422 = vmatprep.subr.mxu0 0.0
  %1423 = vmatpush1.xpose.msra.mxu0 0.0
  %1424 = vmatprep.subr.mxu0 0.0
  %1425 = vmatpush1.xpose.msra.mxu0 0.0
  %1426 = vmatprep.subr.mxu0 0.0
  %1427 = vmatpush1.xpose.msra.mxu0 0.0
  %1428 = vmatprep.subr.mxu0 0.0
  %1429 = vmatpush1.xpose.msra.mxu0 0.0
  %1430 = vmatprep.subr.mxu0 0.0
  %1431 = vmatpush1.xpose.msra.mxu0 0.0
  %1432 = vmatprep.subr.mxu0 0.0
  %1433 = vmatpush1.xpose.msra.mxu0 0.0
  %1434 = vmatprep.subr.mxu0 0.0
  %1435 = vmatpush1.xpose.msra.mxu0 0.0
  %1436 = vmatprep.subr.mxu0 0.0
  %1437 = vmatpush1.xpose.msra.mxu0 0.0
  %1438 = vmatprep.subr.mxu0 0.0
  %1439 = vmatpush1.xpose.msra.mxu0 0.0
  %1440 = vmatprep.subr.mxu0 0.0
  %1441 = vmatpush1.xpose.msra.mxu0 0.0
  %1442 = vmatprep.subr.mxu0 0.0
  %1443 = vmatpush1.xpose.msra.mxu0 0.0
  %1444 = vmatprep.subr.mxu0 0.0
  %1445 = vmatpush1.xpose.msra.mxu0 0.0
  %1446 = vmatprep.subr.mxu0 0.0
  %1447 = vmatpush1.xpose.msra.mxu0 0.0
  %1448 = vmatprep.subr.mxu0 0.0
  %1449 = vmatpush1.xpose.msra.mxu0 0.0
  %1450 = vmatprep.subr.mxu0 0.0
  %1451 = vmatpush1.xpose.msra.mxu0 0.0
  %1452 = vmatprep.subr.mxu0 0.0
  %1453 = vmatpush1.xpose.msra.mxu0 0.0
  %1454 = vmatprep.subr.mxu0 0.0
  %1455 = vmatpush1.xpose.msra.mxu0 0.0
  %1456 = vmatprep.mubr.f32.mxu0 0.0
  %1457 = vmatmul.mubr.f32.gmra.mrb[0].mxu0 %v1388
  %v1458 = vpop.f32.mrb[0].mxu0
  %v1459 = vadd.f32 0.0, %v1458
  %v1460 = vpop.f32.mrb[0].mxu0
  %1461 = vdwg.mxu0
  %1462 = vrot.lane.b32.xlu0 %v394, 96
  %v1463 = vpop.permute.xlu0 %1462
  %v1464 = vsel %vm399, %v394, 0
  %v1466 = vsel %vm399, %v1463, 0
  %1468 = vmatprep.subr.mxu0 0.0
  %1469 = vmatpush1.xpose.msra.mxu0 %v1466
  %1470 = vmatprep.subr.mxu0 0.0
  %1471 = vmatpush1.xpose.msra.mxu0 0.0
  %1472 = vmatprep.subr.mxu0 0.0
  %1473 = vmatpush1.xpose.msra.mxu0 0.0
  %1474 = vmatprep.subr.mxu0 0.0
  %1475 = vmatpush1.xpose.msra.mxu0 0.0
  %1476 = vmatprep.subr.mxu0 0.0
  %1477 = vmatpush1.xpose.msra.mxu0 0.0
  %1478 = vmatprep.subr.mxu0 0.0
  %1479 = vmatpush1.xpose.msra.mxu0 0.0
  %1480 = vmatprep.subr.mxu0 0.0
  %1481 = vmatpush1.xpose.msra.mxu0 0.0
  %1482 = vmatprep.subr.mxu0 0.0
  %1483 = vmatpush1.xpose.msra.mxu0 0.0
  %1484 = vmatprep.subr.mxu0 0.0
  %1485 = vmatpush1.xpose.msra.mxu0 0.0
  %1486 = vmatprep.subr.mxu0 0.0
  %1487 = vmatpush1.xpose.msra.mxu0 0.0
  %1488 = vmatprep.subr.mxu0 0.0
  %1489 = vmatpush1.xpose.msra.mxu0 0.0
  %1490 = vmatprep.subr.mxu0 0.0
  %1491 = vmatpush1.xpose.msra.mxu0 0.0
  %1492 = vmatprep.subr.mxu0 0.0
  %1493 = vmatpush1.xpose.msra.mxu0 0.0
  %1494 = vmatprep.subr.mxu0 0.0
  %1495 = vmatpush1.xpose.msra.mxu0 0.0
  %1496 = vmatprep.subr.mxu0 0.0
  %1497 = vmatpush1.xpose.msra.mxu0 0.0
  %1498 = vmatprep.subr.mxu0 0.0
  %1499 = vmatpush1.xpose.msra.mxu0 0.0
  %1500 = vmatprep.subr.mxu0 0.0
  %1501 = vmatpush1.xpose.msra.mxu0 0.0
  %1502 = vmatprep.subr.mxu0 0.0
  %1503 = vmatpush1.xpose.msra.mxu0 0.0
  %1504 = vmatprep.subr.mxu0 0.0
  %1505 = vmatpush1.xpose.msra.mxu0 0.0
  %1506 = vmatprep.subr.mxu0 0.0
  %1507 = vmatpush1.xpose.msra.mxu0 0.0
  %1508 = vmatprep.subr.mxu0 0.0
  %1509 = vmatpush1.xpose.msra.mxu0 0.0
  %1510 = vmatprep.subr.mxu0 0.0
  %1511 = vmatpush1.xpose.msra.mxu0 0.0
  %1512 = vmatprep.subr.mxu0 0.0
  %1513 = vmatpush1.xpose.msra.mxu0 0.0
  %1514 = vmatprep.subr.mxu0 0.0
  %1515 = vmatpush1.xpose.msra.mxu0 0.0
  %1516 = vmatprep.subr.mxu0 0.0
  %1517 = vmatpush1.xpose.msra.mxu0 0.0
  %1518 = vmatprep.subr.mxu0 0.0
  %1519 = vmatpush1.xpose.msra.mxu0 0.0
  %1520 = vmatprep.subr.mxu0 0.0
  %1521 = vmatpush1.xpose.msra.mxu0 0.0
  %1522 = vmatprep.subr.mxu0 0.0
  %1523 = vmatpush1.xpose.msra.mxu0 0.0
  %1524 = vmatprep.subr.mxu0 0.0
  %1525 = vmatpush1.xpose.msra.mxu0 0.0
  %1526 = vmatprep.subr.mxu0 0.0
  %1527 = vmatpush1.xpose.msra.mxu0 0.0
  %1528 = vmatprep.subr.mxu0 0.0
  %1529 = vmatpush1.xpose.msra.mxu0 0.0
  %1530 = vmatprep.subr.mxu0 0.0
  %1531 = vmatpush1.xpose.msra.mxu0 0.0
  %1532 = vmatprep.mubr.f32.mxu0 0.0
  %1533 = vmatmul.mubr.f32.gmra.mrb[0].mxu0 %v1464
  %v1534 = vpop.f32.mrb[0].mxu0
  %v1535 = vadd.f32 0.0, %v1534
  %v1536 = vpop.f32.mrb[0].mxu0
  %1537 = vdwg.mxu0
  %1538 = vrot.lane.b32.xlu0 %v396, 96
  %v1539 = vpop.permute.xlu0 %1538
  %v1540 = vsel %vm399, %v396, 0
  %v1542 = vsel %vm399, %v1539, 0
  %1544 = vmatprep.subr.mxu0 0.0
  %1545 = vmatpush1.xpose.msra.mxu0 %v1542
  %1546 = vmatprep.subr.mxu0 0.0
  %1547 = vmatpush1.xpose.msra.mxu0 0.0
  %1548 = vmatprep.subr.mxu0 0.0
  %1549 = vmatpush1.xpose.msra.mxu0 0.0
  %1550 = vmatprep.subr.mxu0 0.0
  %1551 = vmatpush1.xpose.msra.mxu0 0.0
  %1552 = vmatprep.subr.mxu0 0.0
  %1553 = vmatpush1.xpose.msra.mxu0 0.0
  %1554 = vmatprep.subr.mxu0 0.0
  %1555 = vmatpush1.xpose.msra.mxu0 0.0
  %1556 = vmatprep.subr.mxu0 0.0
  %1557 = vmatpush1.xpose.msra.mxu0 0.0
  %1558 = vmatprep.subr.mxu0 0.0
  %1559 = vmatpush1.xpose.msra.mxu0 0.0
  %1560 = vmatprep.subr.mxu0 0.0
  %1561 = vmatpush1.xpose.msra.mxu0 0.0
  %1562 = vmatprep.subr.mxu0 0.0
  %1563 = vmatpush1.xpose.msra.mxu0 0.0
  %1564 = vmatprep.subr.mxu0 0.0
  %1565 = vmatpush1.xpose.msra.mxu0 0.0
  %1566 = vmatprep.subr.mxu0 0.0
  %1567 = vmatpush1.xpose.msra.mxu0 0.0
  %1568 = vmatprep.subr.mxu0 0.0
  %1569 = vmatpush1.xpose.msra.mxu0 0.0
  %1570 = vmatprep.subr.mxu0 0.0
  %1571 = vmatpush1.xpose.msra.mxu0 0.0
  %1572 = vmatprep.subr.mxu0 0.0
  %1573 = vmatpush1.xpose.msra.mxu0 0.0
  %1574 = vmatprep.subr.mxu0 0.0
  %1575 = vmatpush1.xpose.msra.mxu0 0.0
  %1576 = vmatprep.subr.mxu0 0.0
  %1577 = vmatpush1.xpose.msra.mxu0 0.0
  %1578 = vmatprep.subr.mxu0 0.0
  %1579 = vmatpush1.xpose.msra.mxu0 0.0
  %1580 = vmatprep.subr.mxu0 0.0
  %1581 = vmatpush1.xpose.msra.mxu0 0.0
  %1582 = vmatprep.subr.mxu0 0.0
  %1583 = vmatpush1.xpose.msra.mxu0 0.0
  %1584 = vmatprep.subr.mxu0 0.0
  %1585 = vmatpush1.xpose.msra.mxu0 0.0
  %1586 = vmatprep.subr.mxu0 0.0
  %1587 = vmatpush1.xpose.msra.mxu0 0.0
  %1588 = vmatprep.subr.mxu0 0.0
  %1589 = vmatpush1.xpose.msra.mxu0 0.0
  %1590 = vmatprep.subr.mxu0 0.0
  %1591 = vmatpush1.xpose.msra.mxu0 0.0
  %1592 = vmatprep.subr.mxu0 0.0
  %1593 = vmatpush1.xpose.msra.mxu0 0.0
  %1594 = vmatprep.subr.mxu0 0.0
  %1595 = vmatpush1.xpose.msra.mxu0 0.0
  %1596 = vmatprep.subr.mxu0 0.0
  %1597 = vmatpush1.xpose.msra.mxu0 0.0
  %1598 = vmatprep.subr.mxu0 0.0
  %1599 = vmatpush1.xpose.msra.mxu0 0.0
  %1600 = vmatprep.subr.mxu0 0.0
  %1601 = vmatpush1.xpose.msra.mxu0 0.0
  %1602 = vmatprep.subr.mxu0 0.0
  %1603 = vmatpush1.xpose.msra.mxu0 0.0
  %1604 = vmatprep.subr.mxu0 0.0
  %1605 = vmatpush1.xpose.msra.mxu0 0.0
  %1606 = vmatprep.subr.mxu0 0.0
  %1607 = vmatpush1.xpose.msra.mxu0 0.0
  %1608 = vmatprep.mubr.f32.mxu0 0.0
  %1609 = vmatmul.mubr.f32.gmra.mrb[0].mxu0 %v1540
  %v1610 = vpop.f32.mrb[0].mxu0
  %v1611 = vadd.f32 0.0, %v1610
  %v1612 = vpop.f32.mrb[0].mxu0
  %1613 = vdwg.mxu0
  %v1614 = vlaneseq
  %v1615 = vshrl.u32 %v1614, 7
  %v1616 = vsub.s32 0, %v1615
  %v1617 = vrot.slane %v241, %v1616
  %v1618 = vlaneseq
  %v1619 = vshrl.u32 %v1618, 7
  %v1620 = vsub.s32 0, %v1619
  %v1621 = vrot.slane %v255, %v1620
  %v1622 = vlaneseq
  %v1623 = vshrl.u32 %v1622, 7
  %v1624 = vsub.s32 0, %v1623
  %v1625 = vrot.slane %v263, %v1624
  %v1626 = vlaneseq
  %v1627 = vshrl.u32 %v1626, 7
  %v1628 = vsub.s32 0, %v1627
  %v1629 = vrot.slane %v265, %v1628
  %v1630 = vlaneseq
  %v1631 = vshrl.u32 %v1630, 7
  %v1632 = vsub.s32 0, %v1631
  %v1633 = vrot.slane %v248, %v1632
  %v1634 = vlaneseq
  %v1635 = vshrl.u32 %v1634, 7
  %v1636 = vsub.s32 0, %v1635
  %v1637 = vrot.slane %v262, %v1636
  %v1638 = vlaneseq
  %v1639 = vshrl.u32 %v1638, 7
  %v1640 = vsub.s32 0, %v1639
  %v1641 = vrot.slane %v264, %v1640
  %v1642 = vlaneseq
  %v1643 = vshrl.u32 %v1642, 7
  %v1644 = vsub.s32 0, %v1643
  %v1645 = vrot.slane %v266, %v1644
  %v1654 = vsub.f32 %v471, %v1617
  %v1655 = vsub.f32 %v547, %v1621
  %v1656 = vsub.f32 %v623, %v1625
  %v1657 = vsub.f32 %v699, %v1629
  %v1658 = vsub.f32 %v775, %v1633
  %v1659 = vsub.f32 %v851, %v1637
  %v1660 = vsub.f32 %v927, %v1641
  %v1661 = vsub.f32 %v1003, %v1645
  %v1662 = vsub.f32 %v1079, %v1617
  %v1663 = vsub.f32 %v1155, %v1621
  %v1664 = vsub.f32 %v1231, %v1625
  %v1665 = vsub.f32 %v1307, %v1629
  %v1666 = vsub.f32 %v1383, %v1633
  %v1667 = vsub.f32 %v1459, %v1637
  %v1668 = vsub.f32 %v1535, %v1641
  %v1669 = vsub.f32 %v1611, %v1645
  %v1670 = vsel %vm399, %v1654, -inf
  %1671 = vmax.xlane.f32.xlu0 %v1670
  %v1672 = vpop.xlane.xlu0 %1671
  %v1673 = vsel %vm399, %v1655, -inf
  %1674 = vmax.xlane.f32.xlu0 %v1673
  %v1675 = vpop.xlane.xlu0 %1674
  %v1676 = vsel %vm399, %v1656, -inf
  %1677 = vmax.xlane.f32.xlu0 %v1676
  %v1678 = vpop.xlane.xlu0 %1677
  %v1679 = vsel %vm399, %v1657, -inf
  %1680 = vmax.xlane.f32.xlu0 %v1679
  %v1681 = vpop.xlane.xlu0 %1680
  %v1682 = vsel %vm399, %v1658, -inf
  %1683 = vmax.xlane.f32.xlu0 %v1682
  %v1684 = vpop.xlane.xlu0 %1683
  %v1685 = vsel %vm399, %v1659, -inf
  %1686 = vmax.xlane.f32.xlu0 %v1685
  %v1687 = vpop.xlane.xlu0 %1686
  %v1688 = vsel %vm399, %v1660, -inf
  %1689 = vmax.xlane.f32.xlu0 %v1688
  %v1690 = vpop.xlane.xlu0 %1689
  %v1691 = vsel %vm399, %v1661, -inf
  %1692 = vmax.xlane.f32.xlu0 %v1691
  %v1693 = vpop.xlane.xlu0 %1692
  %v1694 = vsel %vm399, %v1662, -inf
  %1695 = vmax.xlane.f32.xlu0 %v1694
  %v1696 = vpop.xlane.xlu0 %1695
  %v1697 = vsel %vm399, %v1663, -inf
  %1698 = vmax.xlane.f32.xlu0 %v1697
  %v1699 = vpop.xlane.xlu0 %1698
  %v1700 = vsel %vm399, %v1664, -inf
  %1701 = vmax.xlane.f32.xlu0 %v1700
  %v1702 = vpop.xlane.xlu0 %1701
  %v1703 = vsel %vm399, %v1665, -inf
  %1704 = vmax.xlane.f32.xlu0 %v1703
  %v1705 = vpop.xlane.xlu0 %1704
  %v1706 = vsel %vm399, %v1666, -inf
  %1707 = vmax.xlane.f32.xlu0 %v1706
  %v1708 = vpop.xlane.xlu0 %1707
  %v1709 = vsel %vm399, %v1667, -inf
  %1710 = vmax.xlane.f32.xlu0 %v1709
  %v1711 = vpop.xlane.xlu0 %1710
  %v1712 = vsel %vm399, %v1668, -inf
  %1713 = vmax.xlane.f32.xlu0 %v1712
  %v1714 = vpop.xlane.xlu0 %1713
  %v1715 = vsel %vm399, %v1669, -inf
  %1716 = vmax.xlane.f32.xlu0 %v1715
  %v1717 = vpop.xlane.xlu0 %1716
  %v1718 = vsub.f32 %v1654, %v1672
  %v1719 = vsub.f32 %v1655, %v1675
  %v1720 = vsub.f32 %v1656, %v1678
  %v1721 = vsub.f32 %v1657, %v1681
  %v1722 = vsub.f32 %v1658, %v1684
  %v1723 = vsub.f32 %v1659, %v1687
  %v1724 = vsub.f32 %v1660, %v1690
  %v1725 = vsub.f32 %v1661, %v1693
  %v1726 = vsub.f32 %v1662, %v1696
  %v1727 = vsub.f32 %v1663, %v1699
  %v1728 = vsub.f32 %v1664, %v1702
  %v1729 = vsub.f32 %v1665, %v1705
  %v1730 = vsub.f32 %v1666, %v1708
  %v1731 = vsub.f32 %v1667, %v1711
  %v1732 = vsub.f32 %v1668, %v1714
  %v1733 = vsub.f32 %v1669, %v1717
  %v1734 = vmul.f32 %v1718, 1.442695
  %v1735 = vpow.pop %v1734
  %v1736 = vmul.f32 %v1719, 1.442695
  %v1737 = vpow.pop %v1736
  %v1738 = vmul.f32 %v1720, 1.442695
  %v1739 = vpow.pop %v1738
  %v1740 = vmul.f32 %v1721, 1.442695
  %v1741 = vpow.pop %v1740
  %v1742 = vmul.f32 %v1722, 1.442695
  %v1743 = vpow.pop %v1742
  %v1744 = vmul.f32 %v1723, 1.442695
  %v1745 = vpow.pop %v1744
  %v1746 = vmul.f32 %v1724, 1.442695
  %v1747 = vpow.pop %v1746
  %v1748 = vmul.f32 %v1725, 1.442695
  %v1749 = vpow.pop %v1748
  %v1750 = vmul.f32 %v1726, 1.442695
  %v1751 = vpow.pop %v1750
  %v1752 = vmul.f32 %v1727, 1.442695
  %v1753 = vpow.pop %v1752
  %v1754 = vmul.f32 %v1728, 1.442695
  %v1755 = vpow.pop %v1754
  %v1756 = vmul.f32 %v1729, 1.442695
  %v1757 = vpow.pop %v1756
  %v1758 = vmul.f32 %v1730, 1.442695
  %v1759 = vpow.pop %v1758
  %v1760 = vmul.f32 %v1731, 1.442695
  %v1761 = vpow.pop %v1760
  %v1762 = vmul.f32 %v1732, 1.442695
  %v1763 = vpow.pop %v1762
  %v1764 = vmul.f32 %v1733, 1.442695
  %v1765 = vpow.pop %v1764
  %v1766 = vsel %vm399, %v1735, 0.0
  %1767 = vadd.xlane.f32.xlu0 %v1766
  %v1768 = vpop.xlane.xlu0 %1767
  %v1769 = vsel %vm399, %v1737, 0.0
  %1770 = vadd.xlane.f32.xlu0 %v1769
  %v1771 = vpop.xlane.xlu0 %1770
  %v1772 = vsel %vm399, %v1739, 0.0
  %1773 = vadd.xlane.f32.xlu0 %v1772
  %v1774 = vpop.xlane.xlu0 %1773
  %v1775 = vsel %vm399, %v1741, 0.0
  %1776 = vadd.xlane.f32.xlu0 %v1775
  %v1777 = vpop.xlane.xlu0 %1776
  %v1778 = vsel %vm399, %v1743, 0.0
  %1779 = vadd.xlane.f32.xlu0 %v1778
  %v1780 = vpop.xlane.xlu0 %1779
  %v1781 = vsel %vm399, %v1745, 0.0
  %1782 = vadd.xlane.f32.xlu0 %v1781
  %v1783 = vpop.xlane.xlu0 %1782
  %v1784 = vsel %vm399, %v1747, 0.0
  %1785 = vadd.xlane.f32.xlu0 %v1784
  %v1786 = vpop.xlane.xlu0 %1785
  %v1787 = vsel %vm399, %v1749, 0.0
  %1788 = vadd.xlane.f32.xlu0 %v1787
  %v1789 = vpop.xlane.xlu0 %1788
  %v1790 = vsel %vm399, %v1751, 0.0
  %1791 = vadd.xlane.f32.xlu0 %v1790
  %v1792 = vpop.xlane.xlu0 %1791
  %v1793 = vsel %vm399, %v1753, 0.0
  %1794 = vadd.xlane.f32.xlu0 %v1793
  %v1795 = vpop.xlane.xlu0 %1794
  %v1796 = vsel %vm399, %v1755, 0.0
  %1797 = vadd.xlane.f32.xlu0 %v1796
  %v1798 = vpop.xlane.xlu0 %1797
  %v1799 = vsel %vm399, %v1757, 0.0
  %1800 = vadd.xlane.f32.xlu0 %v1799
  %v1801 = vpop.xlane.xlu0 %1800
  %v1802 = vsel %vm399, %v1759, 0.0
  %1803 = vadd.xlane.f32.xlu0 %v1802
  %v1804 = vpop.xlane.xlu0 %1803
  %v1805 = vsel %vm399, %v1761, 0.0
  %1806 = vadd.xlane.f32.xlu0 %v1805
  %v1807 = vpop.xlane.xlu0 %1806
  %v1808 = vsel %vm399, %v1763, 0.0
  %1809 = vadd.xlane.f32.xlu0 %v1808
  %v1810 = vpop.xlane.xlu0 %1809
  %v1811 = vsel %vm399, %v1765, 0.0
  %1812 = vadd.xlane.f32.xlu0 %v1811
  %v1813 = vpop.xlane.xlu0 %1812
  %v1814 = vrcp.pop %v1768
  %v1815 = vrcp.pop %v1771
  %v1816 = vrcp.pop %v1774
  %v1817 = vrcp.pop %v1777
  %v1818 = vrcp.pop %v1780
  %v1819 = vrcp.pop %v1783
  %v1820 = vrcp.pop %v1786
  %v1821 = vrcp.pop %v1789
  %v1822 = vrcp.pop %v1792
  %v1823 = vrcp.pop %v1795
  %v1824 = vrcp.pop %v1798
  %v1825 = vrcp.pop %v1801
  %v1826 = vrcp.pop %v1804
  %v1827 = vrcp.pop %v1807
  %v1828 = vrcp.pop %v1810
  %v1829 = vrcp.pop %v1813
  %v1830 = vmul.f32 %v1735, %v1814
  %v1831 = vmul.f32 %v1737, %v1815
  %v1832 = vmul.f32 %v1739, %v1816
  %v1833 = vmul.f32 %v1741, %v1817
  %v1834 = vmul.f32 %v1743, %v1818
  %v1835 = vmul.f32 %v1745, %v1819
  %v1836 = vmul.f32 %v1747, %v1820
  %v1837 = vmul.f32 %v1749, %v1821
  %v1838 = vmul.f32 %v1751, %v1822
  %v1839 = vmul.f32 %v1753, %v1823
  %v1840 = vmul.f32 %v1755, %v1824
  %v1841 = vmul.f32 %v1757, %v1825
  %v1842 = vmul.f32 %v1759, %v1826
  %v1843 = vmul.f32 %v1761, %v1827
  %v1844 = vmul.f32 %v1763, %v1828
  %v1845 = vmul.f32 %v1765, %v1829
  %1846 = vrot.lane.b32.xlu0 %v351, 64
  %v1847 = vpop.permute.xlu0 %1846
  %v1850 = vsel %vm399, %v1830, 0
  %1852 = vmatprep.subr.mxu0 0.0
  %1853 = vmatpush1.msra.mxu0 %v1847
  %1854 = vmatprep.subr.mxu0 0.0
  %1855 = vmatpush1.msra.mxu0 0.0
  %1856 = vmatprep.subr.mxu0 0.0
  %1857 = vmatpush1.msra.mxu0 0.0
  %1858 = vmatprep.subr.mxu0 0.0
  %1859 = vmatpush1.msra.mxu0 0.0
  %1860 = vmatprep.subr.mxu0 0.0
  %1861 = vmatpush1.msra.mxu0 0.0
  %1862 = vmatprep.subr.mxu0 0.0
  %1863 = vmatpush1.msra.mxu0 0.0
  %1864 = vmatprep.subr.mxu0 0.0
  %1865 = vmatpush1.msra.mxu0 0.0
  %1866 = vmatprep.subr.mxu0 0.0
  %1867 = vmatpush1.msra.mxu0 0.0
  %1868 = vmatprep.subr.mxu0 0.0
  %1869 = vmatpush1.msra.mxu0 0.0
  %1870 = vmatprep.subr.mxu0 0.0
  %1871 = vmatpush1.msra.mxu0 0.0
  %1872 = vmatprep.subr.mxu0 0.0
  %1873 = vmatpush1.msra.mxu0 0.0
  %1874 = vmatprep.subr.mxu0 0.0
  %1875 = vmatpush1.msra.mxu0 0.0
  %1876 = vmatprep.subr.mxu0 0.0
  %1877 = vmatpush1.msra.mxu0 0.0
  %1878 = vmatprep.subr.mxu0 0.0
  %1879 = vmatpush1.msra.mxu0 0.0
  %1880 = vmatprep.subr.mxu0 0.0
  %1881 = vmatpush1.msra.mxu0 0.0
  %1882 = vmatprep.subr.mxu0 0.0
  %1883 = vmatpush1.msra.mxu0 0.0
  %1884 = vmatprep.subr.mxu0 0.0
  %1885 = vmatpush1.msra.mxu0 0.0
  %1886 = vmatprep.subr.mxu0 0.0
  %1887 = vmatpush1.msra.mxu0 0.0
  %1888 = vmatprep.subr.mxu0 0.0
  %1889 = vmatpush1.msra.mxu0 0.0
  %1890 = vmatprep.subr.mxu0 0.0
  %1891 = vmatpush1.msra.mxu0 0.0
  %1892 = vmatprep.subr.mxu0 0.0
  %1893 = vmatpush1.msra.mxu0 0.0
  %1894 = vmatprep.subr.mxu0 0.0
  %1895 = vmatpush1.msra.mxu0 0.0
  %1896 = vmatprep.subr.mxu0 0.0
  %1897 = vmatpush1.msra.mxu0 0.0
  %1898 = vmatprep.subr.mxu0 0.0
  %1899 = vmatpush1.msra.mxu0 0.0
  %1900 = vmatprep.subr.mxu0 0.0
  %1901 = vmatpush1.msra.mxu0 0.0
  %1902 = vmatprep.subr.mxu0 0.0
  %1903 = vmatpush1.msra.mxu0 0.0
  %1904 = vmatprep.subr.mxu0 0.0
  %1905 = vmatpush1.msra.mxu0 0.0
  %1906 = vmatprep.subr.mxu0 0.0
  %1907 = vmatpush1.msra.mxu0 0.0
  %1908 = vmatprep.subr.mxu0 0.0
  %1909 = vmatpush1.msra.mxu0 0.0
  %1910 = vmatprep.subr.mxu0 0.0
  %1911 = vmatpush1.msra.mxu0 0.0
  %1912 = vmatprep.subr.mxu0 0.0
  %1913 = vmatpush1.msra.mxu0 0.0
  %1914 = vmatprep.subr.mxu0 0.0
  %1915 = vmatpush1.msra.mxu0 0.0
  %1916 = vmatprep.mubr.f32.mxu0 0.0
  %1917 = vmatmul.mubr.f32.gmra.mrb[0].mxu0 %v1850
  %v1918 = vpop.f32.mrb[0].mxu0
  %v1919 = vadd.f32 0.0, %v1918
  %v1920 = vpop.f32.mrb[0].mxu0
  %1921 = vdwg.mxu0
  %1922 = vrot.lane.b32.xlu0 %v356, 64
  %v1923 = vpop.permute.xlu0 %1922
  %v1926 = vsel %vm399, %v1831, 0
  %1928 = vmatprep.subr.mxu0 0.0
  %1929 = vmatpush1.msra.mxu0 %v1923
  %1930 = vmatprep.subr.mxu0 0.0
  %1931 = vmatpush1.msra.mxu0 0.0
  %1932 = vmatprep.subr.mxu0 0.0
  %1933 = vmatpush1.msra.mxu0 0.0
  %1934 = vmatprep.subr.mxu0 0.0
  %1935 = vmatpush1.msra.mxu0 0.0
  %1936 = vmatprep.subr.mxu0 0.0
  %1937 = vmatpush1.msra.mxu0 0.0
  %1938 = vmatprep.subr.mxu0 0.0
  %1939 = vmatpush1.msra.mxu0 0.0
  %1940 = vmatprep.subr.mxu0 0.0
  %1941 = vmatpush1.msra.mxu0 0.0
  %1942 = vmatprep.subr.mxu0 0.0
  %1943 = vmatpush1.msra.mxu0 0.0
  %1944 = vmatprep.subr.mxu0 0.0
  %1945 = vmatpush1.msra.mxu0 0.0
  %1946 = vmatprep.subr.mxu0 0.0
  %1947 = vmatpush1.msra.mxu0 0.0
  %1948 = vmatprep.subr.mxu0 0.0
  %1949 = vmatpush1.msra.mxu0 0.0
  %1950 = vmatprep.subr.mxu0 0.0
  %1951 = vmatpush1.msra.mxu0 0.0
  %1952 = vmatprep.subr.mxu0 0.0
  %1953 = vmatpush1.msra.mxu0 0.0
  %1954 = vmatprep.subr.mxu0 0.0
  %1955 = vmatpush1.msra.mxu0 0.0
  %1956 = vmatprep.subr.mxu0 0.0
  %1957 = vmatpush1.msra.mxu0 0.0
  %1958 = vmatprep.subr.mxu0 0.0
  %1959 = vmatpush1.msra.mxu0 0.0
  %1960 = vmatprep.subr.mxu0 0.0
  %1961 = vmatpush1.msra.mxu0 0.0
  %1962 = vmatprep.subr.mxu0 0.0
  %1963 = vmatpush1.msra.mxu0 0.0
  %1964 = vmatprep.subr.mxu0 0.0
  %1965 = vmatpush1.msra.mxu0 0.0
  %1966 = vmatprep.subr.mxu0 0.0
  %1967 = vmatpush1.msra.mxu0 0.0
  %1968 = vmatprep.subr.mxu0 0.0
  %1969 = vmatpush1.msra.mxu0 0.0
  %1970 = vmatprep.subr.mxu0 0.0
  %1971 = vmatpush1.msra.mxu0 0.0
  %1972 = vmatprep.subr.mxu0 0.0
  %1973 = vmatpush1.msra.mxu0 0.0
  %1974 = vmatprep.subr.mxu0 0.0
  %1975 = vmatpush1.msra.mxu0 0.0
  %1976 = vmatprep.subr.mxu0 0.0
  %1977 = vmatpush1.msra.mxu0 0.0
  %1978 = vmatprep.subr.mxu0 0.0
  %1979 = vmatpush1.msra.mxu0 0.0
  %1980 = vmatprep.subr.mxu0 0.0
  %1981 = vmatpush1.msra.mxu0 0.0
  %1982 = vmatprep.subr.mxu0 0.0
  %1983 = vmatpush1.msra.mxu0 0.0
  %1984 = vmatprep.subr.mxu0 0.0
  %1985 = vmatpush1.msra.mxu0 0.0
  %1986 = vmatprep.subr.mxu0 0.0
  %1987 = vmatpush1.msra.mxu0 0.0
  %1988 = vmatprep.subr.mxu0 0.0
  %1989 = vmatpush1.msra.mxu0 0.0
  %1990 = vmatprep.subr.mxu0 0.0
  %1991 = vmatpush1.msra.mxu0 0.0
  %1992 = vmatprep.mubr.f32.mxu0 0.0
  %1993 = vmatmul.mubr.f32.gmra.mrb[0].mxu0 %v1926
  %v1994 = vpop.f32.mrb[0].mxu0
  %v1995 = vadd.f32 0.0, %v1994
  %v1996 = vpop.f32.mrb[0].mxu0
  %1997 = vdwg.mxu0
  %1998 = vrot.lane.b32.xlu0 %v361, 64
  %v1999 = vpop.permute.xlu0 %1998
  %v2002 = vsel %vm399, %v1832, 0
  %2004 = vmatprep.subr.mxu0 0.0
  %2005 = vmatpush1.msra.mxu0 %v1999
  %2006 = vmatprep.subr.mxu0 0.0
  %2007 = vmatpush1.msra.mxu0 0.0
  %2008 = vmatprep.subr.mxu0 0.0
  %2009 = vmatpush1.msra.mxu0 0.0
  %2010 = vmatprep.subr.mxu0 0.0
  %2011 = vmatpush1.msra.mxu0 0.0
  %2012 = vmatprep.subr.mxu0 0.0
  %2013 = vmatpush1.msra.mxu0 0.0
  %2014 = vmatprep.subr.mxu0 0.0
  %2015 = vmatpush1.msra.mxu0 0.0
  %2016 = vmatprep.subr.mxu0 0.0
  %2017 = vmatpush1.msra.mxu0 0.0
  %2018 = vmatprep.subr.mxu0 0.0
  %2019 = vmatpush1.msra.mxu0 0.0
  %2020 = vmatprep.subr.mxu0 0.0
  %2021 = vmatpush1.msra.mxu0 0.0
  %2022 = vmatprep.subr.mxu0 0.0
  %2023 = vmatpush1.msra.mxu0 0.0
  %2024 = vmatprep.subr.mxu0 0.0
  %2025 = vmatpush1.msra.mxu0 0.0
  %2026 = vmatprep.subr.mxu0 0.0
  %2027 = vmatpush1.msra.mxu0 0.0
  %2028 = vmatprep.subr.mxu0 0.0
  %2029 = vmatpush1.msra.mxu0 0.0
  %2030 = vmatprep.subr.mxu0 0.0
  %2031 = vmatpush1.msra.mxu0 0.0
  %2032 = vmatprep.subr.mxu0 0.0
  %2033 = vmatpush1.msra.mxu0 0.0
  %2034 = vmatprep.subr.mxu0 0.0
  %2035 = vmatpush1.msra.mxu0 0.0
  %2036 = vmatprep.subr.mxu0 0.0
  %2037 = vmatpush1.msra.mxu0 0.0
  %2038 = vmatprep.subr.mxu0 0.0
  %2039 = vmatpush1.msra.mxu0 0.0
  %2040 = vmatprep.subr.mxu0 0.0
  %2041 = vmatpush1.msra.mxu0 0.0
  %2042 = vmatprep.subr.mxu0 0.0
  %2043 = vmatpush1.msra.mxu0 0.0
  %2044 = vmatprep.subr.mxu0 0.0
  %2045 = vmatpush1.msra.mxu0 0.0
  %2046 = vmatprep.subr.mxu0 0.0
  %2047 = vmatpush1.msra.mxu0 0.0
  %2048 = vmatprep.subr.mxu0 0.0
  %2049 = vmatpush1.msra.mxu0 0.0
  %2050 = vmatprep.subr.mxu0 0.0
  %2051 = vmatpush1.msra.mxu0 0.0
  %2052 = vmatprep.subr.mxu0 0.0
  %2053 = vmatpush1.msra.mxu0 0.0
  %2054 = vmatprep.subr.mxu0 0.0
  %2055 = vmatpush1.msra.mxu0 0.0
  %2056 = vmatprep.subr.mxu0 0.0
  %2057 = vmatpush1.msra.mxu0 0.0
  %2058 = vmatprep.subr.mxu0 0.0
  %2059 = vmatpush1.msra.mxu0 0.0
  %2060 = vmatprep.subr.mxu0 0.0
  %2061 = vmatpush1.msra.mxu0 0.0
  %2062 = vmatprep.subr.mxu0 0.0
  %2063 = vmatpush1.msra.mxu0 0.0
  %2064 = vmatprep.subr.mxu0 0.0
  %2065 = vmatpush1.msra.mxu0 0.0
  %2066 = vmatprep.subr.mxu0 0.0
  %2067 = vmatpush1.msra.mxu0 0.0
  %2068 = vmatprep.mubr.f32.mxu0 0.0
  %2069 = vmatmul.mubr.f32.gmra.mrb[0].mxu0 %v2002
  %v2070 = vpop.f32.mrb[0].mxu0
  %v2071 = vadd.f32 0.0, %v2070
  %v2072 = vpop.f32.mrb[0].mxu0
  %2073 = vdwg.mxu0
  %2074 = vrot.lane.b32.xlu0 %v366, 64
  %v2075 = vpop.permute.xlu0 %2074
  %v2078 = vsel %vm399, %v1833, 0
  %2080 = vmatprep.subr.mxu0 0.0
  %2081 = vmatpush1.msra.mxu0 %v2075
  %2082 = vmatprep.subr.mxu0 0.0
  %2083 = vmatpush1.msra.mxu0 0.0
  %2084 = vmatprep.subr.mxu0 0.0
  %2085 = vmatpush1.msra.mxu0 0.0
  %2086 = vmatprep.subr.mxu0 0.0
  %2087 = vmatpush1.msra.mxu0 0.0
  %2088 = vmatprep.subr.mxu0 0.0
  %2089 = vmatpush1.msra.mxu0 0.0
  %2090 = vmatprep.subr.mxu0 0.0
  %2091 = vmatpush1.msra.mxu0 0.0
  %2092 = vmatprep.subr.mxu0 0.0
  %2093 = vmatpush1.msra.mxu0 0.0
  %2094 = vmatprep.subr.mxu0 0.0
  %2095 = vmatpush1.msra.mxu0 0.0
  %2096 = vmatprep.subr.mxu0 0.0
  %2097 = vmatpush1.msra.mxu0 0.0
  %2098 = vmatprep.subr.mxu0 0.0
  %2099 = vmatpush1.msra.mxu0 0.0
  %2100 = vmatprep.subr.mxu0 0.0
  %2101 = vmatpush1.msra.mxu0 0.0
  %2102 = vmatprep.subr.mxu0 0.0
  %2103 = vmatpush1.msra.mxu0 0.0
  %2104 = vmatprep.subr.mxu0 0.0
  %2105 = vmatpush1.msra.mxu0 0.0
  %2106 = vmatprep.subr.mxu0 0.0
  %2107 = vmatpush1.msra.mxu0 0.0
  %2108 = vmatprep.subr.mxu0 0.0
  %2109 = vmatpush1.msra.mxu0 0.0
  %2110 = vmatprep.subr.mxu0 0.0
  %2111 = vmatpush1.msra.mxu0 0.0
  %2112 = vmatprep.subr.mxu0 0.0
  %2113 = vmatpush1.msra.mxu0 0.0
  %2114 = vmatprep.subr.mxu0 0.0
  %2115 = vmatpush1.msra.mxu0 0.0
  %2116 = vmatprep.subr.mxu0 0.0
  %2117 = vmatpush1.msra.mxu0 0.0
  %2118 = vmatprep.subr.mxu0 0.0
  %2119 = vmatpush1.msra.mxu0 0.0
  %2120 = vmatprep.subr.mxu0 0.0
  %2121 = vmatpush1.msra.mxu0 0.0
  %2122 = vmatprep.subr.mxu0 0.0
  %2123 = vmatpush1.msra.mxu0 0.0
  %2124 = vmatprep.subr.mxu0 0.0
  %2125 = vmatpush1.msra.mxu0 0.0
  %2126 = vmatprep.subr.mxu0 0.0
  %2127 = vmatpush1.msra.mxu0 0.0
  %2128 = vmatprep.subr.mxu0 0.0
  %2129 = vmatpush1.msra.mxu0 0.0
  %2130 = vmatprep.subr.mxu0 0.0
  %2131 = vmatpush1.msra.mxu0 0.0
  %2132 = vmatprep.subr.mxu0 0.0
  %2133 = vmatpush1.msra.mxu0 0.0
  %2134 = vmatprep.subr.mxu0 0.0
  %2135 = vmatpush1.msra.mxu0 0.0
  %2136 = vmatprep.subr.mxu0 0.0
  %2137 = vmatpush1.msra.mxu0 0.0
  %2138 = vmatprep.subr.mxu0 0.0
  %2139 = vmatpush1.msra.mxu0 0.0
  %2140 = vmatprep.subr.mxu0 0.0
  %2141 = vmatpush1.msra.mxu0 0.0
  %2142 = vmatprep.subr.mxu0 0.0
  %2143 = vmatpush1.msra.mxu0 0.0
  %2144 = vmatprep.mubr.f32.mxu0 0.0
  %2145 = vmatmul.mubr.f32.gmra.mrb[0].mxu0 %v2078
  %v2146 = vpop.f32.mrb[0].mxu0
  %v2147 = vadd.f32 0.0, %v2146
  %v2148 = vpop.f32.mrb[0].mxu0
  %2149 = vdwg.mxu0
  %2150 = vrot.lane.b32.xlu0 %v374, 64
  %v2151 = vpop.permute.xlu0 %2150
  %v2154 = vsel %vm399, %v1834, 0
  %2156 = vmatprep.subr.mxu0 0.0
  %2157 = vmatpush1.msra.mxu0 %v2151
  %2158 = vmatprep.subr.mxu0 0.0
  %2159 = vmatpush1.msra.mxu0 0.0
  %2160 = vmatprep.subr.mxu0 0.0
  %2161 = vmatpush1.msra.mxu0 0.0
  %2162 = vmatprep.subr.mxu0 0.0
  %2163 = vmatpush1.msra.mxu0 0.0
  %2164 = vmatprep.subr.mxu0 0.0
  %2165 = vmatpush1.msra.mxu0 0.0
  %2166 = vmatprep.subr.mxu0 0.0
  %2167 = vmatpush1.msra.mxu0 0.0
  %2168 = vmatprep.subr.mxu0 0.0
  %2169 = vmatpush1.msra.mxu0 0.0
  %2170 = vmatprep.subr.mxu0 0.0
  %2171 = vmatpush1.msra.mxu0 0.0
  %2172 = vmatprep.subr.mxu0 0.0
  %2173 = vmatpush1.msra.mxu0 0.0
  %2174 = vmatprep.subr.mxu0 0.0
  %2175 = vmatpush1.msra.mxu0 0.0
  %2176 = vmatprep.subr.mxu0 0.0
  %2177 = vmatpush1.msra.mxu0 0.0
  %2178 = vmatprep.subr.mxu0 0.0
  %2179 = vmatpush1.msra.mxu0 0.0
  %2180 = vmatprep.subr.mxu0 0.0
  %2181 = vmatpush1.msra.mxu0 0.0
  %2182 = vmatprep.subr.mxu0 0.0
  %2183 = vmatpush1.msra.mxu0 0.0
  %2184 = vmatprep.subr.mxu0 0.0
  %2185 = vmatpush1.msra.mxu0 0.0
  %2186 = vmatprep.subr.mxu0 0.0
  %2187 = vmatpush1.msra.mxu0 0.0
  %2188 = vmatprep.subr.mxu0 0.0
  %2189 = vmatpush1.msra.mxu0 0.0
  %2190 = vmatprep.subr.mxu0 0.0
  %2191 = vmatpush1.msra.mxu0 0.0
  %2192 = vmatprep.subr.mxu0 0.0
  %2193 = vmatpush1.msra.mxu0 0.0
  %2194 = vmatprep.subr.mxu0 0.0
  %2195 = vmatpush1.msra.mxu0 0.0
  %2196 = vmatprep.subr.mxu0 0.0
  %2197 = vmatpush1.msra.mxu0 0.0
  %2198 = vmatprep.subr.mxu0 0.0
  %2199 = vmatpush1.msra.mxu0 0.0
  %2200 = vmatprep.subr.mxu0 0.0
  %2201 = vmatpush1.msra.mxu0 0.0
  %2202 = vmatprep.subr.mxu0 0.0
  %2203 = vmatpush1.msra.mxu0 0.0
  %2204 = vmatprep.subr.mxu0 0.0
  %2205 = vmatpush1.msra.mxu0 0.0
  %2206 = vmatprep.subr.mxu0 0.0
  %2207 = vmatpush1.msra.mxu0 0.0
  %2208 = vmatprep.subr.mxu0 0.0
  %2209 = vmatpush1.msra.mxu0 0.0
  %2210 = vmatprep.subr.mxu0 0.0
  %2211 = vmatpush1.msra.mxu0 0.0
  %2212 = vmatprep.subr.mxu0 0.0
  %2213 = vmatpush1.msra.mxu0 0.0
  %2214 = vmatprep.subr.mxu0 0.0
  %2215 = vmatpush1.msra.mxu0 0.0
  %2216 = vmatprep.subr.mxu0 0.0
  %2217 = vmatpush1.msra.mxu0 0.0
  %2218 = vmatprep.subr.mxu0 0.0
  %2219 = vmatpush1.msra.mxu0 0.0
  %2220 = vmatprep.mubr.f32.mxu0 0.0
  %2221 = vmatmul.mubr.f32.gmra.mrb[0].mxu0 %v2154
  %v2222 = vpop.f32.mrb[0].mxu0
  %v2223 = vadd.f32 0.0, %v2222
  %v2224 = vpop.f32.mrb[0].mxu0
  %2225 = vdwg.mxu0
  %2226 = vrot.lane.b32.xlu0 %v376, 64
  %v2227 = vpop.permute.xlu0 %2226
  %v2230 = vsel %vm399, %v1835, 0
  %2232 = vmatprep.subr.mxu0 0.0
  %2233 = vmatpush1.msra.mxu0 %v2227
  %2234 = vmatprep.subr.mxu0 0.0
  %2235 = vmatpush1.msra.mxu0 0.0
  %2236 = vmatprep.subr.mxu0 0.0
  %2237 = vmatpush1.msra.mxu0 0.0
  %2238 = vmatprep.subr.mxu0 0.0
  %2239 = vmatpush1.msra.mxu0 0.0
  %2240 = vmatprep.subr.mxu0 0.0
  %2241 = vmatpush1.msra.mxu0 0.0
  %2242 = vmatprep.subr.mxu0 0.0
  %2243 = vmatpush1.msra.mxu0 0.0
  %2244 = vmatprep.subr.mxu0 0.0
  %2245 = vmatpush1.msra.mxu0 0.0
  %2246 = vmatprep.subr.mxu0 0.0
  %2247 = vmatpush1.msra.mxu0 0.0
  %2248 = vmatprep.subr.mxu0 0.0
  %2249 = vmatpush1.msra.mxu0 0.0
  %2250 = vmatprep.subr.mxu0 0.0
  %2251 = vmatpush1.msra.mxu0 0.0
  %2252 = vmatprep.subr.mxu0 0.0
  %2253 = vmatpush1.msra.mxu0 0.0
  %2254 = vmatprep.subr.mxu0 0.0
  %2255 = vmatpush1.msra.mxu0 0.0
  %2256 = vmatprep.subr.mxu0 0.0
  %2257 = vmatpush1.msra.mxu0 0.0
  %2258 = vmatprep.subr.mxu0 0.0
  %2259 = vmatpush1.msra.mxu0 0.0
  %2260 = vmatprep.subr.mxu0 0.0
  %2261 = vmatpush1.msra.mxu0 0.0
  %2262 = vmatprep.subr.mxu0 0.0
  %2263 = vmatpush1.msra.mxu0 0.0
  %2264 = vmatprep.subr.mxu0 0.0
  %2265 = vmatpush1.msra.mxu0 0.0
  %2266 = vmatprep.subr.mxu0 0.0
  %2267 = vmatpush1.msra.mxu0 0.0
  %2268 = vmatprep.subr.mxu0 0.0
  %2269 = vmatpush1.msra.mxu0 0.0
  %2270 = vmatprep.subr.mxu0 0.0
  %2271 = vmatpush1.msra.mxu0 0.0
  %2272 = vmatprep.subr.mxu0 0.0
  %2273 = vmatpush1.msra.mxu0 0.0
  %2274 = vmatprep.subr.mxu0 0.0
  %2275 = vmatpush1.msra.mxu0 0.0
  %2276 = vmatprep.subr.mxu0 0.0
  %2277 = vmatpush1.msra.mxu0 0.0
  %2278 = vmatprep.subr.mxu0 0.0
  %2279 = vmatpush1.msra.mxu0 0.0
  %2280 = vmatprep.subr.mxu0 0.0
  %2281 = vmatpush1.msra.mxu0 0.0
  %2282 = vmatprep.subr.mxu0 0.0
  %2283 = vmatpush1.msra.mxu0 0.0
  %2284 = vmatprep.subr.mxu0 0.0
  %2285 = vmatpush1.msra.mxu0 0.0
  %2286 = vmatprep.subr.mxu0 0.0
  %2287 = vmatpush1.msra.mxu0 0.0
  %2288 = vmatprep.subr.mxu0 0.0
  %2289 = vmatpush1.msra.mxu0 0.0
  %2290 = vmatprep.subr.mxu0 0.0
  %2291 = vmatpush1.msra.mxu0 0.0
  %2292 = vmatprep.subr.mxu0 0.0
  %2293 = vmatpush1.msra.mxu0 0.0
  %2294 = vmatprep.subr.mxu0 0.0
  %2295 = vmatpush1.msra.mxu0 0.0
  %2296 = vmatprep.mubr.f32.mxu0 0.0
  %2297 = vmatmul.mubr.f32.gmra.mrb[0].mxu0 %v2230
  %v2298 = vpop.f32.mrb[0].mxu0
  %v2299 = vadd.f32 0.0, %v2298
  %v2300 = vpop.f32.mrb[0].mxu0
  %2301 = vdwg.mxu0
  %2302 = vrot.lane.b32.xlu0 %v378, 64
  %v2303 = vpop.permute.xlu0 %2302
  %v2306 = vsel %vm399, %v1836, 0
  %2308 = vmatprep.subr.mxu0 0.0
  %2309 = vmatpush1.msra.mxu0 %v2303
  %2310 = vmatprep.subr.mxu0 0.0
  %2311 = vmatpush1.msra.mxu0 0.0
  %2312 = vmatprep.subr.mxu0 0.0
  %2313 = vmatpush1.msra.mxu0 0.0
  %2314 = vmatprep.subr.mxu0 0.0
  %2315 = vmatpush1.msra.mxu0 0.0
  %2316 = vmatprep.subr.mxu0 0.0
  %2317 = vmatpush1.msra.mxu0 0.0
  %2318 = vmatprep.subr.mxu0 0.0
  %2319 = vmatpush1.msra.mxu0 0.0
  %2320 = vmatprep.subr.mxu0 0.0
  %2321 = vmatpush1.msra.mxu0 0.0
  %2322 = vmatprep.subr.mxu0 0.0
  %2323 = vmatpush1.msra.mxu0 0.0
  %2324 = vmatprep.subr.mxu0 0.0
  %2325 = vmatpush1.msra.mxu0 0.0
  %2326 = vmatprep.subr.mxu0 0.0
  %2327 = vmatpush1.msra.mxu0 0.0
  %2328 = vmatprep.subr.mxu0 0.0
  %2329 = vmatpush1.msra.mxu0 0.0
  %2330 = vmatprep.subr.mxu0 0.0
  %2331 = vmatpush1.msra.mxu0 0.0
  %2332 = vmatprep.subr.mxu0 0.0
  %2333 = vmatpush1.msra.mxu0 0.0
  %2334 = vmatprep.subr.mxu0 0.0
  %2335 = vmatpush1.msra.mxu0 0.0
  %2336 = vmatprep.subr.mxu0 0.0
  %2337 = vmatpush1.msra.mxu0 0.0
  %2338 = vmatprep.subr.mxu0 0.0
  %2339 = vmatpush1.msra.mxu0 0.0
  %2340 = vmatprep.subr.mxu0 0.0
  %2341 = vmatpush1.msra.mxu0 0.0
  %2342 = vmatprep.subr.mxu0 0.0
  %2343 = vmatpush1.msra.mxu0 0.0
  %2344 = vmatprep.subr.mxu0 0.0
  %2345 = vmatpush1.msra.mxu0 0.0
  %2346 = vmatprep.subr.mxu0 0.0
  %2347 = vmatpush1.msra.mxu0 0.0
  %2348 = vmatprep.subr.mxu0 0.0
  %2349 = vmatpush1.msra.mxu0 0.0
  %2350 = vmatprep.subr.mxu0 0.0
  %2351 = vmatpush1.msra.mxu0 0.0
  %2352 = vmatprep.subr.mxu0 0.0
  %2353 = vmatpush1.msra.mxu0 0.0
  %2354 = vmatprep.subr.mxu0 0.0
  %2355 = vmatpush1.msra.mxu0 0.0
  %2356 = vmatprep.subr.mxu0 0.0
  %2357 = vmatpush1.msra.mxu0 0.0
  %2358 = vmatprep.subr.mxu0 0.0
  %2359 = vmatpush1.msra.mxu0 0.0
  %2360 = vmatprep.subr.mxu0 0.0
  %2361 = vmatpush1.msra.mxu0 0.0
  %2362 = vmatprep.subr.mxu0 0.0
  %2363 = vmatpush1.msra.mxu0 0.0
  %2364 = vmatprep.subr.mxu0 0.0
  %2365 = vmatpush1.msra.mxu0 0.0
  %2366 = vmatprep.subr.mxu0 0.0
  %2367 = vmatpush1.msra.mxu0 0.0
  %2368 = vmatprep.subr.mxu0 0.0
  %2369 = vmatpush1.msra.mxu0 0.0
  %2370 = vmatprep.subr.mxu0 0.0
  %2371 = vmatpush1.msra.mxu0 0.0
  %2372 = vmatprep.mubr.f32.mxu0 0.0
  %2373 = vmatmul.mubr.f32.gmra.mrb[0].mxu0 %v2306
  %v2374 = vpop.f32.mrb[0].mxu0
  %v2375 = vadd.f32 0.0, %v2374
  %v2376 = vpop.f32.mrb[0].mxu0
  %2377 = vdwg.mxu0
  %2378 = vrot.lane.b32.xlu0 %v380, 64
  %v2379 = vpop.permute.xlu0 %2378
  %v2382 = vsel %vm399, %v1837, 0
  %2384 = vmatprep.subr.mxu0 0.0
  %2385 = vmatpush1.msra.mxu0 %v2379
  %2386 = vmatprep.subr.mxu0 0.0
  %2387 = vmatpush1.msra.mxu0 0.0
  %2388 = vmatprep.subr.mxu0 0.0
  %2389 = vmatpush1.msra.mxu0 0.0
  %2390 = vmatprep.subr.mxu0 0.0
  %2391 = vmatpush1.msra.mxu0 0.0
  %2392 = vmatprep.subr.mxu0 0.0
  %2393 = vmatpush1.msra.mxu0 0.0
  %2394 = vmatprep.subr.mxu0 0.0
  %2395 = vmatpush1.msra.mxu0 0.0
  %2396 = vmatprep.subr.mxu0 0.0
  %2397 = vmatpush1.msra.mxu0 0.0
  %2398 = vmatprep.subr.mxu0 0.0
  %2399 = vmatpush1.msra.mxu0 0.0
  %2400 = vmatprep.subr.mxu0 0.0
  %2401 = vmatpush1.msra.mxu0 0.0
  %2402 = vmatprep.subr.mxu0 0.0
  %2403 = vmatpush1.msra.mxu0 0.0
  %2404 = vmatprep.subr.mxu0 0.0
  %2405 = vmatpush1.msra.mxu0 0.0
  %2406 = vmatprep.subr.mxu0 0.0
  %2407 = vmatpush1.msra.mxu0 0.0
  %2408 = vmatprep.subr.mxu0 0.0
  %2409 = vmatpush1.msra.mxu0 0.0
  %2410 = vmatprep.subr.mxu0 0.0
  %2411 = vmatpush1.msra.mxu0 0.0
  %2412 = vmatprep.subr.mxu0 0.0
  %2413 = vmatpush1.msra.mxu0 0.0
  %2414 = vmatprep.subr.mxu0 0.0
  %2415 = vmatpush1.msra.mxu0 0.0
  %2416 = vmatprep.subr.mxu0 0.0
  %2417 = vmatpush1.msra.mxu0 0.0
  %2418 = vmatprep.subr.mxu0 0.0
  %2419 = vmatpush1.msra.mxu0 0.0
  %2420 = vmatprep.subr.mxu0 0.0
  %2421 = vmatpush1.msra.mxu0 0.0
  %2422 = vmatprep.subr.mxu0 0.0
  %2423 = vmatpush1.msra.mxu0 0.0
  %2424 = vmatprep.subr.mxu0 0.0
  %2425 = vmatpush1.msra.mxu0 0.0
  %2426 = vmatprep.subr.mxu0 0.0
  %2427 = vmatpush1.msra.mxu0 0.0
  %2428 = vmatprep.subr.mxu0 0.0
  %2429 = vmatpush1.msra.mxu0 0.0
  %2430 = vmatprep.subr.mxu0 0.0
  %2431 = vmatpush1.msra.mxu0 0.0
  %2432 = vmatprep.subr.mxu0 0.0
  %2433 = vmatpush1.msra.mxu0 0.0
  %2434 = vmatprep.subr.mxu0 0.0
  %2435 = vmatpush1.msra.mxu0 0.0
  %2436 = vmatprep.subr.mxu0 0.0
  %2437 = vmatpush1.msra.mxu0 0.0
  %2438 = vmatprep.subr.mxu0 0.0
  %2439 = vmatpush1.msra.mxu0 0.0
  %2440 = vmatprep.subr.mxu0 0.0
  %2441 = vmatpush1.msra.mxu0 0.0
  %2442 = vmatprep.subr.mxu0 0.0
  %2443 = vmatpush1.msra.mxu0 0.0
  %2444 = vmatprep.subr.mxu0 0.0
  %2445 = vmatpush1.msra.mxu0 0.0
  %2446 = vmatprep.subr.mxu0 0.0
  %2447 = vmatpush1.msra.mxu0 0.0
  %2448 = vmatprep.mubr.f32.mxu0 0.0
  %2449 = vmatmul.mubr.f32.gmra.mrb[0].mxu0 %v2382
  %v2450 = vpop.f32.mrb[0].mxu0
  %v2451 = vadd.f32 0.0, %v2450
  %v2452 = vpop.f32.mrb[0].mxu0
  %2453 = vdwg.mxu0
  %2454 = vrot.lane.b32.xlu0 %v382, 64
  %v2455 = vpop.permute.xlu0 %2454
  %v2458 = vsel %vm399, %v1838, 0
  %2460 = vmatprep.subr.mxu0 0.0
  %2461 = vmatpush1.msra.mxu0 %v2455
  %2462 = vmatprep.subr.mxu0 0.0
  %2463 = vmatpush1.msra.mxu0 0.0
  %2464 = vmatprep.subr.mxu0 0.0
  %2465 = vmatpush1.msra.mxu0 0.0
  %2466 = vmatprep.subr.mxu0 0.0
  %2467 = vmatpush1.msra.mxu0 0.0
  %2468 = vmatprep.subr.mxu0 0.0
  %2469 = vmatpush1.msra.mxu0 0.0
  %2470 = vmatprep.subr.mxu0 0.0
  %2471 = vmatpush1.msra.mxu0 0.0
  %2472 = vmatprep.subr.mxu0 0.0
  %2473 = vmatpush1.msra.mxu0 0.0
  %2474 = vmatprep.subr.mxu0 0.0
  %2475 = vmatpush1.msra.mxu0 0.0
  %2476 = vmatprep.subr.mxu0 0.0
  %2477 = vmatpush1.msra.mxu0 0.0
  %2478 = vmatprep.subr.mxu0 0.0
  %2479 = vmatpush1.msra.mxu0 0.0
  %2480 = vmatprep.subr.mxu0 0.0
  %2481 = vmatpush1.msra.mxu0 0.0
  %2482 = vmatprep.subr.mxu0 0.0
  %2483 = vmatpush1.msra.mxu0 0.0
  %2484 = vmatprep.subr.mxu0 0.0
  %2485 = vmatpush1.msra.mxu0 0.0
  %2486 = vmatprep.subr.mxu0 0.0
  %2487 = vmatpush1.msra.mxu0 0.0
  %2488 = vmatprep.subr.mxu0 0.0
  %2489 = vmatpush1.msra.mxu0 0.0
  %2490 = vmatprep.subr.mxu0 0.0
  %2491 = vmatpush1.msra.mxu0 0.0
  %2492 = vmatprep.subr.mxu0 0.0
  %2493 = vmatpush1.msra.mxu0 0.0
  %2494 = vmatprep.subr.mxu0 0.0
  %2495 = vmatpush1.msra.mxu0 0.0
  %2496 = vmatprep.subr.mxu0 0.0
  %2497 = vmatpush1.msra.mxu0 0.0
  %2498 = vmatprep.subr.mxu0 0.0
  %2499 = vmatpush1.msra.mxu0 0.0
  %2500 = vmatprep.subr.mxu0 0.0
  %2501 = vmatpush1.msra.mxu0 0.0
  %2502 = vmatprep.subr.mxu0 0.0
  %2503 = vmatpush1.msra.mxu0 0.0
  %2504 = vmatprep.subr.mxu0 0.0
  %2505 = vmatpush1.msra.mxu0 0.0
  %2506 = vmatprep.subr.mxu0 0.0
  %2507 = vmatpush1.msra.mxu0 0.0
  %2508 = vmatprep.subr.mxu0 0.0
  %2509 = vmatpush1.msra.mxu0 0.0
  %2510 = vmatprep.subr.mxu0 0.0
  %2511 = vmatpush1.msra.mxu0 0.0
  %2512 = vmatprep.subr.mxu0 0.0
  %2513 = vmatpush1.msra.mxu0 0.0
  %2514 = vmatprep.subr.mxu0 0.0
  %2515 = vmatpush1.msra.mxu0 0.0
  %2516 = vmatprep.subr.mxu0 0.0
  %2517 = vmatpush1.msra.mxu0 0.0
  %2518 = vmatprep.subr.mxu0 0.0
  %2519 = vmatpush1.msra.mxu0 0.0
  %2520 = vmatprep.subr.mxu0 0.0
  %2521 = vmatpush1.msra.mxu0 0.0
  %2522 = vmatprep.subr.mxu0 0.0
  %2523 = vmatpush1.msra.mxu0 0.0
  %2524 = vmatprep.mubr.f32.mxu0 0.0
  %2525 = vmatmul.mubr.f32.gmra.mrb[0].mxu0 %v2458
  %v2526 = vpop.f32.mrb[0].mxu0
  %v2527 = vadd.f32 0.0, %v2526
  %v2528 = vpop.f32.mrb[0].mxu0
  %2529 = vdwg.mxu0
  %2530 = vrot.lane.b32.xlu0 %v384, 64
  %v2531 = vpop.permute.xlu0 %2530
  %v2534 = vsel %vm399, %v1839, 0
  %2536 = vmatprep.subr.mxu0 0.0
  %2537 = vmatpush1.msra.mxu0 %v2531
  %2538 = vmatprep.subr.mxu0 0.0
  %2539 = vmatpush1.msra.mxu0 0.0
  %2540 = vmatprep.subr.mxu0 0.0
  %2541 = vmatpush1.msra.mxu0 0.0
  %2542 = vmatprep.subr.mxu0 0.0
  %2543 = vmatpush1.msra.mxu0 0.0
  %2544 = vmatprep.subr.mxu0 0.0
  %2545 = vmatpush1.msra.mxu0 0.0
  %2546 = vmatprep.subr.mxu0 0.0
  %2547 = vmatpush1.msra.mxu0 0.0
  %2548 = vmatprep.subr.mxu0 0.0
  %2549 = vmatpush1.msra.mxu0 0.0
  %2550 = vmatprep.subr.mxu0 0.0
  %2551 = vmatpush1.msra.mxu0 0.0
  %2552 = vmatprep.subr.mxu0 0.0
  %2553 = vmatpush1.msra.mxu0 0.0
  %2554 = vmatprep.subr.mxu0 0.0
  %2555 = vmatpush1.msra.mxu0 0.0
  %2556 = vmatprep.subr.mxu0 0.0
  %2557 = vmatpush1.msra.mxu0 0.0
  %2558 = vmatprep.subr.mxu0 0.0
  %2559 = vmatpush1.msra.mxu0 0.0
  %2560 = vmatprep.subr.mxu0 0.0
  %2561 = vmatpush1.msra.mxu0 0.0
  %2562 = vmatprep.subr.mxu0 0.0
  %2563 = vmatpush1.msra.mxu0 0.0
  %2564 = vmatprep.subr.mxu0 0.0
  %2565 = vmatpush1.msra.mxu0 0.0
  %2566 = vmatprep.subr.mxu0 0.0
  %2567 = vmatpush1.msra.mxu0 0.0
  %2568 = vmatprep.subr.mxu0 0.0
  %2569 = vmatpush1.msra.mxu0 0.0
  %2570 = vmatprep.subr.mxu0 0.0
  %2571 = vmatpush1.msra.mxu0 0.0
  %2572 = vmatprep.subr.mxu0 0.0
  %2573 = vmatpush1.msra.mxu0 0.0
  %2574 = vmatprep.subr.mxu0 0.0
  %2575 = vmatpush1.msra.mxu0 0.0
  %2576 = vmatprep.subr.mxu0 0.0
  %2577 = vmatpush1.msra.mxu0 0.0
  %2578 = vmatprep.subr.mxu0 0.0
  %2579 = vmatpush1.msra.mxu0 0.0
  %2580 = vmatprep.subr.mxu0 0.0
  %2581 = vmatpush1.msra.mxu0 0.0
  %2582 = vmatprep.subr.mxu0 0.0
  %2583 = vmatpush1.msra.mxu0 0.0
  %2584 = vmatprep.subr.mxu0 0.0
  %2585 = vmatpush1.msra.mxu0 0.0
  %2586 = vmatprep.subr.mxu0 0.0
  %2587 = vmatpush1.msra.mxu0 0.0
  %2588 = vmatprep.subr.mxu0 0.0
  %2589 = vmatpush1.msra.mxu0 0.0
  %2590 = vmatprep.subr.mxu0 0.0
  %2591 = vmatpush1.msra.mxu0 0.0
  %2592 = vmatprep.subr.mxu0 0.0
  %2593 = vmatpush1.msra.mxu0 0.0
  %2594 = vmatprep.subr.mxu0 0.0
  %2595 = vmatpush1.msra.mxu0 0.0
  %2596 = vmatprep.subr.mxu0 0.0
  %2597 = vmatpush1.msra.mxu0 0.0
  %2598 = vmatprep.subr.mxu0 0.0
  %2599 = vmatpush1.msra.mxu0 0.0
  %2600 = vmatprep.mubr.f32.mxu0 0.0
  %2601 = vmatmul.mubr.f32.gmra.mrb[0].mxu0 %v2534
  %v2602 = vpop.f32.mrb[0].mxu0
  %v2603 = vadd.f32 0.0, %v2602
  %v2604 = vpop.f32.mrb[0].mxu0
  %2605 = vdwg.mxu0
  %2606 = vrot.lane.b32.xlu0 %v386, 64
  %v2607 = vpop.permute.xlu0 %2606
  %v2610 = vsel %vm399, %v1840, 0
  %2612 = vmatprep.subr.mxu0 0.0
  %2613 = vmatpush1.msra.mxu0 %v2607
  %2614 = vmatprep.subr.mxu0 0.0
  %2615 = vmatpush1.msra.mxu0 0.0
  %2616 = vmatprep.subr.mxu0 0.0
  %2617 = vmatpush1.msra.mxu0 0.0
  %2618 = vmatprep.subr.mxu0 0.0
  %2619 = vmatpush1.msra.mxu0 0.0
  %2620 = vmatprep.subr.mxu0 0.0
  %2621 = vmatpush1.msra.mxu0 0.0
  %2622 = vmatprep.subr.mxu0 0.0
  %2623 = vmatpush1.msra.mxu0 0.0
  %2624 = vmatprep.subr.mxu0 0.0
  %2625 = vmatpush1.msra.mxu0 0.0
  %2626 = vmatprep.subr.mxu0 0.0
  %2627 = vmatpush1.msra.mxu0 0.0
  %2628 = vmatprep.subr.mxu0 0.0
  %2629 = vmatpush1.msra.mxu0 0.0
  %2630 = vmatprep.subr.mxu0 0.0
  %2631 = vmatpush1.msra.mxu0 0.0
  %2632 = vmatprep.subr.mxu0 0.0
  %2633 = vmatpush1.msra.mxu0 0.0
  %2634 = vmatprep.subr.mxu0 0.0
  %2635 = vmatpush1.msra.mxu0 0.0
  %2636 = vmatprep.subr.mxu0 0.0
  %2637 = vmatpush1.msra.mxu0 0.0
  %2638 = vmatprep.subr.mxu0 0.0
  %2639 = vmatpush1.msra.mxu0 0.0
  %2640 = vmatprep.subr.mxu0 0.0
  %2641 = vmatpush1.msra.mxu0 0.0
  %2642 = vmatprep.subr.mxu0 0.0
  %2643 = vmatpush1.msra.mxu0 0.0
  %2644 = vmatprep.subr.mxu0 0.0
  %2645 = vmatpush1.msra.mxu0 0.0
  %2646 = vmatprep.subr.mxu0 0.0
  %2647 = vmatpush1.msra.mxu0 0.0
  %2648 = vmatprep.subr.mxu0 0.0
  %2649 = vmatpush1.msra.mxu0 0.0
  %2650 = vmatprep.subr.mxu0 0.0
  %2651 = vmatpush1.msra.mxu0 0.0
  %2652 = vmatprep.subr.mxu0 0.0
  %2653 = vmatpush1.msra.mxu0 0.0
  %2654 = vmatprep.subr.mxu0 0.0
  %2655 = vmatpush1.msra.mxu0 0.0
  %2656 = vmatprep.subr.mxu0 0.0
  %2657 = vmatpush1.msra.mxu0 0.0
  %2658 = vmatprep.subr.mxu0 0.0
  %2659 = vmatpush1.msra.mxu0 0.0
  %2660 = vmatprep.subr.mxu0 0.0
  %2661 = vmatpush1.msra.mxu0 0.0
  %2662 = vmatprep.subr.mxu0 0.0
  %2663 = vmatpush1.msra.mxu0 0.0
  %2664 = vmatprep.subr.mxu0 0.0
  %2665 = vmatpush1.msra.mxu0 0.0
  %2666 = vmatprep.subr.mxu0 0.0
  %2667 = vmatpush1.msra.mxu0 0.0
  %2668 = vmatprep.subr.mxu0 0.0
  %2669 = vmatpush1.msra.mxu0 0.0
  %2670 = vmatprep.subr.mxu0 0.0
  %2671 = vmatpush1.msra.mxu0 0.0
  %2672 = vmatprep.subr.mxu0 0.0
  %2673 = vmatpush1.msra.mxu0 0.0
  %2674 = vmatprep.subr.mxu0 0.0
  %2675 = vmatpush1.msra.mxu0 0.0
  %2676 = vmatprep.mubr.f32.mxu0 0.0
  %2677 = vmatmul.mubr.f32.gmra.mrb[0].mxu0 %v2610
  %v2678 = vpop.f32.mrb[0].mxu0
  %v2679 = vadd.f32 0.0, %v2678
  %v2680 = vpop.f32.mrb[0].mxu0
  %2681 = vdwg.mxu0
  %2682 = vrot.lane.b32.xlu0 %v388, 64
  %v2683 = vpop.permute.xlu0 %2682
  %v2686 = vsel %vm399, %v1841, 0
  %2688 = vmatprep.subr.mxu0 0.0
  %2689 = vmatpush1.msra.mxu0 %v2683
  %2690 = vmatprep.subr.mxu0 0.0
  %2691 = vmatpush1.msra.mxu0 0.0
  %2692 = vmatprep.subr.mxu0 0.0
  %2693 = vmatpush1.msra.mxu0 0.0
  %2694 = vmatprep.subr.mxu0 0.0
  %2695 = vmatpush1.msra.mxu0 0.0
  %2696 = vmatprep.subr.mxu0 0.0
  %2697 = vmatpush1.msra.mxu0 0.0
  %2698 = vmatprep.subr.mxu0 0.0
  %2699 = vmatpush1.msra.mxu0 0.0
  %2700 = vmatprep.subr.mxu0 0.0
  %2701 = vmatpush1.msra.mxu0 0.0
  %2702 = vmatprep.subr.mxu0 0.0
  %2703 = vmatpush1.msra.mxu0 0.0
  %2704 = vmatprep.subr.mxu0 0.0
  %2705 = vmatpush1.msra.mxu0 0.0
  %2706 = vmatprep.subr.mxu0 0.0
  %2707 = vmatpush1.msra.mxu0 0.0
  %2708 = vmatprep.subr.mxu0 0.0
  %2709 = vmatpush1.msra.mxu0 0.0
  %2710 = vmatprep.subr.mxu0 0.0
  %2711 = vmatpush1.msra.mxu0 0.0
  %2712 = vmatprep.subr.mxu0 0.0
  %2713 = vmatpush1.msra.mxu0 0.0
  %2714 = vmatprep.subr.mxu0 0.0
  %2715 = vmatpush1.msra.mxu0 0.0
  %2716 = vmatprep.subr.mxu0 0.0
  %2717 = vmatpush1.msra.mxu0 0.0
  %2718 = vmatprep.subr.mxu0 0.0
  %2719 = vmatpush1.msra.mxu0 0.0
  %2720 = vmatprep.subr.mxu0 0.0
  %2721 = vmatpush1.msra.mxu0 0.0
  %2722 = vmatprep.subr.mxu0 0.0
  %2723 = vmatpush1.msra.mxu0 0.0
  %2724 = vmatprep.subr.mxu0 0.0
  %2725 = vmatpush1.msra.mxu0 0.0
  %2726 = vmatprep.subr.mxu0 0.0
  %2727 = vmatpush1.msra.mxu0 0.0
  %2728 = vmatprep.subr.mxu0 0.0
  %2729 = vmatpush1.msra.mxu0 0.0
  %2730 = vmatprep.subr.mxu0 0.0
  %2731 = vmatpush1.msra.mxu0 0.0
  %2732 = vmatprep.subr.mxu0 0.0
  %2733 = vmatpush1.msra.mxu0 0.0
  %2734 = vmatprep.subr.mxu0 0.0
  %2735 = vmatpush1.msra.mxu0 0.0
  %2736 = vmatprep.subr.mxu0 0.0
  %2737 = vmatpush1.msra.mxu0 0.0
  %2738 = vmatprep.subr.mxu0 0.0
  %2739 = vmatpush1.msra.mxu0 0.0
  %2740 = vmatprep.subr.mxu0 0.0
  %2741 = vmatpush1.msra.mxu0 0.0
  %2742 = vmatprep.subr.mxu0 0.0
  %2743 = vmatpush1.msra.mxu0 0.0
  %2744 = vmatprep.subr.mxu0 0.0
  %2745 = vmatpush1.msra.mxu0 0.0
  %2746 = vmatprep.subr.mxu0 0.0
  %2747 = vmatpush1.msra.mxu0 0.0
  %2748 = vmatprep.subr.mxu0 0.0
  %2749 = vmatpush1.msra.mxu0 0.0
  %2750 = vmatprep.subr.mxu0 0.0
  %2751 = vmatpush1.msra.mxu0 0.0
  %2752 = vmatprep.mubr.f32.mxu0 0.0
  %2753 = vmatmul.mubr.f32.gmra.mrb[0].mxu0 %v2686
  %v2754 = vpop.f32.mrb[0].mxu0
  %v2755 = vadd.f32 0.0, %v2754
  %v2756 = vpop.f32.mrb[0].mxu0
  %2757 = vdwg.mxu0
  %2758 = vrot.lane.b32.xlu0 %v390, 64
  %v2759 = vpop.permute.xlu0 %2758
  %v2762 = vsel %vm399, %v1842, 0
  %2764 = vmatprep.subr.mxu0 0.0
  %2765 = vmatpush1.msra.mxu0 %v2759
  %2766 = vmatprep.subr.mxu0 0.0
  %2767 = vmatpush1.msra.mxu0 0.0
  %2768 = vmatprep.subr.mxu0 0.0
  %2769 = vmatpush1.msra.mxu0 0.0
  %2770 = vmatprep.subr.mxu0 0.0
  %2771 = vmatpush1.msra.mxu0 0.0
  %2772 = vmatprep.subr.mxu0 0.0
  %2773 = vmatpush1.msra.mxu0 0.0
  %2774 = vmatprep.subr.mxu0 0.0
  %2775 = vmatpush1.msra.mxu0 0.0
  %2776 = vmatprep.subr.mxu0 0.0
  %2777 = vmatpush1.msra.mxu0 0.0
  %2778 = vmatprep.subr.mxu0 0.0
  %2779 = vmatpush1.msra.mxu0 0.0
  %2780 = vmatprep.subr.mxu0 0.0
  %2781 = vmatpush1.msra.mxu0 0.0
  %2782 = vmatprep.subr.mxu0 0.0
  %2783 = vmatpush1.msra.mxu0 0.0
  %2784 = vmatprep.subr.mxu0 0.0
  %2785 = vmatpush1.msra.mxu0 0.0
  %2786 = vmatprep.subr.mxu0 0.0
  %2787 = vmatpush1.msra.mxu0 0.0
  %2788 = vmatprep.subr.mxu0 0.0
  %2789 = vmatpush1.msra.mxu0 0.0
  %2790 = vmatprep.subr.mxu0 0.0
  %2791 = vmatpush1.msra.mxu0 0.0
  %2792 = vmatprep.subr.mxu0 0.0
  %2793 = vmatpush1.msra.mxu0 0.0
  %2794 = vmatprep.subr.mxu0 0.0
  %2795 = vmatpush1.msra.mxu0 0.0
  %2796 = vmatprep.subr.mxu0 0.0
  %2797 = vmatpush1.msra.mxu0 0.0
  %2798 = vmatprep.subr.mxu0 0.0
  %2799 = vmatpush1.msra.mxu0 0.0
  %2800 = vmatprep.subr.mxu0 0.0
  %2801 = vmatpush1.msra.mxu0 0.0
  %2802 = vmatprep.subr.mxu0 0.0
  %2803 = vmatpush1.msra.mxu0 0.0
  %2804 = vmatprep.subr.mxu0 0.0
  %2805 = vmatpush1.msra.mxu0 0.0
  %2806 = vmatprep.subr.mxu0 0.0
  %2807 = vmatpush1.msra.mxu0 0.0
  %2808 = vmatprep.subr.mxu0 0.0
  %2809 = vmatpush1.msra.mxu0 0.0
  %2810 = vmatprep.subr.mxu0 0.0
  %2811 = vmatpush1.msra.mxu0 0.0
  %2812 = vmatprep.subr.mxu0 0.0
  %2813 = vmatpush1.msra.mxu0 0.0
  %2814 = vmatprep.subr.mxu0 0.0
  %2815 = vmatpush1.msra.mxu0 0.0
  %2816 = vmatprep.subr.mxu0 0.0
  %2817 = vmatpush1.msra.mxu0 0.0
  %2818 = vmatprep.subr.mxu0 0.0
  %2819 = vmatpush1.msra.mxu0 0.0
  %2820 = vmatprep.subr.mxu0 0.0
  %2821 = vmatpush1.msra.mxu0 0.0
  %2822 = vmatprep.subr.mxu0 0.0
  %2823 = vmatpush1.msra.mxu0 0.0
  %2824 = vmatprep.subr.mxu0 0.0
  %2825 = vmatpush1.msra.mxu0 0.0
  %2826 = vmatprep.subr.mxu0 0.0
  %2827 = vmatpush1.msra.mxu0 0.0
  %2828 = vmatprep.mubr.f32.mxu0 0.0
  %2829 = vmatmul.mubr.f32.gmra.mrb[0].mxu0 %v2762
  %v2830 = vpop.f32.mrb[0].mxu0
  %v2831 = vadd.f32 0.0, %v2830
  %v2832 = vpop.f32.mrb[0].mxu0
  %2833 = vdwg.mxu0
  %2834 = vrot.lane.b32.xlu0 %v392, 64
  %v2835 = vpop.permute.xlu0 %2834
  %v2838 = vsel %vm399, %v1843, 0
  %2840 = vmatprep.subr.mxu0 0.0
  %2841 = vmatpush1.msra.mxu0 %v2835
  %2842 = vmatprep.subr.mxu0 0.0
  %2843 = vmatpush1.msra.mxu0 0.0
  %2844 = vmatprep.subr.mxu0 0.0
  %2845 = vmatpush1.msra.mxu0 0.0
  %2846 = vmatprep.subr.mxu0 0.0
  %2847 = vmatpush1.msra.mxu0 0.0
  %2848 = vmatprep.subr.mxu0 0.0
  %2849 = vmatpush1.msra.mxu0 0.0
  %2850 = vmatprep.subr.mxu0 0.0
  %2851 = vmatpush1.msra.mxu0 0.0
  %2852 = vmatprep.subr.mxu0 0.0
  %2853 = vmatpush1.msra.mxu0 0.0
  %2854 = vmatprep.subr.mxu0 0.0
  %2855 = vmatpush1.msra.mxu0 0.0
  %2856 = vmatprep.subr.mxu0 0.0
  %2857 = vmatpush1.msra.mxu0 0.0
  %2858 = vmatprep.subr.mxu0 0.0
  %2859 = vmatpush1.msra.mxu0 0.0
  %2860 = vmatprep.subr.mxu0 0.0
  %2861 = vmatpush1.msra.mxu0 0.0
  %2862 = vmatprep.subr.mxu0 0.0
  %2863 = vmatpush1.msra.mxu0 0.0
  %2864 = vmatprep.subr.mxu0 0.0
  %2865 = vmatpush1.msra.mxu0 0.0
  %2866 = vmatprep.subr.mxu0 0.0
  %2867 = vmatpush1.msra.mxu0 0.0
  %2868 = vmatprep.subr.mxu0 0.0
  %2869 = vmatpush1.msra.mxu0 0.0
  %2870 = vmatprep.subr.mxu0 0.0
  %2871 = vmatpush1.msra.mxu0 0.0
  %2872 = vmatprep.subr.mxu0 0.0
  %2873 = vmatpush1.msra.mxu0 0.0
  %2874 = vmatprep.subr.mxu0 0.0
  %2875 = vmatpush1.msra.mxu0 0.0
  %2876 = vmatprep.subr.mxu0 0.0
  %2877 = vmatpush1.msra.mxu0 0.0
  %2878 = vmatprep.subr.mxu0 0.0
  %2879 = vmatpush1.msra.mxu0 0.0
  %2880 = vmatprep.subr.mxu0 0.0
  %2881 = vmatpush1.msra.mxu0 0.0
  %2882 = vmatprep.subr.mxu0 0.0
  %2883 = vmatpush1.msra.mxu0 0.0
  %2884 = vmatprep.subr.mxu0 0.0
  %2885 = vmatpush1.msra.mxu0 0.0
  %2886 = vmatprep.subr.mxu0 0.0
  %2887 = vmatpush1.msra.mxu0 0.0
  %2888 = vmatprep.subr.mxu0 0.0
  %2889 = vmatpush1.msra.mxu0 0.0
  %2890 = vmatprep.subr.mxu0 0.0
  %2891 = vmatpush1.msra.mxu0 0.0
  %2892 = vmatprep.subr.mxu0 0.0
  %2893 = vmatpush1.msra.mxu0 0.0
  %2894 = vmatprep.subr.mxu0 0.0
  %2895 = vmatpush1.msra.mxu0 0.0
  %2896 = vmatprep.subr.mxu0 0.0
  %2897 = vmatpush1.msra.mxu0 0.0
  %2898 = vmatprep.subr.mxu0 0.0
  %2899 = vmatpush1.msra.mxu0 0.0
  %2900 = vmatprep.subr.mxu0 0.0
  %2901 = vmatpush1.msra.mxu0 0.0
  %2902 = vmatprep.subr.mxu0 0.0
  %2903 = vmatpush1.msra.mxu0 0.0
  %2904 = vmatprep.mubr.f32.mxu0 0.0
  %2905 = vmatmul.mubr.f32.gmra.mrb[0].mxu0 %v2838
  %v2906 = vpop.f32.mrb[0].mxu0
  %v2907 = vadd.f32 0.0, %v2906
  %v2908 = vpop.f32.mrb[0].mxu0
  %2909 = vdwg.mxu0
  %2910 = vrot.lane.b32.xlu0 %v394, 64
  %v2911 = vpop.permute.xlu0 %2910
  %v2914 = vsel %vm399, %v1844, 0
  %2916 = vmatprep.subr.mxu0 0.0
  %2917 = vmatpush1.msra.mxu0 %v2911
  %2918 = vmatprep.subr.mxu0 0.0
  %2919 = vmatpush1.msra.mxu0 0.0
  %2920 = vmatprep.subr.mxu0 0.0
  %2921 = vmatpush1.msra.mxu0 0.0
  %2922 = vmatprep.subr.mxu0 0.0
  %2923 = vmatpush1.msra.mxu0 0.0
  %2924 = vmatprep.subr.mxu0 0.0
  %2925 = vmatpush1.msra.mxu0 0.0
  %2926 = vmatprep.subr.mxu0 0.0
  %2927 = vmatpush1.msra.mxu0 0.0
  %2928 = vmatprep.subr.mxu0 0.0
  %2929 = vmatpush1.msra.mxu0 0.0
  %2930 = vmatprep.subr.mxu0 0.0
  %2931 = vmatpush1.msra.mxu0 0.0
  %2932 = vmatprep.subr.mxu0 0.0
  %2933 = vmatpush1.msra.mxu0 0.0
  %2934 = vmatprep.subr.mxu0 0.0
  %2935 = vmatpush1.msra.mxu0 0.0
  %2936 = vmatprep.subr.mxu0 0.0
  %2937 = vmatpush1.msra.mxu0 0.0
  %2938 = vmatprep.subr.mxu0 0.0
  %2939 = vmatpush1.msra.mxu0 0.0
  %2940 = vmatprep.subr.mxu0 0.0
  %2941 = vmatpush1.msra.mxu0 0.0
  %2942 = vmatprep.subr.mxu0 0.0
  %2943 = vmatpush1.msra.mxu0 0.0
  %2944 = vmatprep.subr.mxu0 0.0
  %2945 = vmatpush1.msra.mxu0 0.0
  %2946 = vmatprep.subr.mxu0 0.0
  %2947 = vmatpush1.msra.mxu0 0.0
  %2948 = vmatprep.subr.mxu0 0.0
  %2949 = vmatpush1.msra.mxu0 0.0
  %2950 = vmatprep.subr.mxu0 0.0
  %2951 = vmatpush1.msra.mxu0 0.0
  %2952 = vmatprep.subr.mxu0 0.0
  %2953 = vmatpush1.msra.mxu0 0.0
  %2954 = vmatprep.subr.mxu0 0.0
  %2955 = vmatpush1.msra.mxu0 0.0
  %2956 = vmatprep.subr.mxu0 0.0
  %2957 = vmatpush1.msra.mxu0 0.0
  %2958 = vmatprep.subr.mxu0 0.0
  %2959 = vmatpush1.msra.mxu0 0.0
  %2960 = vmatprep.subr.mxu0 0.0
  %2961 = vmatpush1.msra.mxu0 0.0
  %2962 = vmatprep.subr.mxu0 0.0
  %2963 = vmatpush1.msra.mxu0 0.0
  %2964 = vmatprep.subr.mxu0 0.0
  %2965 = vmatpush1.msra.mxu0 0.0
  %2966 = vmatprep.subr.mxu0 0.0
  %2967 = vmatpush1.msra.mxu0 0.0
  %2968 = vmatprep.subr.mxu0 0.0
  %2969 = vmatpush1.msra.mxu0 0.0
  %2970 = vmatprep.subr.mxu0 0.0
  %2971 = vmatpush1.msra.mxu0 0.0
  %2972 = vmatprep.subr.mxu0 0.0
  %2973 = vmatpush1.msra.mxu0 0.0
  %2974 = vmatprep.subr.mxu0 0.0
  %2975 = vmatpush1.msra.mxu0 0.0
  %2976 = vmatprep.subr.mxu0 0.0
  %2977 = vmatpush1.msra.mxu0 0.0
  %2978 = vmatprep.subr.mxu0 0.0
  %2979 = vmatpush1.msra.mxu0 0.0
  %2980 = vmatprep.mubr.f32.mxu0 0.0
  %2981 = vmatmul.mubr.f32.gmra.mrb[0].mxu0 %v2914
  %v2982 = vpop.f32.mrb[0].mxu0
  %v2983 = vadd.f32 0.0, %v2982
  %v2984 = vpop.f32.mrb[0].mxu0
  %2985 = vdwg.mxu0
  %2986 = vrot.lane.b32.xlu0 %v396, 64
  %v2987 = vpop.permute.xlu0 %2986
  %v2990 = vsel %vm399, %v1845, 0
  %2992 = vmatprep.subr.mxu0 0.0
  %2993 = vmatpush1.msra.mxu0 %v2987
  %2994 = vmatprep.subr.mxu0 0.0
  %2995 = vmatpush1.msra.mxu0 0.0
  %2996 = vmatprep.subr.mxu0 0.0
  %2997 = vmatpush1.msra.mxu0 0.0
  %2998 = vmatprep.subr.mxu0 0.0
  %2999 = vmatpush1.msra.mxu0 0.0
  %3000 = vmatprep.subr.mxu0 0.0
  %3001 = vmatpush1.msra.mxu0 0.0
  %3002 = vmatprep.subr.mxu0 0.0
  %3003 = vmatpush1.msra.mxu0 0.0
  %3004 = vmatprep.subr.mxu0 0.0
  %3005 = vmatpush1.msra.mxu0 0.0
  %3006 = vmatprep.subr.mxu0 0.0
  %3007 = vmatpush1.msra.mxu0 0.0
  %3008 = vmatprep.subr.mxu0 0.0
  %3009 = vmatpush1.msra.mxu0 0.0
  %3010 = vmatprep.subr.mxu0 0.0
  %3011 = vmatpush1.msra.mxu0 0.0
  %3012 = vmatprep.subr.mxu0 0.0
  %3013 = vmatpush1.msra.mxu0 0.0
  %3014 = vmatprep.subr.mxu0 0.0
  %3015 = vmatpush1.msra.mxu0 0.0
  %3016 = vmatprep.subr.mxu0 0.0
  %3017 = vmatpush1.msra.mxu0 0.0
  %3018 = vmatprep.subr.mxu0 0.0
  %3019 = vmatpush1.msra.mxu0 0.0
  %3020 = vmatprep.subr.mxu0 0.0
  %3021 = vmatpush1.msra.mxu0 0.0
  %3022 = vmatprep.subr.mxu0 0.0
  %3023 = vmatpush1.msra.mxu0 0.0
  %3024 = vmatprep.subr.mxu0 0.0
  %3025 = vmatpush1.msra.mxu0 0.0
  %3026 = vmatprep.subr.mxu0 0.0
  %3027 = vmatpush1.msra.mxu0 0.0
  %3028 = vmatprep.subr.mxu0 0.0
  %3029 = vmatpush1.msra.mxu0 0.0
  %3030 = vmatprep.subr.mxu0 0.0
  %3031 = vmatpush1.msra.mxu0 0.0
  %3032 = vmatprep.subr.mxu0 0.0
  %3033 = vmatpush1.msra.mxu0 0.0
  %3034 = vmatprep.subr.mxu0 0.0
  %3035 = vmatpush1.msra.mxu0 0.0
  %3036 = vmatprep.subr.mxu0 0.0
  %3037 = vmatpush1.msra.mxu0 0.0
  %3038 = vmatprep.subr.mxu0 0.0
  %3039 = vmatpush1.msra.mxu0 0.0
  %3040 = vmatprep.subr.mxu0 0.0
  %3041 = vmatpush1.msra.mxu0 0.0
  %3042 = vmatprep.subr.mxu0 0.0
  %3043 = vmatpush1.msra.mxu0 0.0
  %3044 = vmatprep.subr.mxu0 0.0
  %3045 = vmatpush1.msra.mxu0 0.0
  %3046 = vmatprep.subr.mxu0 0.0
  %3047 = vmatpush1.msra.mxu0 0.0
  %3048 = vmatprep.subr.mxu0 0.0
  %3049 = vmatpush1.msra.mxu0 0.0
  %3050 = vmatprep.subr.mxu0 0.0
  %3051 = vmatpush1.msra.mxu0 0.0
  %3052 = vmatprep.subr.mxu0 0.0
  %3053 = vmatpush1.msra.mxu0 0.0
  %3054 = vmatprep.subr.mxu0 0.0
  %3055 = vmatpush1.msra.mxu0 0.0
  %3056 = vmatprep.mubr.f32.mxu0 0.0
  %3057 = vmatmul.mubr.f32.gmra.mrb[0].mxu0 %v2990
  %v3058 = vpop.f32.mrb[0].mxu0
  %v3059 = vadd.f32 0.0, %v3058
  %v3060 = vpop.f32.mrb[0].mxu0
  %3061 = vdwg.mxu0
  %v3062 = vld [vmem:[%s5] sm:$0xff]
  %v3063 = vld [vmem:[%s5 + $0x8] sm:$0xff]
  %v3064 = vld [vmem:[%s5 + $0x10] sm:$0xff]
  %v3065 = vld [vmem:[%s5 + $0x18] sm:$0xff]
  %v3067 = vsel %vm399, %v1919, 0
  %v3070 = vsel %vm399, %v1995, 0
  %v3073 = vsel %vm399, %v2071, 0
  %v3076 = vsel %vm399, %v2147, 0
  %3078 = vmatprep.subr.mxu0 0.0
  %3079 = vmatpush1.msra.mxu0 %v3062
  %3080 = vmatprep.subr.mxu0 0.0
  %3081 = vmatpush1.msra.mxu0 0.0
  %3082 = vmatprep.subr.mxu0 0.0
  %3083 = vmatpush1.msra.mxu0 0.0
  %3084 = vmatprep.subr.mxu0 0.0
  %3085 = vmatpush1.msra.mxu0 0.0
  %3086 = vmatprep.subr.mxu0 0.0
  %3087 = vmatpush1.msra.mxu0 0.0
  %3088 = vmatprep.subr.mxu0 0.0
  %3089 = vmatpush1.msra.mxu0 0.0
  %3090 = vmatprep.subr.mxu0 0.0
  %3091 = vmatpush1.msra.mxu0 0.0
  %3092 = vmatprep.subr.mxu0 0.0
  %3093 = vmatpush1.msra.mxu0 0.0
  %3094 = vmatprep.subr.mxu0 0.0
  %3095 = vmatpush1.msra.mxu0 0.0
  %3096 = vmatprep.subr.mxu0 0.0
  %3097 = vmatpush1.msra.mxu0 0.0
  %3098 = vmatprep.subr.mxu0 0.0
  %3099 = vmatpush1.msra.mxu0 0.0
  %3100 = vmatprep.subr.mxu0 0.0
  %3101 = vmatpush1.msra.mxu0 0.0
  %3102 = vmatprep.subr.mxu0 0.0
  %3103 = vmatpush1.msra.mxu0 0.0
  %3104 = vmatprep.subr.mxu0 0.0
  %3105 = vmatpush1.msra.mxu0 0.0
  %3106 = vmatprep.subr.mxu0 0.0
  %3107 = vmatpush1.msra.mxu0 0.0
  %3108 = vmatprep.subr.mxu0 0.0
  %3109 = vmatpush1.msra.mxu0 0.0
  %3110 = vmatprep.subr.mxu0 0.0
  %3111 = vmatpush1.msra.mxu0 0.0
  %3112 = vmatprep.subr.mxu0 0.0
  %3113 = vmatpush1.msra.mxu0 0.0
  %3114 = vmatprep.subr.mxu0 0.0
  %3115 = vmatpush1.msra.mxu0 0.0
  %3116 = vmatprep.subr.mxu0 0.0
  %3117 = vmatpush1.msra.mxu0 0.0
  %3118 = vmatprep.subr.mxu0 0.0
  %3119 = vmatpush1.msra.mxu0 0.0
  %3120 = vmatprep.subr.mxu0 0.0
  %3121 = vmatpush1.msra.mxu0 0.0
  %3122 = vmatprep.subr.mxu0 0.0
  %3123 = vmatpush1.msra.mxu0 0.0
  %3124 = vmatprep.subr.mxu0 0.0
  %3125 = vmatpush1.msra.mxu0 0.0
  %3126 = vmatprep.subr.mxu0 0.0
  %3127 = vmatpush1.msra.mxu0 0.0
  %3128 = vmatprep.subr.mxu0 0.0
  %3129 = vmatpush1.msra.mxu0 0.0
  %3130 = vmatprep.subr.mxu0 0.0
  %3131 = vmatpush1.msra.mxu0 0.0
  %3132 = vmatprep.subr.mxu0 0.0
  %3133 = vmatpush1.msra.mxu0 0.0
  %3134 = vmatprep.subr.mxu0 0.0
  %3135 = vmatpush1.msra.mxu0 0.0
  %3136 = vmatprep.subr.mxu0 0.0
  %3137 = vmatpush1.msra.mxu0 0.0
  %3138 = vmatprep.subr.mxu0 0.0
  %3139 = vmatpush1.msra.mxu0 0.0
  %3140 = vmatprep.subr.mxu0 0.0
  %3141 = vmatpush1.msra.mxu0 0.0
  %3142 = vmatprep.mubr.f32.mxu0 0.0
  %3143 = vmatmul.mubr.f32.gmra.mrb[0].mxu0 %v3067
  %v3144 = vpop.f32.mrb[0].mxu0
  %v3145 = vadd.f32 0.0, %v3144
  %v3146 = vpop.f32.mrb[0].mxu0
  %3147 = vmatprep.mubr.f32.mxu0 0.0
  %3148 = vmatmul.mubr.f32.gmra.mrb[0].mxu0 %v3070
  %v3149 = vpop.f32.mrb[0].mxu0
  %v3150 = vadd.f32 0.0, %v3149
  %v3151 = vpop.f32.mrb[0].mxu0
  %3152 = vmatprep.mubr.f32.mxu0 0.0
  %3153 = vmatmul.mubr.f32.gmra.mrb[0].mxu0 %v3073
  %v3154 = vpop.f32.mrb[0].mxu0
  %v3155 = vadd.f32 0.0, %v3154
  %v3156 = vpop.f32.mrb[0].mxu0
  %3157 = vmatprep.mubr.f32.mxu0 0.0
  %3158 = vmatmul.mubr.f32.gmra.mrb[0].mxu0 %v3076
  %v3159 = vpop.f32.mrb[0].mxu0
  %v3160 = vadd.f32 0.0, %v3159
  %v3161 = vpop.f32.mrb[0].mxu0
  %3162 = vdwg.mxu0
  %v3164 = vsel %vm399, %v2223, 0
  %v3167 = vsel %vm399, %v2299, 0
  %v3170 = vsel %vm399, %v2375, 0
  %v3173 = vsel %vm399, %v2451, 0
  %3175 = vmatprep.subr.mxu0 0.0
  %3176 = vmatpush1.msra.mxu0 %v3063
  %3177 = vmatprep.subr.mxu0 0.0
  %3178 = vmatpush1.msra.mxu0 0.0
  %3179 = vmatprep.subr.mxu0 0.0
  %3180 = vmatpush1.msra.mxu0 0.0
  %3181 = vmatprep.subr.mxu0 0.0
  %3182 = vmatpush1.msra.mxu0 0.0
  %3183 = vmatprep.subr.mxu0 0.0
  %3184 = vmatpush1.msra.mxu0 0.0
  %3185 = vmatprep.subr.mxu0 0.0
  %3186 = vmatpush1.msra.mxu0 0.0
  %3187 = vmatprep.subr.mxu0 0.0
  %3188 = vmatpush1.msra.mxu0 0.0
  %3189 = vmatprep.subr.mxu0 0.0
  %3190 = vmatpush1.msra.mxu0 0.0
  %3191 = vmatprep.subr.mxu0 0.0
  %3192 = vmatpush1.msra.mxu0 0.0
  %3193 = vmatprep.subr.mxu0 0.0
  %3194 = vmatpush1.msra.mxu0 0.0
  %3195 = vmatprep.subr.mxu0 0.0
  %3196 = vmatpush1.msra.mxu0 0.0
  %3197 = vmatprep.subr.mxu0 0.0
  %3198 = vmatpush1.msra.mxu0 0.0
  %3199 = vmatprep.subr.mxu0 0.0
  %3200 = vmatpush1.msra.mxu0 0.0
  %3201 = vmatprep.subr.mxu0 0.0
  %3202 = vmatpush1.msra.mxu0 0.0
  %3203 = vmatprep.subr.mxu0 0.0
  %3204 = vmatpush1.msra.mxu0 0.0
  %3205 = vmatprep.subr.mxu0 0.0
  %3206 = vmatpush1.msra.mxu0 0.0
  %3207 = vmatprep.subr.mxu0 0.0
  %3208 = vmatpush1.msra.mxu0 0.0
  %3209 = vmatprep.subr.mxu0 0.0
  %3210 = vmatpush1.msra.mxu0 0.0
  %3211 = vmatprep.subr.mxu0 0.0
  %3212 = vmatpush1.msra.mxu0 0.0
  %3213 = vmatprep.subr.mxu0 0.0
  %3214 = vmatpush1.msra.mxu0 0.0
  %3215 = vmatprep.subr.mxu0 0.0
  %3216 = vmatpush1.msra.mxu0 0.0
  %3217 = vmatprep.subr.mxu0 0.0
  %3218 = vmatpush1.msra.mxu0 0.0
  %3219 = vmatprep.subr.mxu0 0.0
  %3220 = vmatpush1.msra.mxu0 0.0
  %3221 = vmatprep.subr.mxu0 0.0
  %3222 = vmatpush1.msra.mxu0 0.0
  %3223 = vmatprep.subr.mxu0 0.0
  %3224 = vmatpush1.msra.mxu0 0.0
  %3225 = vmatprep.subr.mxu0 0.0
  %3226 = vmatpush1.msra.mxu0 0.0
  %3227 = vmatprep.subr.mxu0 0.0
  %3228 = vmatpush1.msra.mxu0 0.0
  %3229 = vmatprep.subr.mxu0 0.0
  %3230 = vmatpush1.msra.mxu0 0.0
  %3231 = vmatprep.subr.mxu0 0.0
  %3232 = vmatpush1.msra.mxu0 0.0
  %3233 = vmatprep.subr.mxu0 0.0
  %3234 = vmatpush1.msra.mxu0 0.0
  %3235 = vmatprep.subr.mxu0 0.0
  %3236 = vmatpush1.msra.mxu0 0.0
  %3237 = vmatprep.subr.mxu0 0.0
  %3238 = vmatpush1.msra.mxu0 0.0
  %3239 = vmatprep.mubr.f32.mxu0 0.0
  %3240 = vmatmul.mubr.f32.gmra.mrb[0].mxu0 %v3164
  %v3241 = vpop.f32.mrb[0].mxu0
  %v3242 = vadd.f32 0.0, %v3241
  %v3243 = vpop.f32.mrb[0].mxu0
  %3244 = vmatprep.mubr.f32.mxu0 0.0
  %3245 = vmatmul.mubr.f32.gmra.mrb[0].mxu0 %v3167
  %v3246 = vpop.f32.mrb[0].mxu0
  %v3247 = vadd.f32 0.0, %v3246
  %v3248 = vpop.f32.mrb[0].mxu0
  %3249 = vmatprep.mubr.f32.mxu0 0.0
  %3250 = vmatmul.mubr.f32.gmra.mrb[0].mxu0 %v3170
  %v3251 = vpop.f32.mrb[0].mxu0
  %v3252 = vadd.f32 0.0, %v3251
  %v3253 = vpop.f32.mrb[0].mxu0
  %3254 = vmatprep.mubr.f32.mxu0 0.0
  %3255 = vmatmul.mubr.f32.gmra.mrb[0].mxu0 %v3173
  %v3256 = vpop.f32.mrb[0].mxu0
  %v3257 = vadd.f32 0.0, %v3256
  %v3258 = vpop.f32.mrb[0].mxu0
  %3259 = vdwg.mxu0
  %v3261 = vsel %vm399, %v2527, 0
  %v3264 = vsel %vm399, %v2603, 0
  %v3267 = vsel %vm399, %v2679, 0
  %v3270 = vsel %vm399, %v2755, 0
  %3272 = vmatprep.subr.mxu0 0.0
  %3273 = vmatpush1.msra.mxu0 %v3064
  %3274 = vmatprep.subr.mxu0 0.0
  %3275 = vmatpush1.msra.mxu0 0.0
  %3276 = vmatprep.subr.mxu0 0.0
  %3277 = vmatpush1.msra.mxu0 0.0
  %3278 = vmatprep.subr.mxu0 0.0
  %3279 = vmatpush1.msra.mxu0 0.0
  %3280 = vmatprep.subr.mxu0 0.0
  %3281 = vmatpush1.msra.mxu0 0.0
  %3282 = vmatprep.subr.mxu0 0.0
  %3283 = vmatpush1.msra.mxu0 0.0
  %3284 = vmatprep.subr.mxu0 0.0
  %3285 = vmatpush1.msra.mxu0 0.0
  %3286 = vmatprep.subr.mxu0 0.0
  %3287 = vmatpush1.msra.mxu0 0.0
  %3288 = vmatprep.subr.mxu0 0.0
  %3289 = vmatpush1.msra.mxu0 0.0
  %3290 = vmatprep.subr.mxu0 0.0
  %3291 = vmatpush1.msra.mxu0 0.0
  %3292 = vmatprep.subr.mxu0 0.0
  %3293 = vmatpush1.msra.mxu0 0.0
  %3294 = vmatprep.subr.mxu0 0.0
  %3295 = vmatpush1.msra.mxu0 0.0
  %3296 = vmatprep.subr.mxu0 0.0
  %3297 = vmatpush1.msra.mxu0 0.0
  %3298 = vmatprep.subr.mxu0 0.0
  %3299 = vmatpush1.msra.mxu0 0.0
  %3300 = vmatprep.subr.mxu0 0.0
  %3301 = vmatpush1.msra.mxu0 0.0
  %3302 = vmatprep.subr.mxu0 0.0
  %3303 = vmatpush1.msra.mxu0 0.0
  %3304 = vmatprep.subr.mxu0 0.0
  %3305 = vmatpush1.msra.mxu0 0.0
  %3306 = vmatprep.subr.mxu0 0.0
  %3307 = vmatpush1.msra.mxu0 0.0
  %3308 = vmatprep.subr.mxu0 0.0
  %3309 = vmatpush1.msra.mxu0 0.0
  %3310 = vmatprep.subr.mxu0 0.0
  %3311 = vmatpush1.msra.mxu0 0.0
  %3312 = vmatprep.subr.mxu0 0.0
  %3313 = vmatpush1.msra.mxu0 0.0
  %3314 = vmatprep.subr.mxu0 0.0
  %3315 = vmatpush1.msra.mxu0 0.0
  %3316 = vmatprep.subr.mxu0 0.0
  %3317 = vmatpush1.msra.mxu0 0.0
  %3318 = vmatprep.subr.mxu0 0.0
  %3319 = vmatpush1.msra.mxu0 0.0
  %3320 = vmatprep.subr.mxu0 0.0
  %3321 = vmatpush1.msra.mxu0 0.0
  %3322 = vmatprep.subr.mxu0 0.0
  %3323 = vmatpush1.msra.mxu0 0.0
  %3324 = vmatprep.subr.mxu0 0.0
  %3325 = vmatpush1.msra.mxu0 0.0
  %3326 = vmatprep.subr.mxu0 0.0
  %3327 = vmatpush1.msra.mxu0 0.0
  %3328 = vmatprep.subr.mxu0 0.0
  %3329 = vmatpush1.msra.mxu0 0.0
  %3330 = vmatprep.subr.mxu0 0.0
  %3331 = vmatpush1.msra.mxu0 0.0
  %3332 = vmatprep.subr.mxu0 0.0
  %3333 = vmatpush1.msra.mxu0 0.0
  %3334 = vmatprep.subr.mxu0 0.0
  %3335 = vmatpush1.msra.mxu0 0.0
  %3336 = vmatprep.mubr.f32.mxu0 0.0
  %3337 = vmatmul.mubr.f32.gmra.mrb[0].mxu0 %v3261
  %v3338 = vpop.f32.mrb[0].mxu0
  %v3339 = vadd.f32 0.0, %v3338
  %v3340 = vpop.f32.mrb[0].mxu0
  %3341 = vmatprep.mubr.f32.mxu0 0.0
  %3342 = vmatmul.mubr.f32.gmra.mrb[0].mxu0 %v3264
  %v3343 = vpop.f32.mrb[0].mxu0
  %v3344 = vadd.f32 0.0, %v3343
  %v3345 = vpop.f32.mrb[0].mxu0
  %3346 = vmatprep.mubr.f32.mxu0 0.0
  %3347 = vmatmul.mubr.f32.gmra.mrb[0].mxu0 %v3267
  %v3348 = vpop.f32.mrb[0].mxu0
  %v3349 = vadd.f32 0.0, %v3348
  %v3350 = vpop.f32.mrb[0].mxu0
  %3351 = vmatprep.mubr.f32.mxu0 0.0
  %3352 = vmatmul.mubr.f32.gmra.mrb[0].mxu0 %v3270
  %v3353 = vpop.f32.mrb[0].mxu0
  %v3354 = vadd.f32 0.0, %v3353
  %v3355 = vpop.f32.mrb[0].mxu0
  %3356 = vdwg.mxu0
  %v3358 = vsel %vm399, %v2831, 0
  %v3361 = vsel %vm399, %v2907, 0
  %v3364 = vsel %vm399, %v2983, 0
  %v3367 = vsel %vm399, %v3059, 0
  %3369 = vmatprep.subr.mxu0 0.0
  %3370 = vmatpush1.msra.mxu0 %v3065
  %3371 = vmatprep.subr.mxu0 0.0
  %3372 = vmatpush1.msra.mxu0 0.0
  %3373 = vmatprep.subr.mxu0 0.0
  %3374 = vmatpush1.msra.mxu0 0.0
  %3375 = vmatprep.subr.mxu0 0.0
  %3376 = vmatpush1.msra.mxu0 0.0
  %3377 = vmatprep.subr.mxu0 0.0
  %3378 = vmatpush1.msra.mxu0 0.0
  %3379 = vmatprep.subr.mxu0 0.0
  %3380 = vmatpush1.msra.mxu0 0.0
  %3381 = vmatprep.subr.mxu0 0.0
  %3382 = vmatpush1.msra.mxu0 0.0
  %3383 = vmatprep.subr.mxu0 0.0
  %3384 = vmatpush1.msra.mxu0 0.0
  %3385 = vmatprep.subr.mxu0 0.0
  %3386 = vmatpush1.msra.mxu0 0.0
  %3387 = vmatprep.subr.mxu0 0.0
  %3388 = vmatpush1.msra.mxu0 0.0
  %3389 = vmatprep.subr.mxu0 0.0
  %3390 = vmatpush1.msra.mxu0 0.0
  %3391 = vmatprep.subr.mxu0 0.0
  %3392 = vmatpush1.msra.mxu0 0.0
  %3393 = vmatprep.subr.mxu0 0.0
  %3394 = vmatpush1.msra.mxu0 0.0
  %3395 = vmatprep.subr.mxu0 0.0
  %3396 = vmatpush1.msra.mxu0 0.0
  %3397 = vmatprep.subr.mxu0 0.0
  %3398 = vmatpush1.msra.mxu0 0.0
  %3399 = vmatprep.subr.mxu0 0.0
  %3400 = vmatpush1.msra.mxu0 0.0
  %3401 = vmatprep.subr.mxu0 0.0
  %3402 = vmatpush1.msra.mxu0 0.0
  %3403 = vmatprep.subr.mxu0 0.0
  %3404 = vmatpush1.msra.mxu0 0.0
  %3405 = vmatprep.subr.mxu0 0.0
  %3406 = vmatpush1.msra.mxu0 0.0
  %3407 = vmatprep.subr.mxu0 0.0
  %3408 = vmatpush1.msra.mxu0 0.0
  %3409 = vmatprep.subr.mxu0 0.0
  %3410 = vmatpush1.msra.mxu0 0.0
  %3411 = vmatprep.subr.mxu0 0.0
  %3412 = vmatpush1.msra.mxu0 0.0
  %3413 = vmatprep.subr.mxu0 0.0
  %3414 = vmatpush1.msra.mxu0 0.0
  %3415 = vmatprep.subr.mxu0 0.0
  %3416 = vmatpush1.msra.mxu0 0.0
  %3417 = vmatprep.subr.mxu0 0.0
  %3418 = vmatpush1.msra.mxu0 0.0
  %3419 = vmatprep.subr.mxu0 0.0
  %3420 = vmatpush1.msra.mxu0 0.0
  %3421 = vmatprep.subr.mxu0 0.0
  %3422 = vmatpush1.msra.mxu0 0.0
  %3423 = vmatprep.subr.mxu0 0.0
  %3424 = vmatpush1.msra.mxu0 0.0
  %3425 = vmatprep.subr.mxu0 0.0
  %3426 = vmatpush1.msra.mxu0 0.0
  %3427 = vmatprep.subr.mxu0 0.0
  %3428 = vmatpush1.msra.mxu0 0.0
  %3429 = vmatprep.subr.mxu0 0.0
  %3430 = vmatpush1.msra.mxu0 0.0
  %3431 = vmatprep.subr.mxu0 0.0
  %3432 = vmatpush1.msra.mxu0 0.0
  %3433 = vmatprep.mubr.f32.mxu0 0.0
  %3434 = vmatmul.mubr.f32.gmra.mrb[0].mxu0 %v3358
  %v3435 = vpop.f32.mrb[0].mxu0
  %v3436 = vadd.f32 0.0, %v3435
  %v3437 = vpop.f32.mrb[0].mxu0
  %3438 = vmatprep.mubr.f32.mxu0 0.0
  %3439 = vmatmul.mubr.f32.gmra.mrb[0].mxu0 %v3361
  %v3440 = vpop.f32.mrb[0].mxu0
  %v3441 = vadd.f32 0.0, %v3440
  %v3442 = vpop.f32.mrb[0].mxu0
  %3443 = vmatprep.mubr.f32.mxu0 0.0
  %3444 = vmatmul.mubr.f32.gmra.mrb[0].mxu0 %v3364
  %v3445 = vpop.f32.mrb[0].mxu0
  %v3446 = vadd.f32 0.0, %v3445
  %v3447 = vpop.f32.mrb[0].mxu0
  %3448 = vmatprep.mubr.f32.mxu0 0.0
  %3449 = vmatmul.mubr.f32.gmra.mrb[0].mxu0 %v3367
  %v3450 = vpop.f32.mrb[0].mxu0
  %v3451 = vadd.f32 0.0, %v3450
  %v3452 = vpop.f32.mrb[0].mxu0
  %3453 = vdwg.mxu0
  %v3454 = vsel %vm271, %v3145, 0.0
  %v3455 = vsel %vm271, %v3242, 0.0
  %v3456 = vadd.f32 %v3454, %v3455
  %v3457 = vsel %vm271, %v3339, 0.0
  %v3458 = vadd.f32 %v3456, %v3457
  %v3459 = vsel %vm271, %v3436, 0.0
  %v3460 = vadd.f32 %v3458, %v3459
  %v3461 = vsel %vm271, %v3150, 0.0
  %v3462 = vsel %vm271, %v3247, 0.0
  %v3463 = vadd.f32 %v3461, %v3462
  %v3464 = vsel %vm271, %v3344, 0.0
  %v3465 = vadd.f32 %v3463, %v3464
  %v3466 = vsel %vm271, %v3441, 0.0
  %v3467 = vadd.f32 %v3465, %v3466
  %v3468 = vsel %vm271, %v3155, 0.0
  %v3469 = vsel %vm271, %v3252, 0.0
  %v3470 = vadd.f32 %v3468, %v3469
  %v3471 = vsel %vm271, %v3349, 0.0
  %v3472 = vadd.f32 %v3470, %v3471
  %v3473 = vsel %vm271, %v3446, 0.0
  %v3474 = vadd.f32 %v3472, %v3473
  %v3475 = vsel %vm271, %v3160, 0.0
  %v3476 = vsel %vm271, %v3257, 0.0
  %v3477 = vadd.f32 %v3475, %v3476
  %v3478 = vsel %vm271, %v3354, 0.0
  %v3479 = vadd.f32 %v3477, %v3478
  %v3480 = vsel %vm271, %v3451, 0.0
  %v3481 = vadd.f32 %v3479, %v3480
  %v3482 = vld [vmem:[%s6] sm:$0x1]
  %v3484 = vlaneseq
  %v3485 = vshrl.u32 %v3484, 7
  %v3486 = vsub.s32 0, %v3485
  %v3487 = vrot.slane %v3482, %v3486
  %v3489 = vadd.f32 %v3460, %v3487
  %v3490 = vadd.f32 %v3467, %v3487
  %v3491 = vadd.f32 %v3474, %v3487
  %v3492 = vadd.f32 %v3481, %v3487
  %v3493 = vld [vmem:[%s7] sm:$0x3]
  %v3494 = vadd.f32 %v3489, %v192
  %v3495 = vadd.f32 %v3490, %v197
  %v3496 = vadd.f32 %v3491, %v202
  %v3497 = vadd.f32 %v3492, %v207
  %v3498 = vsel %vm271, %v3494, 0.0
  %3499 = vadd.xlane.f32.xlu0 %v3498
  %v3500 = vpop.xlane.xlu0 %3499
  %v3501 = vsel %vm271, %v3495, 0.0
  %3502 = vadd.xlane.f32.xlu0 %v3501
  %v3503 = vpop.xlane.xlu0 %3502
  %v3504 = vsel %vm271, %v3496, 0.0
  %3505 = vadd.xlane.f32.xlu0 %v3504
  %v3506 = vpop.xlane.xlu0 %3505
  %v3507 = vsel %vm271, %v3497, 0.0
  %3508 = vadd.xlane.f32.xlu0 %v3507
  %v3509 = vpop.xlane.xlu0 %3508
  %v3510 = vrcp.pop 32.0
  %v3511 = vmul.f32 %v3500, %v3510
  %v3512 = vmul.f32 %v3503, %v3510
  %v3513 = vmul.f32 %v3506, %v3510
  %v3514 = vmul.f32 %v3509, %v3510
  %v3515 = vsub.f32 %v3494, %v3511
  %v3516 = vsub.f32 %v3495, %v3512
  %v3517 = vsub.f32 %v3496, %v3513
  %v3518 = vsub.f32 %v3497, %v3514
  %v3519 = vmul.f32 %v3515, %v3515
  %v3520 = vmul.f32 %v3516, %v3516
  %v3521 = vmul.f32 %v3517, %v3517
  %v3522 = vmul.f32 %v3518, %v3518
  %v3523 = vsel %vm271, %v3519, 0.0
  %3524 = vadd.xlane.f32.xlu0 %v3523
  %v3525 = vpop.xlane.xlu0 %3524
  %v3526 = vsel %vm271, %v3520, 0.0
  %3527 = vadd.xlane.f32.xlu0 %v3526
  %v3528 = vpop.xlane.xlu0 %3527
  %v3529 = vsel %vm271, %v3521, 0.0
  %3530 = vadd.xlane.f32.xlu0 %v3529
  %v3531 = vpop.xlane.xlu0 %3530
  %v3532 = vsel %vm271, %v3522, 0.0
  %3533 = vadd.xlane.f32.xlu0 %v3532
  %v3534 = vpop.xlane.xlu0 %3533
  %v3535 = vmul.f32 %v3525, %v3510
  %v3536 = vmul.f32 %v3528, %v3510
  %v3537 = vmul.f32 %v3531, %v3510
  %v3538 = vmul.f32 %v3534, %v3510
  %v3539 = vadd.f32 %v3535, 1e-06
  %v3540 = vadd.f32 %v3536, 1e-06
  %v3541 = vadd.f32 %v3537, 1e-06
  %v3542 = vadd.f32 %v3538, 1e-06
  %v3543 = vrsqrt.pop %v3539
  %v3544 = vrsqrt.pop %v3540
  %v3545 = vrsqrt.pop %v3541
  %v3546 = vrsqrt.pop %v3542
  %v3547 = vmul.f32 %v3515, %v3543
  %v3548 = vmul.f32 %v3516, %v3544
  %v3549 = vmul.f32 %v3517, %v3545
  %v3550 = vmul.f32 %v3518, %v3546
  %v3551 = vlaneseq
  %v3552 = vshrl.u32 %v3551, 7
  %v3553 = vsub.s32 0, %v3552
  %v3554 = vrot.slane %v3493, %v3553
  %v3555 = vmul.f32 %v3547, %v3554
  %v3556 = vmul.f32 %v3548, %v3554
  %v3557 = vmul.f32 %v3549, %v3554
  %v3558 = vmul.f32 %v3550, %v3554
  %v3559 = vlaneseq
  %v3560 = vshrl.u32 %v3559, 7
  %v3561 = vsub.s32 1, %v3560
  %v3562 = vrot.slane %v3493, %v3561
  %v3563 = vadd.f32 %v3555, %v3562
  %v3564 = vadd.f32 %v3556, %v3562
  %v3565 = vadd.f32 %v3557, %v3562
  %v3566 = vadd.f32 %v3558, %v3562
  %v3567 = vld [vmem:[%s8] sm:$0xff]
  %v3568 = vld [vmem:[%s8 + $0x8] sm:$0xff]
  %v3569 = vld [vmem:[%s8 + $0x10] sm:$0xff]
  %v3570 = vld [vmem:[%s8 + $0x18] sm:$0xff]
  %v3571 = vld [vmem:[%s9] sm:$0x1]
  %v3573 = vlaneseq
  %v3574 = vshrl.u32 %v3573, 7
  %v3575 = vsub.s32 0, %v3574
  %v3576 = vrot.slane %v3571, %v3575
  %v3579 = vsel %vm271, %v3563, 0
  %v3582 = vsel %vm271, %v3564, 0
  %v3585 = vsel %vm271, %v3565, 0
  %v3588 = vsel %vm271, %v3566, 0
  %3590 = vmatprep.subr.mxu0 0.0
  %3591 = vmatpush1.msra.mxu0 %v3567
  %3592 = vmatprep.subr.mxu0 0.0
  %3593 = vmatpush1.msra.mxu0 %v3568
  %3594 = vmatprep.subr.mxu0 0.0
  %3595 = vmatpush1.msra.mxu0 %v3569
  %3596 = vmatprep.subr.mxu0 0.0
  %3597 = vmatpush1.msra.mxu0 %v3570
  %3598 = vmatprep.subr.mxu0 0.0
  %3599 = vmatpush1.msra.mxu0 0.0
  %3600 = vmatprep.subr.mxu0 0.0
  %3601 = vmatpush1.msra.mxu0 0.0
  %3602 = vmatprep.subr.mxu0 0.0
  %3603 = vmatpush1.msra.mxu0 0.0
  %3604 = vmatprep.subr.mxu0 0.0
  %3605 = vmatpush1.msra.mxu0 0.0
  %3606 = vmatprep.subr.mxu0 0.0
  %3607 = vmatpush1.msra.mxu0 0.0
  %3608 = vmatprep.subr.mxu0 0.0
  %3609 = vmatpush1.msra.mxu0 0.0
  %3610 = vmatprep.subr.mxu0 0.0
  %3611 = vmatpush1.msra.mxu0 0.0
  %3612 = vmatprep.subr.mxu0 0.0
  %3613 = vmatpush1.msra.mxu0 0.0
  %3614 = vmatprep.subr.mxu0 0.0
  %3615 = vmatpush1.msra.mxu0 0.0
  %3616 = vmatprep.subr.mxu0 0.0
  %3617 = vmatpush1.msra.mxu0 0.0
  %3618 = vmatprep.subr.mxu0 0.0
  %3619 = vmatpush1.msra.mxu0 0.0
  %3620 = vmatprep.subr.mxu0 0.0
  %3621 = vmatpush1.msra.mxu0 0.0
  %3622 = vmatprep.subr.mxu0 0.0
  %3623 = vmatpush1.msra.mxu0 0.0
  %3624 = vmatprep.subr.mxu0 0.0
  %3625 = vmatpush1.msra.mxu0 0.0
  %3626 = vmatprep.subr.mxu0 0.0
  %3627 = vmatpush1.msra.mxu0 0.0
  %3628 = vmatprep.subr.mxu0 0.0
  %3629 = vmatpush1.msra.mxu0 0.0
  %3630 = vmatprep.subr.mxu0 0.0
  %3631 = vmatpush1.msra.mxu0 0.0
  %3632 = vmatprep.subr.mxu0 0.0
  %3633 = vmatpush1.msra.mxu0 0.0
  %3634 = vmatprep.subr.mxu0 0.0
  %3635 = vmatpush1.msra.mxu0 0.0
  %3636 = vmatprep.subr.mxu0 0.0
  %3637 = vmatpush1.msra.mxu0 0.0
  %3638 = vmatprep.subr.mxu0 0.0
  %3639 = vmatpush1.msra.mxu0 0.0
  %3640 = vmatprep.subr.mxu0 0.0
  %3641 = vmatpush1.msra.mxu0 0.0
  %3642 = vmatprep.subr.mxu0 0.0
  %3643 = vmatpush1.msra.mxu0 0.0
  %3644 = vmatprep.subr.mxu0 0.0
  %3645 = vmatpush1.msra.mxu0 0.0
  %3646 = vmatprep.subr.mxu0 0.0
  %3647 = vmatpush1.msra.mxu0 0.0
  %3648 = vmatprep.subr.mxu0 0.0
  %3649 = vmatpush1.msra.mxu0 0.0
  %3650 = vmatprep.subr.mxu0 0.0
  %3651 = vmatpush1.msra.mxu0 0.0
  %3652 = vmatprep.subr.mxu0 0.0
  %3653 = vmatpush1.msra.mxu0 0.0
  %3654 = vmatprep.mubr.f32.mxu0 0.0
  %3655 = vmatmul.mubr.f32.gmra.mrb[0].mxu0 %v3579
  %v3656 = vpop.f32.mrb[0].mxu0
  %v3657 = vadd.f32 %v3576, %v3656
  %v3658 = vpop.f32.mrb[0].mxu0
  %3659 = vmatprep.mubr.f32.mxu0 0.0
  %3660 = vmatmul.mubr.f32.gmra.mrb[0].mxu0 %v3582
  %v3661 = vpop.f32.mrb[0].mxu0
  %v3662 = vadd.f32 %v3576, %v3661
  %v3663 = vpop.f32.mrb[0].mxu0
  %3664 = vmatprep.mubr.f32.mxu0 0.0
  %3665 = vmatmul.mubr.f32.gmra.mrb[0].mxu0 %v3585
  %v3666 = vpop.f32.mrb[0].mxu0
  %v3667 = vadd.f32 %v3576, %v3666
  %v3668 = vpop.f32.mrb[0].mxu0
  %3669 = vmatprep.mubr.f32.mxu0 0.0
  %3670 = vmatmul.mubr.f32.gmra.mrb[0].mxu0 %v3588
  %v3671 = vpop.f32.mrb[0].mxu0
  %v3672 = vadd.f32 %v3576, %v3671
  %v3673 = vpop.f32.mrb[0].mxu0
  %3674 = vdwg.mxu0
  %v3675 = vmax.f32 %v3657, 0.0
  %v3676 = vmax.f32 %v3662, 0.0
  %v3677 = vmax.f32 %v3667, 0.0
  %v3678 = vmax.f32 %v3672, 0.0
  %v3679 = vld [vmem:[%s10] sm:$0xff]
  %v3680 = vld [vmem:[%s10 + $0x8] sm:$0xff]
  %v3681 = vld [vmem:[%s10 + $0x10] sm:$0xff]
  %v3682 = vld [vmem:[%s10 + $0x18] sm:$0xff]
  %v3683 = vld [vmem:[%s10 + $0x20] sm:$0xff]
  %v3684 = vld [vmem:[%s10 + $0x28] sm:$0xff]
  %v3685 = vld [vmem:[%s10 + $0x30] sm:$0xff]
  %v3686 = vld [vmem:[%s10 + $0x38] sm:$0xff]
  %v3687 = vld [vmem:[%s11] sm:$0x1]
  %v3689 = vlaneseq
  %v3690 = vshrl.u32 %v3689, 7
  %v3691 = vsub.s32 0, %v3690
  %v3692 = vrot.slane %v3687, %v3691
  %v3695 = vsel %vm112, %v3675, 0
  %v3698 = vsel %vm112, %v3676, 0
  %v3701 = vsel %vm112, %v3677, 0
  %v3704 = vsel %vm112, %v3678, 0
  %3706 = vmatprep.subr.mxu0 0.0
  %3707 = vmatpush1.msra.mxu0 %v3679
  %3708 = vmatprep.subr.mxu0 0.0
  %3709 = vmatpush1.msra.mxu0 %v3680
  %3710 = vmatprep.subr.mxu0 0.0
  %3711 = vmatpush1.msra.mxu0 %v3681
  %3712 = vmatprep.subr.mxu0 0.0
  %3713 = vmatpush1.msra.mxu0 %v3682
  %3714 = vmatprep.subr.mxu0 0.0
  %3715 = vmatpush1.msra.mxu0 %v3683
  %3716 = vmatprep.subr.mxu0 0.0
  %3717 = vmatpush1.msra.mxu0 %v3684
  %3718 = vmatprep.subr.mxu0 0.0
  %3719 = vmatpush1.msra.mxu0 %v3685
  %3720 = vmatprep.subr.mxu0 0.0
  %3721 = vmatpush1.msra.mxu0 %v3686
  %3722 = vmatprep.subr.mxu0 0.0
  %3723 = vmatpush1.msra.mxu0 0.0
  %3724 = vmatprep.subr.mxu0 0.0
  %3725 = vmatpush1.msra.mxu0 0.0
  %3726 = vmatprep.subr.mxu0 0.0
  %3727 = vmatpush1.msra.mxu0 0.0
  %3728 = vmatprep.subr.mxu0 0.0
  %3729 = vmatpush1.msra.mxu0 0.0
  %3730 = vmatprep.subr.mxu0 0.0
  %3731 = vmatpush1.msra.mxu0 0.0
  %3732 = vmatprep.subr.mxu0 0.0
  %3733 = vmatpush1.msra.mxu0 0.0
  %3734 = vmatprep.subr.mxu0 0.0
  %3735 = vmatpush1.msra.mxu0 0.0
  %3736 = vmatprep.subr.mxu0 0.0
  %3737 = vmatpush1.msra.mxu0 0.0
  %3738 = vmatprep.subr.mxu0 0.0
  %3739 = vmatpush1.msra.mxu0 0.0
  %3740 = vmatprep.subr.mxu0 0.0
  %3741 = vmatpush1.msra.mxu0 0.0
  %3742 = vmatprep.subr.mxu0 0.0
  %3743 = vmatpush1.msra.mxu0 0.0
  %3744 = vmatprep.subr.mxu0 0.0
  %3745 = vmatpush1.msra.mxu0 0.0
  %3746 = vmatprep.subr.mxu0 0.0
  %3747 = vmatpush1.msra.mxu0 0.0
  %3748 = vmatprep.subr.mxu0 0.0
  %3749 = vmatpush1.msra.mxu0 0.0
  %3750 = vmatprep.subr.mxu0 0.0
  %3751 = vmatpush1.msra.mxu0 0.0
  %3752 = vmatprep.subr.mxu0 0.0
  %3753 = vmatpush1.msra.mxu0 0.0
  %3754 = vmatprep.subr.mxu0 0.0
  %3755 = vmatpush1.msra.mxu0 0.0
  %3756 = vmatprep.subr.mxu0 0.0
  %3757 = vmatpush1.msra.mxu0 0.0
  %3758 = vmatprep.subr.mxu0 0.0
  %3759 = vmatpush1.msra.mxu0 0.0
  %3760 = vmatprep.subr.mxu0 0.0
  %3761 = vmatpush1.msra.mxu0 0.0
  %3762 = vmatprep.subr.mxu0 0.0
  %3763 = vmatpush1.msra.mxu0 0.0
  %3764 = vmatprep.subr.mxu0 0.0
  %3765 = vmatpush1.msra.mxu0 0.0
  %3766 = vmatprep.subr.mxu0 0.0
  %3767 = vmatpush1.msra.mxu0 0.0
  %3768 = vmatprep.subr.mxu0 0.0
  %3769 = vmatpush1.msra.mxu0 0.0
  %3770 = vmatprep.mubr.f32.mxu0 0.0
  %3771 = vmatmul.mubr.f32.gmra.mrb[0].mxu0 %v3695
  %v3772 = vpop.f32.mrb[0].mxu0
  %v3773 = vadd.f32 %v3692, %v3772
  %v3774 = vpop.f32.mrb[0].mxu0
  %3775 = vmatprep.mubr.f32.mxu0 0.0
  %3776 = vmatmul.mubr.f32.gmra.mrb[0].mxu0 %v3698
  %v3777 = vpop.f32.mrb[0].mxu0
  %v3778 = vadd.f32 %v3692, %v3777
  %v3779 = vpop.f32.mrb[0].mxu0
  %3780 = vmatprep.mubr.f32.mxu0 0.0
  %3781 = vmatmul.mubr.f32.gmra.mrb[0].mxu0 %v3701
  %v3782 = vpop.f32.mrb[0].mxu0
  %v3783 = vadd.f32 %v3692, %v3782
  %v3784 = vpop.f32.mrb[0].mxu0
  %3785 = vmatprep.mubr.f32.mxu0 0.0
  %3786 = vmatmul.mubr.f32.gmra.mrb[0].mxu0 %v3704
  %v3787 = vpop.f32.mrb[0].mxu0
  %v3788 = vadd.f32 %v3692, %v3787
  %v3789 = vpop.f32.mrb[0].mxu0
  %3790 = vdwg.mxu0
  %v3791 = vld [vmem:[%s12] sm:$0x3]
  %v3792 = vadd.f32 %v3773, %v3563
  %v3793 = vadd.f32 %v3778, %v3564
  %v3794 = vadd.f32 %v3783, %v3565
  %v3795 = vadd.f32 %v3788, %v3566
  %v3796 = vsel %vm271, %v3792, 0.0
  %3797 = vadd.xlane.f32.xlu0 %v3796
  %v3798 = vpop.xlane.xlu0 %3797
  %v3799 = vsel %vm271, %v3793, 0.0
  %3800 = vadd.xlane.f32.xlu0 %v3799
  %v3801 = vpop.xlane.xlu0 %3800
  %v3802 = vsel %vm271, %v3794, 0.0
  %3803 = vadd.xlane.f32.xlu0 %v3802
  %v3804 = vpop.xlane.xlu0 %3803
  %v3805 = vsel %vm271, %v3795, 0.0
  %3806 = vadd.xlane.f32.xlu0 %v3805
  %v3807 = vpop.xlane.xlu0 %3806
  %v3808 = vmul.f32 %v3798, %v3510
  %v3809 = vmul.f32 %v3801, %v3510
  %v3810 = vmul.f32 %v3804, %v3510
  %v3811 = vmul.f32 %v3807, %v3510
  %v3812 = vsub.f32 %v3792, %v3808
  %v3813 = vsub.f32 %v3793, %v3809
  %v3814 = vsub.f32 %v3794, %v3810
  %v3815 = vsub.f32 %v3795, %v3811
  %v3816 = vmul.f32 %v3812, %v3812
  %v3817 = vmul.f32 %v3813, %v3813
  %v3818 = vmul.f32 %v3814, %v3814
  %v3819 = vmul.f32 %v3815, %v3815
  %v3820 = vsel %vm271, %v3816, 0.0
  %3821 = vadd.xlane.f32.xlu0 %v3820
  %v3822 = vpop.xlane.xlu0 %3821
  %v3823 = vsel %vm271, %v3817, 0.0
  %3824 = vadd.xlane.f32.xlu0 %v3823
  %v3825 = vpop.xlane.xlu0 %3824
  %v3826 = vsel %vm271, %v3818, 0.0
  %3827 = vadd.xlane.f32.xlu0 %v3826
  %v3828 = vpop.xlane.xlu0 %3827
  %v3829 = vsel %vm271, %v3819, 0.0
  %3830 = vadd.xlane.f32.xlu0 %v3829
  %v3831 = vpop.xlane.xlu0 %3830
  %v3832 = vmul.f32 %v3822, %v3510
  %v3833 = vmul.f32 %v3825, %v3510
  %v3834 = vmul.f32 %v3828, %v3510
  %v3835 = vmul.f32 %v3831, %v3510
  %v3836 = vadd.f32 %v3832, 1e-06
  %v3837 = vadd.f32 %v3833, 1e-06
  %v3838 = vadd.f32 %v3834, 1e-06
  %v3839 = vadd.f32 %v3835, 1e-06
  %v3840 = vrsqrt.pop %v3836
  %v3841 = vrsqrt.pop %v3837
  %v3842 = vrsqrt.pop %v3838
  %v3843 = vrsqrt.pop %v3839
  %v3844 = vmul.f32 %v3812, %v3840
  %v3845 = vmul.f32 %v3813, %v3841
  %v3846 = vmul.f32 %v3814, %v3842
  %v3847 = vmul.f32 %v3815, %v3843
  %v3848 = vlaneseq
  %v3849 = vshrl.u32 %v3848, 7
  %v3850 = vsub.s32 0, %v3849
  %v3851 = vrot.slane %v3791, %v3850
  %v3852 = vmul.f32 %v3844, %v3851
  %v3853 = vmul.f32 %v3845, %v3851
  %v3854 = vmul.f32 %v3846, %v3851
  %v3855 = vmul.f32 %v3847, %v3851
  %v3856 = vlaneseq
  %v3857 = vshrl.u32 %v3856, 7
  %v3858 = vsub.s32 1, %v3857
  %v3859 = vrot.slane %v3791, %v3858
  %v3860 = vadd.f32 %v3852, %v3859
  %v3861 = vadd.f32 %v3853, %v3859
  %v3862 = vadd.f32 %v3854, %v3859
  %v3863 = vadd.f32 %v3855, %v3859
  %s3864 = scalar_lea.vmem %s4, 32
  %v3865 = vld [vmem:[%s3864] sm:$0xff]
  %v3866 = vld [vmem:[%s3864 + $0x8] sm:$0xff]
  %v3867 = vld [vmem:[%s3864 + $0x10] sm:$0xff]
  %v3868 = vld [vmem:[%s3864 + $0x18] sm:$0xff]
  %v3870 = vsel %vm271, %v3860, 0
  %v3873 = vsel %vm271, %v3861, 0
  %v3876 = vsel %vm271, %v3862, 0
  %v3879 = vsel %vm271, %v3863, 0
  %3881 = vmatprep.subr.mxu0 0.0
  %3882 = vmatpush1.msra.mxu0 %v3865
  %3883 = vmatprep.subr.mxu0 0.0
  %3884 = vmatpush1.msra.mxu0 %v3866
  %3885 = vmatprep.subr.mxu0 0.0
  %3886 = vmatpush1.msra.mxu0 %v3867
  %3887 = vmatprep.subr.mxu0 0.0
  %3888 = vmatpush1.msra.mxu0 %v3868
  %3889 = vmatprep.subr.mxu0 0.0
  %3890 = vmatpush1.msra.mxu0 0.0
  %3891 = vmatprep.subr.mxu0 0.0
  %3892 = vmatpush1.msra.mxu0 0.0
  %3893 = vmatprep.subr.mxu0 0.0
  %3894 = vmatpush1.msra.mxu0 0.0
  %3895 = vmatprep.subr.mxu0 0.0
  %3896 = vmatpush1.msra.mxu0 0.0
  %3897 = vmatprep.subr.mxu0 0.0
  %3898 = vmatpush1.msra.mxu0 0.0
  %3899 = vmatprep.subr.mxu0 0.0
  %3900 = vmatpush1.msra.mxu0 0.0
  %3901 = vmatprep.subr.mxu0 0.0
  %3902 = vmatpush1.msra.mxu0 0.0
  %3903 = vmatprep.subr.mxu0 0.0
  %3904 = vmatpush1.msra.mxu0 0.0
  %3905 = vmatprep.subr.mxu0 0.0
  %3906 = vmatpush1.msra.mxu0 0.0
  %3907 = vmatprep.subr.mxu0 0.0
  %3908 = vmatpush1.msra.mxu0 0.0
  %3909 = vmatprep.subr.mxu0 0.0
  %3910 = vmatpush1.msra.mxu0 0.0
  %3911 = vmatprep.subr.mxu0 0.0
  %3912 = vmatpush1.msra.mxu0 0.0
  %3913 = vmatprep.subr.mxu0 0.0
  %3914 = vmatpush1.msra.mxu0 0.0
  %3915 = vmatprep.subr.mxu0 0.0
  %3916 = vmatpush1.msra.mxu0 0.0
  %3917 = vmatprep.subr.mxu0 0.0
  %3918 = vmatpush1.msra.mxu0 0.0
  %3919 = vmatprep.subr.mxu0 0.0
  %3920 = vmatpush1.msra.mxu0 0.0
  %3921 = vmatprep.subr.mxu0 0.0
  %3922 = vmatpush1.msra.mxu0 0.0
  %3923 = vmatprep.subr.mxu0 0.0
  %3924 = vmatpush1.msra.mxu0 0.0
  %3925 = vmatprep.subr.mxu0 0.0
  %3926 = vmatpush1.msra.mxu0 0.0
  %3927 = vmatprep.subr.mxu0 0.0
  %3928 = vmatpush1.msra.mxu0 0.0
  %3929 = vmatprep.subr.mxu0 0.0
  %3930 = vmatpush1.msra.mxu0 0.0
  %3931 = vmatprep.subr.mxu0 0.0
  %3932 = vmatpush1.msra.mxu0 0.0
  %3933 = vmatprep.subr.mxu0 0.0
  %3934 = vmatpush1.msra.mxu0 0.0
  %3935 = vmatprep.subr.mxu0 0.0
  %3936 = vmatpush1.msra.mxu0 0.0
  %3937 = vmatprep.subr.mxu0 0.0
  %3938 = vmatpush1.msra.mxu0 0.0
  %3939 = vmatprep.subr.mxu0 0.0
  %3940 = vmatpush1.msra.mxu0 0.0
  %3941 = vmatprep.subr.mxu0 0.0
  %3942 = vmatpush1.msra.mxu0 0.0
  %3943 = vmatprep.subr.mxu0 0.0
  %3944 = vmatpush1.msra.mxu0 0.0
  %3945 = vmatprep.mubr.f32.mxu0 0.0
  %3946 = vmatmul.mubr.f32.gmra.mrb[0].mxu0 %v3870
  %v3947 = vpop.f32.mrb[0].mxu0
  %v3948 = vadd.f32 0.0, %v3947
  %v3949 = vpop.f32.mrb[0].mxu0
  %3950 = vmatprep.mubr.f32.mxu0 0.0
  %3951 = vmatmul.mubr.f32.gmra.mrb[0].mxu0 %v3873
  %v3952 = vpop.f32.mrb[0].mxu0
  %v3953 = vadd.f32 0.0, %v3952
  %v3954 = vpop.f32.mrb[0].mxu0
  %3955 = vmatprep.mubr.f32.mxu0 0.0
  %3956 = vmatmul.mubr.f32.gmra.mrb[0].mxu0 %v3876
  %v3957 = vpop.f32.mrb[0].mxu0
  %v3958 = vadd.f32 0.0, %v3957
  %v3959 = vpop.f32.mrb[0].mxu0
  %3960 = vmatprep.mubr.f32.mxu0 0.0
  %3961 = vmatmul.mubr.f32.gmra.mrb[0].mxu0 %v3879
  %v3962 = vpop.f32.mrb[0].mxu0
  %v3963 = vadd.f32 0.0, %v3962
  %v3964 = vpop.f32.mrb[0].mxu0
  %3965 = vdwg.mxu0
  %3970 = vrot.lane.b32.xlu0 %v3948, 120
  %v3971 = vpop.permute.xlu0 %3970
  %3972 = vrot.lane.b32.xlu0 %v3953, 120
  %v3973 = vpop.permute.xlu0 %3972
  %3974 = vrot.lane.b32.xlu0 %v3958, 120
  %v3975 = vpop.permute.xlu0 %3974
  %3976 = vrot.lane.b32.xlu0 %v3963, 120
  %v3977 = vpop.permute.xlu0 %3976
  %3978 = vrot.lane.b32.xlu0 %v3948, 112
  %v3979 = vpop.permute.xlu0 %3978
  %3980 = vrot.lane.b32.xlu0 %v3953, 112
  %v3981 = vpop.permute.xlu0 %3980
  %3982 = vrot.lane.b32.xlu0 %v3958, 112
  %v3983 = vpop.permute.xlu0 %3982
  %3984 = vrot.lane.b32.xlu0 %v3963, 112
  %v3985 = vpop.permute.xlu0 %3984
  %3986 = vrot.lane.b32.xlu0 %v3948, 104
  %v3987 = vpop.permute.xlu0 %3986
  %3988 = vrot.lane.b32.xlu0 %v3953, 104
  %v3989 = vpop.permute.xlu0 %3988
  %3990 = vrot.lane.b32.xlu0 %v3958, 104
  %v3991 = vpop.permute.xlu0 %3990
  %3992 = vrot.lane.b32.xlu0 %v3963, 104
  %v3993 = vpop.permute.xlu0 %3992
  %3994 = vrot.lane.b32.xlu0 %v3948, 96
  %v3995 = vpop.permute.xlu0 %3994
  %v3996 = vsel %vm399, %v3948, 0
  %v3998 = vsel %vm399, %v3995, 0
  %4000 = vmatprep.subr.mxu0 0.0
  %4001 = vmatpush1.xpose.msra.mxu0 %v3998
  %4002 = vmatprep.subr.mxu0 0.0
  %4003 = vmatpush1.xpose.msra.mxu0 0.0
  %4004 = vmatprep.subr.mxu0 0.0
  %4005 = vmatpush1.xpose.msra.mxu0 0.0
  %4006 = vmatprep.subr.mxu0 0.0
  %4007 = vmatpush1.xpose.msra.mxu0 0.0
  %4008 = vmatprep.subr.mxu0 0.0
  %4009 = vmatpush1.xpose.msra.mxu0 0.0
  %4010 = vmatprep.subr.mxu0 0.0
  %4011 = vmatpush1.xpose.msra.mxu0 0.0
  %4012 = vmatprep.subr.mxu0 0.0
  %4013 = vmatpush1.xpose.msra.mxu0 0.0
  %4014 = vmatprep.subr.mxu0 0.0
  %4015 = vmatpush1.xpose.msra.mxu0 0.0
  %4016 = vmatprep.subr.mxu0 0.0
  %4017 = vmatpush1.xpose.msra.mxu0 0.0
  %4018 = vmatprep.subr.mxu0 0.0
  %4019 = vmatpush1.xpose.msra.mxu0 0.0
  %4020 = vmatprep.subr.mxu0 0.0
  %4021 = vmatpush1.xpose.msra.mxu0 0.0
  %4022 = vmatprep.subr.mxu0 0.0
  %4023 = vmatpush1.xpose.msra.mxu0 0.0
  %4024 = vmatprep.subr.mxu0 0.0
  %4025 = vmatpush1.xpose.msra.mxu0 0.0
  %4026 = vmatprep.subr.mxu0 0.0
  %4027 = vmatpush1.xpose.msra.mxu0 0.0
  %4028 = vmatprep.subr.mxu0 0.0
  %4029 = vmatpush1.xpose.msra.mxu0 0.0
  %4030 = vmatprep.subr.mxu0 0.0
  %4031 = vmatpush1.xpose.msra.mxu0 0.0
  %4032 = vmatprep.subr.mxu0 0.0
  %4033 = vmatpush1.xpose.msra.mxu0 0.0
  %4034 = vmatprep.subr.mxu0 0.0
  %4035 = vmatpush1.xpose.msra.mxu0 0.0
  %4036 = vmatprep.subr.mxu0 0.0
  %4037 = vmatpush1.xpose.msra.mxu0 0.0
  %4038 = vmatprep.subr.mxu0 0.0
  %4039 = vmatpush1.xpose.msra.mxu0 0.0
  %4040 = vmatprep.subr.mxu0 0.0
  %4041 = vmatpush1.xpose.msra.mxu0 0.0
  %4042 = vmatprep.subr.mxu0 0.0
  %4043 = vmatpush1.xpose.msra.mxu0 0.0
  %4044 = vmatprep.subr.mxu0 0.0
  %4045 = vmatpush1.xpose.msra.mxu0 0.0
  %4046 = vmatprep.subr.mxu0 0.0
  %4047 = vmatpush1.xpose.msra.mxu0 0.0
  %4048 = vmatprep.subr.mxu0 0.0
  %4049 = vmatpush1.xpose.msra.mxu0 0.0
  %4050 = vmatprep.subr.mxu0 0.0
  %4051 = vmatpush1.xpose.msra.mxu0 0.0
  %4052 = vmatprep.subr.mxu0 0.0
  %4053 = vmatpush1.xpose.msra.mxu0 0.0
  %4054 = vmatprep.subr.mxu0 0.0
  %4055 = vmatpush1.xpose.msra.mxu0 0.0
  %4056 = vmatprep.subr.mxu0 0.0
  %4057 = vmatpush1.xpose.msra.mxu0 0.0
  %4058 = vmatprep.subr.mxu0 0.0
  %4059 = vmatpush1.xpose.msra.mxu0 0.0
  %4060 = vmatprep.subr.mxu0 0.0
  %4061 = vmatpush1.xpose.msra.mxu0 0.0
  %4062 = vmatprep.subr.mxu0 0.0
  %4063 = vmatpush1.xpose.msra.mxu0 0.0
  %4064 = vmatprep.mubr.f32.mxu0 0.0
  %4065 = vmatmul.mubr.f32.gmra.mrb[0].mxu0 %v3996
  %v4066 = vpop.f32.mrb[0].mxu0
  %v4067 = vadd.f32 0.0, %v4066
  %v4068 = vpop.f32.mrb[0].mxu0
  %4069 = vdwg.mxu0
  %4070 = vrot.lane.b32.xlu0 %v3953, 96
  %v4071 = vpop.permute.xlu0 %4070
  %v4072 = vsel %vm399, %v3953, 0
  %v4074 = vsel %vm399, %v4071, 0
  %4076 = vmatprep.subr.mxu0 0.0
  %4077 = vmatpush1.xpose.msra.mxu0 %v4074
  %4078 = vmatprep.subr.mxu0 0.0
  %4079 = vmatpush1.xpose.msra.mxu0 0.0
  %4080 = vmatprep.subr.mxu0 0.0
  %4081 = vmatpush1.xpose.msra.mxu0 0.0
  %4082 = vmatprep.subr.mxu0 0.0
  %4083 = vmatpush1.xpose.msra.mxu0 0.0
  %4084 = vmatprep.subr.mxu0 0.0
  %4085 = vmatpush1.xpose.msra.mxu0 0.0
  %4086 = vmatprep.subr.mxu0 0.0
  %4087 = vmatpush1.xpose.msra.mxu0 0.0
  %4088 = vmatprep.subr.mxu0 0.0
  %4089 = vmatpush1.xpose.msra.mxu0 0.0
  %4090 = vmatprep.subr.mxu0 0.0
  %4091 = vmatpush1.xpose.msra.mxu0 0.0
  %4092 = vmatprep.subr.mxu0 0.0
  %4093 = vmatpush1.xpose.msra.mxu0 0.0
  %4094 = vmatprep.subr.mxu0 0.0
  %4095 = vmatpush1.xpose.msra.mxu0 0.0
  %4096 = vmatprep.subr.mxu0 0.0
  %4097 = vmatpush1.xpose.msra.mxu0 0.0
  %4098 = vmatprep.subr.mxu0 0.0
  %4099 = vmatpush1.xpose.msra.mxu0 0.0
  %4100 = vmatprep.subr.mxu0 0.0
  %4101 = vmatpush1.xpose.msra.mxu0 0.0
  %4102 = vmatprep.subr.mxu0 0.0
  %4103 = vmatpush1.xpose.msra.mxu0 0.0
  %4104 = vmatprep.subr.mxu0 0.0
  %4105 = vmatpush1.xpose.msra.mxu0 0.0
  %4106 = vmatprep.subr.mxu0 0.0
  %4107 = vmatpush1.xpose.msra.mxu0 0.0
  %4108 = vmatprep.subr.mxu0 0.0
  %4109 = vmatpush1.xpose.msra.mxu0 0.0
  %4110 = vmatprep.subr.mxu0 0.0
  %4111 = vmatpush1.xpose.msra.mxu0 0.0
  %4112 = vmatprep.subr.mxu0 0.0
  %4113 = vmatpush1.xpose.msra.mxu0 0.0
  %4114 = vmatprep.subr.mxu0 0.0
  %4115 = vmatpush1.xpose.msra.mxu0 0.0
  %4116 = vmatprep.subr.mxu0 0.0
  %4117 = vmatpush1.xpose.msra.mxu0 0.0
  %4118 = vmatprep.subr.mxu0 0.0
  %4119 = vmatpush1.xpose.msra.mxu0 0.0
  %4120 = vmatprep.subr.mxu0 0.0
  %4121 = vmatpush1.xpose.msra.mxu0 0.0
  %4122 = vmatprep.subr.mxu0 0.0
  %4123 = vmatpush1.xpose.msra.mxu0 0.0
  %4124 = vmatprep.subr.mxu0 0.0
  %4125 = vmatpush1.xpose.msra.mxu0 0.0
  %4126 = vmatprep.subr.mxu0 0.0
  %4127 = vmatpush1.xpose.msra.mxu0 0.0
  %4128 = vmatprep.subr.mxu0 0.0
  %4129 = vmatpush1.xpose.msra.mxu0 0.0
  %4130 = vmatprep.subr.mxu0 0.0
  %4131 = vmatpush1.xpose.msra.mxu0 0.0
  %4132 = vmatprep.subr.mxu0 0.0
  %4133 = vmatpush1.xpose.msra.mxu0 0.0
  %4134 = vmatprep.subr.mxu0 0.0
  %4135 = vmatpush1.xpose.msra.mxu0 0.0
  %4136 = vmatprep.subr.mxu0 0.0
  %4137 = vmatpush1.xpose.msra.mxu0 0.0
  %4138 = vmatprep.subr.mxu0 0.0
  %4139 = vmatpush1.xpose.msra.mxu0 0.0
  %4140 = vmatprep.mubr.f32.mxu0 0.0
  %4141 = vmatmul.mubr.f32.gmra.mrb[0].mxu0 %v4072
  %v4142 = vpop.f32.mrb[0].mxu0
  %v4143 = vadd.f32 0.0, %v4142
  %v4144 = vpop.f32.mrb[0].mxu0
  %4145 = vdwg.mxu0
  %4146 = vrot.lane.b32.xlu0 %v3958, 96
  %v4147 = vpop.permute.xlu0 %4146
  %v4148 = vsel %vm399, %v3958, 0
  %v4150 = vsel %vm399, %v4147, 0
  %4152 = vmatprep.subr.mxu0 0.0
  %4153 = vmatpush1.xpose.msra.mxu0 %v4150
  %4154 = vmatprep.subr.mxu0 0.0
  %4155 = vmatpush1.xpose.msra.mxu0 0.0
  %4156 = vmatprep.subr.mxu0 0.0
  %4157 = vmatpush1.xpose.msra.mxu0 0.0
  %4158 = vmatprep.subr.mxu0 0.0
  %4159 = vmatpush1.xpose.msra.mxu0 0.0
  %4160 = vmatprep.subr.mxu0 0.0
  %4161 = vmatpush1.xpose.msra.mxu0 0.0
  %4162 = vmatprep.subr.mxu0 0.0
  %4163 = vmatpush1.xpose.msra.mxu0 0.0
  %4164 = vmatprep.subr.mxu0 0.0
  %4165 = vmatpush1.xpose.msra.mxu0 0.0
  %4166 = vmatprep.subr.mxu0 0.0
  %4167 = vmatpush1.xpose.msra.mxu0 0.0
  %4168 = vmatprep.subr.mxu0 0.0
  %4169 = vmatpush1.xpose.msra.mxu0 0.0
  %4170 = vmatprep.subr.mxu0 0.0
  %4171 = vmatpush1.xpose.msra.mxu0 0.0
  %4172 = vmatprep.subr.mxu0 0.0
  %4173 = vmatpush1.xpose.msra.mxu0 0.0
  %4174 = vmatprep.subr.mxu0 0.0
  %4175 = vmatpush1.xpose.msra.mxu0 0.0
  %4176 = vmatprep.subr.mxu0 0.0
  %4177 = vmatpush1.xpose.msra.mxu0 0.0
  %4178 = vmatprep.subr.mxu0 0.0
  %4179 = vmatpush1.xpose.msra.mxu0 0.0
  %4180 = vmatprep.subr.mxu0 0.0
  %4181 = vmatpush1.xpose.msra.mxu0 0.0
  %4182 = vmatprep.subr.mxu0 0.0
  %4183 = vmatpush1.xpose.msra.mxu0 0.0
  %4184 = vmatprep.subr.mxu0 0.0
  %4185 = vmatpush1.xpose.msra.mxu0 0.0
  %4186 = vmatprep.subr.mxu0 0.0
  %4187 = vmatpush1.xpose.msra.mxu0 0.0
  %4188 = vmatprep.subr.mxu0 0.0
  %4189 = vmatpush1.xpose.msra.mxu0 0.0
  %4190 = vmatprep.subr.mxu0 0.0
  %4191 = vmatpush1.xpose.msra.mxu0 0.0
  %4192 = vmatprep.subr.mxu0 0.0
  %4193 = vmatpush1.xpose.msra.mxu0 0.0
  %4194 = vmatprep.subr.mxu0 0.0
  %4195 = vmatpush1.xpose.msra.mxu0 0.0
  %4196 = vmatprep.subr.mxu0 0.0
  %4197 = vmatpush1.xpose.msra.mxu0 0.0
  %4198 = vmatprep.subr.mxu0 0.0
  %4199 = vmatpush1.xpose.msra.mxu0 0.0
  %4200 = vmatprep.subr.mxu0 0.0
  %4201 = vmatpush1.xpose.msra.mxu0 0.0
  %4202 = vmatprep.subr.mxu0 0.0
  %4203 = vmatpush1.xpose.msra.mxu0 0.0
  %4204 = vmatprep.subr.mxu0 0.0
  %4205 = vmatpush1.xpose.msra.mxu0 0.0
  %4206 = vmatprep.subr.mxu0 0.0
  %4207 = vmatpush1.xpose.msra.mxu0 0.0
  %4208 = vmatprep.subr.mxu0 0.0
  %4209 = vmatpush1.xpose.msra.mxu0 0.0
  %4210 = vmatprep.subr.mxu0 0.0
  %4211 = vmatpush1.xpose.msra.mxu0 0.0
  %4212 = vmatprep.subr.mxu0 0.0
  %4213 = vmatpush1.xpose.msra.mxu0 0.0
  %4214 = vmatprep.subr.mxu0 0.0
  %4215 = vmatpush1.xpose.msra.mxu0 0.0
  %4216 = vmatprep.mubr.f32.mxu0 0.0
  %4217 = vmatmul.mubr.f32.gmra.mrb[0].mxu0 %v4148
  %v4218 = vpop.f32.mrb[0].mxu0
  %v4219 = vadd.f32 0.0, %v4218
  %v4220 = vpop.f32.mrb[0].mxu0
  %4221 = vdwg.mxu0
  %4222 = vrot.lane.b32.xlu0 %v3963, 96
  %v4223 = vpop.permute.xlu0 %4222
  %v4224 = vsel %vm399, %v3963, 0
  %v4226 = vsel %vm399, %v4223, 0
  %4228 = vmatprep.subr.mxu0 0.0
  %4229 = vmatpush1.xpose.msra.mxu0 %v4226
  %4230 = vmatprep.subr.mxu0 0.0
  %4231 = vmatpush1.xpose.msra.mxu0 0.0
  %4232 = vmatprep.subr.mxu0 0.0
  %4233 = vmatpush1.xpose.msra.mxu0 0.0
  %4234 = vmatprep.subr.mxu0 0.0
  %4235 = vmatpush1.xpose.msra.mxu0 0.0
  %4236 = vmatprep.subr.mxu0 0.0
  %4237 = vmatpush1.xpose.msra.mxu0 0.0
  %4238 = vmatprep.subr.mxu0 0.0
  %4239 = vmatpush1.xpose.msra.mxu0 0.0
  %4240 = vmatprep.subr.mxu0 0.0
  %4241 = vmatpush1.xpose.msra.mxu0 0.0
  %4242 = vmatprep.subr.mxu0 0.0
  %4243 = vmatpush1.xpose.msra.mxu0 0.0
  %4244 = vmatprep.subr.mxu0 0.0
  %4245 = vmatpush1.xpose.msra.mxu0 0.0
  %4246 = vmatprep.subr.mxu0 0.0
  %4247 = vmatpush1.xpose.msra.mxu0 0.0
  %4248 = vmatprep.subr.mxu0 0.0
  %4249 = vmatpush1.xpose.msra.mxu0 0.0
  %4250 = vmatprep.subr.mxu0 0.0
  %4251 = vmatpush1.xpose.msra.mxu0 0.0
  %4252 = vmatprep.subr.mxu0 0.0
  %4253 = vmatpush1.xpose.msra.mxu0 0.0
  %4254 = vmatprep.subr.mxu0 0.0
  %4255 = vmatpush1.xpose.msra.mxu0 0.0
  %4256 = vmatprep.subr.mxu0 0.0
  %4257 = vmatpush1.xpose.msra.mxu0 0.0
  %4258 = vmatprep.subr.mxu0 0.0
  %4259 = vmatpush1.xpose.msra.mxu0 0.0
  %4260 = vmatprep.subr.mxu0 0.0
  %4261 = vmatpush1.xpose.msra.mxu0 0.0
  %4262 = vmatprep.subr.mxu0 0.0
  %4263 = vmatpush1.xpose.msra.mxu0 0.0
  %4264 = vmatprep.subr.mxu0 0.0
  %4265 = vmatpush1.xpose.msra.mxu0 0.0
  %4266 = vmatprep.subr.mxu0 0.0
  %4267 = vmatpush1.xpose.msra.mxu0 0.0
  %4268 = vmatprep.subr.mxu0 0.0
  %4269 = vmatpush1.xpose.msra.mxu0 0.0
  %4270 = vmatprep.subr.mxu0 0.0
  %4271 = vmatpush1.xpose.msra.mxu0 0.0
  %4272 = vmatprep.subr.mxu0 0.0
  %4273 = vmatpush1.xpose.msra.mxu0 0.0
  %4274 = vmatprep.subr.mxu0 0.0
  %4275 = vmatpush1.xpose.msra.mxu0 0.0
  %4276 = vmatprep.subr.mxu0 0.0
  %4277 = vmatpush1.xpose.msra.mxu0 0.0
  %4278 = vmatprep.subr.mxu0 0.0
  %4279 = vmatpush1.xpose.msra.mxu0 0.0
  %4280 = vmatprep.subr.mxu0 0.0
  %4281 = vmatpush1.xpose.msra.mxu0 0.0
  %4282 = vmatprep.subr.mxu0 0.0
  %4283 = vmatpush1.xpose.msra.mxu0 0.0
  %4284 = vmatprep.subr.mxu0 0.0
  %4285 = vmatpush1.xpose.msra.mxu0 0.0
  %4286 = vmatprep.subr.mxu0 0.0
  %4287 = vmatpush1.xpose.msra.mxu0 0.0
  %4288 = vmatprep.subr.mxu0 0.0
  %4289 = vmatpush1.xpose.msra.mxu0 0.0
  %4290 = vmatprep.subr.mxu0 0.0
  %4291 = vmatpush1.xpose.msra.mxu0 0.0
  %4292 = vmatprep.mubr.f32.mxu0 0.0
  %4293 = vmatmul.mubr.f32.gmra.mrb[0].mxu0 %v4224
  %v4294 = vpop.f32.mrb[0].mxu0
  %v4295 = vadd.f32 0.0, %v4294
  %v4296 = vpop.f32.mrb[0].mxu0
  %4297 = vdwg.mxu0
  %4298 = vrot.lane.b32.xlu0 %v3971, 96
  %v4299 = vpop.permute.xlu0 %4298
  %v4300 = vsel %vm399, %v3971, 0
  %v4302 = vsel %vm399, %v4299, 0
  %4304 = vmatprep.subr.mxu0 0.0
  %4305 = vmatpush1.xpose.msra.mxu0 %v4302
  %4306 = vmatprep.subr.mxu0 0.0
  %4307 = vmatpush1.xpose.msra.mxu0 0.0
  %4308 = vmatprep.subr.mxu0 0.0
  %4309 = vmatpush1.xpose.msra.mxu0 0.0
  %4310 = vmatprep.subr.mxu0 0.0
  %4311 = vmatpush1.xpose.msra.mxu0 0.0
  %4312 = vmatprep.subr.mxu0 0.0
  %4313 = vmatpush1.xpose.msra.mxu0 0.0
  %4314 = vmatprep.subr.mxu0 0.0
  %4315 = vmatpush1.xpose.msra.mxu0 0.0
  %4316 = vmatprep.subr.mxu0 0.0
  %4317 = vmatpush1.xpose.msra.mxu0 0.0
  %4318 = vmatprep.subr.mxu0 0.0
  %4319 = vmatpush1.xpose.msra.mxu0 0.0
  %4320 = vmatprep.subr.mxu0 0.0
  %4321 = vmatpush1.xpose.msra.mxu0 0.0
  %4322 = vmatprep.subr.mxu0 0.0
  %4323 = vmatpush1.xpose.msra.mxu0 0.0
  %4324 = vmatprep.subr.mxu0 0.0
  %4325 = vmatpush1.xpose.msra.mxu0 0.0
  %4326 = vmatprep.subr.mxu0 0.0
  %4327 = vmatpush1.xpose.msra.mxu0 0.0
  %4328 = vmatprep.subr.mxu0 0.0
  %4329 = vmatpush1.xpose.msra.mxu0 0.0
  %4330 = vmatprep.subr.mxu0 0.0
  %4331 = vmatpush1.xpose.msra.mxu0 0.0
  %4332 = vmatprep.subr.mxu0 0.0
  %4333 = vmatpush1.xpose.msra.mxu0 0.0
  %4334 = vmatprep.subr.mxu0 0.0
  %4335 = vmatpush1.xpose.msra.mxu0 0.0
  %4336 = vmatprep.subr.mxu0 0.0
  %4337 = vmatpush1.xpose.msra.mxu0 0.0
  %4338 = vmatprep.subr.mxu0 0.0
  %4339 = vmatpush1.xpose.msra.mxu0 0.0
  %4340 = vmatprep.subr.mxu0 0.0
  %4341 = vmatpush1.xpose.msra.mxu0 0.0
  %4342 = vmatprep.subr.mxu0 0.0
  %4343 = vmatpush1.xpose.msra.mxu0 0.0
  %4344 = vmatprep.subr.mxu0 0.0
  %4345 = vmatpush1.xpose.msra.mxu0 0.0
  %4346 = vmatprep.subr.mxu0 0.0
  %4347 = vmatpush1.xpose.msra.mxu0 0.0
  %4348 = vmatprep.subr.mxu0 0.0
  %4349 = vmatpush1.xpose.msra.mxu0 0.0
  %4350 = vmatprep.subr.mxu0 0.0
  %4351 = vmatpush1.xpose.msra.mxu0 0.0
  %4352 = vmatprep.subr.mxu0 0.0
  %4353 = vmatpush1.xpose.msra.mxu0 0.0
  %4354 = vmatprep.subr.mxu0 0.0
  %4355 = vmatpush1.xpose.msra.mxu0 0.0
  %4356 = vmatprep.subr.mxu0 0.0
  %4357 = vmatpush1.xpose.msra.mxu0 0.0
  %4358 = vmatprep.subr.mxu0 0.0
  %4359 = vmatpush1.xpose.msra.mxu0 0.0
  %4360 = vmatprep.subr.mxu0 0.0
  %4361 = vmatpush1.xpose.msra.mxu0 0.0
  %4362 = vmatprep.subr.mxu0 0.0
  %4363 = vmatpush1.xpose.msra.mxu0 0.0
  %4364 = vmatprep.subr.mxu0 0.0
  %4365 = vmatpush1.xpose.msra.mxu0 0.0
  %4366 = vmatprep.subr.mxu0 0.0
  %4367 = vmatpush1.xpose.msra.mxu0 0.0
  %4368 = vmatprep.mubr.f32.mxu0 0.0
  %4369 = vmatmul.mubr.f32.gmra.mrb[0].mxu0 %v4300
  %v4370 = vpop.f32.mrb[0].mxu0
  %v4371 = vadd.f32 0.0, %v4370
  %v4372 = vpop.f32.mrb[0].mxu0
  %4373 = vdwg.mxu0
  %4374 = vrot.lane.b32.xlu0 %v3973, 96
  %v4375 = vpop.permute.xlu0 %4374
  %v4376 = vsel %vm399, %v3973, 0
  %v4378 = vsel %vm399, %v4375, 0
  %4380 = vmatprep.subr.mxu0 0.0
  %4381 = vmatpush1.xpose.msra.mxu0 %v4378
  %4382 = vmatprep.subr.mxu0 0.0
  %4383 = vmatpush1.xpose.msra.mxu0 0.0
  %4384 = vmatprep.subr.mxu0 0.0
  %4385 = vmatpush1.xpose.msra.mxu0 0.0
  %4386 = vmatprep.subr.mxu0 0.0
  %4387 = vmatpush1.xpose.msra.mxu0 0.0
  %4388 = vmatprep.subr.mxu0 0.0
  %4389 = vmatpush1.xpose.msra.mxu0 0.0
  %4390 = vmatprep.subr.mxu0 0.0
  %4391 = vmatpush1.xpose.msra.mxu0 0.0
  %4392 = vmatprep.subr.mxu0 0.0
  %4393 = vmatpush1.xpose.msra.mxu0 0.0
  %4394 = vmatprep.subr.mxu0 0.0
  %4395 = vmatpush1.xpose.msra.mxu0 0.0
  %4396 = vmatprep.subr.mxu0 0.0
  %4397 = vmatpush1.xpose.msra.mxu0 0.0
  %4398 = vmatprep.subr.mxu0 0.0
  %4399 = vmatpush1.xpose.msra.mxu0 0.0
  %4400 = vmatprep.subr.mxu0 0.0
  %4401 = vmatpush1.xpose.msra.mxu0 0.0
  %4402 = vmatprep.subr.mxu0 0.0
  %4403 = vmatpush1.xpose.msra.mxu0 0.0
  %4404 = vmatprep.subr.mxu0 0.0
  %4405 = vmatpush1.xpose.msra.mxu0 0.0
  %4406 = vmatprep.subr.mxu0 0.0
  %4407 = vmatpush1.xpose.msra.mxu0 0.0
  %4408 = vmatprep.subr.mxu0 0.0
  %4409 = vmatpush1.xpose.msra.mxu0 0.0
  %4410 = vmatprep.subr.mxu0 0.0
  %4411 = vmatpush1.xpose.msra.mxu0 0.0
  %4412 = vmatprep.subr.mxu0 0.0
  %4413 = vmatpush1.xpose.msra.mxu0 0.0
  %4414 = vmatprep.subr.mxu0 0.0
  %4415 = vmatpush1.xpose.msra.mxu0 0.0
  %4416 = vmatprep.subr.mxu0 0.0
  %4417 = vmatpush1.xpose.msra.mxu0 0.0
  %4418 = vmatprep.subr.mxu0 0.0
  %4419 = vmatpush1.xpose.msra.mxu0 0.0
  %4420 = vmatprep.subr.mxu0 0.0
  %4421 = vmatpush1.xpose.msra.mxu0 0.0
  %4422 = vmatprep.subr.mxu0 0.0
  %4423 = vmatpush1.xpose.msra.mxu0 0.0
  %4424 = vmatprep.subr.mxu0 0.0
  %4425 = vmatpush1.xpose.msra.mxu0 0.0
  %4426 = vmatprep.subr.mxu0 0.0
  %4427 = vmatpush1.xpose.msra.mxu0 0.0
  %4428 = vmatprep.subr.mxu0 0.0
  %4429 = vmatpush1.xpose.msra.mxu0 0.0
  %4430 = vmatprep.subr.mxu0 0.0
  %4431 = vmatpush1.xpose.msra.mxu0 0.0
  %4432 = vmatprep.subr.mxu0 0.0
  %4433 = vmatpush1.xpose.msra.mxu0 0.0
  %4434 = vmatprep.subr.mxu0 0.0
  %4435 = vmatpush1.xpose.msra.mxu0 0.0
  %4436 = vmatprep.subr.mxu0 0.0
  %4437 = vmatpush1.xpose.msra.mxu0 0.0
  %4438 = vmatprep.subr.mxu0 0.0
  %4439 = vmatpush1.xpose.msra.mxu0 0.0
  %4440 = vmatprep.subr.mxu0 0.0
  %4441 = vmatpush1.xpose.msra.mxu0 0.0
  %4442 = vmatprep.subr.mxu0 0.0
  %4443 = vmatpush1.xpose.msra.mxu0 0.0
  %4444 = vmatprep.mubr.f32.mxu0 0.0
  %4445 = vmatmul.mubr.f32.gmra.mrb[0].mxu0 %v4376
  %v4446 = vpop.f32.mrb[0].mxu0
  %v4447 = vadd.f32 0.0, %v4446
  %v4448 = vpop.f32.mrb[0].mxu0
  %4449 = vdwg.mxu0
  %4450 = vrot.lane.b32.xlu0 %v3975, 96
  %v4451 = vpop.permute.xlu0 %4450
  %v4452 = vsel %vm399, %v3975, 0
  %v4454 = vsel %vm399, %v4451, 0
  %4456 = vmatprep.subr.mxu0 0.0
  %4457 = vmatpush1.xpose.msra.mxu0 %v4454
  %4458 = vmatprep.subr.mxu0 0.0
  %4459 = vmatpush1.xpose.msra.mxu0 0.0
  %4460 = vmatprep.subr.mxu0 0.0
  %4461 = vmatpush1.xpose.msra.mxu0 0.0
  %4462 = vmatprep.subr.mxu0 0.0
  %4463 = vmatpush1.xpose.msra.mxu0 0.0
  %4464 = vmatprep.subr.mxu0 0.0
  %4465 = vmatpush1.xpose.msra.mxu0 0.0
  %4466 = vmatprep.subr.mxu0 0.0
  %4467 = vmatpush1.xpose.msra.mxu0 0.0
  %4468 = vmatprep.subr.mxu0 0.0
  %4469 = vmatpush1.xpose.msra.mxu0 0.0
  %4470 = vmatprep.subr.mxu0 0.0
  %4471 = vmatpush1.xpose.msra.mxu0 0.0
  %4472 = vmatprep.subr.mxu0 0.0
  %4473 = vmatpush1.xpose.msra.mxu0 0.0
  %4474 = vmatprep.subr.mxu0 0.0
  %4475 = vmatpush1.xpose.msra.mxu0 0.0
  %4476 = vmatprep.subr.mxu0 0.0
  %4477 = vmatpush1.xpose.msra.mxu0 0.0
  %4478 = vmatprep.subr.mxu0 0.0
  %4479 = vmatpush1.xpose.msra.mxu0 0.0
  %4480 = vmatprep.subr.mxu0 0.0
  %4481 = vmatpush1.xpose.msra.mxu0 0.0
  %4482 = vmatprep.subr.mxu0 0.0
  %4483 = vmatpush1.xpose.msra.mxu0 0.0
  %4484 = vmatprep.subr.mxu0 0.0
  %4485 = vmatpush1.xpose.msra.mxu0 0.0
  %4486 = vmatprep.subr.mxu0 0.0
  %4487 = vmatpush1.xpose.msra.mxu0 0.0
  %4488 = vmatprep.subr.mxu0 0.0
  %4489 = vmatpush1.xpose.msra.mxu0 0.0
  %4490 = vmatprep.subr.mxu0 0.0
  %4491 = vmatpush1.xpose.msra.mxu0 0.0
  %4492 = vmatprep.subr.mxu0 0.0
  %4493 = vmatpush1.xpose.msra.mxu0 0.0
  %4494 = vmatprep.subr.mxu0 0.0
  %4495 = vmatpush1.xpose.msra.mxu0 0.0
  %4496 = vmatprep.subr.mxu0 0.0
  %4497 = vmatpush1.xpose.msra.mxu0 0.0
  %4498 = vmatprep.subr.mxu0 0.0
  %4499 = vmatpush1.xpose.msra.mxu0 0.0
  %4500 = vmatprep.subr.mxu0 0.0
  %4501 = vmatpush1.xpose.msra.mxu0 0.0
  %4502 = vmatprep.subr.mxu0 0.0
  %4503 = vmatpush1.xpose.msra.mxu0 0.0
  %4504 = vmatprep.subr.mxu0 0.0
  %4505 = vmatpush1.xpose.msra.mxu0 0.0
  %4506 = vmatprep.subr.mxu0 0.0
  %4507 = vmatpush1.xpose.msra.mxu0 0.0
  %4508 = vmatprep.subr.mxu0 0.0
  %4509 = vmatpush1.xpose.msra.mxu0 0.0
  %4510 = vmatprep.subr.mxu0 0.0
  %4511 = vmatpush1.xpose.msra.mxu0 0.0
  %4512 = vmatprep.subr.mxu0 0.0
  %4513 = vmatpush1.xpose.msra.mxu0 0.0
  %4514 = vmatprep.subr.mxu0 0.0
  %4515 = vmatpush1.xpose.msra.mxu0 0.0
  %4516 = vmatprep.subr.mxu0 0.0
  %4517 = vmatpush1.xpose.msra.mxu0 0.0
  %4518 = vmatprep.subr.mxu0 0.0
  %4519 = vmatpush1.xpose.msra.mxu0 0.0
  %4520 = vmatprep.mubr.f32.mxu0 0.0
  %4521 = vmatmul.mubr.f32.gmra.mrb[0].mxu0 %v4452
  %v4522 = vpop.f32.mrb[0].mxu0
  %v4523 = vadd.f32 0.0, %v4522
  %v4524 = vpop.f32.mrb[0].mxu0
  %4525 = vdwg.mxu0
  %4526 = vrot.lane.b32.xlu0 %v3977, 96
  %v4527 = vpop.permute.xlu0 %4526
  %v4528 = vsel %vm399, %v3977, 0
  %v4530 = vsel %vm399, %v4527, 0
  %4532 = vmatprep.subr.mxu0 0.0
  %4533 = vmatpush1.xpose.msra.mxu0 %v4530
  %4534 = vmatprep.subr.mxu0 0.0
  %4535 = vmatpush1.xpose.msra.mxu0 0.0
  %4536 = vmatprep.subr.mxu0 0.0
  %4537 = vmatpush1.xpose.msra.mxu0 0.0
  %4538 = vmatprep.subr.mxu0 0.0
  %4539 = vmatpush1.xpose.msra.mxu0 0.0
  %4540 = vmatprep.subr.mxu0 0.0
  %4541 = vmatpush1.xpose.msra.mxu0 0.0
  %4542 = vmatprep.subr.mxu0 0.0
  %4543 = vmatpush1.xpose.msra.mxu0 0.0
  %4544 = vmatprep.subr.mxu0 0.0
  %4545 = vmatpush1.xpose.msra.mxu0 0.0
  %4546 = vmatprep.subr.mxu0 0.0
  %4547 = vmatpush1.xpose.msra.mxu0 0.0
  %4548 = vmatprep.subr.mxu0 0.0
  %4549 = vmatpush1.xpose.msra.mxu0 0.0
  %4550 = vmatprep.subr.mxu0 0.0
  %4551 = vmatpush1.xpose.msra.mxu0 0.0
  %4552 = vmatprep.subr.mxu0 0.0
  %4553 = vmatpush1.xpose.msra.mxu0 0.0
  %4554 = vmatprep.subr.mxu0 0.0
  %4555 = vmatpush1.xpose.msra.mxu0 0.0
  %4556 = vmatprep.subr.mxu0 0.0
  %4557 = vmatpush1.xpose.msra.mxu0 0.0
  %4558 = vmatprep.subr.mxu0 0.0
  %4559 = vmatpush1.xpose.msra.mxu0 0.0
  %4560 = vmatprep.subr.mxu0 0.0
  %4561 = vmatpush1.xpose.msra.mxu0 0.0
  %4562 = vmatprep.subr.mxu0 0.0
  %4563 = vmatpush1.xpose.msra.mxu0 0.0
  %4564 = vmatprep.subr.mxu0 0.0
  %4565 = vmatpush1.xpose.msra.mxu0 0.0
  %4566 = vmatprep.subr.mxu0 0.0
  %4567 = vmatpush1.xpose.msra.mxu0 0.0
  %4568 = vmatprep.subr.mxu0 0.0
  %4569 = vmatpush1.xpose.msra.mxu0 0.0
  %4570 = vmatprep.subr.mxu0 0.0
  %4571 = vmatpush1.xpose.msra.mxu0 0.0
  %4572 = vmatprep.subr.mxu0 0.0
  %4573 = vmatpush1.xpose.msra.mxu0 0.0
  %4574 = vmatprep.subr.mxu0 0.0
  %4575 = vmatpush1.xpose.msra.mxu0 0.0
  %4576 = vmatprep.subr.mxu0 0.0
  %4577 = vmatpush1.xpose.msra.mxu0 0.0
  %4578 = vmatprep.subr.mxu0 0.0
  %4579 = vmatpush1.xpose.msra.mxu0 0.0
  %4580 = vmatprep.subr.mxu0 0.0
  %4581 = vmatpush1.xpose.msra.mxu0 0.0
  %4582 = vmatprep.subr.mxu0 0.0
  %4583 = vmatpush1.xpose.msra.mxu0 0.0
  %4584 = vmatprep.subr.mxu0 0.0
  %4585 = vmatpush1.xpose.msra.mxu0 0.0
  %4586 = vmatprep.subr.mxu0 0.0
  %4587 = vmatpush1.xpose.msra.mxu0 0.0
  %4588 = vmatprep.subr.mxu0 0.0
  %4589 = vmatpush1.xpose.msra.mxu0 0.0
  %4590 = vmatprep.subr.mxu0 0.0
  %4591 = vmatpush1.xpose.msra.mxu0 0.0
  %4592 = vmatprep.subr.mxu0 0.0
  %4593 = vmatpush1.xpose.msra.mxu0 0.0
  %4594 = vmatprep.subr.mxu0 0.0
  %4595 = vmatpush1.xpose.msra.mxu0 0.0
  %4596 = vmatprep.mubr.f32.mxu0 0.0
  %4597 = vmatmul.mubr.f32.gmra.mrb[0].mxu0 %v4528
  %v4598 = vpop.f32.mrb[0].mxu0
  %v4599 = vadd.f32 0.0, %v4598
  %v4600 = vpop.f32.mrb[0].mxu0
  %4601 = vdwg.mxu0
  %4602 = vrot.lane.b32.xlu0 %v3979, 96
  %v4603 = vpop.permute.xlu0 %4602
  %v4604 = vsel %vm399, %v3979, 0
  %v4606 = vsel %vm399, %v4603, 0
  %4608 = vmatprep.subr.mxu0 0.0
  %4609 = vmatpush1.xpose.msra.mxu0 %v4606
  %4610 = vmatprep.subr.mxu0 0.0
  %4611 = vmatpush1.xpose.msra.mxu0 0.0
  %4612 = vmatprep.subr.mxu0 0.0
  %4613 = vmatpush1.xpose.msra.mxu0 0.0
  %4614 = vmatprep.subr.mxu0 0.0
  %4615 = vmatpush1.xpose.msra.mxu0 0.0
  %4616 = vmatprep.subr.mxu0 0.0
  %4617 = vmatpush1.xpose.msra.mxu0 0.0
  %4618 = vmatprep.subr.mxu0 0.0
  %4619 = vmatpush1.xpose.msra.mxu0 0.0
  %4620 = vmatprep.subr.mxu0 0.0
  %4621 = vmatpush1.xpose.msra.mxu0 0.0
  %4622 = vmatprep.subr.mxu0 0.0
  %4623 = vmatpush1.xpose.msra.mxu0 0.0
  %4624 = vmatprep.subr.mxu0 0.0
  %4625 = vmatpush1.xpose.msra.mxu0 0.0
  %4626 = vmatprep.subr.mxu0 0.0
  %4627 = vmatpush1.xpose.msra.mxu0 0.0
  %4628 = vmatprep.subr.mxu0 0.0
  %4629 = vmatpush1.xpose.msra.mxu0 0.0
  %4630 = vmatprep.subr.mxu0 0.0
  %4631 = vmatpush1.xpose.msra.mxu0 0.0
  %4632 = vmatprep.subr.mxu0 0.0
  %4633 = vmatpush1.xpose.msra.mxu0 0.0
  %4634 = vmatprep.subr.mxu0 0.0
  %4635 = vmatpush1.xpose.msra.mxu0 0.0
  %4636 = vmatprep.subr.mxu0 0.0
  %4637 = vmatpush1.xpose.msra.mxu0 0.0
  %4638 = vmatprep.subr.mxu0 0.0
  %4639 = vmatpush1.xpose.msra.mxu0 0.0
  %4640 = vmatprep.subr.mxu0 0.0
  %4641 = vmatpush1.xpose.msra.mxu0 0.0
  %4642 = vmatprep.subr.mxu0 0.0
  %4643 = vmatpush1.xpose.msra.mxu0 0.0
  %4644 = vmatprep.subr.mxu0 0.0
  %4645 = vmatpush1.xpose.msra.mxu0 0.0
  %4646 = vmatprep.subr.mxu0 0.0
  %4647 = vmatpush1.xpose.msra.mxu0 0.0
  %4648 = vmatprep.subr.mxu0 0.0
  %4649 = vmatpush1.xpose.msra.mxu0 0.0
  %4650 = vmatprep.subr.mxu0 0.0
  %4651 = vmatpush1.xpose.msra.mxu0 0.0
  %4652 = vmatprep.subr.mxu0 0.0
  %4653 = vmatpush1.xpose.msra.mxu0 0.0
  %4654 = vmatprep.subr.mxu0 0.0
  %4655 = vmatpush1.xpose.msra.mxu0 0.0
  %4656 = vmatprep.subr.mxu0 0.0
  %4657 = vmatpush1.xpose.msra.mxu0 0.0
  %4658 = vmatprep.subr.mxu0 0.0
  %4659 = vmatpush1.xpose.msra.mxu0 0.0
  %4660 = vmatprep.subr.mxu0 0.0
  %4661 = vmatpush1.xpose.msra.mxu0 0.0
  %4662 = vmatprep.subr.mxu0 0.0
  %4663 = vmatpush1.xpose.msra.mxu0 0.0
  %4664 = vmatprep.subr.mxu0 0.0
  %4665 = vmatpush1.xpose.msra.mxu0 0.0
  %4666 = vmatprep.subr.mxu0 0.0
  %4667 = vmatpush1.xpose.msra.mxu0 0.0
  %4668 = vmatprep.subr.mxu0 0.0
  %4669 = vmatpush1.xpose.msra.mxu0 0.0
  %4670 = vmatprep.subr.mxu0 0.0
  %4671 = vmatpush1.xpose.msra.mxu0 0.0
  %4672 = vmatprep.mubr.f32.mxu0 0.0
  %4673 = vmatmul.mubr.f32.gmra.mrb[0].mxu0 %v4604
  %v4674 = vpop.f32.mrb[0].mxu0
  %v4675 = vadd.f32 0.0, %v4674
  %v4676 = vpop.f32.mrb[0].mxu0
  %4677 = vdwg.mxu0
  %4678 = vrot.lane.b32.xlu0 %v3981, 96
  %v4679 = vpop.permute.xlu0 %4678
  %v4680 = vsel %vm399, %v3981, 0
  %v4682 = vsel %vm399, %v4679, 0
  %4684 = vmatprep.subr.mxu0 0.0
  %4685 = vmatpush1.xpose.msra.mxu0 %v4682
  %4686 = vmatprep.subr.mxu0 0.0
  %4687 = vmatpush1.xpose.msra.mxu0 0.0
  %4688 = vmatprep.subr.mxu0 0.0
  %4689 = vmatpush1.xpose.msra.mxu0 0.0
  %4690 = vmatprep.subr.mxu0 0.0
  %4691 = vmatpush1.xpose.msra.mxu0 0.0
  %4692 = vmatprep.subr.mxu0 0.0
  %4693 = vmatpush1.xpose.msra.mxu0 0.0
  %4694 = vmatprep.subr.mxu0 0.0
  %4695 = vmatpush1.xpose.msra.mxu0 0.0
  %4696 = vmatprep.subr.mxu0 0.0
  %4697 = vmatpush1.xpose.msra.mxu0 0.0
  %4698 = vmatprep.subr.mxu0 0.0
  %4699 = vmatpush1.xpose.msra.mxu0 0.0
  %4700 = vmatprep.subr.mxu0 0.0
  %4701 = vmatpush1.xpose.msra.mxu0 0.0
  %4702 = vmatprep.subr.mxu0 0.0
  %4703 = vmatpush1.xpose.msra.mxu0 0.0
  %4704 = vmatprep.subr.mxu0 0.0
  %4705 = vmatpush1.xpose.msra.mxu0 0.0
  %4706 = vmatprep.subr.mxu0 0.0
  %4707 = vmatpush1.xpose.msra.mxu0 0.0
  %4708 = vmatprep.subr.mxu0 0.0
  %4709 = vmatpush1.xpose.msra.mxu0 0.0
  %4710 = vmatprep.subr.mxu0 0.0
  %4711 = vmatpush1.xpose.msra.mxu0 0.0
  %4712 = vmatprep.subr.mxu0 0.0
  %4713 = vmatpush1.xpose.msra.mxu0 0.0
  %4714 = vmatprep.subr.mxu0 0.0
  %4715 = vmatpush1.xpose.msra.mxu0 0.0
  %4716 = vmatprep.subr.mxu0 0.0
  %4717 = vmatpush1.xpose.msra.mxu0 0.0
  %4718 = vmatprep.subr.mxu0 0.0
  %4719 = vmatpush1.xpose.msra.mxu0 0.0
  %4720 = vmatprep.subr.mxu0 0.0
  %4721 = vmatpush1.xpose.msra.mxu0 0.0
  %4722 = vmatprep.subr.mxu0 0.0
  %4723 = vmatpush1.xpose.msra.mxu0 0.0
  %4724 = vmatprep.subr.mxu0 0.0
  %4725 = vmatpush1.xpose.msra.mxu0 0.0
  %4726 = vmatprep.subr.mxu0 0.0
  %4727 = vmatpush1.xpose.msra.mxu0 0.0
  %4728 = vmatprep.subr.mxu0 0.0
  %4729 = vmatpush1.xpose.msra.mxu0 0.0
  %4730 = vmatprep.subr.mxu0 0.0
  %4731 = vmatpush1.xpose.msra.mxu0 0.0
  %4732 = vmatprep.subr.mxu0 0.0
  %4733 = vmatpush1.xpose.msra.mxu0 0.0
  %4734 = vmatprep.subr.mxu0 0.0
  %4735 = vmatpush1.xpose.msra.mxu0 0.0
  %4736 = vmatprep.subr.mxu0 0.0
  %4737 = vmatpush1.xpose.msra.mxu0 0.0
  %4738 = vmatprep.subr.mxu0 0.0
  %4739 = vmatpush1.xpose.msra.mxu0 0.0
  %4740 = vmatprep.subr.mxu0 0.0
  %4741 = vmatpush1.xpose.msra.mxu0 0.0
  %4742 = vmatprep.subr.mxu0 0.0
  %4743 = vmatpush1.xpose.msra.mxu0 0.0
  %4744 = vmatprep.subr.mxu0 0.0
  %4745 = vmatpush1.xpose.msra.mxu0 0.0
  %4746 = vmatprep.subr.mxu0 0.0
  %4747 = vmatpush1.xpose.msra.mxu0 0.0
  %4748 = vmatprep.mubr.f32.mxu0 0.0
  %4749 = vmatmul.mubr.f32.gmra.mrb[0].mxu0 %v4680
  %v4750 = vpop.f32.mrb[0].mxu0
  %v4751 = vadd.f32 0.0, %v4750
  %v4752 = vpop.f32.mrb[0].mxu0
  %4753 = vdwg.mxu0
  %4754 = vrot.lane.b32.xlu0 %v3983, 96
  %v4755 = vpop.permute.xlu0 %4754
  %v4756 = vsel %vm399, %v3983, 0
  %v4758 = vsel %vm399, %v4755, 0
  %4760 = vmatprep.subr.mxu0 0.0
  %4761 = vmatpush1.xpose.msra.mxu0 %v4758
  %4762 = vmatprep.subr.mxu0 0.0
  %4763 = vmatpush1.xpose.msra.mxu0 0.0
  %4764 = vmatprep.subr.mxu0 0.0
  %4765 = vmatpush1.xpose.msra.mxu0 0.0
  %4766 = vmatprep.subr.mxu0 0.0
  %4767 = vmatpush1.xpose.msra.mxu0 0.0
  %4768 = vmatprep.subr.mxu0 0.0
  %4769 = vmatpush1.xpose.msra.mxu0 0.0
  %4770 = vmatprep.subr.mxu0 0.0
  %4771 = vmatpush1.xpose.msra.mxu0 0.0
  %4772 = vmatprep.subr.mxu0 0.0
  %4773 = vmatpush1.xpose.msra.mxu0 0.0
  %4774 = vmatprep.subr.mxu0 0.0
  %4775 = vmatpush1.xpose.msra.mxu0 0.0
  %4776 = vmatprep.subr.mxu0 0.0
  %4777 = vmatpush1.xpose.msra.mxu0 0.0
  %4778 = vmatprep.subr.mxu0 0.0
  %4779 = vmatpush1.xpose.msra.mxu0 0.0
  %4780 = vmatprep.subr.mxu0 0.0
  %4781 = vmatpush1.xpose.msra.mxu0 0.0
  %4782 = vmatprep.subr.mxu0 0.0
  %4783 = vmatpush1.xpose.msra.mxu0 0.0
  %4784 = vmatprep.subr.mxu0 0.0
  %4785 = vmatpush1.xpose.msra.mxu0 0.0
  %4786 = vmatprep.subr.mxu0 0.0
  %4787 = vmatpush1.xpose.msra.mxu0 0.0
  %4788 = vmatprep.subr.mxu0 0.0
  %4789 = vmatpush1.xpose.msra.mxu0 0.0
  %4790 = vmatprep.subr.mxu0 0.0
  %4791 = vmatpush1.xpose.msra.mxu0 0.0
  %4792 = vmatprep.subr.mxu0 0.0
  %4793 = vmatpush1.xpose.msra.mxu0 0.0
  %4794 = vmatprep.subr.mxu0 0.0
  %4795 = vmatpush1.xpose.msra.mxu0 0.0
  %4796 = vmatprep.subr.mxu0 0.0
  %4797 = vmatpush1.xpose.msra.mxu0 0.0
  %4798 = vmatprep.subr.mxu0 0.0
  %4799 = vmatpush1.xpose.msra.mxu0 0.0
  %4800 = vmatprep.subr.mxu0 0.0
  %4801 = vmatpush1.xpose.msra.mxu0 0.0
  %4802 = vmatprep.subr.mxu0 0.0
  %4803 = vmatpush1.xpose.msra.mxu0 0.0
  %4804 = vmatprep.subr.mxu0 0.0
  %4805 = vmatpush1.xpose.msra.mxu0 0.0
  %4806 = vmatprep.subr.mxu0 0.0
  %4807 = vmatpush1.xpose.msra.mxu0 0.0
  %4808 = vmatprep.subr.mxu0 0.0
  %4809 = vmatpush1.xpose.msra.mxu0 0.0
  %4810 = vmatprep.subr.mxu0 0.0
  %4811 = vmatpush1.xpose.msra.mxu0 0.0
  %4812 = vmatprep.subr.mxu0 0.0
  %4813 = vmatpush1.xpose.msra.mxu0 0.0
  %4814 = vmatprep.subr.mxu0 0.0
  %4815 = vmatpush1.xpose.msra.mxu0 0.0
  %4816 = vmatprep.subr.mxu0 0.0
  %4817 = vmatpush1.xpose.msra.mxu0 0.0
  %4818 = vmatprep.subr.mxu0 0.0
  %4819 = vmatpush1.xpose.msra.mxu0 0.0
  %4820 = vmatprep.subr.mxu0 0.0
  %4821 = vmatpush1.xpose.msra.mxu0 0.0
  %4822 = vmatprep.subr.mxu0 0.0
  %4823 = vmatpush1.xpose.msra.mxu0 0.0
  %4824 = vmatprep.mubr.f32.mxu0 0.0
  %4825 = vmatmul.mubr.f32.gmra.mrb[0].mxu0 %v4756
  %v4826 = vpop.f32.mrb[0].mxu0
  %v4827 = vadd.f32 0.0, %v4826
  %v4828 = vpop.f32.mrb[0].mxu0
  %4829 = vdwg.mxu0
  %4830 = vrot.lane.b32.xlu0 %v3985, 96
  %v4831 = vpop.permute.xlu0 %4830
  %v4832 = vsel %vm399, %v3985, 0
  %v4834 = vsel %vm399, %v4831, 0
  %4836 = vmatprep.subr.mxu0 0.0
  %4837 = vmatpush1.xpose.msra.mxu0 %v4834
  %4838 = vmatprep.subr.mxu0 0.0
  %4839 = vmatpush1.xpose.msra.mxu0 0.0
  %4840 = vmatprep.subr.mxu0 0.0
  %4841 = vmatpush1.xpose.msra.mxu0 0.0
  %4842 = vmatprep.subr.mxu0 0.0
  %4843 = vmatpush1.xpose.msra.mxu0 0.0
  %4844 = vmatprep.subr.mxu0 0.0
  %4845 = vmatpush1.xpose.msra.mxu0 0.0
  %4846 = vmatprep.subr.mxu0 0.0
  %4847 = vmatpush1.xpose.msra.mxu0 0.0
  %4848 = vmatprep.subr.mxu0 0.0
  %4849 = vmatpush1.xpose.msra.mxu0 0.0
  %4850 = vmatprep.subr.mxu0 0.0
  %4851 = vmatpush1.xpose.msra.mxu0 0.0
  %4852 = vmatprep.subr.mxu0 0.0
  %4853 = vmatpush1.xpose.msra.mxu0 0.0
  %4854 = vmatprep.subr.mxu0 0.0
  %4855 = vmatpush1.xpose.msra.mxu0 0.0
  %4856 = vmatprep.subr.mxu0 0.0
  %4857 = vmatpush1.xpose.msra.mxu0 0.0
  %4858 = vmatprep.subr.mxu0 0.0
  %4859 = vmatpush1.xpose.msra.mxu0 0.0
  %4860 = vmatprep.subr.mxu0 0.0
  %4861 = vmatpush1.xpose.msra.mxu0 0.0
  %4862 = vmatprep.subr.mxu0 0.0
  %4863 = vmatpush1.xpose.msra.mxu0 0.0
  %4864 = vmatprep.subr.mxu0 0.0
  %4865 = vmatpush1.xpose.msra.mxu0 0.0
  %4866 = vmatprep.subr.mxu0 0.0
  %4867 = vmatpush1.xpose.msra.mxu0 0.0
  %4868 = vmatprep.subr.mxu0 0.0
  %4869 = vmatpush1.xpose.msra.mxu0 0.0
  %4870 = vmatprep.subr.mxu0 0.0
  %4871 = vmatpush1.xpose.msra.mxu0 0.0
  %4872 = vmatprep.subr.mxu0 0.0
  %4873 = vmatpush1.xpose.msra.mxu0 0.0
  %4874 = vmatprep.subr.mxu0 0.0
  %4875 = vmatpush1.xpose.msra.mxu0 0.0
  %4876 = vmatprep.subr.mxu0 0.0
  %4877 = vmatpush1.xpose.msra.mxu0 0.0
  %4878 = vmatprep.subr.mxu0 0.0
  %4879 = vmatpush1.xpose.msra.mxu0 0.0
  %4880 = vmatprep.subr.mxu0 0.0
  %4881 = vmatpush1.xpose.msra.mxu0 0.0
  %4882 = vmatprep.subr.mxu0 0.0
  %4883 = vmatpush1.xpose.msra.mxu0 0.0
  %4884 = vmatprep.subr.mxu0 0.0
  %4885 = vmatpush1.xpose.msra.mxu0 0.0
  %4886 = vmatprep.subr.mxu0 0.0
  %4887 = vmatpush1.xpose.msra.mxu0 0.0
  %4888 = vmatprep.subr.mxu0 0.0
  %4889 = vmatpush1.xpose.msra.mxu0 0.0
  %4890 = vmatprep.subr.mxu0 0.0
  %4891 = vmatpush1.xpose.msra.mxu0 0.0
  %4892 = vmatprep.subr.mxu0 0.0
  %4893 = vmatpush1.xpose.msra.mxu0 0.0
  %4894 = vmatprep.subr.mxu0 0.0
  %4895 = vmatpush1.xpose.msra.mxu0 0.0
  %4896 = vmatprep.subr.mxu0 0.0
  %4897 = vmatpush1.xpose.msra.mxu0 0.0
  %4898 = vmatprep.subr.mxu0 0.0
  %4899 = vmatpush1.xpose.msra.mxu0 0.0
  %4900 = vmatprep.mubr.f32.mxu0 0.0
  %4901 = vmatmul.mubr.f32.gmra.mrb[0].mxu0 %v4832
  %v4902 = vpop.f32.mrb[0].mxu0
  %v4903 = vadd.f32 0.0, %v4902
  %v4904 = vpop.f32.mrb[0].mxu0
  %4905 = vdwg.mxu0
  %4906 = vrot.lane.b32.xlu0 %v3987, 96
  %v4907 = vpop.permute.xlu0 %4906
  %v4908 = vsel %vm399, %v3987, 0
  %v4910 = vsel %vm399, %v4907, 0
  %4912 = vmatprep.subr.mxu0 0.0
  %4913 = vmatpush1.xpose.msra.mxu0 %v4910
  %4914 = vmatprep.subr.mxu0 0.0
  %4915 = vmatpush1.xpose.msra.mxu0 0.0
  %4916 = vmatprep.subr.mxu0 0.0
  %4917 = vmatpush1.xpose.msra.mxu0 0.0
  %4918 = vmatprep.subr.mxu0 0.0
  %4919 = vmatpush1.xpose.msra.mxu0 0.0
  %4920 = vmatprep.subr.mxu0 0.0
  %4921 = vmatpush1.xpose.msra.mxu0 0.0
  %4922 = vmatprep.subr.mxu0 0.0
  %4923 = vmatpush1.xpose.msra.mxu0 0.0
  %4924 = vmatprep.subr.mxu0 0.0
  %4925 = vmatpush1.xpose.msra.mxu0 0.0
  %4926 = vmatprep.subr.mxu0 0.0
  %4927 = vmatpush1.xpose.msra.mxu0 0.0
  %4928 = vmatprep.subr.mxu0 0.0
  %4929 = vmatpush1.xpose.msra.mxu0 0.0
  %4930 = vmatprep.subr.mxu0 0.0
  %4931 = vmatpush1.xpose.msra.mxu0 0.0
  %4932 = vmatprep.subr.mxu0 0.0
  %4933 = vmatpush1.xpose.msra.mxu0 0.0
  %4934 = vmatprep.subr.mxu0 0.0
  %4935 = vmatpush1.xpose.msra.mxu0 0.0
  %4936 = vmatprep.subr.mxu0 0.0
  %4937 = vmatpush1.xpose.msra.mxu0 0.0
  %4938 = vmatprep.subr.mxu0 0.0
  %4939 = vmatpush1.xpose.msra.mxu0 0.0
  %4940 = vmatprep.subr.mxu0 0.0
  %4941 = vmatpush1.xpose.msra.mxu0 0.0
  %4942 = vmatprep.subr.mxu0 0.0
  %4943 = vmatpush1.xpose.msra.mxu0 0.0
  %4944 = vmatprep.subr.mxu0 0.0
  %4945 = vmatpush1.xpose.msra.mxu0 0.0
  %4946 = vmatprep.subr.mxu0 0.0
  %4947 = vmatpush1.xpose.msra.mxu0 0.0
  %4948 = vmatprep.subr.mxu0 0.0
  %4949 = vmatpush1.xpose.msra.mxu0 0.0
  %4950 = vmatprep.subr.mxu0 0.0
  %4951 = vmatpush1.xpose.msra.mxu0 0.0
  %4952 = vmatprep.subr.mxu0 0.0
  %4953 = vmatpush1.xpose.msra.mxu0 0.0
  %4954 = vmatprep.subr.mxu0 0.0
  %4955 = vmatpush1.xpose.msra.mxu0 0.0
  %4956 = vmatprep.subr.mxu0 0.0
  %4957 = vmatpush1.xpose.msra.mxu0 0.0
  %4958 = vmatprep.subr.mxu0 0.0
  %4959 = vmatpush1.xpose.msra.mxu0 0.0
  %4960 = vmatprep.subr.mxu0 0.0
  %4961 = vmatpush1.xpose.msra.mxu0 0.0
  %4962 = vmatprep.subr.mxu0 0.0
  %4963 = vmatpush1.xpose.msra.mxu0 0.0
  %4964 = vmatprep.subr.mxu0 0.0
  %4965 = vmatpush1.xpose.msra.mxu0 0.0
  %4966 = vmatprep.subr.mxu0 0.0
  %4967 = vmatpush1.xpose.msra.mxu0 0.0
  %4968 = vmatprep.subr.mxu0 0.0
  %4969 = vmatpush1.xpose.msra.mxu0 0.0
  %4970 = vmatprep.subr.mxu0 0.0
  %4971 = vmatpush1.xpose.msra.mxu0 0.0
  %4972 = vmatprep.subr.mxu0 0.0
  %4973 = vmatpush1.xpose.msra.mxu0 0.0
  %4974 = vmatprep.subr.mxu0 0.0
  %4975 = vmatpush1.xpose.msra.mxu0 0.0
  %4976 = vmatprep.mubr.f32.mxu0 0.0
  %4977 = vmatmul.mubr.f32.gmra.mrb[0].mxu0 %v4908
  %v4978 = vpop.f32.mrb[0].mxu0
  %v4979 = vadd.f32 0.0, %v4978
  %v4980 = vpop.f32.mrb[0].mxu0
  %4981 = vdwg.mxu0
  %4982 = vrot.lane.b32.xlu0 %v3989, 96
  %v4983 = vpop.permute.xlu0 %4982
  %v4984 = vsel %vm399, %v3989, 0
  %v4986 = vsel %vm399, %v4983, 0
  %4988 = vmatprep.subr.mxu0 0.0
  %4989 = vmatpush1.xpose.msra.mxu0 %v4986
  %4990 = vmatprep.subr.mxu0 0.0
  %4991 = vmatpush1.xpose.msra.mxu0 0.0
  %4992 = vmatprep.subr.mxu0 0.0
  %4993 = vmatpush1.xpose.msra.mxu0 0.0
  %4994 = vmatprep.subr.mxu0 0.0
  %4995 = vmatpush1.xpose.msra.mxu0 0.0
  %4996 = vmatprep.subr.mxu0 0.0
  %4997 = vmatpush1.xpose.msra.mxu0 0.0
  %4998 = vmatprep.subr.mxu0 0.0
  %4999 = vmatpush1.xpose.msra.mxu0 0.0
  %5000 = vmatprep.subr.mxu0 0.0
  %5001 = vmatpush1.xpose.msra.mxu0 0.0
  %5002 = vmatprep.subr.mxu0 0.0
  %5003 = vmatpush1.xpose.msra.mxu0 0.0
  %5004 = vmatprep.subr.mxu0 0.0
  %5005 = vmatpush1.xpose.msra.mxu0 0.0
  %5006 = vmatprep.subr.mxu0 0.0
  %5007 = vmatpush1.xpose.msra.mxu0 0.0
  %5008 = vmatprep.subr.mxu0 0.0
  %5009 = vmatpush1.xpose.msra.mxu0 0.0
  %5010 = vmatprep.subr.mxu0 0.0
  %5011 = vmatpush1.xpose.msra.mxu0 0.0
  %5012 = vmatprep.subr.mxu0 0.0
  %5013 = vmatpush1.xpose.msra.mxu0 0.0
  %5014 = vmatprep.subr.mxu0 0.0
  %5015 = vmatpush1.xpose.msra.mxu0 0.0
  %5016 = vmatprep.subr.mxu0 0.0
  %5017 = vmatpush1.xpose.msra.mxu0 0.0
  %5018 = vmatprep.subr.mxu0 0.0
  %5019 = vmatpush1.xpose.msra.mxu0 0.0
  %5020 = vmatprep.subr.mxu0 0.0
  %5021 = vmatpush1.xpose.msra.mxu0 0.0
  %5022 = vmatprep.subr.mxu0 0.0
  %5023 = vmatpush1.xpose.msra.mxu0 0.0
  %5024 = vmatprep.subr.mxu0 0.0
  %5025 = vmatpush1.xpose.msra.mxu0 0.0
  %5026 = vmatprep.subr.mxu0 0.0
  %5027 = vmatpush1.xpose.msra.mxu0 0.0
  %5028 = vmatprep.subr.mxu0 0.0
  %5029 = vmatpush1.xpose.msra.mxu0 0.0
  %5030 = vmatprep.subr.mxu0 0.0
  %5031 = vmatpush1.xpose.msra.mxu0 0.0
  %5032 = vmatprep.subr.mxu0 0.0
  %5033 = vmatpush1.xpose.msra.mxu0 0.0
  %5034 = vmatprep.subr.mxu0 0.0
  %5035 = vmatpush1.xpose.msra.mxu0 0.0
  %5036 = vmatprep.subr.mxu0 0.0
  %5037 = vmatpush1.xpose.msra.mxu0 0.0
  %5038 = vmatprep.subr.mxu0 0.0
  %5039 = vmatpush1.xpose.msra.mxu0 0.0
  %5040 = vmatprep.subr.mxu0 0.0
  %5041 = vmatpush1.xpose.msra.mxu0 0.0
  %5042 = vmatprep.subr.mxu0 0.0
  %5043 = vmatpush1.xpose.msra.mxu0 0.0
  %5044 = vmatprep.subr.mxu0 0.0
  %5045 = vmatpush1.xpose.msra.mxu0 0.0
  %5046 = vmatprep.subr.mxu0 0.0
  %5047 = vmatpush1.xpose.msra.mxu0 0.0
  %5048 = vmatprep.subr.mxu0 0.0
  %5049 = vmatpush1.xpose.msra.mxu0 0.0
  %5050 = vmatprep.subr.mxu0 0.0
  %5051 = vmatpush1.xpose.msra.mxu0 0.0
  %5052 = vmatprep.mubr.f32.mxu0 0.0
  %5053 = vmatmul.mubr.f32.gmra.mrb[0].mxu0 %v4984
  %v5054 = vpop.f32.mrb[0].mxu0
  %v5055 = vadd.f32 0.0, %v5054
  %v5056 = vpop.f32.mrb[0].mxu0
  %5057 = vdwg.mxu0
  %5058 = vrot.lane.b32.xlu0 %v3991, 96
  %v5059 = vpop.permute.xlu0 %5058
  %v5060 = vsel %vm399, %v3991, 0
  %v5062 = vsel %vm399, %v5059, 0
  %5064 = vmatprep.subr.mxu0 0.0
  %5065 = vmatpush1.xpose.msra.mxu0 %v5062
  %5066 = vmatprep.subr.mxu0 0.0
  %5067 = vmatpush1.xpose.msra.mxu0 0.0
  %5068 = vmatprep.subr.mxu0 0.0
  %5069 = vmatpush1.xpose.msra.mxu0 0.0
  %5070 = vmatprep.subr.mxu0 0.0
  %5071 = vmatpush1.xpose.msra.mxu0 0.0
  %5072 = vmatprep.subr.mxu0 0.0
  %5073 = vmatpush1.xpose.msra.mxu0 0.0
  %5074 = vmatprep.subr.mxu0 0.0
  %5075 = vmatpush1.xpose.msra.mxu0 0.0
  %5076 = vmatprep.subr.mxu0 0.0
  %5077 = vmatpush1.xpose.msra.mxu0 0.0
  %5078 = vmatprep.subr.mxu0 0.0
  %5079 = vmatpush1.xpose.msra.mxu0 0.0
  %5080 = vmatprep.subr.mxu0 0.0
  %5081 = vmatpush1.xpose.msra.mxu0 0.0
  %5082 = vmatprep.subr.mxu0 0.0
  %5083 = vmatpush1.xpose.msra.mxu0 0.0
  %5084 = vmatprep.subr.mxu0 0.0
  %5085 = vmatpush1.xpose.msra.mxu0 0.0
  %5086 = vmatprep.subr.mxu0 0.0
  %5087 = vmatpush1.xpose.msra.mxu0 0.0
  %5088 = vmatprep.subr.mxu0 0.0
  %5089 = vmatpush1.xpose.msra.mxu0 0.0
  %5090 = vmatprep.subr.mxu0 0.0
  %5091 = vmatpush1.xpose.msra.mxu0 0.0
  %5092 = vmatprep.subr.mxu0 0.0
  %5093 = vmatpush1.xpose.msra.mxu0 0.0
  %5094 = vmatprep.subr.mxu0 0.0
  %5095 = vmatpush1.xpose.msra.mxu0 0.0
  %5096 = vmatprep.subr.mxu0 0.0
  %5097 = vmatpush1.xpose.msra.mxu0 0.0
  %5098 = vmatprep.subr.mxu0 0.0
  %5099 = vmatpush1.xpose.msra.mxu0 0.0
  %5100 = vmatprep.subr.mxu0 0.0
  %5101 = vmatpush1.xpose.msra.mxu0 0.0
  %5102 = vmatprep.subr.mxu0 0.0
  %5103 = vmatpush1.xpose.msra.mxu0 0.0
  %5104 = vmatprep.subr.mxu0 0.0
  %5105 = vmatpush1.xpose.msra.mxu0 0.0
  %5106 = vmatprep.subr.mxu0 0.0
  %5107 = vmatpush1.xpose.msra.mxu0 0.0
  %5108 = vmatprep.subr.mxu0 0.0
  %5109 = vmatpush1.xpose.msra.mxu0 0.0
  %5110 = vmatprep.subr.mxu0 0.0
  %5111 = vmatpush1.xpose.msra.mxu0 0.0
  %5112 = vmatprep.subr.mxu0 0.0
  %5113 = vmatpush1.xpose.msra.mxu0 0.0
  %5114 = vmatprep.subr.mxu0 0.0
  %5115 = vmatpush1.xpose.msra.mxu0 0.0
  %5116 = vmatprep.subr.mxu0 0.0
  %5117 = vmatpush1.xpose.msra.mxu0 0.0
  %5118 = vmatprep.subr.mxu0 0.0
  %5119 = vmatpush1.xpose.msra.mxu0 0.0
  %5120 = vmatprep.subr.mxu0 0.0
  %5121 = vmatpush1.xpose.msra.mxu0 0.0
  %5122 = vmatprep.subr.mxu0 0.0
  %5123 = vmatpush1.xpose.msra.mxu0 0.0
  %5124 = vmatprep.subr.mxu0 0.0
  %5125 = vmatpush1.xpose.msra.mxu0 0.0
  %5126 = vmatprep.subr.mxu0 0.0
  %5127 = vmatpush1.xpose.msra.mxu0 0.0
  %5128 = vmatprep.mubr.f32.mxu0 0.0
  %5129 = vmatmul.mubr.f32.gmra.mrb[0].mxu0 %v5060
  %v5130 = vpop.f32.mrb[0].mxu0
  %v5131 = vadd.f32 0.0, %v5130
  %v5132 = vpop.f32.mrb[0].mxu0
  %5133 = vdwg.mxu0
  %5134 = vrot.lane.b32.xlu0 %v3993, 96
  %v5135 = vpop.permute.xlu0 %5134
  %v5136 = vsel %vm399, %v3993, 0
  %v5138 = vsel %vm399, %v5135, 0
  %5140 = vmatprep.subr.mxu0 0.0
  %5141 = vmatpush1.xpose.msra.mxu0 %v5138
  %5142 = vmatprep.subr.mxu0 0.0
  %5143 = vmatpush1.xpose.msra.mxu0 0.0
  %5144 = vmatprep.subr.mxu0 0.0
  %5145 = vmatpush1.xpose.msra.mxu0 0.0
  %5146 = vmatprep.subr.mxu0 0.0
  %5147 = vmatpush1.xpose.msra.mxu0 0.0
  %5148 = vmatprep.subr.mxu0 0.0
  %5149 = vmatpush1.xpose.msra.mxu0 0.0
  %5150 = vmatprep.subr.mxu0 0.0
  %5151 = vmatpush1.xpose.msra.mxu0 0.0
  %5152 = vmatprep.subr.mxu0 0.0
  %5153 = vmatpush1.xpose.msra.mxu0 0.0
  %5154 = vmatprep.subr.mxu0 0.0
  %5155 = vmatpush1.xpose.msra.mxu0 0.0
  %5156 = vmatprep.subr.mxu0 0.0
  %5157 = vmatpush1.xpose.msra.mxu0 0.0
  %5158 = vmatprep.subr.mxu0 0.0
  %5159 = vmatpush1.xpose.msra.mxu0 0.0
  %5160 = vmatprep.subr.mxu0 0.0
  %5161 = vmatpush1.xpose.msra.mxu0 0.0
  %5162 = vmatprep.subr.mxu0 0.0
  %5163 = vmatpush1.xpose.msra.mxu0 0.0
  %5164 = vmatprep.subr.mxu0 0.0
  %5165 = vmatpush1.xpose.msra.mxu0 0.0
  %5166 = vmatprep.subr.mxu0 0.0
  %5167 = vmatpush1.xpose.msra.mxu0 0.0
  %5168 = vmatprep.subr.mxu0 0.0
  %5169 = vmatpush1.xpose.msra.mxu0 0.0
  %5170 = vmatprep.subr.mxu0 0.0
  %5171 = vmatpush1.xpose.msra.mxu0 0.0
  %5172 = vmatprep.subr.mxu0 0.0
  %5173 = vmatpush1.xpose.msra.mxu0 0.0
  %5174 = vmatprep.subr.mxu0 0.0
  %5175 = vmatpush1.xpose.msra.mxu0 0.0
  %5176 = vmatprep.subr.mxu0 0.0
  %5177 = vmatpush1.xpose.msra.mxu0 0.0
  %5178 = vmatprep.subr.mxu0 0.0
  %5179 = vmatpush1.xpose.msra.mxu0 0.0
  %5180 = vmatprep.subr.mxu0 0.0
  %5181 = vmatpush1.xpose.msra.mxu0 0.0
  %5182 = vmatprep.subr.mxu0 0.0
  %5183 = vmatpush1.xpose.msra.mxu0 0.0
  %5184 = vmatprep.subr.mxu0 0.0
  %5185 = vmatpush1.xpose.msra.mxu0 0.0
  %5186 = vmatprep.subr.mxu0 0.0
  %5187 = vmatpush1.xpose.msra.mxu0 0.0
  %5188 = vmatprep.subr.mxu0 0.0
  %5189 = vmatpush1.xpose.msra.mxu0 0.0
  %5190 = vmatprep.subr.mxu0 0.0
  %5191 = vmatpush1.xpose.msra.mxu0 0.0
  %5192 = vmatprep.subr.mxu0 0.0
  %5193 = vmatpush1.xpose.msra.mxu0 0.0
  %5194 = vmatprep.subr.mxu0 0.0
  %5195 = vmatpush1.xpose.msra.mxu0 0.0
  %5196 = vmatprep.subr.mxu0 0.0
  %5197 = vmatpush1.xpose.msra.mxu0 0.0
  %5198 = vmatprep.subr.mxu0 0.0
  %5199 = vmatpush1.xpose.msra.mxu0 0.0
  %5200 = vmatprep.subr.mxu0 0.0
  %5201 = vmatpush1.xpose.msra.mxu0 0.0
  %5202 = vmatprep.subr.mxu0 0.0
  %5203 = vmatpush1.xpose.msra.mxu0 0.0
  %5204 = vmatprep.mubr.f32.mxu0 0.0
  %5205 = vmatmul.mubr.f32.gmra.mrb[0].mxu0 %v5136
  %v5206 = vpop.f32.mrb[0].mxu0
  %v5207 = vadd.f32 0.0, %v5206
  %v5208 = vpop.f32.mrb[0].mxu0
  %5209 = vdwg.mxu0
  %v5210 = vsub.f32 %v4067, %v1617
  %v5211 = vsub.f32 %v4143, %v1621
  %v5212 = vsub.f32 %v4219, %v1625
  %v5213 = vsub.f32 %v4295, %v1629
  %v5214 = vsub.f32 %v4371, %v1633
  %v5215 = vsub.f32 %v4447, %v1637
  %v5216 = vsub.f32 %v4523, %v1641
  %v5217 = vsub.f32 %v4599, %v1645
  %v5218 = vsub.f32 %v4675, %v1617
  %v5219 = vsub.f32 %v4751, %v1621
  %v5220 = vsub.f32 %v4827, %v1625
  %v5221 = vsub.f32 %v4903, %v1629
  %v5222 = vsub.f32 %v4979, %v1633
  %v5223 = vsub.f32 %v5055, %v1637
  %v5224 = vsub.f32 %v5131, %v1641
  %v5225 = vsub.f32 %v5207, %v1645
  %v5226 = vsel %vm399, %v5210, -inf
  %5227 = vmax.xlane.f32.xlu0 %v5226
  %v5228 = vpop.xlane.xlu0 %5227
  %v5229 = vsel %vm399, %v5211, -inf
  %5230 = vmax.xlane.f32.xlu0 %v5229
  %v5231 = vpop.xlane.xlu0 %5230
  %v5232 = vsel %vm399, %v5212, -inf
  %5233 = vmax.xlane.f32.xlu0 %v5232
  %v5234 = vpop.xlane.xlu0 %5233
  %v5235 = vsel %vm399, %v5213, -inf
  %5236 = vmax.xlane.f32.xlu0 %v5235
  %v5237 = vpop.xlane.xlu0 %5236
  %v5238 = vsel %vm399, %v5214, -inf
  %5239 = vmax.xlane.f32.xlu0 %v5238
  %v5240 = vpop.xlane.xlu0 %5239
  %v5241 = vsel %vm399, %v5215, -inf
  %5242 = vmax.xlane.f32.xlu0 %v5241
  %v5243 = vpop.xlane.xlu0 %5242
  %v5244 = vsel %vm399, %v5216, -inf
  %5245 = vmax.xlane.f32.xlu0 %v5244
  %v5246 = vpop.xlane.xlu0 %5245
  %v5247 = vsel %vm399, %v5217, -inf
  %5248 = vmax.xlane.f32.xlu0 %v5247
  %v5249 = vpop.xlane.xlu0 %5248
  %v5250 = vsel %vm399, %v5218, -inf
  %5251 = vmax.xlane.f32.xlu0 %v5250
  %v5252 = vpop.xlane.xlu0 %5251
  %v5253 = vsel %vm399, %v5219, -inf
  %5254 = vmax.xlane.f32.xlu0 %v5253
  %v5255 = vpop.xlane.xlu0 %5254
  %v5256 = vsel %vm399, %v5220, -inf
  %5257 = vmax.xlane.f32.xlu0 %v5256
  %v5258 = vpop.xlane.xlu0 %5257
  %v5259 = vsel %vm399, %v5221, -inf
  %5260 = vmax.xlane.f32.xlu0 %v5259
  %v5261 = vpop.xlane.xlu0 %5260
  %v5262 = vsel %vm399, %v5222, -inf
  %5263 = vmax.xlane.f32.xlu0 %v5262
  %v5264 = vpop.xlane.xlu0 %5263
  %v5265 = vsel %vm399, %v5223, -inf
  %5266 = vmax.xlane.f32.xlu0 %v5265
  %v5267 = vpop.xlane.xlu0 %5266
  %v5268 = vsel %vm399, %v5224, -inf
  %5269 = vmax.xlane.f32.xlu0 %v5268
  %v5270 = vpop.xlane.xlu0 %5269
  %v5271 = vsel %vm399, %v5225, -inf
  %5272 = vmax.xlane.f32.xlu0 %v5271
  %v5273 = vpop.xlane.xlu0 %5272
  %v5274 = vsub.f32 %v5210, %v5228
  %v5275 = vsub.f32 %v5211, %v5231
  %v5276 = vsub.f32 %v5212, %v5234
  %v5277 = vsub.f32 %v5213, %v5237
  %v5278 = vsub.f32 %v5214, %v5240
  %v5279 = vsub.f32 %v5215, %v5243
  %v5280 = vsub.f32 %v5216, %v5246
  %v5281 = vsub.f32 %v5217, %v5249
  %v5282 = vsub.f32 %v5218, %v5252
  %v5283 = vsub.f32 %v5219, %v5255
  %v5284 = vsub.f32 %v5220, %v5258
  %v5285 = vsub.f32 %v5221, %v5261
  %v5286 = vsub.f32 %v5222, %v5264
  %v5287 = vsub.f32 %v5223, %v5267
  %v5288 = vsub.f32 %v5224, %v5270
  %v5289 = vsub.f32 %v5225, %v5273
  %v5290 = vmul.f32 %v5274, 1.442695
  %v5291 = vpow.pop %v5290
  %v5292 = vmul.f32 %v5275, 1.442695
  %v5293 = vpow.pop %v5292
  %v5294 = vmul.f32 %v5276, 1.442695
  %v5295 = vpow.pop %v5294
  %v5296 = vmul.f32 %v5277, 1.442695
  %v5297 = vpow.pop %v5296
  %v5298 = vmul.f32 %v5278, 1.442695
  %v5299 = vpow.pop %v5298
  %v5300 = vmul.f32 %v5279, 1.442695
  %v5301 = vpow.pop %v5300
  %v5302 = vmul.f32 %v5280, 1.442695
  %v5303 = vpow.pop %v5302
  %v5304 = vmul.f32 %v5281, 1.442695
  %v5305 = vpow.pop %v5304
  %v5306 = vmul.f32 %v5282, 1.442695
  %v5307 = vpow.pop %v5306
  %v5308 = vmul.f32 %v5283, 1.442695
  %v5309 = vpow.pop %v5308
  %v5310 = vmul.f32 %v5284, 1.442695
  %v5311 = vpow.pop %v5310
  %v5312 = vmul.f32 %v5285, 1.442695
  %v5313 = vpow.pop %v5312
  %v5314 = vmul.f32 %v5286, 1.442695
  %v5315 = vpow.pop %v5314
  %v5316 = vmul.f32 %v5287, 1.442695
  %v5317 = vpow.pop %v5316
  %v5318 = vmul.f32 %v5288, 1.442695
  %v5319 = vpow.pop %v5318
  %v5320 = vmul.f32 %v5289, 1.442695
  %v5321 = vpow.pop %v5320
  %v5322 = vsel %vm399, %v5291, 0.0
  %5323 = vadd.xlane.f32.xlu0 %v5322
  %v5324 = vpop.xlane.xlu0 %5323
  %v5325 = vsel %vm399, %v5293, 0.0
  %5326 = vadd.xlane.f32.xlu0 %v5325
  %v5327 = vpop.xlane.xlu0 %5326
  %v5328 = vsel %vm399, %v5295, 0.0
  %5329 = vadd.xlane.f32.xlu0 %v5328
  %v5330 = vpop.xlane.xlu0 %5329
  %v5331 = vsel %vm399, %v5297, 0.0
  %5332 = vadd.xlane.f32.xlu0 %v5331
  %v5333 = vpop.xlane.xlu0 %5332
  %v5334 = vsel %vm399, %v5299, 0.0
  %5335 = vadd.xlane.f32.xlu0 %v5334
  %v5336 = vpop.xlane.xlu0 %5335
  %v5337 = vsel %vm399, %v5301, 0.0
  %5338 = vadd.xlane.f32.xlu0 %v5337
  %v5339 = vpop.xlane.xlu0 %5338
  %v5340 = vsel %vm399, %v5303, 0.0
  %5341 = vadd.xlane.f32.xlu0 %v5340
  %v5342 = vpop.xlane.xlu0 %5341
  %v5343 = vsel %vm399, %v5305, 0.0
  %5344 = vadd.xlane.f32.xlu0 %v5343
  %v5345 = vpop.xlane.xlu0 %5344
  %v5346 = vsel %vm399, %v5307, 0.0
  %5347 = vadd.xlane.f32.xlu0 %v5346
  %v5348 = vpop.xlane.xlu0 %5347
  %v5349 = vsel %vm399, %v5309, 0.0
  %5350 = vadd.xlane.f32.xlu0 %v5349
  %v5351 = vpop.xlane.xlu0 %5350
  %v5352 = vsel %vm399, %v5311, 0.0
  %5353 = vadd.xlane.f32.xlu0 %v5352
  %v5354 = vpop.xlane.xlu0 %5353
  %v5355 = vsel %vm399, %v5313, 0.0
  %5356 = vadd.xlane.f32.xlu0 %v5355
  %v5357 = vpop.xlane.xlu0 %5356
  %v5358 = vsel %vm399, %v5315, 0.0
  %5359 = vadd.xlane.f32.xlu0 %v5358
  %v5360 = vpop.xlane.xlu0 %5359
  %v5361 = vsel %vm399, %v5317, 0.0
  %5362 = vadd.xlane.f32.xlu0 %v5361
  %v5363 = vpop.xlane.xlu0 %5362
  %v5364 = vsel %vm399, %v5319, 0.0
  %5365 = vadd.xlane.f32.xlu0 %v5364
  %v5366 = vpop.xlane.xlu0 %5365
  %v5367 = vsel %vm399, %v5321, 0.0
  %5368 = vadd.xlane.f32.xlu0 %v5367
  %v5369 = vpop.xlane.xlu0 %5368
  %v5370 = vrcp.pop %v5324
  %v5371 = vrcp.pop %v5327
  %v5372 = vrcp.pop %v5330
  %v5373 = vrcp.pop %v5333
  %v5374 = vrcp.pop %v5336
  %v5375 = vrcp.pop %v5339
  %v5376 = vrcp.pop %v5342
  %v5377 = vrcp.pop %v5345
  %v5378 = vrcp.pop %v5348
  %v5379 = vrcp.pop %v5351
  %v5380 = vrcp.pop %v5354
  %v5381 = vrcp.pop %v5357
  %v5382 = vrcp.pop %v5360
  %v5383 = vrcp.pop %v5363
  %v5384 = vrcp.pop %v5366
  %v5385 = vrcp.pop %v5369
  %v5386 = vmul.f32 %v5291, %v5370
  %v5387 = vmul.f32 %v5293, %v5371
  %v5388 = vmul.f32 %v5295, %v5372
  %v5389 = vmul.f32 %v5297, %v5373
  %v5390 = vmul.f32 %v5299, %v5374
  %v5391 = vmul.f32 %v5301, %v5375
  %v5392 = vmul.f32 %v5303, %v5376
  %v5393 = vmul.f32 %v5305, %v5377
  %v5394 = vmul.f32 %v5307, %v5378
  %v5395 = vmul.f32 %v5309, %v5379
  %v5396 = vmul.f32 %v5311, %v5380
  %v5397 = vmul.f32 %v5313, %v5381
  %v5398 = vmul.f32 %v5315, %v5382
  %v5399 = vmul.f32 %v5317, %v5383
  %v5400 = vmul.f32 %v5319, %v5384
  %v5401 = vmul.f32 %v5321, %v5385
  %5402 = vrot.lane.b32.xlu0 %v3948, 64
  %v5403 = vpop.permute.xlu0 %5402
  %v5406 = vsel %vm399, %v5386, 0
  %5408 = vmatprep.subr.mxu0 0.0
  %5409 = vmatpush1.msra.mxu0 %v5403
  %5410 = vmatprep.subr.mxu0 0.0
  %5411 = vmatpush1.msra.mxu0 0.0
  %5412 = vmatprep.subr.mxu0 0.0
  %5413 = vmatpush1.msra.mxu0 0.0
  %5414 = vmatprep.subr.mxu0 0.0
  %5415 = vmatpush1.msra.mxu0 0.0
  %5416 = vmatprep.subr.mxu0 0.0
  %5417 = vmatpush1.msra.mxu0 0.0
  %5418 = vmatprep.subr.mxu0 0.0
  %5419 = vmatpush1.msra.mxu0 0.0
  %5420 = vmatprep.subr.mxu0 0.0
  %5421 = vmatpush1.msra.mxu0 0.0
  %5422 = vmatprep.subr.mxu0 0.0
  %5423 = vmatpush1.msra.mxu0 0.0
  %5424 = vmatprep.subr.mxu0 0.0
  %5425 = vmatpush1.msra.mxu0 0.0
  %5426 = vmatprep.subr.mxu0 0.0
  %5427 = vmatpush1.msra.mxu0 0.0
  %5428 = vmatprep.subr.mxu0 0.0
  %5429 = vmatpush1.msra.mxu0 0.0
  %5430 = vmatprep.subr.mxu0 0.0
  %5431 = vmatpush1.msra.mxu0 0.0
  %5432 = vmatprep.subr.mxu0 0.0
  %5433 = vmatpush1.msra.mxu0 0.0
  %5434 = vmatprep.subr.mxu0 0.0
  %5435 = vmatpush1.msra.mxu0 0.0
  %5436 = vmatprep.subr.mxu0 0.0
  %5437 = vmatpush1.msra.mxu0 0.0
  %5438 = vmatprep.subr.mxu0 0.0
  %5439 = vmatpush1.msra.mxu0 0.0
  %5440 = vmatprep.subr.mxu0 0.0
  %5441 = vmatpush1.msra.mxu0 0.0
  %5442 = vmatprep.subr.mxu0 0.0
  %5443 = vmatpush1.msra.mxu0 0.0
  %5444 = vmatprep.subr.mxu0 0.0
  %5445 = vmatpush1.msra.mxu0 0.0
  %5446 = vmatprep.subr.mxu0 0.0
  %5447 = vmatpush1.msra.mxu0 0.0
  %5448 = vmatprep.subr.mxu0 0.0
  %5449 = vmatpush1.msra.mxu0 0.0
  %5450 = vmatprep.subr.mxu0 0.0
  %5451 = vmatpush1.msra.mxu0 0.0
  %5452 = vmatprep.subr.mxu0 0.0
  %5453 = vmatpush1.msra.mxu0 0.0
  %5454 = vmatprep.subr.mxu0 0.0
  %5455 = vmatpush1.msra.mxu0 0.0
  %5456 = vmatprep.subr.mxu0 0.0
  %5457 = vmatpush1.msra.mxu0 0.0
  %5458 = vmatprep.subr.mxu0 0.0
  %5459 = vmatpush1.msra.mxu0 0.0
  %5460 = vmatprep.subr.mxu0 0.0
  %5461 = vmatpush1.msra.mxu0 0.0
  %5462 = vmatprep.subr.mxu0 0.0
  %5463 = vmatpush1.msra.mxu0 0.0
  %5464 = vmatprep.subr.mxu0 0.0
  %5465 = vmatpush1.msra.mxu0 0.0
  %5466 = vmatprep.subr.mxu0 0.0
  %5467 = vmatpush1.msra.mxu0 0.0
  %5468 = vmatprep.subr.mxu0 0.0
  %5469 = vmatpush1.msra.mxu0 0.0
  %5470 = vmatprep.subr.mxu0 0.0
  %5471 = vmatpush1.msra.mxu0 0.0
  %5472 = vmatprep.mubr.f32.mxu0 0.0
  %5473 = vmatmul.mubr.f32.gmra.mrb[0].mxu0 %v5406
  %v5474 = vpop.f32.mrb[0].mxu0
  %v5475 = vadd.f32 0.0, %v5474
  %v5476 = vpop.f32.mrb[0].mxu0
  %5477 = vdwg.mxu0
  %5478 = vrot.lane.b32.xlu0 %v3953, 64
  %v5479 = vpop.permute.xlu0 %5478
  %v5482 = vsel %vm399, %v5387, 0
  %5484 = vmatprep.subr.mxu0 0.0
  %5485 = vmatpush1.msra.mxu0 %v5479
  %5486 = vmatprep.subr.mxu0 0.0
  %5487 = vmatpush1.msra.mxu0 0.0
  %5488 = vmatprep.subr.mxu0 0.0
  %5489 = vmatpush1.msra.mxu0 0.0
  %5490 = vmatprep.subr.mxu0 0.0
  %5491 = vmatpush1.msra.mxu0 0.0
  %5492 = vmatprep.subr.mxu0 0.0
  %5493 = vmatpush1.msra.mxu0 0.0
  %5494 = vmatprep.subr.mxu0 0.0
  %5495 = vmatpush1.msra.mxu0 0.0
  %5496 = vmatprep.subr.mxu0 0.0
  %5497 = vmatpush1.msra.mxu0 0.0
  %5498 = vmatprep.subr.mxu0 0.0
  %5499 = vmatpush1.msra.mxu0 0.0
  %5500 = vmatprep.subr.mxu0 0.0
  %5501 = vmatpush1.msra.mxu0 0.0
  %5502 = vmatprep.subr.mxu0 0.0
  %5503 = vmatpush1.msra.mxu0 0.0
  %5504 = vmatprep.subr.mxu0 0.0
  %5505 = vmatpush1.msra.mxu0 0.0
  %5506 = vmatprep.subr.mxu0 0.0
  %5507 = vmatpush1.msra.mxu0 0.0
  %5508 = vmatprep.subr.mxu0 0.0
  %5509 = vmatpush1.msra.mxu0 0.0
  %5510 = vmatprep.subr.mxu0 0.0
  %5511 = vmatpush1.msra.mxu0 0.0
  %5512 = vmatprep.subr.mxu0 0.0
  %5513 = vmatpush1.msra.mxu0 0.0
  %5514 = vmatprep.subr.mxu0 0.0
  %5515 = vmatpush1.msra.mxu0 0.0
  %5516 = vmatprep.subr.mxu0 0.0
  %5517 = vmatpush1.msra.mxu0 0.0
  %5518 = vmatprep.subr.mxu0 0.0
  %5519 = vmatpush1.msra.mxu0 0.0
  %5520 = vmatprep.subr.mxu0 0.0
  %5521 = vmatpush1.msra.mxu0 0.0
  %5522 = vmatprep.subr.mxu0 0.0
  %5523 = vmatpush1.msra.mxu0 0.0
  %5524 = vmatprep.subr.mxu0 0.0
  %5525 = vmatpush1.msra.mxu0 0.0
  %5526 = vmatprep.subr.mxu0 0.0
  %5527 = vmatpush1.msra.mxu0 0.0
  %5528 = vmatprep.subr.mxu0 0.0
  %5529 = vmatpush1.msra.mxu0 0.0
  %5530 = vmatprep.subr.mxu0 0.0
  %5531 = vmatpush1.msra.mxu0 0.0
  %5532 = vmatprep.subr.mxu0 0.0
  %5533 = vmatpush1.msra.mxu0 0.0
  %5534 = vmatprep.subr.mxu0 0.0
  %5535 = vmatpush1.msra.mxu0 0.0
  %5536 = vmatprep.subr.mxu0 0.0
  %5537 = vmatpush1.msra.mxu0 0.0
  %5538 = vmatprep.subr.mxu0 0.0
  %5539 = vmatpush1.msra.mxu0 0.0
  %5540 = vmatprep.subr.mxu0 0.0
  %5541 = vmatpush1.msra.mxu0 0.0
  %5542 = vmatprep.subr.mxu0 0.0
  %5543 = vmatpush1.msra.mxu0 0.0
  %5544 = vmatprep.subr.mxu0 0.0
  %5545 = vmatpush1.msra.mxu0 0.0
  %5546 = vmatprep.subr.mxu0 0.0
  %5547 = vmatpush1.msra.mxu0 0.0
  %5548 = vmatprep.mubr.f32.mxu0 0.0
  %5549 = vmatmul.mubr.f32.gmra.mrb[0].mxu0 %v5482
  %v5550 = vpop.f32.mrb[0].mxu0
  %v5551 = vadd.f32 0.0, %v5550
  %v5552 = vpop.f32.mrb[0].mxu0
  %5553 = vdwg.mxu0
  %5554 = vrot.lane.b32.xlu0 %v3958, 64
  %v5555 = vpop.permute.xlu0 %5554
  %v5558 = vsel %vm399, %v5388, 0
  %5560 = vmatprep.subr.mxu0 0.0
  %5561 = vmatpush1.msra.mxu0 %v5555
  %5562 = vmatprep.subr.mxu0 0.0
  %5563 = vmatpush1.msra.mxu0 0.0
  %5564 = vmatprep.subr.mxu0 0.0
  %5565 = vmatpush1.msra.mxu0 0.0
  %5566 = vmatprep.subr.mxu0 0.0
  %5567 = vmatpush1.msra.mxu0 0.0
  %5568 = vmatprep.subr.mxu0 0.0
  %5569 = vmatpush1.msra.mxu0 0.0
  %5570 = vmatprep.subr.mxu0 0.0
  %5571 = vmatpush1.msra.mxu0 0.0
  %5572 = vmatprep.subr.mxu0 0.0
  %5573 = vmatpush1.msra.mxu0 0.0
  %5574 = vmatprep.subr.mxu0 0.0
  %5575 = vmatpush1.msra.mxu0 0.0
  %5576 = vmatprep.subr.mxu0 0.0
  %5577 = vmatpush1.msra.mxu0 0.0
  %5578 = vmatprep.subr.mxu0 0.0
  %5579 = vmatpush1.msra.mxu0 0.0
  %5580 = vmatprep.subr.mxu0 0.0
  %5581 = vmatpush1.msra.mxu0 0.0
  %5582 = vmatprep.subr.mxu0 0.0
  %5583 = vmatpush1.msra.mxu0 0.0
  %5584 = vmatprep.subr.mxu0 0.0
  %5585 = vmatpush1.msra.mxu0 0.0
  %5586 = vmatprep.subr.mxu0 0.0
  %5587 = vmatpush1.msra.mxu0 0.0
  %5588 = vmatprep.subr.mxu0 0.0
  %5589 = vmatpush1.msra.mxu0 0.0
  %5590 = vmatprep.subr.mxu0 0.0
  %5591 = vmatpush1.msra.mxu0 0.0
  %5592 = vmatprep.subr.mxu0 0.0
  %5593 = vmatpush1.msra.mxu0 0.0
  %5594 = vmatprep.subr.mxu0 0.0
  %5595 = vmatpush1.msra.mxu0 0.0
  %5596 = vmatprep.subr.mxu0 0.0
  %5597 = vmatpush1.msra.mxu0 0.0
  %5598 = vmatprep.subr.mxu0 0.0
  %5599 = vmatpush1.msra.mxu0 0.0
  %5600 = vmatprep.subr.mxu0 0.0
  %5601 = vmatpush1.msra.mxu0 0.0
  %5602 = vmatprep.subr.mxu0 0.0
  %5603 = vmatpush1.msra.mxu0 0.0
  %5604 = vmatprep.subr.mxu0 0.0
  %5605 = vmatpush1.msra.mxu0 0.0
  %5606 = vmatprep.subr.mxu0 0.0
  %5607 = vmatpush1.msra.mxu0 0.0
  %5608 = vmatprep.subr.mxu0 0.0
  %5609 = vmatpush1.msra.mxu0 0.0
  %5610 = vmatprep.subr.mxu0 0.0
  %5611 = vmatpush1.msra.mxu0 0.0
  %5612 = vmatprep.subr.mxu0 0.0
  %5613 = vmatpush1.msra.mxu0 0.0
  %5614 = vmatprep.subr.mxu0 0.0
  %5615 = vmatpush1.msra.mxu0 0.0
  %5616 = vmatprep.subr.mxu0 0.0
  %5617 = vmatpush1.msra.mxu0 0.0
  %5618 = vmatprep.subr.mxu0 0.0
  %5619 = vmatpush1.msra.mxu0 0.0
  %5620 = vmatprep.subr.mxu0 0.0
  %5621 = vmatpush1.msra.mxu0 0.0
  %5622 = vmatprep.subr.mxu0 0.0
  %5623 = vmatpush1.msra.mxu0 0.0
  %5624 = vmatprep.mubr.f32.mxu0 0.0
  %5625 = vmatmul.mubr.f32.gmra.mrb[0].mxu0 %v5558
  %v5626 = vpop.f32.mrb[0].mxu0
  %v5627 = vadd.f32 0.0, %v5626
  %v5628 = vpop.f32.mrb[0].mxu0
  %5629 = vdwg.mxu0
  %5630 = vrot.lane.b32.xlu0 %v3963, 64
  %v5631 = vpop.permute.xlu0 %5630
  %v5634 = vsel %vm399, %v5389, 0
  %5636 = vmatprep.subr.mxu0 0.0
  %5637 = vmatpush1.msra.mxu0 %v5631
  %5638 = vmatprep.subr.mxu0 0.0
  %5639 = vmatpush1.msra.mxu0 0.0
  %5640 = vmatprep.subr.mxu0 0.0
  %5641 = vmatpush1.msra.mxu0 0.0
  %5642 = vmatprep.subr.mxu0 0.0
  %5643 = vmatpush1.msra.mxu0 0.0
  %5644 = vmatprep.subr.mxu0 0.0
  %5645 = vmatpush1.msra.mxu0 0.0
  %5646 = vmatprep.subr.mxu0 0.0
  %5647 = vmatpush1.msra.mxu0 0.0
  %5648 = vmatprep.subr.mxu0 0.0
  %5649 = vmatpush1.msra.mxu0 0.0
  %5650 = vmatprep.subr.mxu0 0.0
  %5651 = vmatpush1.msra.mxu0 0.0
  %5652 = vmatprep.subr.mxu0 0.0
  %5653 = vmatpush1.msra.mxu0 0.0
  %5654 = vmatprep.subr.mxu0 0.0
  %5655 = vmatpush1.msra.mxu0 0.0
  %5656 = vmatprep.subr.mxu0 0.0
  %5657 = vmatpush1.msra.mxu0 0.0
  %5658 = vmatprep.subr.mxu0 0.0
  %5659 = vmatpush1.msra.mxu0 0.0
  %5660 = vmatprep.subr.mxu0 0.0
  %5661 = vmatpush1.msra.mxu0 0.0
  %5662 = vmatprep.subr.mxu0 0.0
  %5663 = vmatpush1.msra.mxu0 0.0
  %5664 = vmatprep.subr.mxu0 0.0
  %5665 = vmatpush1.msra.mxu0 0.0
  %5666 = vmatprep.subr.mxu0 0.0
  %5667 = vmatpush1.msra.mxu0 0.0
  %5668 = vmatprep.subr.mxu0 0.0
  %5669 = vmatpush1.msra.mxu0 0.0
  %5670 = vmatprep.subr.mxu0 0.0
  %5671 = vmatpush1.msra.mxu0 0.0
  %5672 = vmatprep.subr.mxu0 0.0
  %5673 = vmatpush1.msra.mxu0 0.0
  %5674 = vmatprep.subr.mxu0 0.0
  %5675 = vmatpush1.msra.mxu0 0.0
  %5676 = vmatprep.subr.mxu0 0.0
  %5677 = vmatpush1.msra.mxu0 0.0
  %5678 = vmatprep.subr.mxu0 0.0
  %5679 = vmatpush1.msra.mxu0 0.0
  %5680 = vmatprep.subr.mxu0 0.0
  %5681 = vmatpush1.msra.mxu0 0.0
  %5682 = vmatprep.subr.mxu0 0.0
  %5683 = vmatpush1.msra.mxu0 0.0
  %5684 = vmatprep.subr.mxu0 0.0
  %5685 = vmatpush1.msra.mxu0 0.0
  %5686 = vmatprep.subr.mxu0 0.0
  %5687 = vmatpush1.msra.mxu0 0.0
  %5688 = vmatprep.subr.mxu0 0.0
  %5689 = vmatpush1.msra.mxu0 0.0
  %5690 = vmatprep.subr.mxu0 0.0
  %5691 = vmatpush1.msra.mxu0 0.0
  %5692 = vmatprep.subr.mxu0 0.0
  %5693 = vmatpush1.msra.mxu0 0.0
  %5694 = vmatprep.subr.mxu0 0.0
  %5695 = vmatpush1.msra.mxu0 0.0
  %5696 = vmatprep.subr.mxu0 0.0
  %5697 = vmatpush1.msra.mxu0 0.0
  %5698 = vmatprep.subr.mxu0 0.0
  %5699 = vmatpush1.msra.mxu0 0.0
  %5700 = vmatprep.mubr.f32.mxu0 0.0
  %5701 = vmatmul.mubr.f32.gmra.mrb[0].mxu0 %v5634
  %v5702 = vpop.f32.mrb[0].mxu0
  %v5703 = vadd.f32 0.0, %v5702
  %v5704 = vpop.f32.mrb[0].mxu0
  %5705 = vdwg.mxu0
  %5706 = vrot.lane.b32.xlu0 %v3971, 64
  %v5707 = vpop.permute.xlu0 %5706
  %v5710 = vsel %vm399, %v5390, 0
  %5712 = vmatprep.subr.mxu0 0.0
  %5713 = vmatpush1.msra.mxu0 %v5707
  %5714 = vmatprep.subr.mxu0 0.0
  %5715 = vmatpush1.msra.mxu0 0.0
  %5716 = vmatprep.subr.mxu0 0.0
  %5717 = vmatpush1.msra.mxu0 0.0
  %5718 = vmatprep.subr.mxu0 0.0
  %5719 = vmatpush1.msra.mxu0 0.0
  %5720 = vmatprep.subr.mxu0 0.0
  %5721 = vmatpush1.msra.mxu0 0.0
  %5722 = vmatprep.subr.mxu0 0.0
  %5723 = vmatpush1.msra.mxu0 0.0
  %5724 = vmatprep.subr.mxu0 0.0
  %5725 = vmatpush1.msra.mxu0 0.0
  %5726 = vmatprep.subr.mxu0 0.0
  %5727 = vmatpush1.msra.mxu0 0.0
  %5728 = vmatprep.subr.mxu0 0.0
  %5729 = vmatpush1.msra.mxu0 0.0
  %5730 = vmatprep.subr.mxu0 0.0
  %5731 = vmatpush1.msra.mxu0 0.0
  %5732 = vmatprep.subr.mxu0 0.0
  %5733 = vmatpush1.msra.mxu0 0.0
  %5734 = vmatprep.subr.mxu0 0.0
  %5735 = vmatpush1.msra.mxu0 0.0
  %5736 = vmatprep.subr.mxu0 0.0
  %5737 = vmatpush1.msra.mxu0 0.0
  %5738 = vmatprep.subr.mxu0 0.0
  %5739 = vmatpush1.msra.mxu0 0.0
  %5740 = vmatprep.subr.mxu0 0.0
  %5741 = vmatpush1.msra.mxu0 0.0
  %5742 = vmatprep.subr.mxu0 0.0
  %5743 = vmatpush1.msra.mxu0 0.0
  %5744 = vmatprep.subr.mxu0 0.0
  %5745 = vmatpush1.msra.mxu0 0.0
  %5746 = vmatprep.subr.mxu0 0.0
  %5747 = vmatpush1.msra.mxu0 0.0
  %5748 = vmatprep.subr.mxu0 0.0
  %5749 = vmatpush1.msra.mxu0 0.0
  %5750 = vmatprep.subr.mxu0 0.0
  %5751 = vmatpush1.msra.mxu0 0.0
  %5752 = vmatprep.subr.mxu0 0.0
  %5753 = vmatpush1.msra.mxu0 0.0
  %5754 = vmatprep.subr.mxu0 0.0
  %5755 = vmatpush1.msra.mxu0 0.0
  %5756 = vmatprep.subr.mxu0 0.0
  %5757 = vmatpush1.msra.mxu0 0.0
  %5758 = vmatprep.subr.mxu0 0.0
  %5759 = vmatpush1.msra.mxu0 0.0
  %5760 = vmatprep.subr.mxu0 0.0
  %5761 = vmatpush1.msra.mxu0 0.0
  %5762 = vmatprep.subr.mxu0 0.0
  %5763 = vmatpush1.msra.mxu0 0.0
  %5764 = vmatprep.subr.mxu0 0.0
  %5765 = vmatpush1.msra.mxu0 0.0
  %5766 = vmatprep.subr.mxu0 0.0
  %5767 = vmatpush1.msra.mxu0 0.0
  %5768 = vmatprep.subr.mxu0 0.0
  %5769 = vmatpush1.msra.mxu0 0.0
  %5770 = vmatprep.subr.mxu0 0.0
  %5771 = vmatpush1.msra.mxu0 0.0
  %5772 = vmatprep.subr.mxu0 0.0
  %5773 = vmatpush1.msra.mxu0 0.0
  %5774 = vmatprep.subr.mxu0 0.0
  %5775 = vmatpush1.msra.mxu0 0.0
  %5776 = vmatprep.mubr.f32.mxu0 0.0
  %5777 = vmatmul.mubr.f32.gmra.mrb[0].mxu0 %v5710
  %v5778 = vpop.f32.mrb[0].mxu0
  %v5779 = vadd.f32 0.0, %v5778
  %v5780 = vpop.f32.mrb[0].mxu0
  %5781 = vdwg.mxu0
  %5782 = vrot.lane.b32.xlu0 %v3973, 64
  %v5783 = vpop.permute.xlu0 %5782
  %v5786 = vsel %vm399, %v5391, 0
  %5788 = vmatprep.subr.mxu0 0.0
  %5789 = vmatpush1.msra.mxu0 %v5783
  %5790 = vmatprep.subr.mxu0 0.0
  %5791 = vmatpush1.msra.mxu0 0.0
  %5792 = vmatprep.subr.mxu0 0.0
  %5793 = vmatpush1.msra.mxu0 0.0
  %5794 = vmatprep.subr.mxu0 0.0
  %5795 = vmatpush1.msra.mxu0 0.0
  %5796 = vmatprep.subr.mxu0 0.0
  %5797 = vmatpush1.msra.mxu0 0.0
  %5798 = vmatprep.subr.mxu0 0.0
  %5799 = vmatpush1.msra.mxu0 0.0
  %5800 = vmatprep.subr.mxu0 0.0
  %5801 = vmatpush1.msra.mxu0 0.0
  %5802 = vmatprep.subr.mxu0 0.0
  %5803 = vmatpush1.msra.mxu0 0.0
  %5804 = vmatprep.subr.mxu0 0.0
  %5805 = vmatpush1.msra.mxu0 0.0
  %5806 = vmatprep.subr.mxu0 0.0
  %5807 = vmatpush1.msra.mxu0 0.0
  %5808 = vmatprep.subr.mxu0 0.0
  %5809 = vmatpush1.msra.mxu0 0.0
  %5810 = vmatprep.subr.mxu0 0.0
  %5811 = vmatpush1.msra.mxu0 0.0
  %5812 = vmatprep.subr.mxu0 0.0
  %5813 = vmatpush1.msra.mxu0 0.0
  %5814 = vmatprep.subr.mxu0 0.0
  %5815 = vmatpush1.msra.mxu0 0.0
  %5816 = vmatprep.subr.mxu0 0.0
  %5817 = vmatpush1.msra.mxu0 0.0
  %5818 = vmatprep.subr.mxu0 0.0
  %5819 = vmatpush1.msra.mxu0 0.0
  %5820 = vmatprep.subr.mxu0 0.0
  %5821 = vmatpush1.msra.mxu0 0.0
  %5822 = vmatprep.subr.mxu0 0.0
  %5823 = vmatpush1.msra.mxu0 0.0
  %5824 = vmatprep.subr.mxu0 0.0
  %5825 = vmatpush1.msra.mxu0 0.0
  %5826 = vmatprep.subr.mxu0 0.0
  %5827 = vmatpush1.msra.mxu0 0.0
  %5828 = vmatprep.subr.mxu0 0.0
  %5829 = vmatpush1.msra.mxu0 0.0
  %5830 = vmatprep.subr.mxu0 0.0
  %5831 = vmatpush1.msra.mxu0 0.0
  %5832 = vmatprep.subr.mxu0 0.0
  %5833 = vmatpush1.msra.mxu0 0.0
  %5834 = vmatprep.subr.mxu0 0.0
  %5835 = vmatpush1.msra.mxu0 0.0
  %5836 = vmatprep.subr.mxu0 0.0
  %5837 = vmatpush1.msra.mxu0 0.0
  %5838 = vmatprep.subr.mxu0 0.0
  %5839 = vmatpush1.msra.mxu0 0.0
  %5840 = vmatprep.subr.mxu0 0.0
  %5841 = vmatpush1.msra.mxu0 0.0
  %5842 = vmatprep.subr.mxu0 0.0
  %5843 = vmatpush1.msra.mxu0 0.0
  %5844 = vmatprep.subr.mxu0 0.0
  %5845 = vmatpush1.msra.mxu0 0.0
  %5846 = vmatprep.subr.mxu0 0.0
  %5847 = vmatpush1.msra.mxu0 0.0
  %5848 = vmatprep.subr.mxu0 0.0
  %5849 = vmatpush1.msra.mxu0 0.0
  %5850 = vmatprep.subr.mxu0 0.0
  %5851 = vmatpush1.msra.mxu0 0.0
  %5852 = vmatprep.mubr.f32.mxu0 0.0
  %5853 = vmatmul.mubr.f32.gmra.mrb[0].mxu0 %v5786
  %v5854 = vpop.f32.mrb[0].mxu0
  %v5855 = vadd.f32 0.0, %v5854
  %v5856 = vpop.f32.mrb[0].mxu0
  %5857 = vdwg.mxu0
  %5858 = vrot.lane.b32.xlu0 %v3975, 64
  %v5859 = vpop.permute.xlu0 %5858
  %v5862 = vsel %vm399, %v5392, 0
  %5864 = vmatprep.subr.mxu0 0.0
  %5865 = vmatpush1.msra.mxu0 %v5859
  %5866 = vmatprep.subr.mxu0 0.0
  %5867 = vmatpush1.msra.mxu0 0.0
  %5868 = vmatprep.subr.mxu0 0.0
  %5869 = vmatpush1.msra.mxu0 0.0
  %5870 = vmatprep.subr.mxu0 0.0
  %5871 = vmatpush1.msra.mxu0 0.0
  %5872 = vmatprep.subr.mxu0 0.0
  %5873 = vmatpush1.msra.mxu0 0.0
  %5874 = vmatprep.subr.mxu0 0.0
  %5875 = vmatpush1.msra.mxu0 0.0
  %5876 = vmatprep.subr.mxu0 0.0
  %5877 = vmatpush1.msra.mxu0 0.0
  %5878 = vmatprep.subr.mxu0 0.0
  %5879 = vmatpush1.msra.mxu0 0.0
  %5880 = vmatprep.subr.mxu0 0.0
  %5881 = vmatpush1.msra.mxu0 0.0
  %5882 = vmatprep.subr.mxu0 0.0
  %5883 = vmatpush1.msra.mxu0 0.0
  %5884 = vmatprep.subr.mxu0 0.0
  %5885 = vmatpush1.msra.mxu0 0.0
  %5886 = vmatprep.subr.mxu0 0.0
  %5887 = vmatpush1.msra.mxu0 0.0
  %5888 = vmatprep.subr.mxu0 0.0
  %5889 = vmatpush1.msra.mxu0 0.0
  %5890 = vmatprep.subr.mxu0 0.0
  %5891 = vmatpush1.msra.mxu0 0.0
  %5892 = vmatprep.subr.mxu0 0.0
  %5893 = vmatpush1.msra.mxu0 0.0
  %5894 = vmatprep.subr.mxu0 0.0
  %5895 = vmatpush1.msra.mxu0 0.0
  %5896 = vmatprep.subr.mxu0 0.0
  %5897 = vmatpush1.msra.mxu0 0.0
  %5898 = vmatprep.subr.mxu0 0.0
  %5899 = vmatpush1.msra.mxu0 0.0
  %5900 = vmatprep.subr.mxu0 0.0
  %5901 = vmatpush1.msra.mxu0 0.0
  %5902 = vmatprep.subr.mxu0 0.0
  %5903 = vmatpush1.msra.mxu0 0.0
  %5904 = vmatprep.subr.mxu0 0.0
  %5905 = vmatpush1.msra.mxu0 0.0
  %5906 = vmatprep.subr.mxu0 0.0
  %5907 = vmatpush1.msra.mxu0 0.0
  %5908 = vmatprep.subr.mxu0 0.0
  %5909 = vmatpush1.msra.mxu0 0.0
  %5910 = vmatprep.subr.mxu0 0.0
  %5911 = vmatpush1.msra.mxu0 0.0
  %5912 = vmatprep.subr.mxu0 0.0
  %5913 = vmatpush1.msra.mxu0 0.0
  %5914 = vmatprep.subr.mxu0 0.0
  %5915 = vmatpush1.msra.mxu0 0.0
  %5916 = vmatprep.subr.mxu0 0.0
  %5917 = vmatpush1.msra.mxu0 0.0
  %5918 = vmatprep.subr.mxu0 0.0
  %5919 = vmatpush1.msra.mxu0 0.0
  %5920 = vmatprep.subr.mxu0 0.0
  %5921 = vmatpush1.msra.mxu0 0.0
  %5922 = vmatprep.subr.mxu0 0.0
  %5923 = vmatpush1.msra.mxu0 0.0
  %5924 = vmatprep.subr.mxu0 0.0
  %5925 = vmatpush1.msra.mxu0 0.0
  %5926 = vmatprep.subr.mxu0 0.0
  %5927 = vmatpush1.msra.mxu0 0.0
  %5928 = vmatprep.mubr.f32.mxu0 0.0
  %5929 = vmatmul.mubr.f32.gmra.mrb[0].mxu0 %v5862
  %v5930 = vpop.f32.mrb[0].mxu0
  %v5931 = vadd.f32 0.0, %v5930
  %v5932 = vpop.f32.mrb[0].mxu0
  %5933 = vdwg.mxu0
  %5934 = vrot.lane.b32.xlu0 %v3977, 64
  %v5935 = vpop.permute.xlu0 %5934
  %v5938 = vsel %vm399, %v5393, 0
  %5940 = vmatprep.subr.mxu0 0.0
  %5941 = vmatpush1.msra.mxu0 %v5935
  %5942 = vmatprep.subr.mxu0 0.0
  %5943 = vmatpush1.msra.mxu0 0.0
  %5944 = vmatprep.subr.mxu0 0.0
  %5945 = vmatpush1.msra.mxu0 0.0
  %5946 = vmatprep.subr.mxu0 0.0
  %5947 = vmatpush1.msra.mxu0 0.0
  %5948 = vmatprep.subr.mxu0 0.0
  %5949 = vmatpush1.msra.mxu0 0.0
  %5950 = vmatprep.subr.mxu0 0.0
  %5951 = vmatpush1.msra.mxu0 0.0
  %5952 = vmatprep.subr.mxu0 0.0
  %5953 = vmatpush1.msra.mxu0 0.0
  %5954 = vmatprep.subr.mxu0 0.0
  %5955 = vmatpush1.msra.mxu0 0.0
  %5956 = vmatprep.subr.mxu0 0.0
  %5957 = vmatpush1.msra.mxu0 0.0
  %5958 = vmatprep.subr.mxu0 0.0
  %5959 = vmatpush1.msra.mxu0 0.0
  %5960 = vmatprep.subr.mxu0 0.0
  %5961 = vmatpush1.msra.mxu0 0.0
  %5962 = vmatprep.subr.mxu0 0.0
  %5963 = vmatpush1.msra.mxu0 0.0
  %5964 = vmatprep.subr.mxu0 0.0
  %5965 = vmatpush1.msra.mxu0 0.0
  %5966 = vmatprep.subr.mxu0 0.0
  %5967 = vmatpush1.msra.mxu0 0.0
  %5968 = vmatprep.subr.mxu0 0.0
  %5969 = vmatpush1.msra.mxu0 0.0
  %5970 = vmatprep.subr.mxu0 0.0
  %5971 = vmatpush1.msra.mxu0 0.0
  %5972 = vmatprep.subr.mxu0 0.0
  %5973 = vmatpush1.msra.mxu0 0.0
  %5974 = vmatprep.subr.mxu0 0.0
  %5975 = vmatpush1.msra.mxu0 0.0
  %5976 = vmatprep.subr.mxu0 0.0
  %5977 = vmatpush1.msra.mxu0 0.0
  %5978 = vmatprep.subr.mxu0 0.0
  %5979 = vmatpush1.msra.mxu0 0.0
  %5980 = vmatprep.subr.mxu0 0.0
  %5981 = vmatpush1.msra.mxu0 0.0
  %5982 = vmatprep.subr.mxu0 0.0
  %5983 = vmatpush1.msra.mxu0 0.0
  %5984 = vmatprep.subr.mxu0 0.0
  %5985 = vmatpush1.msra.mxu0 0.0
  %5986 = vmatprep.subr.mxu0 0.0
  %5987 = vmatpush1.msra.mxu0 0.0
  %5988 = vmatprep.subr.mxu0 0.0
  %5989 = vmatpush1.msra.mxu0 0.0
  %5990 = vmatprep.subr.mxu0 0.0
  %5991 = vmatpush1.msra.mxu0 0.0
  %5992 = vmatprep.subr.mxu0 0.0
  %5993 = vmatpush1.msra.mxu0 0.0
  %5994 = vmatprep.subr.mxu0 0.0
  %5995 = vmatpush1.msra.mxu0 0.0
  %5996 = vmatprep.subr.mxu0 0.0
  %5997 = vmatpush1.msra.mxu0 0.0
  %5998 = vmatprep.subr.mxu0 0.0
  %5999 = vmatpush1.msra.mxu0 0.0
  %6000 = vmatprep.subr.mxu0 0.0
  %6001 = vmatpush1.msra.mxu0 0.0
  %6002 = vmatprep.subr.mxu0 0.0
  %6003 = vmatpush1.msra.mxu0 0.0
  %6004 = vmatprep.mubr.f32.mxu0 0.0
  %6005 = vmatmul.mubr.f32.gmra.mrb[0].mxu0 %v5938
  %v6006 = vpop.f32.mrb[0].mxu0
  %v6007 = vadd.f32 0.0, %v6006
  %v6008 = vpop.f32.mrb[0].mxu0
  %6009 = vdwg.mxu0
  %6010 = vrot.lane.b32.xlu0 %v3979, 64
  %v6011 = vpop.permute.xlu0 %6010
  %v6014 = vsel %vm399, %v5394, 0
  %6016 = vmatprep.subr.mxu0 0.0
  %6017 = vmatpush1.msra.mxu0 %v6011
  %6018 = vmatprep.subr.mxu0 0.0
  %6019 = vmatpush1.msra.mxu0 0.0
  %6020 = vmatprep.subr.mxu0 0.0
  %6021 = vmatpush1.msra.mxu0 0.0
  %6022 = vmatprep.subr.mxu0 0.0
  %6023 = vmatpush1.msra.mxu0 0.0
  %6024 = vmatprep.subr.mxu0 0.0
  %6025 = vmatpush1.msra.mxu0 0.0
  %6026 = vmatprep.subr.mxu0 0.0
  %6027 = vmatpush1.msra.mxu0 0.0
  %6028 = vmatprep.subr.mxu0 0.0
  %6029 = vmatpush1.msra.mxu0 0.0
  %6030 = vmatprep.subr.mxu0 0.0
  %6031 = vmatpush1.msra.mxu0 0.0
  %6032 = vmatprep.subr.mxu0 0.0
  %6033 = vmatpush1.msra.mxu0 0.0
  %6034 = vmatprep.subr.mxu0 0.0
  %6035 = vmatpush1.msra.mxu0 0.0
  %6036 = vmatprep.subr.mxu0 0.0
  %6037 = vmatpush1.msra.mxu0 0.0
  %6038 = vmatprep.subr.mxu0 0.0
  %6039 = vmatpush1.msra.mxu0 0.0
  %6040 = vmatprep.subr.mxu0 0.0
  %6041 = vmatpush1.msra.mxu0 0.0
  %6042 = vmatprep.subr.mxu0 0.0
  %6043 = vmatpush1.msra.mxu0 0.0
  %6044 = vmatprep.subr.mxu0 0.0
  %6045 = vmatpush1.msra.mxu0 0.0
  %6046 = vmatprep.subr.mxu0 0.0
  %6047 = vmatpush1.msra.mxu0 0.0
  %6048 = vmatprep.subr.mxu0 0.0
  %6049 = vmatpush1.msra.mxu0 0.0
  %6050 = vmatprep.subr.mxu0 0.0
  %6051 = vmatpush1.msra.mxu0 0.0
  %6052 = vmatprep.subr.mxu0 0.0
  %6053 = vmatpush1.msra.mxu0 0.0
  %6054 = vmatprep.subr.mxu0 0.0
  %6055 = vmatpush1.msra.mxu0 0.0
  %6056 = vmatprep.subr.mxu0 0.0
  %6057 = vmatpush1.msra.mxu0 0.0
  %6058 = vmatprep.subr.mxu0 0.0
  %6059 = vmatpush1.msra.mxu0 0.0
  %6060 = vmatprep.subr.mxu0 0.0
  %6061 = vmatpush1.msra.mxu0 0.0
  %6062 = vmatprep.subr.mxu0 0.0
  %6063 = vmatpush1.msra.mxu0 0.0
  %6064 = vmatprep.subr.mxu0 0.0
  %6065 = vmatpush1.msra.mxu0 0.0
  %6066 = vmatprep.subr.mxu0 0.0
  %6067 = vmatpush1.msra.mxu0 0.0
  %6068 = vmatprep.subr.mxu0 0.0
  %6069 = vmatpush1.msra.mxu0 0.0
  %6070 = vmatprep.subr.mxu0 0.0
  %6071 = vmatpush1.msra.mxu0 0.0
  %6072 = vmatprep.subr.mxu0 0.0
  %6073 = vmatpush1.msra.mxu0 0.0
  %6074 = vmatprep.subr.mxu0 0.0
  %6075 = vmatpush1.msra.mxu0 0.0
  %6076 = vmatprep.subr.mxu0 0.0
  %6077 = vmatpush1.msra.mxu0 0.0
  %6078 = vmatprep.subr.mxu0 0.0
  %6079 = vmatpush1.msra.mxu0 0.0
  %6080 = vmatprep.mubr.f32.mxu0 0.0
  %6081 = vmatmul.mubr.f32.gmra.mrb[0].mxu0 %v6014
  %v6082 = vpop.f32.mrb[0].mxu0
  %v6083 = vadd.f32 0.0, %v6082
  %v6084 = vpop.f32.mrb[0].mxu0
  %6085 = vdwg.mxu0
  %6086 = vrot.lane.b32.xlu0 %v3981, 64
  %v6087 = vpop.permute.xlu0 %6086
  %v6090 = vsel %vm399, %v5395, 0
  %6092 = vmatprep.subr.mxu0 0.0
  %6093 = vmatpush1.msra.mxu0 %v6087
  %6094 = vmatprep.subr.mxu0 0.0
  %6095 = vmatpush1.msra.mxu0 0.0
  %6096 = vmatprep.subr.mxu0 0.0
  %6097 = vmatpush1.msra.mxu0 0.0
  %6098 = vmatprep.subr.mxu0 0.0
  %6099 = vmatpush1.msra.mxu0 0.0
  %6100 = vmatprep.subr.mxu0 0.0
  %6101 = vmatpush1.msra.mxu0 0.0
  %6102 = vmatprep.subr.mxu0 0.0
  %6103 = vmatpush1.msra.mxu0 0.0
  %6104 = vmatprep.subr.mxu0 0.0
  %6105 = vmatpush1.msra.mxu0 0.0
  %6106 = vmatprep.subr.mxu0 0.0
  %6107 = vmatpush1.msra.mxu0 0.0
  %6108 = vmatprep.subr.mxu0 0.0
  %6109 = vmatpush1.msra.mxu0 0.0
  %6110 = vmatprep.subr.mxu0 0.0
  %6111 = vmatpush1.msra.mxu0 0.0
  %6112 = vmatprep.subr.mxu0 0.0
  %6113 = vmatpush1.msra.mxu0 0.0
  %6114 = vmatprep.subr.mxu0 0.0
  %6115 = vmatpush1.msra.mxu0 0.0
  %6116 = vmatprep.subr.mxu0 0.0
  %6117 = vmatpush1.msra.mxu0 0.0
  %6118 = vmatprep.subr.mxu0 0.0
  %6119 = vmatpush1.msra.mxu0 0.0
  %6120 = vmatprep.subr.mxu0 0.0
  %6121 = vmatpush1.msra.mxu0 0.0
  %6122 = vmatprep.subr.mxu0 0.0
  %6123 = vmatpush1.msra.mxu0 0.0
  %6124 = vmatprep.subr.mxu0 0.0
  %6125 = vmatpush1.msra.mxu0 0.0
  %6126 = vmatprep.subr.mxu0 0.0
  %6127 = vmatpush1.msra.mxu0 0.0
  %6128 = vmatprep.subr.mxu0 0.0
  %6129 = vmatpush1.msra.mxu0 0.0
  %6130 = vmatprep.subr.mxu0 0.0
  %6131 = vmatpush1.msra.mxu0 0.0
  %6132 = vmatprep.subr.mxu0 0.0
  %6133 = vmatpush1.msra.mxu0 0.0
  %6134 = vmatprep.subr.mxu0 0.0
  %6135 = vmatpush1.msra.mxu0 0.0
  %6136 = vmatprep.subr.mxu0 0.0
  %6137 = vmatpush1.msra.mxu0 0.0
  %6138 = vmatprep.subr.mxu0 0.0
  %6139 = vmatpush1.msra.mxu0 0.0
  %6140 = vmatprep.subr.mxu0 0.0
  %6141 = vmatpush1.msra.mxu0 0.0
  %6142 = vmatprep.subr.mxu0 0.0
  %6143 = vmatpush1.msra.mxu0 0.0
  %6144 = vmatprep.subr.mxu0 0.0
  %6145 = vmatpush1.msra.mxu0 0.0
  %6146 = vmatprep.subr.mxu0 0.0
  %6147 = vmatpush1.msra.mxu0 0.0
  %6148 = vmatprep.subr.mxu0 0.0
  %6149 = vmatpush1.msra.mxu0 0.0
  %6150 = vmatprep.subr.mxu0 0.0
  %6151 = vmatpush1.msra.mxu0 0.0
  %6152 = vmatprep.subr.mxu0 0.0
  %6153 = vmatpush1.msra.mxu0 0.0
  %6154 = vmatprep.subr.mxu0 0.0
  %6155 = vmatpush1.msra.mxu0 0.0
  %6156 = vmatprep.mubr.f32.mxu0 0.0
  %6157 = vmatmul.mubr.f32.gmra.mrb[0].mxu0 %v6090
  %v6158 = vpop.f32.mrb[0].mxu0
  %v6159 = vadd.f32 0.0, %v6158
  %v6160 = vpop.f32.mrb[0].mxu0
  %6161 = vdwg.mxu0
  %6162 = vrot.lane.b32.xlu0 %v3983, 64
  %v6163 = vpop.permute.xlu0 %6162
  %v6166 = vsel %vm399, %v5396, 0
  %6168 = vmatprep.subr.mxu0 0.0
  %6169 = vmatpush1.msra.mxu0 %v6163
  %6170 = vmatprep.subr.mxu0 0.0
  %6171 = vmatpush1.msra.mxu0 0.0
  %6172 = vmatprep.subr.mxu0 0.0
  %6173 = vmatpush1.msra.mxu0 0.0
  %6174 = vmatprep.subr.mxu0 0.0
  %6175 = vmatpush1.msra.mxu0 0.0
  %6176 = vmatprep.subr.mxu0 0.0
  %6177 = vmatpush1.msra.mxu0 0.0
  %6178 = vmatprep.subr.mxu0 0.0
  %6179 = vmatpush1.msra.mxu0 0.0
  %6180 = vmatprep.subr.mxu0 0.0
  %6181 = vmatpush1.msra.mxu0 0.0
  %6182 = vmatprep.subr.mxu0 0.0
  %6183 = vmatpush1.msra.mxu0 0.0
  %6184 = vmatprep.subr.mxu0 0.0
  %6185 = vmatpush1.msra.mxu0 0.0
  %6186 = vmatprep.subr.mxu0 0.0
  %6187 = vmatpush1.msra.mxu0 0.0
  %6188 = vmatprep.subr.mxu0 0.0
  %6189 = vmatpush1.msra.mxu0 0.0
  %6190 = vmatprep.subr.mxu0 0.0
  %6191 = vmatpush1.msra.mxu0 0.0
  %6192 = vmatprep.subr.mxu0 0.0
  %6193 = vmatpush1.msra.mxu0 0.0
  %6194 = vmatprep.subr.mxu0 0.0
  %6195 = vmatpush1.msra.mxu0 0.0
  %6196 = vmatprep.subr.mxu0 0.0
  %6197 = vmatpush1.msra.mxu0 0.0
  %6198 = vmatprep.subr.mxu0 0.0
  %6199 = vmatpush1.msra.mxu0 0.0
  %6200 = vmatprep.subr.mxu0 0.0
  %6201 = vmatpush1.msra.mxu0 0.0
  %6202 = vmatprep.subr.mxu0 0.0
  %6203 = vmatpush1.msra.mxu0 0.0
  %6204 = vmatprep.subr.mxu0 0.0
  %6205 = vmatpush1.msra.mxu0 0.0
  %6206 = vmatprep.subr.mxu0 0.0
  %6207 = vmatpush1.msra.mxu0 0.0
  %6208 = vmatprep.subr.mxu0 0.0
  %6209 = vmatpush1.msra.mxu0 0.0
  %6210 = vmatprep.subr.mxu0 0.0
  %6211 = vmatpush1.msra.mxu0 0.0
  %6212 = vmatprep.subr.mxu0 0.0
  %6213 = vmatpush1.msra.mxu0 0.0
  %6214 = vmatprep.subr.mxu0 0.0
  %6215 = vmatpush1.msra.mxu0 0.0
  %6216 = vmatprep.subr.mxu0 0.0
  %6217 = vmatpush1.msra.mxu0 0.0
  %6218 = vmatprep.subr.mxu0 0.0
  %6219 = vmatpush1.msra.mxu0 0.0
  %6220 = vmatprep.subr.mxu0 0.0
  %6221 = vmatpush1.msra.mxu0 0.0
  %6222 = vmatprep.subr.mxu0 0.0
  %6223 = vmatpush1.msra.mxu0 0.0
  %6224 = vmatprep.subr.mxu0 0.0
  %6225 = vmatpush1.msra.mxu0 0.0
  %6226 = vmatprep.subr.mxu0 0.0
  %6227 = vmatpush1.msra.mxu0 0.0
  %6228 = vmatprep.subr.mxu0 0.0
  %6229 = vmatpush1.msra.mxu0 0.0
  %6230 = vmatprep.subr.mxu0 0.0
  %6231 = vmatpush1.msra.mxu0 0.0
  %6232 = vmatprep.mubr.f32.mxu0 0.0
  %6233 = vmatmul.mubr.f32.gmra.mrb[0].mxu0 %v6166
  %v6234 = vpop.f32.mrb[0].mxu0
  %v6235 = vadd.f32 0.0, %v6234
  %v6236 = vpop.f32.mrb[0].mxu0
  %6237 = vdwg.mxu0
  %6238 = vrot.lane.b32.xlu0 %v3985, 64
  %v6239 = vpop.permute.xlu0 %6238
  %v6242 = vsel %vm399, %v5397, 0
  %6244 = vmatprep.subr.mxu0 0.0
  %6245 = vmatpush1.msra.mxu0 %v6239
  %6246 = vmatprep.subr.mxu0 0.0
  %6247 = vmatpush1.msra.mxu0 0.0
  %6248 = vmatprep.subr.mxu0 0.0
  %6249 = vmatpush1.msra.mxu0 0.0
  %6250 = vmatprep.subr.mxu0 0.0
  %6251 = vmatpush1.msra.mxu0 0.0
  %6252 = vmatprep.subr.mxu0 0.0
  %6253 = vmatpush1.msra.mxu0 0.0
  %6254 = vmatprep.subr.mxu0 0.0
  %6255 = vmatpush1.msra.mxu0 0.0
  %6256 = vmatprep.subr.mxu0 0.0
  %6257 = vmatpush1.msra.mxu0 0.0
  %6258 = vmatprep.subr.mxu0 0.0
  %6259 = vmatpush1.msra.mxu0 0.0
  %6260 = vmatprep.subr.mxu0 0.0
  %6261 = vmatpush1.msra.mxu0 0.0
  %6262 = vmatprep.subr.mxu0 0.0
  %6263 = vmatpush1.msra.mxu0 0.0
  %6264 = vmatprep.subr.mxu0 0.0
  %6265 = vmatpush1.msra.mxu0 0.0
  %6266 = vmatprep.subr.mxu0 0.0
  %6267 = vmatpush1.msra.mxu0 0.0
  %6268 = vmatprep.subr.mxu0 0.0
  %6269 = vmatpush1.msra.mxu0 0.0
  %6270 = vmatprep.subr.mxu0 0.0
  %6271 = vmatpush1.msra.mxu0 0.0
  %6272 = vmatprep.subr.mxu0 0.0
  %6273 = vmatpush1.msra.mxu0 0.0
  %6274 = vmatprep.subr.mxu0 0.0
  %6275 = vmatpush1.msra.mxu0 0.0
  %6276 = vmatprep.subr.mxu0 0.0
  %6277 = vmatpush1.msra.mxu0 0.0
  %6278 = vmatprep.subr.mxu0 0.0
  %6279 = vmatpush1.msra.mxu0 0.0
  %6280 = vmatprep.subr.mxu0 0.0
  %6281 = vmatpush1.msra.mxu0 0.0
  %6282 = vmatprep.subr.mxu0 0.0
  %6283 = vmatpush1.msra.mxu0 0.0
  %6284 = vmatprep.subr.mxu0 0.0
  %6285 = vmatpush1.msra.mxu0 0.0
  %6286 = vmatprep.subr.mxu0 0.0
  %6287 = vmatpush1.msra.mxu0 0.0
  %6288 = vmatprep.subr.mxu0 0.0
  %6289 = vmatpush1.msra.mxu0 0.0
  %6290 = vmatprep.subr.mxu0 0.0
  %6291 = vmatpush1.msra.mxu0 0.0
  %6292 = vmatprep.subr.mxu0 0.0
  %6293 = vmatpush1.msra.mxu0 0.0
  %6294 = vmatprep.subr.mxu0 0.0
  %6295 = vmatpush1.msra.mxu0 0.0
  %6296 = vmatprep.subr.mxu0 0.0
  %6297 = vmatpush1.msra.mxu0 0.0
  %6298 = vmatprep.subr.mxu0 0.0
  %6299 = vmatpush1.msra.mxu0 0.0
  %6300 = vmatprep.subr.mxu0 0.0
  %6301 = vmatpush1.msra.mxu0 0.0
  %6302 = vmatprep.subr.mxu0 0.0
  %6303 = vmatpush1.msra.mxu0 0.0
  %6304 = vmatprep.subr.mxu0 0.0
  %6305 = vmatpush1.msra.mxu0 0.0
  %6306 = vmatprep.subr.mxu0 0.0
  %6307 = vmatpush1.msra.mxu0 0.0
  %6308 = vmatprep.mubr.f32.mxu0 0.0
  %6309 = vmatmul.mubr.f32.gmra.mrb[0].mxu0 %v6242
  %v6310 = vpop.f32.mrb[0].mxu0
  %v6311 = vadd.f32 0.0, %v6310
  %v6312 = vpop.f32.mrb[0].mxu0
  %6313 = vdwg.mxu0
  %6314 = vrot.lane.b32.xlu0 %v3987, 64
  %v6315 = vpop.permute.xlu0 %6314
  %v6318 = vsel %vm399, %v5398, 0
  %6320 = vmatprep.subr.mxu0 0.0
  %6321 = vmatpush1.msra.mxu0 %v6315
  %6322 = vmatprep.subr.mxu0 0.0
  %6323 = vmatpush1.msra.mxu0 0.0
  %6324 = vmatprep.subr.mxu0 0.0
  %6325 = vmatpush1.msra.mxu0 0.0
  %6326 = vmatprep.subr.mxu0 0.0
  %6327 = vmatpush1.msra.mxu0 0.0
  %6328 = vmatprep.subr.mxu0 0.0
  %6329 = vmatpush1.msra.mxu0 0.0
  %6330 = vmatprep.subr.mxu0 0.0
  %6331 = vmatpush1.msra.mxu0 0.0
  %6332 = vmatprep.subr.mxu0 0.0
  %6333 = vmatpush1.msra.mxu0 0.0
  %6334 = vmatprep.subr.mxu0 0.0
  %6335 = vmatpush1.msra.mxu0 0.0
  %6336 = vmatprep.subr.mxu0 0.0
  %6337 = vmatpush1.msra.mxu0 0.0
  %6338 = vmatprep.subr.mxu0 0.0
  %6339 = vmatpush1.msra.mxu0 0.0
  %6340 = vmatprep.subr.mxu0 0.0
  %6341 = vmatpush1.msra.mxu0 0.0
  %6342 = vmatprep.subr.mxu0 0.0
  %6343 = vmatpush1.msra.mxu0 0.0
  %6344 = vmatprep.subr.mxu0 0.0
  %6345 = vmatpush1.msra.mxu0 0.0
  %6346 = vmatprep.subr.mxu0 0.0
  %6347 = vmatpush1.msra.mxu0 0.0
  %6348 = vmatprep.subr.mxu0 0.0
  %6349 = vmatpush1.msra.mxu0 0.0
  %6350 = vmatprep.subr.mxu0 0.0
  %6351 = vmatpush1.msra.mxu0 0.0
  %6352 = vmatprep.subr.mxu0 0.0
  %6353 = vmatpush1.msra.mxu0 0.0
  %6354 = vmatprep.subr.mxu0 0.0
  %6355 = vmatpush1.msra.mxu0 0.0
  %6356 = vmatprep.subr.mxu0 0.0
  %6357 = vmatpush1.msra.mxu0 0.0
  %6358 = vmatprep.subr.mxu0 0.0
  %6359 = vmatpush1.msra.mxu0 0.0
  %6360 = vmatprep.subr.mxu0 0.0
  %6361 = vmatpush1.msra.mxu0 0.0
  %6362 = vmatprep.subr.mxu0 0.0
  %6363 = vmatpush1.msra.mxu0 0.0
  %6364 = vmatprep.subr.mxu0 0.0
  %6365 = vmatpush1.msra.mxu0 0.0
  %6366 = vmatprep.subr.mxu0 0.0
  %6367 = vmatpush1.msra.mxu0 0.0
  %6368 = vmatprep.subr.mxu0 0.0
  %6369 = vmatpush1.msra.mxu0 0.0
  %6370 = vmatprep.subr.mxu0 0.0
  %6371 = vmatpush1.msra.mxu0 0.0
  %6372 = vmatprep.subr.mxu0 0.0
  %6373 = vmatpush1.msra.mxu0 0.0
  %6374 = vmatprep.subr.mxu0 0.0
  %6375 = vmatpush1.msra.mxu0 0.0
  %6376 = vmatprep.subr.mxu0 0.0
  %6377 = vmatpush1.msra.mxu0 0.0
  %6378 = vmatprep.subr.mxu0 0.0
  %6379 = vmatpush1.msra.mxu0 0.0
  %6380 = vmatprep.subr.mxu0 0.0
  %6381 = vmatpush1.msra.mxu0 0.0
  %6382 = vmatprep.subr.mxu0 0.0
  %6383 = vmatpush1.msra.mxu0 0.0
  %6384 = vmatprep.mubr.f32.mxu0 0.0
  %6385 = vmatmul.mubr.f32.gmra.mrb[0].mxu0 %v6318
  %v6386 = vpop.f32.mrb[0].mxu0
  %v6387 = vadd.f32 0.0, %v6386
  %v6388 = vpop.f32.mrb[0].mxu0
  %6389 = vdwg.mxu0
  %6390 = vrot.lane.b32.xlu0 %v3989, 64
  %v6391 = vpop.permute.xlu0 %6390
  %v6394 = vsel %vm399, %v5399, 0
  %6396 = vmatprep.subr.mxu0 0.0
  %6397 = vmatpush1.msra.mxu0 %v6391
  %6398 = vmatprep.subr.mxu0 0.0
  %6399 = vmatpush1.msra.mxu0 0.0
  %6400 = vmatprep.subr.mxu0 0.0
  %6401 = vmatpush1.msra.mxu0 0.0
  %6402 = vmatprep.subr.mxu0 0.0
  %6403 = vmatpush1.msra.mxu0 0.0
  %6404 = vmatprep.subr.mxu0 0.0
  %6405 = vmatpush1.msra.mxu0 0.0
  %6406 = vmatprep.subr.mxu0 0.0
  %6407 = vmatpush1.msra.mxu0 0.0
  %6408 = vmatprep.subr.mxu0 0.0
  %6409 = vmatpush1.msra.mxu0 0.0
  %6410 = vmatprep.subr.mxu0 0.0
  %6411 = vmatpush1.msra.mxu0 0.0
  %6412 = vmatprep.subr.mxu0 0.0
  %6413 = vmatpush1.msra.mxu0 0.0
  %6414 = vmatprep.subr.mxu0 0.0
  %6415 = vmatpush1.msra.mxu0 0.0
  %6416 = vmatprep.subr.mxu0 0.0
  %6417 = vmatpush1.msra.mxu0 0.0
  %6418 = vmatprep.subr.mxu0 0.0
  %6419 = vmatpush1.msra.mxu0 0.0
  %6420 = vmatprep.subr.mxu0 0.0
  %6421 = vmatpush1.msra.mxu0 0.0
  %6422 = vmatprep.subr.mxu0 0.0
  %6423 = vmatpush1.msra.mxu0 0.0
  %6424 = vmatprep.subr.mxu0 0.0
  %6425 = vmatpush1.msra.mxu0 0.0
  %6426 = vmatprep.subr.mxu0 0.0
  %6427 = vmatpush1.msra.mxu0 0.0
  %6428 = vmatprep.subr.mxu0 0.0
  %6429 = vmatpush1.msra.mxu0 0.0
  %6430 = vmatprep.subr.mxu0 0.0
  %6431 = vmatpush1.msra.mxu0 0.0
  %6432 = vmatprep.subr.mxu0 0.0
  %6433 = vmatpush1.msra.mxu0 0.0
  %6434 = vmatprep.subr.mxu0 0.0
  %6435 = vmatpush1.msra.mxu0 0.0
  %6436 = vmatprep.subr.mxu0 0.0
  %6437 = vmatpush1.msra.mxu0 0.0
  %6438 = vmatprep.subr.mxu0 0.0
  %6439 = vmatpush1.msra.mxu0 0.0
  %6440 = vmatprep.subr.mxu0 0.0
  %6441 = vmatpush1.msra.mxu0 0.0
  %6442 = vmatprep.subr.mxu0 0.0
  %6443 = vmatpush1.msra.mxu0 0.0
  %6444 = vmatprep.subr.mxu0 0.0
  %6445 = vmatpush1.msra.mxu0 0.0
  %6446 = vmatprep.subr.mxu0 0.0
  %6447 = vmatpush1.msra.mxu0 0.0
  %6448 = vmatprep.subr.mxu0 0.0
  %6449 = vmatpush1.msra.mxu0 0.0
  %6450 = vmatprep.subr.mxu0 0.0
  %6451 = vmatpush1.msra.mxu0 0.0
  %6452 = vmatprep.subr.mxu0 0.0
  %6453 = vmatpush1.msra.mxu0 0.0
  %6454 = vmatprep.subr.mxu0 0.0
  %6455 = vmatpush1.msra.mxu0 0.0
  %6456 = vmatprep.subr.mxu0 0.0
  %6457 = vmatpush1.msra.mxu0 0.0
  %6458 = vmatprep.subr.mxu0 0.0
  %6459 = vmatpush1.msra.mxu0 0.0
  %6460 = vmatprep.mubr.f32.mxu0 0.0
  %6461 = vmatmul.mubr.f32.gmra.mrb[0].mxu0 %v6394
  %v6462 = vpop.f32.mrb[0].mxu0
  %v6463 = vadd.f32 0.0, %v6462
  %v6464 = vpop.f32.mrb[0].mxu0
  %6465 = vdwg.mxu0
  %6466 = vrot.lane.b32.xlu0 %v3991, 64
  %v6467 = vpop.permute.xlu0 %6466
  %v6470 = vsel %vm399, %v5400, 0
  %6472 = vmatprep.subr.mxu0 0.0
  %6473 = vmatpush1.msra.mxu0 %v6467
  %6474 = vmatprep.subr.mxu0 0.0
  %6475 = vmatpush1.msra.mxu0 0.0
  %6476 = vmatprep.subr.mxu0 0.0
  %6477 = vmatpush1.msra.mxu0 0.0
  %6478 = vmatprep.subr.mxu0 0.0
  %6479 = vmatpush1.msra.mxu0 0.0
  %6480 = vmatprep.subr.mxu0 0.0
  %6481 = vmatpush1.msra.mxu0 0.0
  %6482 = vmatprep.subr.mxu0 0.0
  %6483 = vmatpush1.msra.mxu0 0.0
  %6484 = vmatprep.subr.mxu0 0.0
  %6485 = vmatpush1.msra.mxu0 0.0
  %6486 = vmatprep.subr.mxu0 0.0
  %6487 = vmatpush1.msra.mxu0 0.0
  %6488 = vmatprep.subr.mxu0 0.0
  %6489 = vmatpush1.msra.mxu0 0.0
  %6490 = vmatprep.subr.mxu0 0.0
  %6491 = vmatpush1.msra.mxu0 0.0
  %6492 = vmatprep.subr.mxu0 0.0
  %6493 = vmatpush1.msra.mxu0 0.0
  %6494 = vmatprep.subr.mxu0 0.0
  %6495 = vmatpush1.msra.mxu0 0.0
  %6496 = vmatprep.subr.mxu0 0.0
  %6497 = vmatpush1.msra.mxu0 0.0
  %6498 = vmatprep.subr.mxu0 0.0
  %6499 = vmatpush1.msra.mxu0 0.0
  %6500 = vmatprep.subr.mxu0 0.0
  %6501 = vmatpush1.msra.mxu0 0.0
  %6502 = vmatprep.subr.mxu0 0.0
  %6503 = vmatpush1.msra.mxu0 0.0
  %6504 = vmatprep.subr.mxu0 0.0
  %6505 = vmatpush1.msra.mxu0 0.0
  %6506 = vmatprep.subr.mxu0 0.0
  %6507 = vmatpush1.msra.mxu0 0.0
  %6508 = vmatprep.subr.mxu0 0.0
  %6509 = vmatpush1.msra.mxu0 0.0
  %6510 = vmatprep.subr.mxu0 0.0
  %6511 = vmatpush1.msra.mxu0 0.0
  %6512 = vmatprep.subr.mxu0 0.0
  %6513 = vmatpush1.msra.mxu0 0.0
  %6514 = vmatprep.subr.mxu0 0.0
  %6515 = vmatpush1.msra.mxu0 0.0
  %6516 = vmatprep.subr.mxu0 0.0
  %6517 = vmatpush1.msra.mxu0 0.0
  %6518 = vmatprep.subr.mxu0 0.0
  %6519 = vmatpush1.msra.mxu0 0.0
  %6520 = vmatprep.subr.mxu0 0.0
  %6521 = vmatpush1.msra.mxu0 0.0
  %6522 = vmatprep.subr.mxu0 0.0
  %6523 = vmatpush1.msra.mxu0 0.0
  %6524 = vmatprep.subr.mxu0 0.0
  %6525 = vmatpush1.msra.mxu0 0.0
  %6526 = vmatprep.subr.mxu0 0.0
  %6527 = vmatpush1.msra.mxu0 0.0
  %6528 = vmatprep.subr.mxu0 0.0
  %6529 = vmatpush1.msra.mxu0 0.0
  %6530 = vmatprep.subr.mxu0 0.0
  %6531 = vmatpush1.msra.mxu0 0.0
  %6532 = vmatprep.subr.mxu0 0.0
  %6533 = vmatpush1.msra.mxu0 0.0
  %6534 = vmatprep.subr.mxu0 0.0
  %6535 = vmatpush1.msra.mxu0 0.0
  %6536 = vmatprep.mubr.f32.mxu0 0.0
  %6537 = vmatmul.mubr.f32.gmra.mrb[0].mxu0 %v6470
  %v6538 = vpop.f32.mrb[0].mxu0
  %v6539 = vadd.f32 0.0, %v6538
  %v6540 = vpop.f32.mrb[0].mxu0
  %6541 = vdwg.mxu0
  %6542 = vrot.lane.b32.xlu0 %v3993, 64
  %v6543 = vpop.permute.xlu0 %6542
  %v6546 = vsel %vm399, %v5401, 0
  %6548 = vmatprep.subr.mxu0 0.0
  %6549 = vmatpush1.msra.mxu0 %v6543
  %6550 = vmatprep.subr.mxu0 0.0
  %6551 = vmatpush1.msra.mxu0 0.0
  %6552 = vmatprep.subr.mxu0 0.0
  %6553 = vmatpush1.msra.mxu0 0.0
  %6554 = vmatprep.subr.mxu0 0.0
  %6555 = vmatpush1.msra.mxu0 0.0
  %6556 = vmatprep.subr.mxu0 0.0
  %6557 = vmatpush1.msra.mxu0 0.0
  %6558 = vmatprep.subr.mxu0 0.0
  %6559 = vmatpush1.msra.mxu0 0.0
  %6560 = vmatprep.subr.mxu0 0.0
  %6561 = vmatpush1.msra.mxu0 0.0
  %6562 = vmatprep.subr.mxu0 0.0
  %6563 = vmatpush1.msra.mxu0 0.0
  %6564 = vmatprep.subr.mxu0 0.0
  %6565 = vmatpush1.msra.mxu0 0.0
  %6566 = vmatprep.subr.mxu0 0.0
  %6567 = vmatpush1.msra.mxu0 0.0
  %6568 = vmatprep.subr.mxu0 0.0
  %6569 = vmatpush1.msra.mxu0 0.0
  %6570 = vmatprep.subr.mxu0 0.0
  %6571 = vmatpush1.msra.mxu0 0.0
  %6572 = vmatprep.subr.mxu0 0.0
  %6573 = vmatpush1.msra.mxu0 0.0
  %6574 = vmatprep.subr.mxu0 0.0
  %6575 = vmatpush1.msra.mxu0 0.0
  %6576 = vmatprep.subr.mxu0 0.0
  %6577 = vmatpush1.msra.mxu0 0.0
  %6578 = vmatprep.subr.mxu0 0.0
  %6579 = vmatpush1.msra.mxu0 0.0
  %6580 = vmatprep.subr.mxu0 0.0
  %6581 = vmatpush1.msra.mxu0 0.0
  %6582 = vmatprep.subr.mxu0 0.0
  %6583 = vmatpush1.msra.mxu0 0.0
  %6584 = vmatprep.subr.mxu0 0.0
  %6585 = vmatpush1.msra.mxu0 0.0
  %6586 = vmatprep.subr.mxu0 0.0
  %6587 = vmatpush1.msra.mxu0 0.0
  %6588 = vmatprep.subr.mxu0 0.0
  %6589 = vmatpush1.msra.mxu0 0.0
  %6590 = vmatprep.subr.mxu0 0.0
  %6591 = vmatpush1.msra.mxu0 0.0
  %6592 = vmatprep.subr.mxu0 0.0
  %6593 = vmatpush1.msra.mxu0 0.0
  %6594 = vmatprep.subr.mxu0 0.0
  %6595 = vmatpush1.msra.mxu0 0.0
  %6596 = vmatprep.subr.mxu0 0.0
  %6597 = vmatpush1.msra.mxu0 0.0
  %6598 = vmatprep.subr.mxu0 0.0
  %6599 = vmatpush1.msra.mxu0 0.0
  %6600 = vmatprep.subr.mxu0 0.0
  %6601 = vmatpush1.msra.mxu0 0.0
  %6602 = vmatprep.subr.mxu0 0.0
  %6603 = vmatpush1.msra.mxu0 0.0
  %6604 = vmatprep.subr.mxu0 0.0
  %6605 = vmatpush1.msra.mxu0 0.0
  %6606 = vmatprep.subr.mxu0 0.0
  %6607 = vmatpush1.msra.mxu0 0.0
  %6608 = vmatprep.subr.mxu0 0.0
  %6609 = vmatpush1.msra.mxu0 0.0
  %6610 = vmatprep.subr.mxu0 0.0
  %6611 = vmatpush1.msra.mxu0 0.0
  %6612 = vmatprep.mubr.f32.mxu0 0.0
  %6613 = vmatmul.mubr.f32.gmra.mrb[0].mxu0 %v6546
  %v6614 = vpop.f32.mrb[0].mxu0
  %v6615 = vadd.f32 0.0, %v6614
  %v6616 = vpop.f32.mrb[0].mxu0
  %6617 = vdwg.mxu0
  %s6618 = scalar_lea.vmem %s5, 32
  %v6619 = vld [vmem:[%s6618] sm:$0xff]
  %v6620 = vld [vmem:[%s6618 + $0x8] sm:$0xff]
  %v6621 = vld [vmem:[%s6618 + $0x10] sm:$0xff]
  %v6622 = vld [vmem:[%s6618 + $0x18] sm:$0xff]
  %v6624 = vsel %vm399, %v5475, 0
  %v6627 = vsel %vm399, %v5551, 0
  %v6630 = vsel %vm399, %v5627, 0
  %v6633 = vsel %vm399, %v5703, 0
  %6635 = vmatprep.subr.mxu0 0.0
  %6636 = vmatpush1.msra.mxu0 %v6619
  %6637 = vmatprep.subr.mxu0 0.0
  %6638 = vmatpush1.msra.mxu0 0.0
  %6639 = vmatprep.subr.mxu0 0.0
  %6640 = vmatpush1.msra.mxu0 0.0
  %6641 = vmatprep.subr.mxu0 0.0
  %6642 = vmatpush1.msra.mxu0 0.0
  %6643 = vmatprep.subr.mxu0 0.0
  %6644 = vmatpush1.msra.mxu0 0.0
  %6645 = vmatprep.subr.mxu0 0.0
  %6646 = vmatpush1.msra.mxu0 0.0
  %6647 = vmatprep.subr.mxu0 0.0
  %6648 = vmatpush1.msra.mxu0 0.0
  %6649 = vmatprep.subr.mxu0 0.0
  %6650 = vmatpush1.msra.mxu0 0.0
  %6651 = vmatprep.subr.mxu0 0.0
  %6652 = vmatpush1.msra.mxu0 0.0
  %6653 = vmatprep.subr.mxu0 0.0
  %6654 = vmatpush1.msra.mxu0 0.0
  %6655 = vmatprep.subr.mxu0 0.0
  %6656 = vmatpush1.msra.mxu0 0.0
  %6657 = vmatprep.subr.mxu0 0.0
  %6658 = vmatpush1.msra.mxu0 0.0
  %6659 = vmatprep.subr.mxu0 0.0
  %6660 = vmatpush1.msra.mxu0 0.0
  %6661 = vmatprep.subr.mxu0 0.0
  %6662 = vmatpush1.msra.mxu0 0.0
  %6663 = vmatprep.subr.mxu0 0.0
  %6664 = vmatpush1.msra.mxu0 0.0
  %6665 = vmatprep.subr.mxu0 0.0
  %6666 = vmatpush1.msra.mxu0 0.0
  %6667 = vmatprep.subr.mxu0 0.0
  %6668 = vmatpush1.msra.mxu0 0.0
  %6669 = vmatprep.subr.mxu0 0.0
  %6670 = vmatpush1.msra.mxu0 0.0
  %6671 = vmatprep.subr.mxu0 0.0
  %6672 = vmatpush1.msra.mxu0 0.0
  %6673 = vmatprep.subr.mxu0 0.0
  %6674 = vmatpush1.msra.mxu0 0.0
  %6675 = vmatprep.subr.mxu0 0.0
  %6676 = vmatpush1.msra.mxu0 0.0
  %6677 = vmatprep.subr.mxu0 0.0
  %6678 = vmatpush1.msra.mxu0 0.0
  %6679 = vmatprep.subr.mxu0 0.0
  %6680 = vmatpush1.msra.mxu0 0.0
  %6681 = vmatprep.subr.mxu0 0.0
  %6682 = vmatpush1.msra.mxu0 0.0
  %6683 = vmatprep.subr.mxu0 0.0
  %6684 = vmatpush1.msra.mxu0 0.0
  %6685 = vmatprep.subr.mxu0 0.0
  %6686 = vmatpush1.msra.mxu0 0.0
  %6687 = vmatprep.subr.mxu0 0.0
  %6688 = vmatpush1.msra.mxu0 0.0
  %6689 = vmatprep.subr.mxu0 0.0
  %6690 = vmatpush1.msra.mxu0 0.0
  %6691 = vmatprep.subr.mxu0 0.0
  %6692 = vmatpush1.msra.mxu0 0.0
  %6693 = vmatprep.subr.mxu0 0.0
  %6694 = vmatpush1.msra.mxu0 0.0
  %6695 = vmatprep.subr.mxu0 0.0
  %6696 = vmatpush1.msra.mxu0 0.0
  %6697 = vmatprep.subr.mxu0 0.0
  %6698 = vmatpush1.msra.mxu0 0.0
  %6699 = vmatprep.mubr.f32.mxu0 0.0
  %6700 = vmatmul.mubr.f32.gmra.mrb[0].mxu0 %v6624
  %v6701 = vpop.f32.mrb[0].mxu0
  %v6702 = vadd.f32 0.0, %v6701
  %v6703 = vpop.f32.mrb[0].mxu0
  %6704 = vmatprep.mubr.f32.mxu0 0.0
  %6705 = vmatmul.mubr.f32.gmra.mrb[0].mxu0 %v6627
  %v6706 = vpop.f32.mrb[0].mxu0
  %v6707 = vadd.f32 0.0, %v6706
  %v6708 = vpop.f32.mrb[0].mxu0
  %6709 = vmatprep.mubr.f32.mxu0 0.0
  %6710 = vmatmul.mubr.f32.gmra.mrb[0].mxu0 %v6630
  %v6711 = vpop.f32.mrb[0].mxu0
  %v6712 = vadd.f32 0.0, %v6711
  %v6713 = vpop.f32.mrb[0].mxu0
  %6714 = vmatprep.mubr.f32.mxu0 0.0
  %6715 = vmatmul.mubr.f32.gmra.mrb[0].mxu0 %v6633
  %v6716 = vpop.f32.mrb[0].mxu0
  %v6717 = vadd.f32 0.0, %v6716
  %v6718 = vpop.f32.mrb[0].mxu0
  %6719 = vdwg.mxu0
  %v6721 = vsel %vm399, %v5779, 0
  %v6724 = vsel %vm399, %v5855, 0
  %v6727 = vsel %vm399, %v5931, 0
  %v6730 = vsel %vm399, %v6007, 0
  %6732 = vmatprep.subr.mxu0 0.0
  %6733 = vmatpush1.msra.mxu0 %v6620
  %6734 = vmatprep.subr.mxu0 0.0
  %6735 = vmatpush1.msra.mxu0 0.0
  %6736 = vmatprep.subr.mxu0 0.0
  %6737 = vmatpush1.msra.mxu0 0.0
  %6738 = vmatprep.subr.mxu0 0.0
  %6739 = vmatpush1.msra.mxu0 0.0
  %6740 = vmatprep.subr.mxu0 0.0
  %6741 = vmatpush1.msra.mxu0 0.0
  %6742 = vmatprep.subr.mxu0 0.0
  %6743 = vmatpush1.msra.mxu0 0.0
  %6744 = vmatprep.subr.mxu0 0.0
  %6745 = vmatpush1.msra.mxu0 0.0
  %6746 = vmatprep.subr.mxu0 0.0
  %6747 = vmatpush1.msra.mxu0 0.0
  %6748 = vmatprep.subr.mxu0 0.0
  %6749 = vmatpush1.msra.mxu0 0.0
  %6750 = vmatprep.subr.mxu0 0.0
  %6751 = vmatpush1.msra.mxu0 0.0
  %6752 = vmatprep.subr.mxu0 0.0
  %6753 = vmatpush1.msra.mxu0 0.0
  %6754 = vmatprep.subr.mxu0 0.0
  %6755 = vmatpush1.msra.mxu0 0.0
  %6756 = vmatprep.subr.mxu0 0.0
  %6757 = vmatpush1.msra.mxu0 0.0
  %6758 = vmatprep.subr.mxu0 0.0
  %6759 = vmatpush1.msra.mxu0 0.0
  %6760 = vmatprep.subr.mxu0 0.0
  %6761 = vmatpush1.msra.mxu0 0.0
  %6762 = vmatprep.subr.mxu0 0.0
  %6763 = vmatpush1.msra.mxu0 0.0
  %6764 = vmatprep.subr.mxu0 0.0
  %6765 = vmatpush1.msra.mxu0 0.0
  %6766 = vmatprep.subr.mxu0 0.0
  %6767 = vmatpush1.msra.mxu0 0.0
  %6768 = vmatprep.subr.mxu0 0.0
  %6769 = vmatpush1.msra.mxu0 0.0
  %6770 = vmatprep.subr.mxu0 0.0
  %6771 = vmatpush1.msra.mxu0 0.0
  %6772 = vmatprep.subr.mxu0 0.0
  %6773 = vmatpush1.msra.mxu0 0.0
  %6774 = vmatprep.subr.mxu0 0.0
  %6775 = vmatpush1.msra.mxu0 0.0
  %6776 = vmatprep.subr.mxu0 0.0
  %6777 = vmatpush1.msra.mxu0 0.0
  %6778 = vmatprep.subr.mxu0 0.0
  %6779 = vmatpush1.msra.mxu0 0.0
  %6780 = vmatprep.subr.mxu0 0.0
  %6781 = vmatpush1.msra.mxu0 0.0
  %6782 = vmatprep.subr.mxu0 0.0
  %6783 = vmatpush1.msra.mxu0 0.0
  %6784 = vmatprep.subr.mxu0 0.0
  %6785 = vmatpush1.msra.mxu0 0.0
  %6786 = vmatprep.subr.mxu0 0.0
  %6787 = vmatpush1.msra.mxu0 0.0
  %6788 = vmatprep.subr.mxu0 0.0
  %6789 = vmatpush1.msra.mxu0 0.0
  %6790 = vmatprep.subr.mxu0 0.0
  %6791 = vmatpush1.msra.mxu0 0.0
  %6792 = vmatprep.subr.mxu0 0.0
  %6793 = vmatpush1.msra.mxu0 0.0
  %6794 = vmatprep.subr.mxu0 0.0
  %6795 = vmatpush1.msra.mxu0 0.0
  %6796 = vmatprep.mubr.f32.mxu0 0.0
  %6797 = vmatmul.mubr.f32.gmra.mrb[0].mxu0 %v6721
  %v6798 = vpop.f32.mrb[0].mxu0
  %v6799 = vadd.f32 0.0, %v6798
  %v6800 = vpop.f32.mrb[0].mxu0
  %6801 = vmatprep.mubr.f32.mxu0 0.0
  %6802 = vmatmul.mubr.f32.gmra.mrb[0].mxu0 %v6724
  %v6803 = vpop.f32.mrb[0].mxu0
  %v6804 = vadd.f32 0.0, %v6803
  %v6805 = vpop.f32.mrb[0].mxu0
  %6806 = vmatprep.mubr.f32.mxu0 0.0
  %6807 = vmatmul.mubr.f32.gmra.mrb[0].mxu0 %v6727
  %v6808 = vpop.f32.mrb[0].mxu0
  %v6809 = vadd.f32 0.0, %v6808
  %v6810 = vpop.f32.mrb[0].mxu0
  %6811 = vmatprep.mubr.f32.mxu0 0.0
  %6812 = vmatmul.mubr.f32.gmra.mrb[0].mxu0 %v6730
  %v6813 = vpop.f32.mrb[0].mxu0
  %v6814 = vadd.f32 0.0, %v6813
  %v6815 = vpop.f32.mrb[0].mxu0
  %6816 = vdwg.mxu0
  %v6818 = vsel %vm399, %v6083, 0
  %v6821 = vsel %vm399, %v6159, 0
  %v6824 = vsel %vm399, %v6235, 0
  %v6827 = vsel %vm399, %v6311, 0
  %6829 = vmatprep.subr.mxu0 0.0
  %6830 = vmatpush1.msra.mxu0 %v6621
  %6831 = vmatprep.subr.mxu0 0.0
  %6832 = vmatpush1.msra.mxu0 0.0
  %6833 = vmatprep.subr.mxu0 0.0
  %6834 = vmatpush1.msra.mxu0 0.0
  %6835 = vmatprep.subr.mxu0 0.0
  %6836 = vmatpush1.msra.mxu0 0.0
  %6837 = vmatprep.subr.mxu0 0.0
  %6838 = vmatpush1.msra.mxu0 0.0
  %6839 = vmatprep.subr.mxu0 0.0
  %6840 = vmatpush1.msra.mxu0 0.0
  %6841 = vmatprep.subr.mxu0 0.0
  %6842 = vmatpush1.msra.mxu0 0.0
  %6843 = vmatprep.subr.mxu0 0.0
  %6844 = vmatpush1.msra.mxu0 0.0
  %6845 = vmatprep.subr.mxu0 0.0
  %6846 = vmatpush1.msra.mxu0 0.0
  %6847 = vmatprep.subr.mxu0 0.0
  %6848 = vmatpush1.msra.mxu0 0.0
  %6849 = vmatprep.subr.mxu0 0.0
  %6850 = vmatpush1.msra.mxu0 0.0
  %6851 = vmatprep.subr.mxu0 0.0
  %6852 = vmatpush1.msra.mxu0 0.0
  %6853 = vmatprep.subr.mxu0 0.0
  %6854 = vmatpush1.msra.mxu0 0.0
  %6855 = vmatprep.subr.mxu0 0.0
  %6856 = vmatpush1.msra.mxu0 0.0
  %6857 = vmatprep.subr.mxu0 0.0
  %6858 = vmatpush1.msra.mxu0 0.0
  %6859 = vmatprep.subr.mxu0 0.0
  %6860 = vmatpush1.msra.mxu0 0.0
  %6861 = vmatprep.subr.mxu0 0.0
  %6862 = vmatpush1.msra.mxu0 0.0
  %6863 = vmatprep.subr.mxu0 0.0
  %6864 = vmatpush1.msra.mxu0 0.0
  %6865 = vmatprep.subr.mxu0 0.0
  %6866 = vmatpush1.msra.mxu0 0.0
  %6867 = vmatprep.subr.mxu0 0.0
  %6868 = vmatpush1.msra.mxu0 0.0
  %6869 = vmatprep.subr.mxu0 0.0
  %6870 = vmatpush1.msra.mxu0 0.0
  %6871 = vmatprep.subr.mxu0 0.0
  %6872 = vmatpush1.msra.mxu0 0.0
  %6873 = vmatprep.subr.mxu0 0.0
  %6874 = vmatpush1.msra.mxu0 0.0
  %6875 = vmatprep.subr.mxu0 0.0
  %6876 = vmatpush1.msra.mxu0 0.0
  %6877 = vmatprep.subr.mxu0 0.0
  %6878 = vmatpush1.msra.mxu0 0.0
  %6879 = vmatprep.subr.mxu0 0.0
  %6880 = vmatpush1.msra.mxu0 0.0
  %6881 = vmatprep.subr.mxu0 0.0
  %6882 = vmatpush1.msra.mxu0 0.0
  %6883 = vmatprep.subr.mxu0 0.0
  %6884 = vmatpush1.msra.mxu0 0.0
  %6885 = vmatprep.subr.mxu0 0.0
  %6886 = vmatpush1.msra.mxu0 0.0
  %6887 = vmatprep.subr.mxu0 0.0
  %6888 = vmatpush1.msra.mxu0 0.0
  %6889 = vmatprep.subr.mxu0 0.0
  %6890 = vmatpush1.msra.mxu0 0.0
  %6891 = vmatprep.subr.mxu0 0.0
  %6892 = vmatpush1.msra.mxu0 0.0
  %6893 = vmatprep.mubr.f32.mxu0 0.0
  %6894 = vmatmul.mubr.f32.gmra.mrb[0].mxu0 %v6818
  %v6895 = vpop.f32.mrb[0].mxu0
  %v6896 = vadd.f32 0.0, %v6895
  %v6897 = vpop.f32.mrb[0].mxu0
  %6898 = vmatprep.mubr.f32.mxu0 0.0
  %6899 = vmatmul.mubr.f32.gmra.mrb[0].mxu0 %v6821
  %v6900 = vpop.f32.mrb[0].mxu0
  %v6901 = vadd.f32 0.0, %v6900
  %v6902 = vpop.f32.mrb[0].mxu0
  %6903 = vmatprep.mubr.f32.mxu0 0.0
  %6904 = vmatmul.mubr.f32.gmra.mrb[0].mxu0 %v6824
  %v6905 = vpop.f32.mrb[0].mxu0
  %v6906 = vadd.f32 0.0, %v6905
  %v6907 = vpop.f32.mrb[0].mxu0
  %6908 = vmatprep.mubr.f32.mxu0 0.0
  %6909 = vmatmul.mubr.f32.gmra.mrb[0].mxu0 %v6827
  %v6910 = vpop.f32.mrb[0].mxu0
  %v6911 = vadd.f32 0.0, %v6910
  %v6912 = vpop.f32.mrb[0].mxu0
  %6913 = vdwg.mxu0
  %v6915 = vsel %vm399, %v6387, 0
  %v6918 = vsel %vm399, %v6463, 0
  %v6921 = vsel %vm399, %v6539, 0
  %v6924 = vsel %vm399, %v6615, 0
  %6926 = vmatprep.subr.mxu0 0.0
  %6927 = vmatpush1.msra.mxu0 %v6622
  %6928 = vmatprep.subr.mxu0 0.0
  %6929 = vmatpush1.msra.mxu0 0.0
  %6930 = vmatprep.subr.mxu0 0.0
  %6931 = vmatpush1.msra.mxu0 0.0
  %6932 = vmatprep.subr.mxu0 0.0
  %6933 = vmatpush1.msra.mxu0 0.0
  %6934 = vmatprep.subr.mxu0 0.0
  %6935 = vmatpush1.msra.mxu0 0.0
  %6936 = vmatprep.subr.mxu0 0.0
  %6937 = vmatpush1.msra.mxu0 0.0
  %6938 = vmatprep.subr.mxu0 0.0
  %6939 = vmatpush1.msra.mxu0 0.0
  %6940 = vmatprep.subr.mxu0 0.0
  %6941 = vmatpush1.msra.mxu0 0.0
  %6942 = vmatprep.subr.mxu0 0.0
  %6943 = vmatpush1.msra.mxu0 0.0
  %6944 = vmatprep.subr.mxu0 0.0
  %6945 = vmatpush1.msra.mxu0 0.0
  %6946 = vmatprep.subr.mxu0 0.0
  %6947 = vmatpush1.msra.mxu0 0.0
  %6948 = vmatprep.subr.mxu0 0.0
  %6949 = vmatpush1.msra.mxu0 0.0
  %6950 = vmatprep.subr.mxu0 0.0
  %6951 = vmatpush1.msra.mxu0 0.0
  %6952 = vmatprep.subr.mxu0 0.0
  %6953 = vmatpush1.msra.mxu0 0.0
  %6954 = vmatprep.subr.mxu0 0.0
  %6955 = vmatpush1.msra.mxu0 0.0
  %6956 = vmatprep.subr.mxu0 0.0
  %6957 = vmatpush1.msra.mxu0 0.0
  %6958 = vmatprep.subr.mxu0 0.0
  %6959 = vmatpush1.msra.mxu0 0.0
  %6960 = vmatprep.subr.mxu0 0.0
  %6961 = vmatpush1.msra.mxu0 0.0
  %6962 = vmatprep.subr.mxu0 0.0
  %6963 = vmatpush1.msra.mxu0 0.0
  %6964 = vmatprep.subr.mxu0 0.0
  %6965 = vmatpush1.msra.mxu0 0.0
  %6966 = vmatprep.subr.mxu0 0.0
  %6967 = vmatpush1.msra.mxu0 0.0
  %6968 = vmatprep.subr.mxu0 0.0
  %6969 = vmatpush1.msra.mxu0 0.0
  %6970 = vmatprep.subr.mxu0 0.0
  %6971 = vmatpush1.msra.mxu0 0.0
  %6972 = vmatprep.subr.mxu0 0.0
  %6973 = vmatpush1.msra.mxu0 0.0
  %6974 = vmatprep.subr.mxu0 0.0
  %6975 = vmatpush1.msra.mxu0 0.0
  %6976 = vmatprep.subr.mxu0 0.0
  %6977 = vmatpush1.msra.mxu0 0.0
  %6978 = vmatprep.subr.mxu0 0.0
  %6979 = vmatpush1.msra.mxu0 0.0
  %6980 = vmatprep.subr.mxu0 0.0
  %6981 = vmatpush1.msra.mxu0 0.0
  %6982 = vmatprep.subr.mxu0 0.0
  %6983 = vmatpush1.msra.mxu0 0.0
  %6984 = vmatprep.subr.mxu0 0.0
  %6985 = vmatpush1.msra.mxu0 0.0
  %6986 = vmatprep.subr.mxu0 0.0
  %6987 = vmatpush1.msra.mxu0 0.0
  %6988 = vmatprep.subr.mxu0 0.0
  %6989 = vmatpush1.msra.mxu0 0.0
  %6990 = vmatprep.mubr.f32.mxu0 0.0
  %6991 = vmatmul.mubr.f32.gmra.mrb[0].mxu0 %v6915
  %v6992 = vpop.f32.mrb[0].mxu0
  %v6993 = vadd.f32 0.0, %v6992
  %v6994 = vpop.f32.mrb[0].mxu0
  %6995 = vmatprep.mubr.f32.mxu0 0.0
  %6996 = vmatmul.mubr.f32.gmra.mrb[0].mxu0 %v6918
  %v6997 = vpop.f32.mrb[0].mxu0
  %v6998 = vadd.f32 0.0, %v6997
  %v6999 = vpop.f32.mrb[0].mxu0
  %7000 = vmatprep.mubr.f32.mxu0 0.0
  %7001 = vmatmul.mubr.f32.gmra.mrb[0].mxu0 %v6921
  %v7002 = vpop.f32.mrb[0].mxu0
  %v7003 = vadd.f32 0.0, %v7002
  %v7004 = vpop.f32.mrb[0].mxu0
  %7005 = vmatprep.mubr.f32.mxu0 0.0
  %7006 = vmatmul.mubr.f32.gmra.mrb[0].mxu0 %v6924
  %v7007 = vpop.f32.mrb[0].mxu0
  %v7008 = vadd.f32 0.0, %v7007
  %v7009 = vpop.f32.mrb[0].mxu0
  %7010 = vdwg.mxu0
  %v7011 = vsel %vm271, %v6702, 0.0
  %v7012 = vsel %vm271, %v6799, 0.0
  %v7013 = vadd.f32 %v7011, %v7012
  %v7014 = vsel %vm271, %v6896, 0.0
  %v7015 = vadd.f32 %v7013, %v7014
  %v7016 = vsel %vm271, %v6993, 0.0
  %v7017 = vadd.f32 %v7015, %v7016
  %v7018 = vsel %vm271, %v6707, 0.0
  %v7019 = vsel %vm271, %v6804, 0.0
  %v7020 = vadd.f32 %v7018, %v7019
  %v7021 = vsel %vm271, %v6901, 0.0
  %v7022 = vadd.f32 %v7020, %v7021
  %v7023 = vsel %vm271, %v6998, 0.0
  %v7024 = vadd.f32 %v7022, %v7023
  %v7025 = vsel %vm271, %v6712, 0.0
  %v7026 = vsel %vm271, %v6809, 0.0
  %v7027 = vadd.f32 %v7025, %v7026
  %v7028 = vsel %vm271, %v6906, 0.0
  %v7029 = vadd.f32 %v7027, %v7028
  %v7030 = vsel %vm271, %v7003, 0.0
  %v7031 = vadd.f32 %v7029, %v7030
  %v7032 = vsel %vm271, %v6717, 0.0
  %v7033 = vsel %vm271, %v6814, 0.0
  %v7034 = vadd.f32 %v7032, %v7033
  %v7035 = vsel %vm271, %v6911, 0.0
  %v7036 = vadd.f32 %v7034, %v7035
  %v7037 = vsel %vm271, %v7008, 0.0
  %v7038 = vadd.f32 %v7036, %v7037
  %s7039 = scalar_lea.vmem %s6, 1
  %v7040 = vld [vmem:[%s7039] sm:$0x1]
  %v7042 = vlaneseq
  %v7043 = vshrl.u32 %v7042, 7
  %v7044 = vsub.s32 0, %v7043
  %v7045 = vrot.slane %v7040, %v7044
  %v7047 = vadd.f32 %v7017, %v7045
  %v7048 = vadd.f32 %v7024, %v7045
  %v7049 = vadd.f32 %v7031, %v7045
  %v7050 = vadd.f32 %v7038, %v7045
  %s7051 = scalar_lea.vmem %s7, 2
  %v7052 = vld [vmem:[%s7051] sm:$0x3]
  %v7053 = vadd.f32 %v7047, %v3860
  %v7054 = vadd.f32 %v7048, %v3861
  %v7055 = vadd.f32 %v7049, %v3862
  %v7056 = vadd.f32 %v7050, %v3863
  %v7057 = vsel %vm271, %v7053, 0.0
  %7058 = vadd.xlane.f32.xlu0 %v7057
  %v7059 = vpop.xlane.xlu0 %7058
  %v7060 = vsel %vm271, %v7054, 0.0
  %7061 = vadd.xlane.f32.xlu0 %v7060
  %v7062 = vpop.xlane.xlu0 %7061
  %v7063 = vsel %vm271, %v7055, 0.0
  %7064 = vadd.xlane.f32.xlu0 %v7063
  %v7065 = vpop.xlane.xlu0 %7064
  %v7066 = vsel %vm271, %v7056, 0.0
  %7067 = vadd.xlane.f32.xlu0 %v7066
  %v7068 = vpop.xlane.xlu0 %7067
  %v7069 = vmul.f32 %v7059, %v3510
  %v7070 = vmul.f32 %v7062, %v3510
  %v7071 = vmul.f32 %v7065, %v3510
  %v7072 = vmul.f32 %v7068, %v3510
  %v7073 = vsub.f32 %v7053, %v7069
  %v7074 = vsub.f32 %v7054, %v7070
  %v7075 = vsub.f32 %v7055, %v7071
  %v7076 = vsub.f32 %v7056, %v7072
  %v7077 = vmul.f32 %v7073, %v7073
  %v7078 = vmul.f32 %v7074, %v7074
  %v7079 = vmul.f32 %v7075, %v7075
  %v7080 = vmul.f32 %v7076, %v7076
  %v7081 = vsel %vm271, %v7077, 0.0
  %7082 = vadd.xlane.f32.xlu0 %v7081
  %v7083 = vpop.xlane.xlu0 %7082
  %v7084 = vsel %vm271, %v7078, 0.0
  %7085 = vadd.xlane.f32.xlu0 %v7084
  %v7086 = vpop.xlane.xlu0 %7085
  %v7087 = vsel %vm271, %v7079, 0.0
  %7088 = vadd.xlane.f32.xlu0 %v7087
  %v7089 = vpop.xlane.xlu0 %7088
  %v7090 = vsel %vm271, %v7080, 0.0
  %7091 = vadd.xlane.f32.xlu0 %v7090
  %v7092 = vpop.xlane.xlu0 %7091
  %v7093 = vmul.f32 %v7083, %v3510
  %v7094 = vmul.f32 %v7086, %v3510
  %v7095 = vmul.f32 %v7089, %v3510
  %v7096 = vmul.f32 %v7092, %v3510
  %v7097 = vadd.f32 %v7093, 1e-06
  %v7098 = vadd.f32 %v7094, 1e-06
  %v7099 = vadd.f32 %v7095, 1e-06
  %v7100 = vadd.f32 %v7096, 1e-06
  %v7101 = vrsqrt.pop %v7097
  %v7102 = vrsqrt.pop %v7098
  %v7103 = vrsqrt.pop %v7099
  %v7104 = vrsqrt.pop %v7100
  %v7105 = vmul.f32 %v7073, %v7101
  %v7106 = vmul.f32 %v7074, %v7102
  %v7107 = vmul.f32 %v7075, %v7103
  %v7108 = vmul.f32 %v7076, %v7104
  %v7109 = vlaneseq
  %v7110 = vshrl.u32 %v7109, 7
  %v7111 = vsub.s32 0, %v7110
  %v7112 = vrot.slane %v7052, %v7111
  %v7113 = vmul.f32 %v7105, %v7112
  %v7114 = vmul.f32 %v7106, %v7112
  %v7115 = vmul.f32 %v7107, %v7112
  %v7116 = vmul.f32 %v7108, %v7112
  %v7117 = vlaneseq
  %v7118 = vshrl.u32 %v7117, 7
  %v7119 = vsub.s32 1, %v7118
  %v7120 = vrot.slane %v7052, %v7119
  %v7121 = vadd.f32 %v7113, %v7120
  %v7122 = vadd.f32 %v7114, %v7120
  %v7123 = vadd.f32 %v7115, %v7120
  %v7124 = vadd.f32 %v7116, %v7120
  %s7125 = scalar_lea.vmem %s8, 32
  %v7126 = vld [vmem:[%s7125] sm:$0xff]
  %v7127 = vld [vmem:[%s7125 + $0x8] sm:$0xff]
  %v7128 = vld [vmem:[%s7125 + $0x10] sm:$0xff]
  %v7129 = vld [vmem:[%s7125 + $0x18] sm:$0xff]
  %s7130 = scalar_lea.vmem %s9, 1
  %v7131 = vld [vmem:[%s7130] sm:$0x1]
  %v7133 = vlaneseq
  %v7134 = vshrl.u32 %v7133, 7
  %v7135 = vsub.s32 0, %v7134
  %v7136 = vrot.slane %v7131, %v7135
  %v7139 = vsel %vm271, %v7121, 0
  %v7142 = vsel %vm271, %v7122, 0
  %v7145 = vsel %vm271, %v7123, 0
  %v7148 = vsel %vm271, %v7124, 0
  %7150 = vmatprep.subr.mxu0 0.0
  %7151 = vmatpush1.msra.mxu0 %v7126
  %7152 = vmatprep.subr.mxu0 0.0
  %7153 = vmatpush1.msra.mxu0 %v7127
  %7154 = vmatprep.subr.mxu0 0.0
  %7155 = vmatpush1.msra.mxu0 %v7128
  %7156 = vmatprep.subr.mxu0 0.0
  %7157 = vmatpush1.msra.mxu0 %v7129
  %7158 = vmatprep.subr.mxu0 0.0
  %7159 = vmatpush1.msra.mxu0 0.0
  %7160 = vmatprep.subr.mxu0 0.0
  %7161 = vmatpush1.msra.mxu0 0.0
  %7162 = vmatprep.subr.mxu0 0.0
  %7163 = vmatpush1.msra.mxu0 0.0
  %7164 = vmatprep.subr.mxu0 0.0
  %7165 = vmatpush1.msra.mxu0 0.0
  %7166 = vmatprep.subr.mxu0 0.0
  %7167 = vmatpush1.msra.mxu0 0.0
  %7168 = vmatprep.subr.mxu0 0.0
  %7169 = vmatpush1.msra.mxu0 0.0
  %7170 = vmatprep.subr.mxu0 0.0
  %7171 = vmatpush1.msra.mxu0 0.0
  %7172 = vmatprep.subr.mxu0 0.0
  %7173 = vmatpush1.msra.mxu0 0.0
  %7174 = vmatprep.subr.mxu0 0.0
  %7175 = vmatpush1.msra.mxu0 0.0
  %7176 = vmatprep.subr.mxu0 0.0
  %7177 = vmatpush1.msra.mxu0 0.0
  %7178 = vmatprep.subr.mxu0 0.0
  %7179 = vmatpush1.msra.mxu0 0.0
  %7180 = vmatprep.subr.mxu0 0.0
  %7181 = vmatpush1.msra.mxu0 0.0
  %7182 = vmatprep.subr.mxu0 0.0
  %7183 = vmatpush1.msra.mxu0 0.0
  %7184 = vmatprep.subr.mxu0 0.0
  %7185 = vmatpush1.msra.mxu0 0.0
  %7186 = vmatprep.subr.mxu0 0.0
  %7187 = vmatpush1.msra.mxu0 0.0
  %7188 = vmatprep.subr.mxu0 0.0
  %7189 = vmatpush1.msra.mxu0 0.0
  %7190 = vmatprep.subr.mxu0 0.0
  %7191 = vmatpush1.msra.mxu0 0.0
  %7192 = vmatprep.subr.mxu0 0.0
  %7193 = vmatpush1.msra.mxu0 0.0
  %7194 = vmatprep.subr.mxu0 0.0
  %7195 = vmatpush1.msra.mxu0 0.0
  %7196 = vmatprep.subr.mxu0 0.0
  %7197 = vmatpush1.msra.mxu0 0.0
  %7198 = vmatprep.subr.mxu0 0.0
  %7199 = vmatpush1.msra.mxu0 0.0
  %7200 = vmatprep.subr.mxu0 0.0
  %7201 = vmatpush1.msra.mxu0 0.0
  %7202 = vmatprep.subr.mxu0 0.0
  %7203 = vmatpush1.msra.mxu0 0.0
  %7204 = vmatprep.subr.mxu0 0.0
  %7205 = vmatpush1.msra.mxu0 0.0
  %7206 = vmatprep.subr.mxu0 0.0
  %7207 = vmatpush1.msra.mxu0 0.0
  %7208 = vmatprep.subr.mxu0 0.0
  %7209 = vmatpush1.msra.mxu0 0.0
  %7210 = vmatprep.subr.mxu0 0.0
  %7211 = vmatpush1.msra.mxu0 0.0
  %7212 = vmatprep.subr.mxu0 0.0
  %7213 = vmatpush1.msra.mxu0 0.0
  %7214 = vmatprep.mubr.f32.mxu0 0.0
  %7215 = vmatmul.mubr.f32.gmra.mrb[0].mxu0 %v7139
  %v7216 = vpop.f32.mrb[0].mxu0
  %v7217 = vadd.f32 %v7136, %v7216
  %v7218 = vpop.f32.mrb[0].mxu0
  %7219 = vmatprep.mubr.f32.mxu0 0.0
  %7220 = vmatmul.mubr.f32.gmra.mrb[0].mxu0 %v7142
  %v7221 = vpop.f32.mrb[0].mxu0
  %v7222 = vadd.f32 %v7136, %v7221
  %v7223 = vpop.f32.mrb[0].mxu0
  %7224 = vmatprep.mubr.f32.mxu0 0.0
  %7225 = vmatmul.mubr.f32.gmra.mrb[0].mxu0 %v7145
  %v7226 = vpop.f32.mrb[0].mxu0
  %v7227 = vadd.f32 %v7136, %v7226
  %v7228 = vpop.f32.mrb[0].mxu0
  %7229 = vmatprep.mubr.f32.mxu0 0.0
  %7230 = vmatmul.mubr.f32.gmra.mrb[0].mxu0 %v7148
  %v7231 = vpop.f32.mrb[0].mxu0
  %v7232 = vadd.f32 %v7136, %v7231
  %v7233 = vpop.f32.mrb[0].mxu0
  %7234 = vdwg.mxu0
  %v7235 = vmax.f32 %v7217, 0.0
  %v7236 = vmax.f32 %v7222, 0.0
  %v7237 = vmax.f32 %v7227, 0.0
  %v7238 = vmax.f32 %v7232, 0.0
  %s7239 = scalar_lea.vmem %s10, 64
  %v7240 = vld [vmem:[%s7239] sm:$0xff]
  %v7241 = vld [vmem:[%s7239 + $0x8] sm:$0xff]
  %v7242 = vld [vmem:[%s7239 + $0x10] sm:$0xff]
  %v7243 = vld [vmem:[%s7239 + $0x18] sm:$0xff]
  %v7244 = vld [vmem:[%s7239 + $0x20] sm:$0xff]
  %v7245 = vld [vmem:[%s7239 + $0x28] sm:$0xff]
  %v7246 = vld [vmem:[%s7239 + $0x30] sm:$0xff]
  %v7247 = vld [vmem:[%s7239 + $0x38] sm:$0xff]
  %s7248 = scalar_lea.vmem %s11, 1
  %v7249 = vld [vmem:[%s7248] sm:$0x1]
  %v7251 = vlaneseq
  %v7252 = vshrl.u32 %v7251, 7
  %v7253 = vsub.s32 0, %v7252
  %v7254 = vrot.slane %v7249, %v7253
  %v7257 = vsel %vm112, %v7235, 0
  %v7260 = vsel %vm112, %v7236, 0
  %v7263 = vsel %vm112, %v7237, 0
  %v7266 = vsel %vm112, %v7238, 0
  %7268 = vmatprep.subr.mxu0 0.0
  %7269 = vmatpush1.msra.mxu0 %v7240
  %7270 = vmatprep.subr.mxu0 0.0
  %7271 = vmatpush1.msra.mxu0 %v7241
  %7272 = vmatprep.subr.mxu0 0.0
  %7273 = vmatpush1.msra.mxu0 %v7242
  %7274 = vmatprep.subr.mxu0 0.0
  %7275 = vmatpush1.msra.mxu0 %v7243
  %7276 = vmatprep.subr.mxu0 0.0
  %7277 = vmatpush1.msra.mxu0 %v7244
  %7278 = vmatprep.subr.mxu0 0.0
  %7279 = vmatpush1.msra.mxu0 %v7245
  %7280 = vmatprep.subr.mxu0 0.0
  %7281 = vmatpush1.msra.mxu0 %v7246
  %7282 = vmatprep.subr.mxu0 0.0
  %7283 = vmatpush1.msra.mxu0 %v7247
  %7284 = vmatprep.subr.mxu0 0.0
  %7285 = vmatpush1.msra.mxu0 0.0
  %7286 = vmatprep.subr.mxu0 0.0
  %7287 = vmatpush1.msra.mxu0 0.0
  %7288 = vmatprep.subr.mxu0 0.0
  %7289 = vmatpush1.msra.mxu0 0.0
  %7290 = vmatprep.subr.mxu0 0.0
  %7291 = vmatpush1.msra.mxu0 0.0
  %7292 = vmatprep.subr.mxu0 0.0
  %7293 = vmatpush1.msra.mxu0 0.0
  %7294 = vmatprep.subr.mxu0 0.0
  %7295 = vmatpush1.msra.mxu0 0.0
  %7296 = vmatprep.subr.mxu0 0.0
  %7297 = vmatpush1.msra.mxu0 0.0
  %7298 = vmatprep.subr.mxu0 0.0
  %7299 = vmatpush1.msra.mxu0 0.0
  %7300 = vmatprep.subr.mxu0 0.0
  %7301 = vmatpush1.msra.mxu0 0.0
  %7302 = vmatprep.subr.mxu0 0.0
  %7303 = vmatpush1.msra.mxu0 0.0
  %7304 = vmatprep.subr.mxu0 0.0
  %7305 = vmatpush1.msra.mxu0 0.0
  %7306 = vmatprep.subr.mxu0 0.0
  %7307 = vmatpush1.msra.mxu0 0.0
  %7308 = vmatprep.subr.mxu0 0.0
  %7309 = vmatpush1.msra.mxu0 0.0
  %7310 = vmatprep.subr.mxu0 0.0
  %7311 = vmatpush1.msra.mxu0 0.0
  %7312 = vmatprep.subr.mxu0 0.0
  %7313 = vmatpush1.msra.mxu0 0.0
  %7314 = vmatprep.subr.mxu0 0.0
  %7315 = vmatpush1.msra.mxu0 0.0
  %7316 = vmatprep.subr.mxu0 0.0
  %7317 = vmatpush1.msra.mxu0 0.0
  %7318 = vmatprep.subr.mxu0 0.0
  %7319 = vmatpush1.msra.mxu0 0.0
  %7320 = vmatprep.subr.mxu0 0.0
  %7321 = vmatpush1.msra.mxu0 0.0
  %7322 = vmatprep.subr.mxu0 0.0
  %7323 = vmatpush1.msra.mxu0 0.0
  %7324 = vmatprep.subr.mxu0 0.0
  %7325 = vmatpush1.msra.mxu0 0.0
  %7326 = vmatprep.subr.mxu0 0.0
  %7327 = vmatpush1.msra.mxu0 0.0
  %7328 = vmatprep.subr.mxu0 0.0
  %7329 = vmatpush1.msra.mxu0 0.0
  %7330 = vmatprep.subr.mxu0 0.0
  %7331 = vmatpush1.msra.mxu0 0.0
  %7332 = vmatprep.mubr.f32.mxu0 0.0
  %7333 = vmatmul.mubr.f32.gmra.mrb[0].mxu0 %v7257
  %v7334 = vpop.f32.mrb[0].mxu0
  %v7335 = vadd.f32 %v7254, %v7334
  %v7336 = vpop.f32.mrb[0].mxu0
  %7337 = vmatprep.mubr.f32.mxu0 0.0
  %7338 = vmatmul.mubr.f32.gmra.mrb[0].mxu0 %v7260
  %v7339 = vpop.f32.mrb[0].mxu0
  %v7340 = vadd.f32 %v7254, %v7339
  %v7341 = vpop.f32.mrb[0].mxu0
  %7342 = vmatprep.mubr.f32.mxu0 0.0
  %7343 = vmatmul.mubr.f32.gmra.mrb[0].mxu0 %v7263
  %v7344 = vpop.f32.mrb[0].mxu0
  %v7345 = vadd.f32 %v7254, %v7344
  %v7346 = vpop.f32.mrb[0].mxu0
  %7347 = vmatprep.mubr.f32.mxu0 0.0
  %7348 = vmatmul.mubr.f32.gmra.mrb[0].mxu0 %v7266
  %v7349 = vpop.f32.mrb[0].mxu0
  %v7350 = vadd.f32 %v7254, %v7349
  %v7351 = vpop.f32.mrb[0].mxu0
  %7352 = vdwg.mxu0
  %s7353 = scalar_lea.vmem %s12, 2
  %v7354 = vld [vmem:[%s7353] sm:$0x3]
  %v7355 = vadd.f32 %v7335, %v7121
  %v7356 = vadd.f32 %v7340, %v7122
  %v7357 = vadd.f32 %v7345, %v7123
  %v7358 = vadd.f32 %v7350, %v7124
  %v7359 = vsel %vm271, %v7355, 0.0
  %7360 = vadd.xlane.f32.xlu0 %v7359
  %v7361 = vpop.xlane.xlu0 %7360
  %v7362 = vsel %vm271, %v7356, 0.0
  %7363 = vadd.xlane.f32.xlu0 %v7362
  %v7364 = vpop.xlane.xlu0 %7363
  %v7365 = vsel %vm271, %v7357, 0.0
  %7366 = vadd.xlane.f32.xlu0 %v7365
  %v7367 = vpop.xlane.xlu0 %7366
  %v7368 = vsel %vm271, %v7358, 0.0
  %7369 = vadd.xlane.f32.xlu0 %v7368
  %v7370 = vpop.xlane.xlu0 %7369
  %v7371 = vmul.f32 %v7361, %v3510
  %v7372 = vmul.f32 %v7364, %v3510
  %v7373 = vmul.f32 %v7367, %v3510
  %v7374 = vmul.f32 %v7370, %v3510
  %v7375 = vsub.f32 %v7355, %v7371
  %v7376 = vsub.f32 %v7356, %v7372
  %v7377 = vsub.f32 %v7357, %v7373
  %v7378 = vsub.f32 %v7358, %v7374
  %v7379 = vmul.f32 %v7375, %v7375
  %v7380 = vmul.f32 %v7376, %v7376
  %v7381 = vmul.f32 %v7377, %v7377
  %v7382 = vmul.f32 %v7378, %v7378
  %v7383 = vsel %vm271, %v7379, 0.0
  %7384 = vadd.xlane.f32.xlu0 %v7383
  %v7385 = vpop.xlane.xlu0 %7384
  %v7386 = vsel %vm271, %v7380, 0.0
  %7387 = vadd.xlane.f32.xlu0 %v7386
  %v7388 = vpop.xlane.xlu0 %7387
  %v7389 = vsel %vm271, %v7381, 0.0
  %7390 = vadd.xlane.f32.xlu0 %v7389
  %v7391 = vpop.xlane.xlu0 %7390
  %v7392 = vsel %vm271, %v7382, 0.0
  %7393 = vadd.xlane.f32.xlu0 %v7392
  %v7394 = vpop.xlane.xlu0 %7393
  %v7395 = vmul.f32 %v7385, %v3510
  %v7396 = vmul.f32 %v7388, %v3510
  %v7397 = vmul.f32 %v7391, %v3510
  %v7398 = vmul.f32 %v7394, %v3510
  %v7399 = vadd.f32 %v7395, 1e-06
  %v7400 = vadd.f32 %v7396, 1e-06
  %v7401 = vadd.f32 %v7397, 1e-06
  %v7402 = vadd.f32 %v7398, 1e-06
  %v7403 = vrsqrt.pop %v7399
  %v7404 = vrsqrt.pop %v7400
  %v7405 = vrsqrt.pop %v7401
  %v7406 = vrsqrt.pop %v7402
  %v7407 = vmul.f32 %v7375, %v7403
  %v7408 = vmul.f32 %v7376, %v7404
  %v7409 = vmul.f32 %v7377, %v7405
  %v7410 = vmul.f32 %v7378, %v7406
  %v7411 = vlaneseq
  %v7412 = vshrl.u32 %v7411, 7
  %v7413 = vsub.s32 0, %v7412
  %v7414 = vrot.slane %v7354, %v7413
  %v7415 = vmul.f32 %v7407, %v7414
  %v7416 = vmul.f32 %v7408, %v7414
  %v7417 = vmul.f32 %v7409, %v7414
  %v7418 = vmul.f32 %v7410, %v7414
  %v7419 = vlaneseq
  %v7420 = vshrl.u32 %v7419, 7
  %v7421 = vsub.s32 1, %v7420
  %v7422 = vrot.slane %v7354, %v7421
  %v7423 = vadd.f32 %v7415, %v7422
  %v7424 = vadd.f32 %v7416, %v7422
  %v7425 = vadd.f32 %v7417, %v7422
  %v7426 = vadd.f32 %v7418, %v7422
  %v7427 = vsel %vm271, %v7423, 0.0
  %v7428 = vrot.slane %v7427, 4
  %v7429 = vadd.f32 %v7427, %v7428
  %v7430 = vrot.slane %v7429, 2
  %v7431 = vadd.f32 %v7429, %v7430
  %v7432 = vrot.slane %v7431, 1
  %v7433 = vadd.f32 %v7431, %v7432
  %v7434 = vsel %vm271, %v7424, 0.0
  %v7435 = vrot.slane %v7434, 4
  %v7436 = vadd.f32 %v7434, %v7435
  %v7437 = vrot.slane %v7436, 2
  %v7438 = vadd.f32 %v7436, %v7437
  %v7439 = vrot.slane %v7438, 1
  %v7440 = vadd.f32 %v7438, %v7439
  %v7441 = vsel %vm271, %v7425, 0.0
  %v7442 = vrot.slane %v7441, 4
  %v7443 = vadd.f32 %v7441, %v7442
  %v7444 = vrot.slane %v7443, 2
  %v7445 = vadd.f32 %v7443, %v7444
  %v7446 = vrot.slane %v7445, 1
  %v7447 = vadd.f32 %v7445, %v7446
  %v7448 = vsel %vm271, %v7426, 0.0
  %v7449 = vrot.slane %v7448, 4
  %v7450 = vadd.f32 %v7448, %v7449
  %v7451 = vrot.slane %v7450, 2
  %v7452 = vadd.f32 %v7450, %v7451
  %v7453 = vrot.slane %v7452, 1
  %v7454 = vadd.f32 %v7452, %v7453
  %v7455 = vrcp.pop 8.0
  %v7456 = vmul.f32 %v7433, %v7455
  %v7457 = vmul.f32 %v7440, %v7455
  %v7458 = vmul.f32 %v7447, %v7455
  %v7459 = vmul.f32 %v7454, %v7455
  %v7460 = vld [vmem:[%s13] sm:$0xff]
  %v7461 = vld [vmem:[%s13 + $0x8] sm:$0xff]
  %v7462 = vld [vmem:[%s13 + $0x10] sm:$0xff]
  %v7463 = vld [vmem:[%s13 + $0x18] sm:$0xff]
  %v7464 = vld [vmem:[%s13 + $0x20] sm:$0xff]
  %v7465 = vld [vmem:[%s13 + $0x28] sm:$0xff]
  %v7466 = vld [vmem:[%s13 + $0x30] sm:$0xff]
  %v7467 = vld [vmem:[%s13 + $0x38] sm:$0xff]
  %vm7470 = vcmask 1041409
  %v7471 = vsel %vm7470, %v7459, %v7458
  %v7472 = vsel %vm271, %v7471, 0
  %7474 = vmatprep.subr.mxu0 0.0
  %7475 = vmatpush1.msra.mxu0 %v7464
  %7476 = vmatprep.subr.mxu0 0.0
  %7477 = vmatpush1.msra.mxu0 %v7465
  %7478 = vmatprep.subr.mxu0 0.0
  %7479 = vmatpush1.msra.mxu0 %v7466
  %7480 = vmatprep.subr.mxu0 0.0
  %7481 = vmatpush1.msra.mxu0 %v7467
  %7482 = vmatprep.subr.mxu0 0.0
  %7483 = vmatpush1.msra.mxu0 0.0
  %7484 = vmatprep.subr.mxu0 0.0
  %7485 = vmatpush1.msra.mxu0 0.0
  %7486 = vmatprep.subr.mxu0 0.0
  %7487 = vmatpush1.msra.mxu0 0.0
  %7488 = vmatprep.subr.mxu0 0.0
  %7489 = vmatpush1.msra.mxu0 0.0
  %7490 = vmatprep.subr.mxu0 0.0
  %7491 = vmatpush1.msra.mxu0 0.0
  %7492 = vmatprep.subr.mxu0 0.0
  %7493 = vmatpush1.msra.mxu0 0.0
  %7494 = vmatprep.subr.mxu0 0.0
  %7495 = vmatpush1.msra.mxu0 0.0
  %7496 = vmatprep.subr.mxu0 0.0
  %7497 = vmatpush1.msra.mxu0 0.0
  %7498 = vmatprep.subr.mxu0 0.0
  %7499 = vmatpush1.msra.mxu0 0.0
  %7500 = vmatprep.subr.mxu0 0.0
  %7501 = vmatpush1.msra.mxu0 0.0
  %7502 = vmatprep.subr.mxu0 0.0
  %7503 = vmatpush1.msra.mxu0 0.0
  %7504 = vmatprep.subr.mxu0 0.0
  %7505 = vmatpush1.msra.mxu0 0.0
  %7506 = vmatprep.subr.mxu0 0.0
  %7507 = vmatpush1.msra.mxu0 0.0
  %7508 = vmatprep.subr.mxu0 0.0
  %7509 = vmatpush1.msra.mxu0 0.0
  %7510 = vmatprep.subr.mxu0 0.0
  %7511 = vmatpush1.msra.mxu0 0.0
  %7512 = vmatprep.subr.mxu0 0.0
  %7513 = vmatpush1.msra.mxu0 0.0
  %7514 = vmatprep.subr.mxu0 0.0
  %7515 = vmatpush1.msra.mxu0 0.0
  %7516 = vmatprep.subr.mxu0 0.0
  %7517 = vmatpush1.msra.mxu0 0.0
  %7518 = vmatprep.subr.mxu0 0.0
  %7519 = vmatpush1.msra.mxu0 0.0
  %7520 = vmatprep.subr.mxu0 0.0
  %7521 = vmatpush1.msra.mxu0 0.0
  %7522 = vmatprep.subr.mxu0 0.0
  %7523 = vmatpush1.msra.mxu0 0.0
  %7524 = vmatprep.subr.mxu0 0.0
  %7525 = vmatpush1.msra.mxu0 0.0
  %7526 = vmatprep.subr.mxu0 0.0
  %7527 = vmatpush1.msra.mxu0 0.0
  %7528 = vmatprep.subr.mxu0 0.0
  %7529 = vmatpush1.msra.mxu0 0.0
  %7530 = vmatprep.subr.mxu0 0.0
  %7531 = vmatpush1.msra.mxu0 0.0
  %7532 = vmatprep.subr.mxu0 0.0
  %7533 = vmatpush1.msra.mxu0 0.0
  %7534 = vmatprep.subr.mxu0 0.0
  %7535 = vmatpush1.msra.mxu0 0.0
  %7536 = vmatprep.subr.mxu0 0.0
  %7537 = vmatpush1.msra.mxu0 0.0
  %7538 = vmatprep.mubr.f32.mxu0 0.0
  %7539 = vmatmul.mubr.f32.gmra.mrb[0].mxu0 %v7472
  %v7540 = vpop.f32.mrb[0].mxu0
  %v7541 = vadd.f32 0.0, %v7540
  %v7542 = vpop.f32.mrb[0].mxu0
  %7543 = vdwg.mxu0
  %v7546 = vsel %vm7470, %v7457, %v7456
  %v7547 = vsel %vm271, %v7546, 0
  %7549 = vmatprep.subr.mxu0 0.0
  %7550 = vmatpush1.msra.mxu0 %v7460
  %7551 = vmatprep.subr.mxu0 0.0
  %7552 = vmatpush1.msra.mxu0 %v7461
  %7553 = vmatprep.subr.mxu0 0.0
  %7554 = vmatpush1.msra.mxu0 %v7462
  %7555 = vmatprep.subr.mxu0 0.0
  %7556 = vmatpush1.msra.mxu0 %v7463
  %7557 = vmatprep.subr.mxu0 0.0
  %7558 = vmatpush1.msra.mxu0 0.0
  %7559 = vmatprep.subr.mxu0 0.0
  %7560 = vmatpush1.msra.mxu0 0.0
  %7561 = vmatprep.subr.mxu0 0.0
  %7562 = vmatpush1.msra.mxu0 0.0
  %7563 = vmatprep.subr.mxu0 0.0
  %7564 = vmatpush1.msra.mxu0 0.0
  %7565 = vmatprep.subr.mxu0 0.0
  %7566 = vmatpush1.msra.mxu0 0.0
  %7567 = vmatprep.subr.mxu0 0.0
  %7568 = vmatpush1.msra.mxu0 0.0
  %7569 = vmatprep.subr.mxu0 0.0
  %7570 = vmatpush1.msra.mxu0 0.0
  %7571 = vmatprep.subr.mxu0 0.0
  %7572 = vmatpush1.msra.mxu0 0.0
  %7573 = vmatprep.subr.mxu0 0.0
  %7574 = vmatpush1.msra.mxu0 0.0
  %7575 = vmatprep.subr.mxu0 0.0
  %7576 = vmatpush1.msra.mxu0 0.0
  %7577 = vmatprep.subr.mxu0 0.0
  %7578 = vmatpush1.msra.mxu0 0.0
  %7579 = vmatprep.subr.mxu0 0.0
  %7580 = vmatpush1.msra.mxu0 0.0
  %7581 = vmatprep.subr.mxu0 0.0
  %7582 = vmatpush1.msra.mxu0 0.0
  %7583 = vmatprep.subr.mxu0 0.0
  %7584 = vmatpush1.msra.mxu0 0.0
  %7585 = vmatprep.subr.mxu0 0.0
  %7586 = vmatpush1.msra.mxu0 0.0
  %7587 = vmatprep.subr.mxu0 0.0
  %7588 = vmatpush1.msra.mxu0 0.0
  %7589 = vmatprep.subr.mxu0 0.0
  %7590 = vmatpush1.msra.mxu0 0.0
  %7591 = vmatprep.subr.mxu0 0.0
  %7592 = vmatpush1.msra.mxu0 0.0
  %7593 = vmatprep.subr.mxu0 0.0
  %7594 = vmatpush1.msra.mxu0 0.0
  %7595 = vmatprep.subr.mxu0 0.0
  %7596 = vmatpush1.msra.mxu0 0.0
  %7597 = vmatprep.subr.mxu0 0.0
  %7598 = vmatpush1.msra.mxu0 0.0
  %7599 = vmatprep.subr.mxu0 0.0
  %7600 = vmatpush1.msra.mxu0 0.0
  %7601 = vmatprep.subr.mxu0 0.0
  %7602 = vmatpush1.msra.mxu0 0.0
  %7603 = vmatprep.subr.mxu0 0.0
  %7604 = vmatpush1.msra.mxu0 0.0
  %7605 = vmatprep.subr.mxu0 0.0
  %7606 = vmatpush1.msra.mxu0 0.0
  %7607 = vmatprep.subr.mxu0 0.0
  %7608 = vmatpush1.msra.mxu0 0.0
  %7609 = vmatprep.subr.mxu0 0.0
  %7610 = vmatpush1.msra.mxu0 0.0
  %7611 = vmatprep.subr.mxu0 0.0
  %7612 = vmatpush1.msra.mxu0 0.0
  %7613 = vmatprep.mubr.f32.mxu0 0.0
  %7614 = vmatmul.mubr.f32.gmra.mrb[0].mxu0 %v7547
  %v7615 = vpop.f32.mrb[0].mxu0
  %v7616 = vadd.f32 %v7541, %v7615
  %v7617 = vpop.f32.mrb[0].mxu0
  %7618 = vdwg.mxu0
  %v7619 = vld [vmem:[%s14] sm:$0x1]
  %v7621 = vlaneseq
  %v7622 = vshrl.u32 %v7621, 7
  %v7623 = vsub.s32 0, %v7622
  %v7624 = vrot.slane %v7619, %v7623
  %v7626 = vadd.f32 %v7616, %v7624
  %v7627 = vtanh.pop %v7626
  %v7628 = vld [vmem:[%s15] sm:$0xff]
  %v7629 = vld [vmem:[%s15 + $0x8] sm:$0xff]
  %v7630 = vld [vmem:[%s15 + $0x10] sm:$0xff]
  %v7631 = vld [vmem:[%s15 + $0x18] sm:$0xff]
  %v7632 = vld [vmem:[%s16] sm:$0x1]
  %v7634 = vlaneseq
  %v7635 = vshrl.u32 %v7634, 7
  %v7636 = vsub.s32 0, %v7635
  %v7637 = vrot.slane %v7632, %v7636
  %v7640 = vsel %vm271, %v7627, 0
  %7642 = vmatprep.subr.mxu0 0.0
  %7643 = vmatpush1.msra.mxu0 %v7628
  %7644 = vmatprep.subr.mxu0 0.0
  %7645 = vmatpush1.msra.mxu0 %v7629
  %7646 = vmatprep.subr.mxu0 0.0
  %7647 = vmatpush1.msra.mxu0 %v7630
  %7648 = vmatprep.subr.mxu0 0.0
  %7649 = vmatpush1.msra.mxu0 %v7631
  %7650 = vmatprep.subr.mxu0 0.0
  %7651 = vmatpush1.msra.mxu0 0.0
  %7652 = vmatprep.subr.mxu0 0.0
  %7653 = vmatpush1.msra.mxu0 0.0
  %7654 = vmatprep.subr.mxu0 0.0
  %7655 = vmatpush1.msra.mxu0 0.0
  %7656 = vmatprep.subr.mxu0 0.0
  %7657 = vmatpush1.msra.mxu0 0.0
  %7658 = vmatprep.subr.mxu0 0.0
  %7659 = vmatpush1.msra.mxu0 0.0
  %7660 = vmatprep.subr.mxu0 0.0
  %7661 = vmatpush1.msra.mxu0 0.0
  %7662 = vmatprep.subr.mxu0 0.0
  %7663 = vmatpush1.msra.mxu0 0.0
  %7664 = vmatprep.subr.mxu0 0.0
  %7665 = vmatpush1.msra.mxu0 0.0
  %7666 = vmatprep.subr.mxu0 0.0
  %7667 = vmatpush1.msra.mxu0 0.0
  %7668 = vmatprep.subr.mxu0 0.0
  %7669 = vmatpush1.msra.mxu0 0.0
  %7670 = vmatprep.subr.mxu0 0.0
  %7671 = vmatpush1.msra.mxu0 0.0
  %7672 = vmatprep.subr.mxu0 0.0
  %7673 = vmatpush1.msra.mxu0 0.0
  %7674 = vmatprep.subr.mxu0 0.0
  %7675 = vmatpush1.msra.mxu0 0.0
  %7676 = vmatprep.subr.mxu0 0.0
  %7677 = vmatpush1.msra.mxu0 0.0
  %7678 = vmatprep.subr.mxu0 0.0
  %7679 = vmatpush1.msra.mxu0 0.0
  %7680 = vmatprep.subr.mxu0 0.0
  %7681 = vmatpush1.msra.mxu0 0.0
  %7682 = vmatprep.subr.mxu0 0.0
  %7683 = vmatpush1.msra.mxu0 0.0
  %7684 = vmatprep.subr.mxu0 0.0
  %7685 = vmatpush1.msra.mxu0 0.0
  %7686 = vmatprep.subr.mxu0 0.0
  %7687 = vmatpush1.msra.mxu0 0.0
  %7688 = vmatprep.subr.mxu0 0.0
  %7689 = vmatpush1.msra.mxu0 0.0
  %7690 = vmatprep.subr.mxu0 0.0
  %7691 = vmatpush1.msra.mxu0 0.0
  %7692 = vmatprep.subr.mxu0 0.0
  %7693 = vmatpush1.msra.mxu0 0.0
  %7694 = vmatprep.subr.mxu0 0.0
  %7695 = vmatpush1.msra.mxu0 0.0
  %7696 = vmatprep.subr.mxu0 0.0
  %7697 = vmatpush1.msra.mxu0 0.0
  %7698 = vmatprep.subr.mxu0 0.0
  %7699 = vmatpush1.msra.mxu0 0.0
  %7700 = vmatprep.subr.mxu0 0.0
  %7701 = vmatpush1.msra.mxu0 0.0
  %7702 = vmatprep.subr.mxu0 0.0
  %7703 = vmatpush1.msra.mxu0 0.0
  %7704 = vmatprep.subr.mxu0 0.0
  %7705 = vmatpush1.msra.mxu0 0.0
  %7706 = vmatprep.mubr.f32.mxu0 0.0
  %7707 = vmatmul.mubr.f32.gmra.mrb[0].mxu0 %v7640
  %v7708 = vpop.f32.mrb[0].mxu0
  %v7709 = vadd.f32 %v7637, %v7708
  %v7710 = vpop.f32.mrb[0].mxu0
  %7711 = vdwg.mxu0
  %7712 = vst [vmem:[%s17] sm:$0xff] 0.0
  %vm7713 = vcmask 17408
  %7714 = vst.msk [vmem:[%s17] sm:$0x3] %vm7713, %v7709
  // Predicated region
  $region70: #{siamese_forward.1} parent=0 // pred_check
    _
  $region71: #{siamese_forward.1} parent=0 // pred_check_branch
    %7716 = sbr.rel (0) target = $region73
  $region72: #{siamese_forward.1} parent=0 // pred_region
    _
  $region73: #{siamese_forward.1} parent=0 // pred_fallthru
    _
  // Predicated region
  $region74: #{siamese_forward.1} parent=0 // pred_check
    _
  $region75: #{siamese_forward.1} parent=0 // pred_check_branch
    %7718 = sbr.rel (0) target = $region77
  $region76: #{siamese_forward.1} parent=0 // pred_region
    _
  $region77: #{siamese_forward.1} parent=0 // pred_fallthru
    _

</llo_original>
